<compile_context>
chip_gen: v7x
topology: tpu7x:2x2x1
jax: 0.10.0
libtpu: 0.0.40
codegen_flags: <defaults>
</compile_context>

<pallas_src>
import numpy as np
import jax
import jax.numpy as jnp
from jax.experimental import pallas as pl
from jax.experimental.pallas import tpu as pltpu

BN_EPS = 1e-5
LEAKY_SLOPE = 0.2
K = 4                 # conv kernel size for every layer
OUT_COLS = 128        # final layer Cout (=1) padded to a full lane width

_LAYER_CFG = [        # (stride, pad, has_bn)
    (2, 1, False),    # Conv + LeakyReLU
    (2, 1, True),     # block: Conv(bias=False) + BN + LeakyReLU
    (2, 1, True),
    (2, 1, True),
    (2, 0, False),    # Conv + Sigmoid
]


# ----------------------------------------------------------------------------
# The single fused Pallas kernel
# ----------------------------------------------------------------------------
def _disc_kernel(x_ref,
                 s1_ref, g1_ref, b1_ref,
                 s2_ref, g2_ref, kr2_ref, ke2_ref, ga2_ref, be2_ref,
                 s3_ref, g3_ref, kr3_ref, ke3_ref, ga3_ref, be3_ref,
                 s4_ref, g4_ref, kr4_ref, ke4_ref, ga4_ref, be4_ref,
                 s5_ref, g5_ref, b5_ref,
                 o_ref):
    f32 = jnp.float32
    bf16 = jnp.bfloat16

    def conv(x, s_ref, g_ref):
        # x: (N*H_in, W_in*Cin) f32  ->  (N*Ho, Wo*Cout) f32
        xb = x.astype(bf16)
        acc = None
        for kh in range(K):
            # stride-2 + H-padding row selection (S is 0/1 -> exact)
            t = jnp.dot(s_ref[kh], xb, preferred_element_type=f32).astype(bf16)
            # stride-2 + W-padding column selection fused into the weights
            p = jnp.dot(t, g_ref[kh], preferred_element_type=f32)
            acc = p if acc is None else acc + p
        return acc

    def batchnorm(y, kr_ref, ke_ref, ga_ref, be_ref):
        # Exact training-mode batch stats per channel.  Channels are
        # interleaved along lanes as (j, c): fold with Kred, expand with Kexp.
        kr = kr_ref[...]                       # (Wo*Cout, Cout)
        ke = ke_ref[...]                       # (Cout, Wo*Cout)
        cout = kr.shape[1]
        m = y.shape[0] * (y.shape[1] // cout)  # N * Ho * Wo
        inv_m = 1.0 / m
        col_sum = jnp.sum(y, axis=0, keepdims=True)
        ch_mean = jnp.dot(col_sum, kr, preferred_element_type=f32) * inv_m
        mean_row = jnp.dot(ch_mean, ke, preferred_element_type=f32)
        d = y - mean_row
        col_sq = jnp.sum(d * d, axis=0, keepdims=True)
        ch_var = jnp.dot(col_sq, kr, preferred_element_type=f32) * inv_m
        var_row = jnp.dot(ch_var, ke, preferred_element_type=f32)
        inv_row = jax.lax.rsqrt(var_row + BN_EPS)
        return d * inv_row * ga_ref[...] + be_ref[...]

    def leaky(y):
        return jnp.where(y >= 0.0, y, LEAKY_SLOPE * y)

    x = x_ref[...]                                             # (N*64, 64*C)
    y = leaky(conv(x, s1_ref, g1_ref) + b1_ref[...])           # (N*32, 32*fd)
    y = leaky(batchnorm(conv(y, s2_ref, g2_ref),
                        kr2_ref, ke2_ref, ga2_ref, be2_ref))   # (N*16, 16*2fd)
    y = leaky(batchnorm(conv(y, s3_ref, g3_ref),
                        kr3_ref, ke3_ref, ga3_ref, be3_ref))   # (N*8, 8*4fd)
    y = leaky(batchnorm(conv(y, s4_ref, g4_ref),
                        kr4_ref, ke4_ref, ga4_ref, be4_ref))   # (N*4, 4*8fd)
    logits = conv(y, s5_ref, g5_ref) + b5_ref[...]             # (N, 128)
    o_ref[...] = (1.0 / (1.0 + jnp.exp(-logits))).astype(o_ref.dtype)


# ----------------------------------------------------------------------------
# Host-side constant builders (run once, outside the hot path)
# ----------------------------------------------------------------------------
def _build_selection(n, h_in, h_out, stride, pad):
    """S[kh, n*h_out+i, n*h_in+r] = 1 where r = stride*i + kh - pad (in range)."""
    s = np.zeros((K, n * h_out, n * h_in), np.float32)
    for kh in range(K):
        for b in range(n):
            for i in range(h_out):
                r = stride * i + kh - pad
                if 0 <= r < h_in:
                    s[kh, b * h_out + i, b * h_in + r] = 1.0
    return s


def _build_gmat(wgt, w_in, w_out, stride, pad, cout_pad=None):
    """G[kh, w*Cin+c, j*Co+co] = W[co, c, kh, kw] with w = stride*j + kw - pad."""
    cout, cin, _, _ = wgt.shape
    co = cout_pad if cout_pad is not None else cout
    g = np.zeros((K, w_in * cin, w_out * co), np.float32)
    for kh in range(K):
        for j in range(w_out):
            for kw in range(K):
                col = stride * j + kw - pad
                if 0 <= col < w_in:
                    g[kh, col * cin:(col + 1) * cin,
                      j * co:j * co + cout] = wgt[:, :, kh, kw].T
    return g


def precompute_operands(params, n, h, w, c):
    """Flat tuple of constant kernel operands (everything except the image)."""
    args = []
    for li, (p, (stride, pad, has_bn)) in enumerate(zip(params, _LAYER_CFG)):
        wgt = np.asarray(p["w"], np.float32)            # (Cout, Cin, K, K)
        cout = wgt.shape[0]
        ho = (h + 2 * pad - K) // stride + 1
        wo = (w + 2 * pad - K) // stride + 1
        cout_pad = OUT_COLS if li == len(params) - 1 else cout

        s = _build_selection(n, h, ho, stride, pad)
        g = _build_gmat(wgt, w, wo, stride, pad, cout_pad)
        args += [jnp.asarray(s, jnp.bfloat16), jnp.asarray(g, jnp.bfloat16)]

        if has_bn:
            kred = np.tile(np.eye(cout, dtype=np.float32), (wo, 1))
            args += [
                jnp.asarray(kred),
                jnp.asarray(np.ascontiguousarray(kred.T)),
                jnp.asarray(np.tile(np.asarray(p["gamma"], np.float32), wo)[None, :]),
                jnp.asarray(np.tile(np.asarray(p["beta"], np.float32), wo)[None, :]),
            ]
        else:
            brow = np.zeros((1, wo * cout_pad), np.float32)
            bvec = np.asarray(p["b"], np.float32)
            for j in range(wo):
                brow[0, j * cout_pad:j * cout_pad + cout] = bvec
            args.append(jnp.asarray(brow))

        h, w, c = ho, wo, cout
    return tuple(args)


# ----------------------------------------------------------------------------
# Fused forward (single pallas_call)
# ----------------------------------------------------------------------------
def fused_forward(op_args, x):
    n, c, h, w = x.shape
    # single tiny layout change of the *input only*: NCHW -> rows=(n,h), cols=(w,c)
    x2d = jnp.transpose(x, (0, 2, 3, 1)).reshape(n * h, w * c)
    args = (x2d,) + tuple(op_args)

    def _spec(a):
        nd = a.ndim
        return pl.BlockSpec(a.shape, lambda i, nd=nd: (0,) * nd)

    out = pl.pallas_call(
        _disc_kernel,
        out_shape=jax.ShapeDtypeStruct((n, OUT_COLS), jnp.float32),
        grid=(1,),
        in_specs=[_spec(a) for a in args],
        out_specs=pl.BlockSpec((n, OUT_COLS), lambda i: (0, 0)),
        compiler_params=pltpu.CompilerParams(
            dimension_semantics=("arbitrary",)),
    )(*args)
    return out[:, :1].reshape(n, 1, 1, 1)


# ----------------------------------------------------------------------------
# Parameters + pure-JAX reference (for a sanity check)
# ----------------------------------------------------------------------------
def init_params(key, channels_img, features_d):
    fd = features_d
    specs = [
        (fd,     channels_img, True),
        (fd * 2, fd,           False),
        (fd * 4, fd * 2,       False),
        (fd * 8, fd * 4,       False),
        (1,      fd * 8,       True),
    ]
    params = []
    for cout, cin, has_bias in specs:
        key, kw, kb = jax.random.split(key, 3)
        wgt = 0.02 * jax.random.normal(kw, (cout, cin, K, K), jnp.float32)
        b = (0.01 * jax.random.normal(kb, (cout,), jnp.float32)
             if has_bias else jnp.zeros((cout,), jnp.float32))
        params.append(dict(w=wgt, b=b,
                           gamma=jnp.ones((cout,), jnp.float32),
                           beta=jnp.zeros((cout,), jnp.float32)))
    return params


def reference_forward(params, x):
    def conv2d(h, wgt, stride, pad, b=None):
        y = jax.lax.conv_general_dilated(
            h, wgt, window_strides=(stride, stride),
            padding=[(pad, pad), (pad, pad)],
            dimension_numbers=("NCHW", "OIHW", "NCHW"),
            precision=jax.lax.Precision.HIGHEST)
        if b is not None:
            y = y + b.reshape(1, -1, 1, 1)
        return y

    def bn(h, gamma, beta):
        mean = jnp.mean(h, axis=(0, 2, 3), keepdims=True)
        var = jnp.mean((h - mean) ** 2, axis=(0, 2, 3), keepdims=True)
        hn = (h - mean) * jax.lax.rsqrt(var + BN_EPS)
        return hn * gamma.reshape(1, -1, 1, 1) + beta.reshape(1, -1, 1, 1)

    def leaky(h):
        return jnp.where(h >= 0, h, LEAKY_SLOPE * h)

    h = x
    for li, (p, (stride, pad, has_bn)) in enumerate(zip(params, _LAYER_CFG)):
        if has_bn:
            h = leaky(bn(conv2d(h, p["w"], stride, pad), p["gamma"], p["beta"]))
        elif li == 0:
            h = leaky(conv2d(h, p["w"], stride, pad, p["b"]))
        else:
            h = conv2d(h, p["w"], stride, pad, p["b"])
            h = 1.0 / (1.0 + jnp.exp(-h))
    return h


if __name__ == "__main__":
    channels_img, features_d = 3, 8
    batch, img_size = 2, 64     # DCGAN discriminator expects 64x64 inputs

    key = jax.random.PRNGKey(0)
    key, kx = jax.random.split(key)
    x = jax.random.normal(kx, (batch, channels_img, img_size, img_size),
                          jnp.float32)
    params = init_params(key, channels_img, features_d)

    op_args = precompute_operands(params, batch, img_size, img_size,
                                  channels_img)

    fwd = jax.jit(fused_forward)
    out = jax.block_until_ready(fwd(op_args, x))

    assert out.shape == (batch, 1, 1, 1), out.shape
    assert bool(jnp.all((out >= 0.0) & (out <= 1.0)))

    ref = jax.block_until_ready(reference_forward(params, x))
    err = float(jnp.max(jnp.abs(out - ref)))
    assert err < 3e-2, f"max |kernel - reference| = {err}"

    print("KERNEL_OK")
</pallas_src>

<mosaic_0001>
module attributes {stable_mosaic.version = 11 : i64} {
  func.func @_disc_kernel(%arg0: i32, %arg1: memref<128x192xf32, #tpu.memory_space<vmem>>, %arg2: memref<4x64x128xbf16, #tpu.memory_space<vmem>>, %arg3: memref<4x192x256xbf16, #tpu.memory_space<vmem>>, %arg4: memref<1x256xf32, #tpu.memory_space<vmem>>, %arg5: memref<4x32x64xbf16, #tpu.memory_space<vmem>>, %arg6: memref<4x256x256xbf16, #tpu.memory_space<vmem>>, %arg7: memref<256x16xf32, #tpu.memory_space<vmem>>, %arg8: memref<16x256xf32, #tpu.memory_space<vmem>>, %arg9: memref<1x256xf32, #tpu.memory_space<vmem>>, %arg10: memref<1x256xf32, #tpu.memory_space<vmem>>, %arg11: memref<4x16x32xbf16, #tpu.memory_space<vmem>>, %arg12: memref<4x256x256xbf16, #tpu.memory_space<vmem>>, %arg13: memref<256x32xf32, #tpu.memory_space<vmem>>, %arg14: memref<32x256xf32, #tpu.memory_space<vmem>>, %arg15: memref<1x256xf32, #tpu.memory_space<vmem>>, %arg16: memref<1x256xf32, #tpu.memory_space<vmem>>, %arg17: memref<4x8x16xbf16, #tpu.memory_space<vmem>>, %arg18: memref<4x256x256xbf16, #tpu.memory_space<vmem>>, %arg19: memref<256x64xf32, #tpu.memory_space<vmem>>, %arg20: memref<64x256xf32, #tpu.memory_space<vmem>>, %arg21: memref<1x256xf32, #tpu.memory_space<vmem>>, %arg22: memref<1x256xf32, #tpu.memory_space<vmem>>, %arg23: memref<4x2x8xbf16, #tpu.memory_space<vmem>>, %arg24: memref<4x256x128xbf16, #tpu.memory_space<vmem>>, %arg25: memref<1x128xf32, #tpu.memory_space<vmem>>, %arg26: memref<2x128xf32, #tpu.memory_space<vmem>>) attributes {dimension_semantics = [#tpu.dimension_semantics<arbitrary>], iteration_bounds = array<i64: 1>, scalar_prefetch = 0 : i64, scratch_operands = 0 : i64, tpu.core_type = #tpu.core_type<tc>, window_params = [{pipeline_mode = #tpu.pipeline_mode<synchronous>, transform_indices = @transform_0, window_bounds = array<i64: 128, 192>}, {pipeline_mode = #tpu.pipeline_mode<synchronous>, transform_indices = @transform_1, window_bounds = array<i64: 4, 64, 128>}, {pipeline_mode = #tpu.pipeline_mode<synchronous>, transform_indices = @transform_2, window_bounds = array<i64: 4, 192, 256>}, {pipeline_mode = #tpu.pipeline_mode<synchronous>, transform_indices = @transform_3, window_bounds = array<i64: 1, 256>}, {pipeline_mode = #tpu.pipeline_mode<synchronous>, transform_indices = @transform_4, window_bounds = array<i64: 4, 32, 64>}, {pipeline_mode = #tpu.pipeline_mode<synchronous>, transform_indices = @transform_5, window_bounds = array<i64: 4, 256, 256>}, {pipeline_mode = #tpu.pipeline_mode<synchronous>, transform_indices = @transform_6, window_bounds = array<i64: 256, 16>}, {pipeline_mode = #tpu.pipeline_mode<synchronous>, transform_indices = @transform_7, window_bounds = array<i64: 16, 256>}, {pipeline_mode = #tpu.pipeline_mode<synchronous>, transform_indices = @transform_8, window_bounds = array<i64: 1, 256>}, {pipeline_mode = #tpu.pipeline_mode<synchronous>, transform_indices = @transform_9, window_bounds = array<i64: 1, 256>}, {pipeline_mode = #tpu.pipeline_mode<synchronous>, transform_indices = @transform_10, window_bounds = array<i64: 4, 16, 32>}, {pipeline_mode = #tpu.pipeline_mode<synchronous>, transform_indices = @transform_11, window_bounds = array<i64: 4, 256, 256>}, {pipeline_mode = #tpu.pipeline_mode<synchronous>, transform_indices = @transform_12, window_bounds = array<i64: 256, 32>}, {pipeline_mode = #tpu.pipeline_mode<synchronous>, transform_indices = @transform_13, window_bounds = array<i64: 32, 256>}, {pipeline_mode = #tpu.pipeline_mode<synchronous>, transform_indices = @transform_14, window_bounds = array<i64: 1, 256>}, {pipeline_mode = #tpu.pipeline_mode<synchronous>, transform_indices = @transform_15, window_bounds = array<i64: 1, 256>}, {pipeline_mode = #tpu.pipeline_mode<synchronous>, transform_indices = @transform_16, window_bounds = array<i64: 4, 8, 16>}, {pipeline_mode = #tpu.pipeline_mode<synchronous>, transform_indices = @transform_17, window_bounds = array<i64: 4, 256, 256>}, {pipeline_mode = #tpu.pipeline_mode<synchronous>, transform_indices = @transform_18, window_bounds = array<i64: 256, 64>}, {pipeline_mode = #tpu.pipeline_mode<synchronous>, transform_indices = @transform_19, window_bounds = array<i64: 64, 256>}, {pipeline_mode = #tpu.pipeline_mode<synchronous>, transform_indices = @transform_20, window_bounds = array<i64: 1, 256>}, {pipeline_mode = #tpu.pipeline_mode<synchronous>, transform_indices = @transform_21, window_bounds = array<i64: 1, 256>}, {pipeline_mode = #tpu.pipeline_mode<synchronous>, transform_indices = @transform_22, window_bounds = array<i64: 4, 2, 8>}, {pipeline_mode = #tpu.pipeline_mode<synchronous>, transform_indices = @transform_23, window_bounds = array<i64: 4, 256, 128>}, {pipeline_mode = #tpu.pipeline_mode<synchronous>, transform_indices = @transform_24, window_bounds = array<i64: 1, 128>}, {pipeline_mode = #tpu.pipeline_mode<synchronous>, transform_indices = @transform_25, window_bounds = array<i64: 2, 128>}]} {
    %c0 = arith.constant 0 : index
    %c0_0 = arith.constant 0 : index
    %0 = vector.load %arg1[%c0, %c0_0] : memref<128x192xf32, #tpu.memory_space<vmem>>, vector<128x192xf32>
    %1 = arith.truncf %0 : vector<128x192xf32> to vector<128x192xbf16>
    %c0_1 = arith.constant 0 : index
    %c0_2 = arith.constant 0 : index
    %c0_3 = arith.constant 0 : index
    %2 = vector.load %arg2[%c0_1, %c0_2, %c0_3] : memref<4x64x128xbf16, #tpu.memory_space<vmem>>, vector<1x64x128xbf16>
    %3 = vector.shape_cast %2 : vector<1x64x128xbf16> to vector<64x128xbf16>
    %cst = arith.constant dense<0.000000e+00> : vector<64x192xf32>
    %4 = tpu.matmul %3, %1, %cst {dimension_numbers = #tpu.dot_dimension_numbers<[1], [0], [0], [1], [0, 0, 1, 1], [], []>} : vector<64x128xbf16>, vector<128x192xbf16>, vector<64x192xf32> -> vector<64x192xf32>
    %5 = arith.truncf %4 : vector<64x192xf32> to vector<64x192xbf16>
    %c0_4 = arith.constant 0 : index
    %c0_5 = arith.constant 0 : index
    %c0_6 = arith.constant 0 : index
    %6 = vector.load %arg3[%c0_4, %c0_5, %c0_6] : memref<4x192x256xbf16, #tpu.memory_space<vmem>>, vector<1x192x256xbf16>
    %7 = vector.shape_cast %6 : vector<1x192x256xbf16> to vector<192x256xbf16>
    %cst_7 = arith.constant dense<0.000000e+00> : vector<64x256xf32>
    %8 = tpu.matmul %5, %7, %cst_7 {dimension_numbers = #tpu.dot_dimension_numbers<[1], [0], [0], [1], [0, 0, 1, 1], [], []>} : vector<64x192xbf16>, vector<192x256xbf16>, vector<64x256xf32> -> vector<64x256xf32>
    %c1 = arith.constant 1 : index
    %c0_8 = arith.constant 0 : index
    %c0_9 = arith.constant 0 : index
    %9 = vector.load %arg2[%c1, %c0_8, %c0_9] : memref<4x64x128xbf16, #tpu.memory_space<vmem>>, vector<1x64x128xbf16>
    %10 = vector.shape_cast %9 : vector<1x64x128xbf16> to vector<64x128xbf16>
    %cst_10 = arith.constant dense<0.000000e+00> : vector<64x192xf32>
    %11 = tpu.matmul %10, %1, %cst_10 {dimension_numbers = #tpu.dot_dimension_numbers<[1], [0], [0], [1], [0, 0, 1, 1], [], []>} : vector<64x128xbf16>, vector<128x192xbf16>, vector<64x192xf32> -> vector<64x192xf32>
    %12 = arith.truncf %11 : vector<64x192xf32> to vector<64x192xbf16>
    %c1_11 = arith.constant 1 : index
    %c0_12 = arith.constant 0 : index
    %c0_13 = arith.constant 0 : index
    %13 = vector.load %arg3[%c1_11, %c0_12, %c0_13] : memref<4x192x256xbf16, #tpu.memory_space<vmem>>, vector<1x192x256xbf16>
    %14 = vector.shape_cast %13 : vector<1x192x256xbf16> to vector<192x256xbf16>
    %cst_14 = arith.constant dense<0.000000e+00> : vector<64x256xf32>
    %15 = tpu.matmul %12, %14, %cst_14 {dimension_numbers = #tpu.dot_dimension_numbers<[1], [0], [0], [1], [0, 0, 1, 1], [], []>} : vector<64x192xbf16>, vector<192x256xbf16>, vector<64x256xf32> -> vector<64x256xf32>
    %16 = arith.addf %8, %15 : vector<64x256xf32>
    %c2 = arith.constant 2 : index
    %c0_15 = arith.constant 0 : index
    %c0_16 = arith.constant 0 : index
    %17 = vector.load %arg2[%c2, %c0_15, %c0_16] : memref<4x64x128xbf16, #tpu.memory_space<vmem>>, vector<1x64x128xbf16>
    %18 = vector.shape_cast %17 : vector<1x64x128xbf16> to vector<64x128xbf16>
    %cst_17 = arith.constant dense<0.000000e+00> : vector<64x192xf32>
    %19 = tpu.matmul %18, %1, %cst_17 {dimension_numbers = #tpu.dot_dimension_numbers<[1], [0], [0], [1], [0, 0, 1, 1], [], []>} : vector<64x128xbf16>, vector<128x192xbf16>, vector<64x192xf32> -> vector<64x192xf32>
    %20 = arith.truncf %19 : vector<64x192xf32> to vector<64x192xbf16>
    %c2_18 = arith.constant 2 : index
    %c0_19 = arith.constant 0 : index
    %c0_20 = arith.constant 0 : index
    %21 = vector.load %arg3[%c2_18, %c0_19, %c0_20] : memref<4x192x256xbf16, #tpu.memory_space<vmem>>, vector<1x192x256xbf16>
    %22 = vector.shape_cast %21 : vector<1x192x256xbf16> to vector<192x256xbf16>
    %cst_21 = arith.constant dense<0.000000e+00> : vector<64x256xf32>
    %23 = tpu.matmul %20, %22, %cst_21 {dimension_numbers = #tpu.dot_dimension_numbers<[1], [0], [0], [1], [0, 0, 1, 1], [], []>} : vector<64x192xbf16>, vector<192x256xbf16>, vector<64x256xf32> -> vector<64x256xf32>
    %24 = arith.addf %16, %23 : vector<64x256xf32>
    %c3 = arith.constant 3 : index
    %c0_22 = arith.constant 0 : index
    %c0_23 = arith.constant 0 : index
    %25 = vector.load %arg2[%c3, %c0_22, %c0_23] : memref<4x64x128xbf16, #tpu.memory_space<vmem>>, vector<1x64x128xbf16>
    %26 = vector.shape_cast %25 : vector<1x64x128xbf16> to vector<64x128xbf16>
    %cst_24 = arith.constant dense<0.000000e+00> : vector<64x192xf32>
    %27 = tpu.matmul %26, %1, %cst_24 {dimension_numbers = #tpu.dot_dimension_numbers<[1], [0], [0], [1], [0, 0, 1, 1], [], []>} : vector<64x128xbf16>, vector<128x192xbf16>, vector<64x192xf32> -> vector<64x192xf32>
    %28 = arith.truncf %27 : vector<64x192xf32> to vector<64x192xbf16>
    %c3_25 = arith.constant 3 : index
    %c0_26 = arith.constant 0 : index
    %c0_27 = arith.constant 0 : index
    %29 = vector.load %arg3[%c3_25, %c0_26, %c0_27] : memref<4x192x256xbf16, #tpu.memory_space<vmem>>, vector<1x192x256xbf16>
    %30 = vector.shape_cast %29 : vector<1x192x256xbf16> to vector<192x256xbf16>
    %cst_28 = arith.constant dense<0.000000e+00> : vector<64x256xf32>
    %31 = tpu.matmul %28, %30, %cst_28 {dimension_numbers = #tpu.dot_dimension_numbers<[1], [0], [0], [1], [0, 0, 1, 1], [], []>} : vector<64x192xbf16>, vector<192x256xbf16>, vector<64x256xf32> -> vector<64x256xf32>
    %32 = arith.addf %24, %31 : vector<64x256xf32>
    %c0_29 = arith.constant 0 : index
    %c0_30 = arith.constant 0 : index
    %33 = vector.load %arg4[%c0_29, %c0_30] : memref<1x256xf32, #tpu.memory_space<vmem>>, vector<1x256xf32>
    %34 = vector.broadcast %33 : vector<1x256xf32> to vector<64x256xf32>
    %35 = arith.addf %32, %34 : vector<64x256xf32>
    %cst_31 = arith.constant 0.000000e+00 : f32
    %36 = vector.broadcast %cst_31 : f32 to vector<64x256xf32>
    %37 = arith.cmpf oge, %35, %36 : vector<64x256xf32>
    %cst_32 = arith.constant 2.000000e-01 : f32
    %38 = vector.broadcast %cst_32 : f32 to vector<64x256xf32>
    %39 = arith.mulf %38, %35 : vector<64x256xf32>
    %40 = arith.select %37, %35, %39 : vector<64x256xi1>, vector<64x256xf32>
    %41 = arith.truncf %40 : vector<64x256xf32> to vector<64x256xbf16>
    %c0_33 = arith.constant 0 : index
    %c0_34 = arith.constant 0 : index
    %c0_35 = arith.constant 0 : index
    %42 = vector.load %arg5[%c0_33, %c0_34, %c0_35] : memref<4x32x64xbf16, #tpu.memory_space<vmem>>, vector<1x32x64xbf16>
    %43 = vector.shape_cast %42 : vector<1x32x64xbf16> to vector<32x64xbf16>
    %cst_36 = arith.constant dense<0.000000e+00> : vector<32x256xf32>
    %44 = tpu.matmul %43, %41, %cst_36 {dimension_numbers = #tpu.dot_dimension_numbers<[1], [0], [0], [1], [0, 0, 1, 1], [], []>} : vector<32x64xbf16>, vector<64x256xbf16>, vector<32x256xf32> -> vector<32x256xf32>
    %45 = arith.truncf %44 : vector<32x256xf32> to vector<32x256xbf16>
    %c0_37 = arith.constant 0 : index
    %c0_38 = arith.constant 0 : index
    %c0_39 = arith.constant 0 : index
    %46 = vector.load %arg6[%c0_37, %c0_38, %c0_39] : memref<4x256x256xbf16, #tpu.memory_space<vmem>>, vector<1x256x256xbf16>
    %47 = vector.shape_cast %46 : vector<1x256x256xbf16> to vector<256x256xbf16>
    %cst_40 = arith.constant dense<0.000000e+00> : vector<32x256xf32>
    %48 = tpu.matmul %45, %47, %cst_40 {dimension_numbers = #tpu.dot_dimension_numbers<[1], [0], [0], [1], [0, 0, 1, 1], [], []>} : vector<32x256xbf16>, vector<256x256xbf16>, vector<32x256xf32> -> vector<32x256xf32>
    %c1_41 = arith.constant 1 : index
    %c0_42 = arith.constant 0 : index
    %c0_43 = arith.constant 0 : index
    %49 = vector.load %arg5[%c1_41, %c0_42, %c0_43] : memref<4x32x64xbf16, #tpu.memory_space<vmem>>, vector<1x32x64xbf16>
    %50 = vector.shape_cast %49 : vector<1x32x64xbf16> to vector<32x64xbf16>
    %cst_44 = arith.constant dense<0.000000e+00> : vector<32x256xf32>
    %51 = tpu.matmul %50, %41, %cst_44 {dimension_numbers = #tpu.dot_dimension_numbers<[1], [0], [0], [1], [0, 0, 1, 1], [], []>} : vector<32x64xbf16>, vector<64x256xbf16>, vector<32x256xf32> -> vector<32x256xf32>
    %52 = arith.truncf %51 : vector<32x256xf32> to vector<32x256xbf16>
    %c1_45 = arith.constant 1 : index
    %c0_46 = arith.constant 0 : index
    %c0_47 = arith.constant 0 : index
    %53 = vector.load %arg6[%c1_45, %c0_46, %c0_47] : memref<4x256x256xbf16, #tpu.memory_space<vmem>>, vector<1x256x256xbf16>
    %54 = vector.shape_cast %53 : vector<1x256x256xbf16> to vector<256x256xbf16>
    %cst_48 = arith.constant dense<0.000000e+00> : vector<32x256xf32>
    %55 = tpu.matmul %52, %54, %cst_48 {dimension_numbers = #tpu.dot_dimension_numbers<[1], [0], [0], [1], [0, 0, 1, 1], [], []>} : vector<32x256xbf16>, vector<256x256xbf16>, vector<32x256xf32> -> vector<32x256xf32>
    %56 = arith.addf %48, %55 : vector<32x256xf32>
    %c2_49 = arith.constant 2 : index
    %c0_50 = arith.constant 0 : index
    %c0_51 = arith.constant 0 : index
    %57 = vector.load %arg5[%c2_49, %c0_50, %c0_51] : memref<4x32x64xbf16, #tpu.memory_space<vmem>>, vector<1x32x64xbf16>
    %58 = vector.shape_cast %57 : vector<1x32x64xbf16> to vector<32x64xbf16>
    %cst_52 = arith.constant dense<0.000000e+00> : vector<32x256xf32>
    %59 = tpu.matmul %58, %41, %cst_52 {dimension_numbers = #tpu.dot_dimension_numbers<[1], [0], [0], [1], [0, 0, 1, 1], [], []>} : vector<32x64xbf16>, vector<64x256xbf16>, vector<32x256xf32> -> vector<32x256xf32>
    %60 = arith.truncf %59 : vector<32x256xf32> to vector<32x256xbf16>
    %c2_53 = arith.constant 2 : index
    %c0_54 = arith.constant 0 : index
    %c0_55 = arith.constant 0 : index
    %61 = vector.load %arg6[%c2_53, %c0_54, %c0_55] : memref<4x256x256xbf16, #tpu.memory_space<vmem>>, vector<1x256x256xbf16>
    %62 = vector.shape_cast %61 : vector<1x256x256xbf16> to vector<256x256xbf16>
    %cst_56 = arith.constant dense<0.000000e+00> : vector<32x256xf32>
    %63 = tpu.matmul %60, %62, %cst_56 {dimension_numbers = #tpu.dot_dimension_numbers<[1], [0], [0], [1], [0, 0, 1, 1], [], []>} : vector<32x256xbf16>, vector<256x256xbf16>, vector<32x256xf32> -> vector<32x256xf32>
    %64 = arith.addf %56, %63 : vector<32x256xf32>
    %c3_57 = arith.constant 3 : index
    %c0_58 = arith.constant 0 : index
    %c0_59 = arith.constant 0 : index
    %65 = vector.load %arg5[%c3_57, %c0_58, %c0_59] : memref<4x32x64xbf16, #tpu.memory_space<vmem>>, vector<1x32x64xbf16>
    %66 = vector.shape_cast %65 : vector<1x32x64xbf16> to vector<32x64xbf16>
    %cst_60 = arith.constant dense<0.000000e+00> : vector<32x256xf32>
    %67 = tpu.matmul %66, %41, %cst_60 {dimension_numbers = #tpu.dot_dimension_numbers<[1], [0], [0], [1], [0, 0, 1, 1], [], []>} : vector<32x64xbf16>, vector<64x256xbf16>, vector<32x256xf32> -> vector<32x256xf32>
    %68 = arith.truncf %67 : vector<32x256xf32> to vector<32x256xbf16>
    %c3_61 = arith.constant 3 : index
    %c0_62 = arith.constant 0 : index
    %c0_63 = arith.constant 0 : index
    %69 = vector.load %arg6[%c3_61, %c0_62, %c0_63] : memref<4x256x256xbf16, #tpu.memory_space<vmem>>, vector<1x256x256xbf16>
    %70 = vector.shape_cast %69 : vector<1x256x256xbf16> to vector<256x256xbf16>
    %cst_64 = arith.constant dense<0.000000e+00> : vector<32x256xf32>
    %71 = tpu.matmul %68, %70, %cst_64 {dimension_numbers = #tpu.dot_dimension_numbers<[1], [0], [0], [1], [0, 0, 1, 1], [], []>} : vector<32x256xbf16>, vector<256x256xbf16>, vector<32x256xf32> -> vector<32x256xf32>
    %72 = arith.addf %64, %71 : vector<32x256xf32>
    %c0_65 = arith.constant 0 : index
    %c0_66 = arith.constant 0 : index
    %73 = vector.load %arg7[%c0_65, %c0_66] : memref<256x16xf32, #tpu.memory_space<vmem>>, vector<256x16xf32>
    %c0_67 = arith.constant 0 : index
    %c0_68 = arith.constant 0 : index
    %74 = vector.load %arg8[%c0_67, %c0_68] : memref<16x256xf32, #tpu.memory_space<vmem>>, vector<16x256xf32>
    %cst_69 = arith.constant dense<0.000000e+00> : vector<256xf32>
    %75 = vector.multi_reduction <add>, %72, %cst_69 [0] : vector<32x256xf32> to vector<256xf32>
    %76 = vector.shape_cast %75 : vector<256xf32> to vector<1x256xf32>
    %cst_70 = arith.constant dense<0.000000e+00> : vector<1x16xf32>
    %77 = tpu.matmul %76, %73, %cst_70 {dimension_numbers = #tpu.dot_dimension_numbers<[1], [0], [0], [1], [0, 0, 1, 1], [], []>} : vector<1x256xf32>, vector<256x16xf32>, vector<1x16xf32> -> vector<1x16xf32>
    %cst_71 = arith.constant 0.001953125 : f32
    %78 = vector.broadcast %cst_71 : f32 to vector<1x16xf32>
    %79 = arith.mulf %77, %78 : vector<1x16xf32>
    %cst_72 = arith.constant dense<0.000000e+00> : vector<1x256xf32>
    %80 = tpu.matmul %79, %74, %cst_72 {dimension_numbers = #tpu.dot_dimension_numbers<[1], [0], [0], [1], [0, 0, 1, 1], [], []>} : vector<1x16xf32>, vector<16x256xf32>, vector<1x256xf32> -> vector<1x256xf32>
    %81 = vector.broadcast %80 : vector<1x256xf32> to vector<32x256xf32>
    %82 = arith.subf %72, %81 : vector<32x256xf32>
    %83 = arith.mulf %82, %82 : vector<32x256xf32>
    %cst_73 = arith.constant dense<0.000000e+00> : vector<256xf32>
    %84 = vector.multi_reduction <add>, %83, %cst_73 [0] : vector<32x256xf32> to vector<256xf32>
    %85 = vector.shape_cast %84 : vector<256xf32> to vector<1x256xf32>
    %cst_74 = arith.constant dense<0.000000e+00> : vector<1x16xf32>
    %86 = tpu.matmul %85, %73, %cst_74 {dimension_numbers = #tpu.dot_dimension_numbers<[1], [0], [0], [1], [0, 0, 1, 1], [], []>} : vector<1x256xf32>, vector<256x16xf32>, vector<1x16xf32> -> vector<1x16xf32>
    %cst_75 = arith.constant 0.001953125 : f32
    %87 = vector.broadcast %cst_75 : f32 to vector<1x16xf32>
    %88 = arith.mulf %86, %87 : vector<1x16xf32>
    %cst_76 = arith.constant dense<0.000000e+00> : vector<1x256xf32>
    %89 = tpu.matmul %88, %74, %cst_76 {dimension_numbers = #tpu.dot_dimension_numbers<[1], [0], [0], [1], [0, 0, 1, 1], [], []>} : vector<1x16xf32>, vector<16x256xf32>, vector<1x256xf32> -> vector<1x256xf32>
    %cst_77 = arith.constant 9.99999974E-6 : f32
    %90 = vector.broadcast %cst_77 : f32 to vector<1x256xf32>
    %91 = arith.addf %89, %90 : vector<1x256xf32>
    %92 = math.rsqrt %91 : vector<1x256xf32>
    %93 = vector.broadcast %92 : vector<1x256xf32> to vector<32x256xf32>
    %94 = arith.mulf %82, %93 : vector<32x256xf32>
    %c0_78 = arith.constant 0 : index
    %c0_79 = arith.constant 0 : index
    %95 = vector.load %arg9[%c0_78, %c0_79] : memref<1x256xf32, #tpu.memory_space<vmem>>, vector<1x256xf32>
    %96 = vector.broadcast %95 : vector<1x256xf32> to vector<32x256xf32>
    %97 = arith.mulf %94, %96 : vector<32x256xf32>
    %c0_80 = arith.constant 0 : index
    %c0_81 = arith.constant 0 : index
    %98 = vector.load %arg10[%c0_80, %c0_81] : memref<1x256xf32, #tpu.memory_space<vmem>>, vector<1x256xf32>
    %99 = vector.broadcast %98 : vector<1x256xf32> to vector<32x256xf32>
    %100 = arith.addf %97, %99 : vector<32x256xf32>
    %cst_82 = arith.constant 0.000000e+00 : f32
    %101 = vector.broadcast %cst_82 : f32 to vector<32x256xf32>
    %102 = arith.cmpf oge, %100, %101 : vector<32x256xf32>
    %cst_83 = arith.constant 2.000000e-01 : f32
    %103 = vector.broadcast %cst_83 : f32 to vector<32x256xf32>
    %104 = arith.mulf %103, %100 : vector<32x256xf32>
    %105 = arith.select %102, %100, %104 : vector<32x256xi1>, vector<32x256xf32>
    %106 = arith.truncf %105 : vector<32x256xf32> to vector<32x256xbf16>
    %c0_84 = arith.constant 0 : index
    %c0_85 = arith.constant 0 : index
    %c0_86 = arith.constant 0 : index
    %107 = vector.load %arg11[%c0_84, %c0_85, %c0_86] : memref<4x16x32xbf16, #tpu.memory_space<vmem>>, vector<1x16x32xbf16>
    %108 = vector.shape_cast %107 : vector<1x16x32xbf16> to vector<16x32xbf16>
    %cst_87 = arith.constant dense<0.000000e+00> : vector<16x256xf32>
    %109 = tpu.matmul %108, %106, %cst_87 {dimension_numbers = #tpu.dot_dimension_numbers<[1], [0], [0], [1], [0, 0, 1, 1], [], []>} : vector<16x32xbf16>, vector<32x256xbf16>, vector<16x256xf32> -> vector<16x256xf32>
    %110 = arith.truncf %109 : vector<16x256xf32> to vector<16x256xbf16>
    %c0_88 = arith.constant 0 : index
    %c0_89 = arith.constant 0 : index
    %c0_90 = arith.constant 0 : index
    %111 = vector.load %arg12[%c0_88, %c0_89, %c0_90] : memref<4x256x256xbf16, #tpu.memory_space<vmem>>, vector<1x256x256xbf16>
    %112 = vector.shape_cast %111 : vector<1x256x256xbf16> to vector<256x256xbf16>
    %cst_91 = arith.constant dense<0.000000e+00> : vector<16x256xf32>
    %113 = tpu.matmul %110, %112, %cst_91 {dimension_numbers = #tpu.dot_dimension_numbers<[1], [0], [0], [1], [0, 0, 1, 1], [], []>} : vector<16x256xbf16>, vector<256x256xbf16>, vector<16x256xf32> -> vector<16x256xf32>
    %c1_92 = arith.constant 1 : index
    %c0_93 = arith.constant 0 : index
    %c0_94 = arith.constant 0 : index
    %114 = vector.load %arg11[%c1_92, %c0_93, %c0_94] : memref<4x16x32xbf16, #tpu.memory_space<vmem>>, vector<1x16x32xbf16>
    %115 = vector.shape_cast %114 : vector<1x16x32xbf16> to vector<16x32xbf16>
    %cst_95 = arith.constant dense<0.000000e+00> : vector<16x256xf32>
    %116 = tpu.matmul %115, %106, %cst_95 {dimension_numbers = #tpu.dot_dimension_numbers<[1], [0], [0], [1], [0, 0, 1, 1], [], []>} : vector<16x32xbf16>, vector<32x256xbf16>, vector<16x256xf32> -> vector<16x256xf32>
    %117 = arith.truncf %116 : vector<16x256xf32> to vector<16x256xbf16>
    %c1_96 = arith.constant 1 : index
    %c0_97 = arith.constant 0 : index
    %c0_98 = arith.constant 0 : index
    %118 = vector.load %arg12[%c1_96, %c0_97, %c0_98] : memref<4x256x256xbf16, #tpu.memory_space<vmem>>, vector<1x256x256xbf16>
    %119 = vector.shape_cast %118 : vector<1x256x256xbf16> to vector<256x256xbf16>
    %cst_99 = arith.constant dense<0.000000e+00> : vector<16x256xf32>
    %120 = tpu.matmul %117, %119, %cst_99 {dimension_numbers = #tpu.dot_dimension_numbers<[1], [0], [0], [1], [0, 0, 1, 1], [], []>} : vector<16x256xbf16>, vector<256x256xbf16>, vector<16x256xf32> -> vector<16x256xf32>
    %121 = arith.addf %113, %120 : vector<16x256xf32>
    %c2_100 = arith.constant 2 : index
    %c0_101 = arith.constant 0 : index
    %c0_102 = arith.constant 0 : index
    %122 = vector.load %arg11[%c2_100, %c0_101, %c0_102] : memref<4x16x32xbf16, #tpu.memory_space<vmem>>, vector<1x16x32xbf16>
    %123 = vector.shape_cast %122 : vector<1x16x32xbf16> to vector<16x32xbf16>
    %cst_103 = arith.constant dense<0.000000e+00> : vector<16x256xf32>
    %124 = tpu.matmul %123, %106, %cst_103 {dimension_numbers = #tpu.dot_dimension_numbers<[1], [0], [0], [1], [0, 0, 1, 1], [], []>} : vector<16x32xbf16>, vector<32x256xbf16>, vector<16x256xf32> -> vector<16x256xf32>
    %125 = arith.truncf %124 : vector<16x256xf32> to vector<16x256xbf16>
    %c2_104 = arith.constant 2 : index
    %c0_105 = arith.constant 0 : index
    %c0_106 = arith.constant 0 : index
    %126 = vector.load %arg12[%c2_104, %c0_105, %c0_106] : memref<4x256x256xbf16, #tpu.memory_space<vmem>>, vector<1x256x256xbf16>
    %127 = vector.shape_cast %126 : vector<1x256x256xbf16> to vector<256x256xbf16>
    %cst_107 = arith.constant dense<0.000000e+00> : vector<16x256xf32>
    %128 = tpu.matmul %125, %127, %cst_107 {dimension_numbers = #tpu.dot_dimension_numbers<[1], [0], [0], [1], [0, 0, 1, 1], [], []>} : vector<16x256xbf16>, vector<256x256xbf16>, vector<16x256xf32> -> vector<16x256xf32>
    %129 = arith.addf %121, %128 : vector<16x256xf32>
    %c3_108 = arith.constant 3 : index
    %c0_109 = arith.constant 0 : index
    %c0_110 = arith.constant 0 : index
    %130 = vector.load %arg11[%c3_108, %c0_109, %c0_110] : memref<4x16x32xbf16, #tpu.memory_space<vmem>>, vector<1x16x32xbf16>
    %131 = vector.shape_cast %130 : vector<1x16x32xbf16> to vector<16x32xbf16>
    %cst_111 = arith.constant dense<0.000000e+00> : vector<16x256xf32>
    %132 = tpu.matmul %131, %106, %cst_111 {dimension_numbers = #tpu.dot_dimension_numbers<[1], [0], [0], [1], [0, 0, 1, 1], [], []>} : vector<16x32xbf16>, vector<32x256xbf16>, vector<16x256xf32> -> vector<16x256xf32>
    %133 = arith.truncf %132 : vector<16x256xf32> to vector<16x256xbf16>
    %c3_112 = arith.constant 3 : index
    %c0_113 = arith.constant 0 : index
    %c0_114 = arith.constant 0 : index
    %134 = vector.load %arg12[%c3_112, %c0_113, %c0_114] : memref<4x256x256xbf16, #tpu.memory_space<vmem>>, vector<1x256x256xbf16>
    %135 = vector.shape_cast %134 : vector<1x256x256xbf16> to vector<256x256xbf16>
    %cst_115 = arith.constant dense<0.000000e+00> : vector<16x256xf32>
    %136 = tpu.matmul %133, %135, %cst_115 {dimension_numbers = #tpu.dot_dimension_numbers<[1], [0], [0], [1], [0, 0, 1, 1], [], []>} : vector<16x256xbf16>, vector<256x256xbf16>, vector<16x256xf32> -> vector<16x256xf32>
    %137 = arith.addf %129, %136 : vector<16x256xf32>
    %c0_116 = arith.constant 0 : index
    %c0_117 = arith.constant 0 : index
    %138 = vector.load %arg13[%c0_116, %c0_117] : memref<256x32xf32, #tpu.memory_space<vmem>>, vector<256x32xf32>
    %c0_118 = arith.constant 0 : index
    %c0_119 = arith.constant 0 : index
    %139 = vector.load %arg14[%c0_118, %c0_119] : memref<32x256xf32, #tpu.memory_space<vmem>>, vector<32x256xf32>
    %cst_120 = arith.constant dense<0.000000e+00> : vector<256xf32>
    %140 = vector.multi_reduction <add>, %137, %cst_120 [0] : vector<16x256xf32> to vector<256xf32>
    %141 = vector.shape_cast %140 : vector<256xf32> to vector<1x256xf32>
    %cst_121 = arith.constant dense<0.000000e+00> : vector<1x32xf32>
    %142 = tpu.matmul %141, %138, %cst_121 {dimension_numbers = #tpu.dot_dimension_numbers<[1], [0], [0], [1], [0, 0, 1, 1], [], []>} : vector<1x256xf32>, vector<256x32xf32>, vector<1x32xf32> -> vector<1x32xf32>
    %cst_122 = arith.constant 7.812500e-03 : f32
    %143 = vector.broadcast %cst_122 : f32 to vector<1x32xf32>
    %144 = arith.mulf %142, %143 : vector<1x32xf32>
    %cst_123 = arith.constant dense<0.000000e+00> : vector<1x256xf32>
    %145 = tpu.matmul %144, %139, %cst_123 {dimension_numbers = #tpu.dot_dimension_numbers<[1], [0], [0], [1], [0, 0, 1, 1], [], []>} : vector<1x32xf32>, vector<32x256xf32>, vector<1x256xf32> -> vector<1x256xf32>
    %146 = vector.broadcast %145 : vector<1x256xf32> to vector<16x256xf32>
    %147 = arith.subf %137, %146 : vector<16x256xf32>
    %148 = arith.mulf %147, %147 : vector<16x256xf32>
    %cst_124 = arith.constant dense<0.000000e+00> : vector<256xf32>
    %149 = vector.multi_reduction <add>, %148, %cst_124 [0] : vector<16x256xf32> to vector<256xf32>
    %150 = vector.shape_cast %149 : vector<256xf32> to vector<1x256xf32>
    %cst_125 = arith.constant dense<0.000000e+00> : vector<1x32xf32>
    %151 = tpu.matmul %150, %138, %cst_125 {dimension_numbers = #tpu.dot_dimension_numbers<[1], [0], [0], [1], [0, 0, 1, 1], [], []>} : vector<1x256xf32>, vector<256x32xf32>, vector<1x32xf32> -> vector<1x32xf32>
    %cst_126 = arith.constant 7.812500e-03 : f32
    %152 = vector.broadcast %cst_126 : f32 to vector<1x32xf32>
    %153 = arith.mulf %151, %152 : vector<1x32xf32>
    %cst_127 = arith.constant dense<0.000000e+00> : vector<1x256xf32>
    %154 = tpu.matmul %153, %139, %cst_127 {dimension_numbers = #tpu.dot_dimension_numbers<[1], [0], [0], [1], [0, 0, 1, 1], [], []>} : vector<1x32xf32>, vector<32x256xf32>, vector<1x256xf32> -> vector<1x256xf32>
    %cst_128 = arith.constant 9.99999974E-6 : f32
    %155 = vector.broadcast %cst_128 : f32 to vector<1x256xf32>
    %156 = arith.addf %154, %155 : vector<1x256xf32>
    %157 = math.rsqrt %156 : vector<1x256xf32>
    %158 = vector.broadcast %157 : vector<1x256xf32> to vector<16x256xf32>
    %159 = arith.mulf %147, %158 : vector<16x256xf32>
    %c0_129 = arith.constant 0 : index
    %c0_130 = arith.constant 0 : index
    %160 = vector.load %arg15[%c0_129, %c0_130] : memref<1x256xf32, #tpu.memory_space<vmem>>, vector<1x256xf32>
    %161 = vector.broadcast %160 : vector<1x256xf32> to vector<16x256xf32>
    %162 = arith.mulf %159, %161 : vector<16x256xf32>
    %c0_131 = arith.constant 0 : index
    %c0_132 = arith.constant 0 : index
    %163 = vector.load %arg16[%c0_131, %c0_132] : memref<1x256xf32, #tpu.memory_space<vmem>>, vector<1x256xf32>
    %164 = vector.broadcast %163 : vector<1x256xf32> to vector<16x256xf32>
    %165 = arith.addf %162, %164 : vector<16x256xf32>
    %cst_133 = arith.constant 0.000000e+00 : f32
    %166 = vector.broadcast %cst_133 : f32 to vector<16x256xf32>
    %167 = arith.cmpf oge, %165, %166 : vector<16x256xf32>
    %cst_134 = arith.constant 2.000000e-01 : f32
    %168 = vector.broadcast %cst_134 : f32 to vector<16x256xf32>
    %169 = arith.mulf %168, %165 : vector<16x256xf32>
    %170 = arith.select %167, %165, %169 : vector<16x256xi1>, vector<16x256xf32>
    %171 = arith.truncf %170 : vector<16x256xf32> to vector<16x256xbf16>
    %c0_135 = arith.constant 0 : index
    %c0_136 = arith.constant 0 : index
    %c0_137 = arith.constant 0 : index
    %172 = vector.load %arg17[%c0_135, %c0_136, %c0_137] : memref<4x8x16xbf16, #tpu.memory_space<vmem>>, vector<1x8x16xbf16>
    %173 = vector.shape_cast %172 : vector<1x8x16xbf16> to vector<8x16xbf16>
    %cst_138 = arith.constant dense<0.000000e+00> : vector<8x256xf32>
    %174 = tpu.matmul %173, %171, %cst_138 {dimension_numbers = #tpu.dot_dimension_numbers<[1], [0], [0], [1], [0, 0, 1, 1], [], []>} : vector<8x16xbf16>, vector<16x256xbf16>, vector<8x256xf32> -> vector<8x256xf32>
    %175 = arith.truncf %174 : vector<8x256xf32> to vector<8x256xbf16>
    %c0_139 = arith.constant 0 : index
    %c0_140 = arith.constant 0 : index
    %c0_141 = arith.constant 0 : index
    %176 = vector.load %arg18[%c0_139, %c0_140, %c0_141] : memref<4x256x256xbf16, #tpu.memory_space<vmem>>, vector<1x256x256xbf16>
    %177 = vector.shape_cast %176 : vector<1x256x256xbf16> to vector<256x256xbf16>
    %cst_142 = arith.constant dense<0.000000e+00> : vector<8x256xf32>
    %178 = tpu.matmul %175, %177, %cst_142 {dimension_numbers = #tpu.dot_dimension_numbers<[1], [0], [0], [1], [0, 0, 1, 1], [], []>} : vector<8x256xbf16>, vector<256x256xbf16>, vector<8x256xf32> -> vector<8x256xf32>
    %c1_143 = arith.constant 1 : index
    %c0_144 = arith.constant 0 : index
    %c0_145 = arith.constant 0 : index
    %179 = vector.load %arg17[%c1_143, %c0_144, %c0_145] : memref<4x8x16xbf16, #tpu.memory_space<vmem>>, vector<1x8x16xbf16>
    %180 = vector.shape_cast %179 : vector<1x8x16xbf16> to vector<8x16xbf16>
    %cst_146 = arith.constant dense<0.000000e+00> : vector<8x256xf32>
    %181 = tpu.matmul %180, %171, %cst_146 {dimension_numbers = #tpu.dot_dimension_numbers<[1], [0], [0], [1], [0, 0, 1, 1], [], []>} : vector<8x16xbf16>, vector<16x256xbf16>, vector<8x256xf32> -> vector<8x256xf32>
    %182 = arith.truncf %181 : vector<8x256xf32> to vector<8x256xbf16>
    %c1_147 = arith.constant 1 : index
    %c0_148 = arith.constant 0 : index
    %c0_149 = arith.constant 0 : index
    %183 = vector.load %arg18[%c1_147, %c0_148, %c0_149] : memref<4x256x256xbf16, #tpu.memory_space<vmem>>, vector<1x256x256xbf16>
    %184 = vector.shape_cast %183 : vector<1x256x256xbf16> to vector<256x256xbf16>
    %cst_150 = arith.constant dense<0.000000e+00> : vector<8x256xf32>
    %185 = tpu.matmul %182, %184, %cst_150 {dimension_numbers = #tpu.dot_dimension_numbers<[1], [0], [0], [1], [0, 0, 1, 1], [], []>} : vector<8x256xbf16>, vector<256x256xbf16>, vector<8x256xf32> -> vector<8x256xf32>
    %186 = arith.addf %178, %185 : vector<8x256xf32>
    %c2_151 = arith.constant 2 : index
    %c0_152 = arith.constant 0 : index
    %c0_153 = arith.constant 0 : index
    %187 = vector.load %arg17[%c2_151, %c0_152, %c0_153] : memref<4x8x16xbf16, #tpu.memory_space<vmem>>, vector<1x8x16xbf16>
    %188 = vector.shape_cast %187 : vector<1x8x16xbf16> to vector<8x16xbf16>
    %cst_154 = arith.constant dense<0.000000e+00> : vector<8x256xf32>
    %189 = tpu.matmul %188, %171, %cst_154 {dimension_numbers = #tpu.dot_dimension_numbers<[1], [0], [0], [1], [0, 0, 1, 1], [], []>} : vector<8x16xbf16>, vector<16x256xbf16>, vector<8x256xf32> -> vector<8x256xf32>
    %190 = arith.truncf %189 : vector<8x256xf32> to vector<8x256xbf16>
    %c2_155 = arith.constant 2 : index
    %c0_156 = arith.constant 0 : index
    %c0_157 = arith.constant 0 : index
    %191 = vector.load %arg18[%c2_155, %c0_156, %c0_157] : memref<4x256x256xbf16, #tpu.memory_space<vmem>>, vector<1x256x256xbf16>
    %192 = vector.shape_cast %191 : vector<1x256x256xbf16> to vector<256x256xbf16>
    %cst_158 = arith.constant dense<0.000000e+00> : vector<8x256xf32>
    %193 = tpu.matmul %190, %192, %cst_158 {dimension_numbers = #tpu.dot_dimension_numbers<[1], [0], [0], [1], [0, 0, 1, 1], [], []>} : vector<8x256xbf16>, vector<256x256xbf16>, vector<8x256xf32> -> vector<8x256xf32>
    %194 = arith.addf %186, %193 : vector<8x256xf32>
    %c3_159 = arith.constant 3 : index
    %c0_160 = arith.constant 0 : index
    %c0_161 = arith.constant 0 : index
    %195 = vector.load %arg17[%c3_159, %c0_160, %c0_161] : memref<4x8x16xbf16, #tpu.memory_space<vmem>>, vector<1x8x16xbf16>
    %196 = vector.shape_cast %195 : vector<1x8x16xbf16> to vector<8x16xbf16>
    %cst_162 = arith.constant dense<0.000000e+00> : vector<8x256xf32>
    %197 = tpu.matmul %196, %171, %cst_162 {dimension_numbers = #tpu.dot_dimension_numbers<[1], [0], [0], [1], [0, 0, 1, 1], [], []>} : vector<8x16xbf16>, vector<16x256xbf16>, vector<8x256xf32> -> vector<8x256xf32>
    %198 = arith.truncf %197 : vector<8x256xf32> to vector<8x256xbf16>
    %c3_163 = arith.constant 3 : index
    %c0_164 = arith.constant 0 : index
    %c0_165 = arith.constant 0 : index
    %199 = vector.load %arg18[%c3_163, %c0_164, %c0_165] : memref<4x256x256xbf16, #tpu.memory_space<vmem>>, vector<1x256x256xbf16>
    %200 = vector.shape_cast %199 : vector<1x256x256xbf16> to vector<256x256xbf16>
    %cst_166 = arith.constant dense<0.000000e+00> : vector<8x256xf32>
    %201 = tpu.matmul %198, %200, %cst_166 {dimension_numbers = #tpu.dot_dimension_numbers<[1], [0], [0], [1], [0, 0, 1, 1], [], []>} : vector<8x256xbf16>, vector<256x256xbf16>, vector<8x256xf32> -> vector<8x256xf32>
    %202 = arith.addf %194, %201 : vector<8x256xf32>
    %c0_167 = arith.constant 0 : index
    %c0_168 = arith.constant 0 : index
    %203 = vector.load %arg19[%c0_167, %c0_168] : memref<256x64xf32, #tpu.memory_space<vmem>>, vector<256x64xf32>
    %c0_169 = arith.constant 0 : index
    %c0_170 = arith.constant 0 : index
    %204 = vector.load %arg20[%c0_169, %c0_170] : memref<64x256xf32, #tpu.memory_space<vmem>>, vector<64x256xf32>
    %cst_171 = arith.constant dense<0.000000e+00> : vector<256xf32>
    %205 = vector.multi_reduction <add>, %202, %cst_171 [0] : vector<8x256xf32> to vector<256xf32>
    %206 = vector.shape_cast %205 : vector<256xf32> to vector<1x256xf32>
    %cst_172 = arith.constant dense<0.000000e+00> : vector<1x64xf32>
    %207 = tpu.matmul %206, %203, %cst_172 {dimension_numbers = #tpu.dot_dimension_numbers<[1], [0], [0], [1], [0, 0, 1, 1], [], []>} : vector<1x256xf32>, vector<256x64xf32>, vector<1x64xf32> -> vector<1x64xf32>
    %cst_173 = arith.constant 3.125000e-02 : f32
    %208 = vector.broadcast %cst_173 : f32 to vector<1x64xf32>
    %209 = arith.mulf %207, %208 : vector<1x64xf32>
    %cst_174 = arith.constant dense<0.000000e+00> : vector<1x256xf32>
    %210 = tpu.matmul %209, %204, %cst_174 {dimension_numbers = #tpu.dot_dimension_numbers<[1], [0], [0], [1], [0, 0, 1, 1], [], []>} : vector<1x64xf32>, vector<64x256xf32>, vector<1x256xf32> -> vector<1x256xf32>
    %211 = vector.broadcast %210 : vector<1x256xf32> to vector<8x256xf32>
    %212 = arith.subf %202, %211 : vector<8x256xf32>
    %213 = arith.mulf %212, %212 : vector<8x256xf32>
    %cst_175 = arith.constant dense<0.000000e+00> : vector<256xf32>
    %214 = vector.multi_reduction <add>, %213, %cst_175 [0] : vector<8x256xf32> to vector<256xf32>
    %215 = vector.shape_cast %214 : vector<256xf32> to vector<1x256xf32>
    %cst_176 = arith.constant dense<0.000000e+00> : vector<1x64xf32>
    %216 = tpu.matmul %215, %203, %cst_176 {dimension_numbers = #tpu.dot_dimension_numbers<[1], [0], [0], [1], [0, 0, 1, 1], [], []>} : vector<1x256xf32>, vector<256x64xf32>, vector<1x64xf32> -> vector<1x64xf32>
    %cst_177 = arith.constant 3.125000e-02 : f32
    %217 = vector.broadcast %cst_177 : f32 to vector<1x64xf32>
    %218 = arith.mulf %216, %217 : vector<1x64xf32>
    %cst_178 = arith.constant dense<0.000000e+00> : vector<1x256xf32>
    %219 = tpu.matmul %218, %204, %cst_178 {dimension_numbers = #tpu.dot_dimension_numbers<[1], [0], [0], [1], [0, 0, 1, 1], [], []>} : vector<1x64xf32>, vector<64x256xf32>, vector<1x256xf32> -> vector<1x256xf32>
    %cst_179 = arith.constant 9.99999974E-6 : f32
    %220 = vector.broadcast %cst_179 : f32 to vector<1x256xf32>
    %221 = arith.addf %219, %220 : vector<1x256xf32>
    %222 = math.rsqrt %221 : vector<1x256xf32>
    %223 = vector.broadcast %222 : vector<1x256xf32> to vector<8x256xf32>
    %224 = arith.mulf %212, %223 : vector<8x256xf32>
    %c0_180 = arith.constant 0 : index
    %c0_181 = arith.constant 0 : index
    %225 = vector.load %arg21[%c0_180, %c0_181] : memref<1x256xf32, #tpu.memory_space<vmem>>, vector<1x256xf32>
    %226 = vector.broadcast %225 : vector<1x256xf32> to vector<8x256xf32>
    %227 = arith.mulf %224, %226 : vector<8x256xf32>
    %c0_182 = arith.constant 0 : index
    %c0_183 = arith.constant 0 : index
    %228 = vector.load %arg22[%c0_182, %c0_183] : memref<1x256xf32, #tpu.memory_space<vmem>>, vector<1x256xf32>
    %229 = vector.broadcast %228 : vector<1x256xf32> to vector<8x256xf32>
    %230 = arith.addf %227, %229 : vector<8x256xf32>
    %cst_184 = arith.constant 0.000000e+00 : f32
    %231 = vector.broadcast %cst_184 : f32 to vector<8x256xf32>
    %232 = arith.cmpf oge, %230, %231 : vector<8x256xf32>
    %cst_185 = arith.constant 2.000000e-01 : f32
    %233 = vector.broadcast %cst_185 : f32 to vector<8x256xf32>
    %234 = arith.mulf %233, %230 : vector<8x256xf32>
    %235 = arith.select %232, %230, %234 : vector<8x256xi1>, vector<8x256xf32>
    %236 = arith.truncf %235 : vector<8x256xf32> to vector<8x256xbf16>
    %c0_186 = arith.constant 0 : index
    %c0_187 = arith.constant 0 : index
    %c0_188 = arith.constant 0 : index
    %237 = vector.load %arg23[%c0_186, %c0_187, %c0_188] : memref<4x2x8xbf16, #tpu.memory_space<vmem>>, vector<1x2x8xbf16>
    %238 = vector.shape_cast %237 : vector<1x2x8xbf16> to vector<2x8xbf16>
    %cst_189 = arith.constant dense<0.000000e+00> : vector<2x256xf32>
    %239 = tpu.matmul %238, %236, %cst_189 {dimension_numbers = #tpu.dot_dimension_numbers<[1], [0], [0], [1], [0, 0, 1, 1], [], []>} : vector<2x8xbf16>, vector<8x256xbf16>, vector<2x256xf32> -> vector<2x256xf32>
    %240 = arith.truncf %239 : vector<2x256xf32> to vector<2x256xbf16>
    %c0_190 = arith.constant 0 : index
    %c0_191 = arith.constant 0 : index
    %c0_192 = arith.constant 0 : index
    %241 = vector.load %arg24[%c0_190, %c0_191, %c0_192] : memref<4x256x128xbf16, #tpu.memory_space<vmem>>, vector<1x256x128xbf16>
    %242 = vector.shape_cast %241 : vector<1x256x128xbf16> to vector<256x128xbf16>
    %cst_193 = arith.constant dense<0.000000e+00> : vector<2x128xf32>
    %243 = tpu.matmul %240, %242, %cst_193 {dimension_numbers = #tpu.dot_dimension_numbers<[1], [0], [0], [1], [0, 0, 1, 1], [], []>} : vector<2x256xbf16>, vector<256x128xbf16>, vector<2x128xf32> -> vector<2x128xf32>
    %c1_194 = arith.constant 1 : index
    %c0_195 = arith.constant 0 : index
    %c0_196 = arith.constant 0 : index
    %244 = vector.load %arg23[%c1_194, %c0_195, %c0_196] : memref<4x2x8xbf16, #tpu.memory_space<vmem>>, vector<1x2x8xbf16>
    %245 = vector.shape_cast %244 : vector<1x2x8xbf16> to vector<2x8xbf16>
    %cst_197 = arith.constant dense<0.000000e+00> : vector<2x256xf32>
    %246 = tpu.matmul %245, %236, %cst_197 {dimension_numbers = #tpu.dot_dimension_numbers<[1], [0], [0], [1], [0, 0, 1, 1], [], []>} : vector<2x8xbf16>, vector<8x256xbf16>, vector<2x256xf32> -> vector<2x256xf32>
    %247 = arith.truncf %246 : vector<2x256xf32> to vector<2x256xbf16>
    %c1_198 = arith.constant 1 : index
    %c0_199 = arith.constant 0 : index
    %c0_200 = arith.constant 0 : index
    %248 = vector.load %arg24[%c1_198, %c0_199, %c0_200] : memref<4x256x128xbf16, #tpu.memory_space<vmem>>, vector<1x256x128xbf16>
    %249 = vector.shape_cast %248 : vector<1x256x128xbf16> to vector<256x128xbf16>
    %cst_201 = arith.constant dense<0.000000e+00> : vector<2x128xf32>
    %250 = tpu.matmul %247, %249, %cst_201 {dimension_numbers = #tpu.dot_dimension_numbers<[1], [0], [0], [1], [0, 0, 1, 1], [], []>} : vector<2x256xbf16>, vector<256x128xbf16>, vector<2x128xf32> -> vector<2x128xf32>
    %251 = arith.addf %243, %250 : vector<2x128xf32>
    %c2_202 = arith.constant 2 : index
    %c0_203 = arith.constant 0 : index
    %c0_204 = arith.constant 0 : index
    %252 = vector.load %arg23[%c2_202, %c0_203, %c0_204] : memref<4x2x8xbf16, #tpu.memory_space<vmem>>, vector<1x2x8xbf16>
    %253 = vector.shape_cast %252 : vector<1x2x8xbf16> to vector<2x8xbf16>
    %cst_205 = arith.constant dense<0.000000e+00> : vector<2x256xf32>
    %254 = tpu.matmul %253, %236, %cst_205 {dimension_numbers = #tpu.dot_dimension_numbers<[1], [0], [0], [1], [0, 0, 1, 1], [], []>} : vector<2x8xbf16>, vector<8x256xbf16>, vector<2x256xf32> -> vector<2x256xf32>
    %255 = arith.truncf %254 : vector<2x256xf32> to vector<2x256xbf16>
    %c2_206 = arith.constant 2 : index
    %c0_207 = arith.constant 0 : index
    %c0_208 = arith.constant 0 : index
    %256 = vector.load %arg24[%c2_206, %c0_207, %c0_208] : memref<4x256x128xbf16, #tpu.memory_space<vmem>>, vector<1x256x128xbf16>
    %257 = vector.shape_cast %256 : vector<1x256x128xbf16> to vector<256x128xbf16>
    %cst_209 = arith.constant dense<0.000000e+00> : vector<2x128xf32>
    %258 = tpu.matmul %255, %257, %cst_209 {dimension_numbers = #tpu.dot_dimension_numbers<[1], [0], [0], [1], [0, 0, 1, 1], [], []>} : vector<2x256xbf16>, vector<256x128xbf16>, vector<2x128xf32> -> vector<2x128xf32>
    %259 = arith.addf %251, %258 : vector<2x128xf32>
    %c3_210 = arith.constant 3 : index
    %c0_211 = arith.constant 0 : index
    %c0_212 = arith.constant 0 : index
    %260 = vector.load %arg23[%c3_210, %c0_211, %c0_212] : memref<4x2x8xbf16, #tpu.memory_space<vmem>>, vector<1x2x8xbf16>
    %261 = vector.shape_cast %260 : vector<1x2x8xbf16> to vector<2x8xbf16>
    %cst_213 = arith.constant dense<0.000000e+00> : vector<2x256xf32>
    %262 = tpu.matmul %261, %236, %cst_213 {dimension_numbers = #tpu.dot_dimension_numbers<[1], [0], [0], [1], [0, 0, 1, 1], [], []>} : vector<2x8xbf16>, vector<8x256xbf16>, vector<2x256xf32> -> vector<2x256xf32>
    %263 = arith.truncf %262 : vector<2x256xf32> to vector<2x256xbf16>
    %c3_214 = arith.constant 3 : index
    %c0_215 = arith.constant 0 : index
    %c0_216 = arith.constant 0 : index
    %264 = vector.load %arg24[%c3_214, %c0_215, %c0_216] : memref<4x256x128xbf16, #tpu.memory_space<vmem>>, vector<1x256x128xbf16>
    %265 = vector.shape_cast %264 : vector<1x256x128xbf16> to vector<256x128xbf16>
    %cst_217 = arith.constant dense<0.000000e+00> : vector<2x128xf32>
    %266 = tpu.matmul %263, %265, %cst_217 {dimension_numbers = #tpu.dot_dimension_numbers<[1], [0], [0], [1], [0, 0, 1, 1], [], []>} : vector<2x256xbf16>, vector<256x128xbf16>, vector<2x128xf32> -> vector<2x128xf32>
    %267 = arith.addf %259, %266 : vector<2x128xf32>
    %c0_218 = arith.constant 0 : index
    %c0_219 = arith.constant 0 : index
    %268 = vector.load %arg25[%c0_218, %c0_219] : memref<1x128xf32, #tpu.memory_space<vmem>>, vector<1x128xf32>
    %269 = vector.broadcast %268 : vector<1x128xf32> to vector<2x128xf32>
    %270 = arith.addf %267, %269 : vector<2x128xf32>
    %cst_220 = arith.constant 0.000000e+00 : f32
    %271 = vector.broadcast %cst_220 : f32 to vector<2x128xf32>
    %272 = arith.subf %271, %270 : vector<2x128xf32>
    %273 = math.exp %272 : vector<2x128xf32>
    %cst_221 = arith.constant 1.000000e+00 : f32
    %274 = vector.broadcast %cst_221 : f32 to vector<2x128xf32>
    %275 = arith.addf %274, %273 : vector<2x128xf32>
    %cst_222 = arith.constant 1.000000e+00 : f32
    %276 = vector.broadcast %cst_222 : f32 to vector<2x128xf32>
    %277 = arith.divf %276, %275 : vector<2x128xf32>
    %c0_223 = arith.constant 0 : index
    %c0_224 = arith.constant 0 : index
    %278 = vector.load %arg26[%c0_223, %c0_224] : memref<2x128xf32, #tpu.memory_space<vmem>>, vector<2x128xf32>
    tpu.vector_store %arg26[%c0_223, %c0_224], %277 {strides = array<i32>} : memref<2x128xf32, #tpu.memory_space<vmem>>, vector<2x128xf32>,
    return
  }
  func.func @transform_0(%arg0: i32) -> (i32, i32) {
    %c0_i32 = arith.constant 0 : i32
    %c0_i32_0 = arith.constant 0 : i32
    %c0_i32_1 = arith.constant 0 : i32
    return %c0_i32, %c0_i32_0 : i32, i32
  }
  func.func @transform_1(%arg0: i32) -> (i32, i32, i32) {
    %c0_i32 = arith.constant 0 : i32
    %c0_i32_0 = arith.constant 0 : i32
    %c0_i32_1 = arith.constant 0 : i32
    %c0_i32_2 = arith.constant 0 : i32
    return %c0_i32, %c0_i32_0, %c0_i32_1 : i32, i32, i32
  }
  func.func @transform_2(%arg0: i32) -> (i32, i32, i32) {
    %c0_i32 = arith.constant 0 : i32
    %c0_i32_0 = arith.constant 0 : i32
    %c0_i32_1 = arith.constant 0 : i32
    %c0_i32_2 = arith.constant 0 : i32
    return %c0_i32, %c0_i32_0, %c0_i32_1 : i32, i32, i32
  }
  func.func @transform_3(%arg0: i32) -> (i32, i32) {
    %c0_i32 = arith.constant 0 : i32
    %c0_i32_0 = arith.constant 0 : i32
    %c0_i32_1 = arith.constant 0 : i32
    return %c0_i32, %c0_i32_0 : i32, i32
  }
  func.func @transform_4(%arg0: i32) -> (i32, i32, i32) {
    %c0_i32 = arith.constant 0 : i32
    %c0_i32_0 = arith.constant 0 : i32
    %c0_i32_1 = arith.constant 0 : i32
    %c0_i32_2 = arith.constant 0 : i32
    return %c0_i32, %c0_i32_0, %c0_i32_1 : i32, i32, i32
  }
  func.func @transform_5(%arg0: i32) -> (i32, i32, i32) {
    %c0_i32 = arith.constant 0 : i32
    %c0_i32_0 = arith.constant 0 : i32
    %c0_i32_1 = arith.constant 0 : i32
    %c0_i32_2 = arith.constant 0 : i32
    return %c0_i32, %c0_i32_0, %c0_i32_1 : i32, i32, i32
  }
  func.func @transform_6(%arg0: i32) -> (i32, i32) {
    %c0_i32 = arith.constant 0 : i32
    %c0_i32_0 = arith.constant 0 : i32
    %c0_i32_1 = arith.constant 0 : i32
    return %c0_i32, %c0_i32_0 : i32, i32
  }
  func.func @transform_7(%arg0: i32) -> (i32, i32) {
    %c0_i32 = arith.constant 0 : i32
    %c0_i32_0 = arith.constant 0 : i32
    %c0_i32_1 = arith.constant 0 : i32
    return %c0_i32, %c0_i32_0 : i32, i32
  }
  func.func @transform_8(%arg0: i32) -> (i32, i32) {
    %c0_i32 = arith.constant 0 : i32
    %c0_i32_0 = arith.constant 0 : i32
    %c0_i32_1 = arith.constant 0 : i32
    return %c0_i32, %c0_i32_0 : i32, i32
  }
  func.func @transform_9(%arg0: i32) -> (i32, i32) {
    %c0_i32 = arith.constant 0 : i32
    %c0_i32_0 = arith.constant 0 : i32
    %c0_i32_1 = arith.constant 0 : i32
    return %c0_i32, %c0_i32_0 : i32, i32
  }
  func.func @transform_10(%arg0: i32) -> (i32, i32, i32) {
    %c0_i32 = arith.constant 0 : i32
    %c0_i32_0 = arith.constant 0 : i32
    %c0_i32_1 = arith.constant 0 : i32
    %c0_i32_2 = arith.constant 0 : i32
    return %c0_i32, %c0_i32_0, %c0_i32_1 : i32, i32, i32
  }
  func.func @transform_11(%arg0: i32) -> (i32, i32, i32) {
    %c0_i32 = arith.constant 0 : i32
    %c0_i32_0 = arith.constant 0 : i32
    %c0_i32_1 = arith.constant 0 : i32
    %c0_i32_2 = arith.constant 0 : i32
    return %c0_i32, %c0_i32_0, %c0_i32_1 : i32, i32, i32
  }
  func.func @transform_12(%arg0: i32) -> (i32, i32) {
    %c0_i32 = arith.constant 0 : i32
    %c0_i32_0 = arith.constant 0 : i32
    %c0_i32_1 = arith.constant 0 : i32
    return %c0_i32, %c0_i32_0 : i32, i32
  }
  func.func @transform_13(%arg0: i32) -> (i32, i32) {
    %c0_i32 = arith.constant 0 : i32
    %c0_i32_0 = arith.constant 0 : i32
    %c0_i32_1 = arith.constant 0 : i32
    return %c0_i32, %c0_i32_0 : i32, i32
  }
  func.func @transform_14(%arg0: i32) -> (i32, i32) {
    %c0_i32 = arith.constant 0 : i32
    %c0_i32_0 = arith.constant 0 : i32
    %c0_i32_1 = arith.constant 0 : i32
    return %c0_i32, %c0_i32_0 : i32, i32
  }
  func.func @transform_15(%arg0: i32) -> (i32, i32) {
    %c0_i32 = arith.constant 0 : i32
    %c0_i32_0 = arith.constant 0 : i32
    %c0_i32_1 = arith.constant 0 : i32
    return %c0_i32, %c0_i32_0 : i32, i32
  }
  func.func @transform_16(%arg0: i32) -> (i32, i32, i32) {
    %c0_i32 = arith.constant 0 : i32
    %c0_i32_0 = arith.constant 0 : i32
    %c0_i32_1 = arith.constant 0 : i32
    %c0_i32_2 = arith.constant 0 : i32
    return %c0_i32, %c0_i32_0, %c0_i32_1 : i32, i32, i32
  }
  func.func @transform_17(%arg0: i32) -> (i32, i32, i32) {
    %c0_i32 = arith.constant 0 : i32
    %c0_i32_0 = arith.constant 0 : i32
    %c0_i32_1 = arith.constant 0 : i32
    %c0_i32_2 = arith.constant 0 : i32
    return %c0_i32, %c0_i32_0, %c0_i32_1 : i32, i32, i32
  }
  func.func @transform_18(%arg0: i32) -> (i32, i32) {
    %c0_i32 = arith.constant 0 : i32
    %c0_i32_0 = arith.constant 0 : i32
    %c0_i32_1 = arith.constant 0 : i32
    return %c0_i32, %c0_i32_0 : i32, i32
  }
  func.func @transform_19(%arg0: i32) -> (i32, i32) {
    %c0_i32 = arith.constant 0 : i32
    %c0_i32_0 = arith.constant 0 : i32
    %c0_i32_1 = arith.constant 0 : i32
    return %c0_i32, %c0_i32_0 : i32, i32
  }
  func.func @transform_20(%arg0: i32) -> (i32, i32) {
    %c0_i32 = arith.constant 0 : i32
    %c0_i32_0 = arith.constant 0 : i32
    %c0_i32_1 = arith.constant 0 : i32
    return %c0_i32, %c0_i32_0 : i32, i32
  }
  func.func @transform_21(%arg0: i32) -> (i32, i32) {
    %c0_i32 = arith.constant 0 : i32
    %c0_i32_0 = arith.constant 0 : i32
    %c0_i32_1 = arith.constant 0 : i32
    return %c0_i32, %c0_i32_0 : i32, i32
  }
  func.func @transform_22(%arg0: i32) -> (i32, i32, i32) {
    %c0_i32 = arith.constant 0 : i32
    %c0_i32_0 = arith.constant 0 : i32
    %c0_i32_1 = arith.constant 0 : i32
    %c0_i32_2 = arith.constant 0 : i32
    return %c0_i32, %c0_i32_0, %c0_i32_1 : i32, i32, i32
  }
  func.func @transform_23(%arg0: i32) -> (i32, i32, i32) {
    %c0_i32 = arith.constant 0 : i32
    %c0_i32_0 = arith.constant 0 : i32
    %c0_i32_1 = arith.constant 0 : i32
    %c0_i32_2 = arith.constant 0 : i32
    return %c0_i32, %c0_i32_0, %c0_i32_1 : i32, i32, i32
  }
  func.func @transform_24(%arg0: i32) -> (i32, i32) {
    %c0_i32 = arith.constant 0 : i32
    %c0_i32_0 = arith.constant 0 : i32
    %c0_i32_1 = arith.constant 0 : i32
    return %c0_i32, %c0_i32_0 : i32, i32
  }
  func.func @transform_25(%arg0: i32) -> (i32, i32) {
    %c0_i32 = arith.constant 0 : i32
    %c0_i32_0 = arith.constant 0 : i32
    %c0_i32_1 = arith.constant 0 : i32
    return %c0_i32, %c0_i32_0 : i32, i32
  }
}

</mosaic_0001>

<llo_original>
// kernel: fused_forward.1
$region0: #{fused_forward.1}
  #allocation0 [shape = 'u32[]', space=smem, size = 0x4, offset = 0x4, fixed_abs, tag = 'smem constant byte address 0x4 - core index']
  #allocation1 [shape = 'u32[144,128]{1,0:T(1,128)}', space=vmem, size = 0x12000, scoped, tag = 'internal scratch']
  %s0 = inlined_call_operand.vmem [shape: f32[128,192], index: 0, kind: input, shape index: {}]
  %s1 = inlined_call_operand.hbm [shape: bf16[4,64,128], index: 1, kind: input, shape index: {}]
  %s2 = inlined_call_operand.vmem [shape: bf16[4,192,256], index: 2, kind: input, shape index: {}]
  %s3 = inlined_call_operand.vmem [shape: f32[1,256], index: 3, kind: input, shape index: {}]
  %s4 = inlined_call_operand.hbm [shape: bf16[4,32,64], index: 4, kind: input, shape index: {}]
  %s5 = inlined_call_operand.vmem [shape: bf16[4,256,256], index: 5, kind: input, shape index: {}]
  %s6 = inlined_call_operand.vmem [shape: f32[256,16], index: 6, kind: input, shape index: {}]
  %s7 = inlined_call_operand.hbm [shape: f32[16,256], index: 7, kind: input, shape index: {}]
  %s8 = inlined_call_operand.hbm [shape: f32[1,256], index: 8, kind: input, shape index: {}]
  %s9 = inlined_call_operand.hbm [shape: f32[1,256], index: 9, kind: input, shape index: {}]
  %s10 = inlined_call_operand.hbm [shape: bf16[4,16,32], index: 10, kind: input, shape index: {}]
  %s11 = inlined_call_operand.vmem [shape: bf16[4,256,256], index: 11, kind: input, shape index: {}]
  %s12 = inlined_call_operand.vmem [shape: f32[256,32], index: 12, kind: input, shape index: {}]
  %s13 = inlined_call_operand.hbm [shape: f32[32,256], index: 13, kind: input, shape index: {}]
  %s14 = inlined_call_operand.vmem [shape: f32[1,256], index: 14, kind: input, shape index: {}]
  %s15 = inlined_call_operand.vmem [shape: f32[1,256], index: 15, kind: input, shape index: {}]
  %s16 = inlined_call_operand.hbm [shape: bf16[4,8,16], index: 16, kind: input, shape index: {}]
  %s17 = inlined_call_operand.hbm [shape: bf16[4,256,256], index: 17, kind: input, shape index: {}]
  %s18 = inlined_call_operand.vmem [shape: f32[256,64], index: 18, kind: input, shape index: {}]
  %s19 = inlined_call_operand.hbm [shape: f32[64,256], index: 19, kind: input, shape index: {}]
  %s20 = inlined_call_operand.hbm [shape: f32[1,256], index: 20, kind: input, shape index: {}]
  %s21 = inlined_call_operand.hbm [shape: f32[1,256], index: 21, kind: input, shape index: {}]
  %s22 = inlined_call_operand.hbm [shape: bf16[4,2,8], index: 22, kind: input, shape index: {}]
  %s23 = inlined_call_operand.hbm [shape: bf16[4,256,128], index: 23, kind: input, shape index: {}]
  %s24 = inlined_call_operand.hbm [shape: f32[1,128], index: 24, kind: input, shape index: {}]
  %s25 = inlined_call_operand.vmem [shape: f32[2,128], index: 25, kind: output, shape index: {}]
  %s26 = sld [smem:[#allocation0]]
  $region170: #{fused_forward.1} parent=0
    _
  %s28 = ssub.s32 1, %s26
  %s29 = scalar_select 0, %s28, %s26
  $region1: #{fused_forward.1} parent=0
    #allocation2 [shape = 'u8[65536]{0}', space=vmem, size = 0x10000, scoped, tag = 'input window, operand 1, single buffered']
    #allocation3 [shape = 's32[1]{0}', space=sflag, size = 0x4, scoped, tag = 'scoped memory for fused_forward.1']
    #allocation4 [shape = 'u8[32768]{0}', space=vmem, size = 0x8000, scoped, tag = 'input window, operand 4, single buffered']
    #allocation5 [shape = 's32[1]{0}', space=sflag, size = 0x4, scoped, tag = 'scoped memory for fused_forward.1']
    #allocation6 [shape = 'u8[16384]{0}', space=vmem, size = 0x4000, scoped, tag = 'input window, operand 7, single buffered']
    #allocation7 [shape = 'u8[1024]{0}', space=vmem, size = 0x400, scoped, tag = 'input window, operand 8, single buffered']
    #allocation8 [shape = 's32[1]{0}', space=sflag, size = 0x4, scoped, tag = 'scoped memory for fused_forward.1']
    #allocation9 [shape = 'u8[1024]{0}', space=vmem, size = 0x400, scoped, tag = 'input window, operand 9, single buffered']
    #allocation10 [shape = 'u8[16384]{0}', space=vmem, size = 0x4000, scoped, tag = 'input window, operand 10, single buffered']
    #allocation11 [shape = 's32[1]{0}', space=sflag, size = 0x4, scoped, tag = 'scoped memory for fused_forward.1']
    #allocation12 [shape = 'u8[32768]{0}', space=vmem, size = 0x8000, scoped, tag = 'input window, operand 13, single buffered']
    #allocation13 [shape = 'u8[8192]{0}', space=vmem, size = 0x2000, scoped, tag = 'input window, operand 16, single buffered']
    #allocation14 [shape = 's32[1]{0}', space=sflag, size = 0x4, scoped, tag = 'scoped memory for fused_forward.1']
    #allocation15 [shape = 'u8[524288]{0}', space=vmem, size = 0x80000, scoped, tag = 'input window, operand 17, single buffered']
    #allocation16 [shape = 'u8[65536]{0}', space=vmem, size = 0x10000, scoped, tag = 'input window, operand 19, single buffered']
    #allocation17 [shape = 's32[1]{0}', space=sflag, size = 0x4, scoped, tag = 'scoped memory for fused_forward.1']
    #allocation18 [shape = 'u8[1024]{0}', space=vmem, size = 0x400, scoped, tag = 'input window, operand 20, single buffered']
    #allocation19 [shape = 'u8[1024]{0}', space=vmem, size = 0x400, scoped, tag = 'input window, operand 21, single buffered']
    #allocation20 [shape = 's32[1]{0}', space=sflag, size = 0x4, scoped, tag = 'scoped memory for fused_forward.1']
    #allocation21 [shape = 'u8[2048]{0}', space=vmem, size = 0x800, scoped, tag = 'input window, operand 22, single buffered']
    #allocation22 [shape = 'u8[262144]{0}', space=vmem, size = 0x40000, scoped, tag = 'input window, operand 23, single buffered']
    #allocation23 [shape = 's32[1]{0}', space=sflag, size = 0x4, scoped, tag = 'scoped memory for fused_forward.1']
    #allocation24 [shape = 'u8[512]{0}', space=vmem, size = 0x400, scoped, tag = 'input window, operand 24, single buffered']
    %30 = vsyncpa [#allocation3], 0
    %31 = vsyncpa [#allocation5], 0
    %32 = vsyncpa [#allocation8], 0
    %33 = vsyncpa [#allocation11], 0
    %34 = vsyncpa [#allocation14], 0
    %35 = vsyncpa [#allocation17], 0
    %36 = vsyncpa [#allocation20], 0
    %37 = vsyncpa [#allocation23], 0
    // Predicated region
    $region2: #{fused_forward.1} parent=1 // pred_check
      _
    $region3: #{fused_forward.1} parent=1 // pred_check_branch
      %39 = sbr.rel (0) target = $region5
    $region4: #{fused_forward.1} parent=1 // pred_region
      _
    $region5: #{fused_forward.1} parent=1 // pred_fallthru
      _
    // Predicated region
    $region6: #{fused_forward.1} parent=1 // pred_check
      _
    $region7: #{fused_forward.1} parent=1 // pred_check_branch
      %41 = sbr.rel (0) target = $region9
    $region8: #{fused_forward.1} parent=1 // pred_region
      %s43 = ssub.s32 2048, 2048
      %44 = vsyncadd [#allocation3], %s43
      %s45 = sshll.u32 [#allocation2], 4
      %s46 = int_to_ptr.vmem [resolvable:$true] %s45
      %51 = dma.hbm_to_vmem [thread:$0]  %s1, 2048, %s46, [#allocation3], 64, 64, 4
    $region9: #{fused_forward.1} parent=1 // pred_fallthru
      _
    // Predicated region
    $region10: #{fused_forward.1} parent=1 // pred_check
      _
    $region11: #{fused_forward.1} parent=1 // pred_check_branch
      %53 = sbr.rel (0) target = $region13
    $region12: #{fused_forward.1} parent=1 // pred_region
      _
    $region13: #{fused_forward.1} parent=1 // pred_fallthru
      _
    // Predicated region
    $region14: #{fused_forward.1} parent=1 // pred_check
      _
    $region15: #{fused_forward.1} parent=1 // pred_check_branch
      %55 = sbr.rel (0) target = $region17
    $region16: #{fused_forward.1} parent=1 // pred_region
      _
    $region17: #{fused_forward.1} parent=1 // pred_fallthru
      _
    // Predicated region
    $region18: #{fused_forward.1} parent=1 // pred_check
      _
    $region19: #{fused_forward.1} parent=1 // pred_check_branch
      %57 = sbr.rel (0) target = $region21
    $region20: #{fused_forward.1} parent=1 // pred_region
      %s59 = ssub.s32 1024, 1024
      %60 = vsyncadd [#allocation5], %s59
      %s61 = sshll.u32 [#allocation4], 4
      %s62 = int_to_ptr.vmem [resolvable:$true] %s61
      %67 = dma.hbm_to_vmem [thread:$0]  %s4, 1024, %s62, [#allocation5], 64, 64, 4
    $region21: #{fused_forward.1} parent=1 // pred_fallthru
      _
    // Predicated region
    $region22: #{fused_forward.1} parent=1 // pred_check
      _
    $region23: #{fused_forward.1} parent=1 // pred_check_branch
      %69 = sbr.rel (0) target = $region25
    $region24: #{fused_forward.1} parent=1 // pred_region
      _
    $region25: #{fused_forward.1} parent=1 // pred_fallthru
      _
    // Predicated region
    $region26: #{fused_forward.1} parent=1 // pred_check
      _
    $region27: #{fused_forward.1} parent=1 // pred_check_branch
      %71 = sbr.rel (0) target = $region29
    $region28: #{fused_forward.1} parent=1 // pred_region
      _
    $region29: #{fused_forward.1} parent=1 // pred_fallthru
      _
    // Predicated region
    $region30: #{fused_forward.1} parent=1 // pred_check
      _
    $region31: #{fused_forward.1} parent=1 // pred_check_branch
      %73 = sbr.rel (0) target = $region33
    $region32: #{fused_forward.1} parent=1 // pred_region
      %s75 = ssub.s32 512, 512
      %76 = vsyncadd [#allocation5], %s75
      %s77 = sshll.u32 [#allocation6], 4
      %s78 = int_to_ptr.vmem [resolvable:$true] %s77
      %83 = dma.hbm_to_vmem [thread:$0]  %s7, 512, %s78, [#allocation5], 256, 256, 16
    $region33: #{fused_forward.1} parent=1 // pred_fallthru
      _
    // Predicated region
    $region34: #{fused_forward.1} parent=1 // pred_check
      _
    $region35: #{fused_forward.1} parent=1 // pred_check_branch
      %85 = sbr.rel (0) target = $region37
    $region36: #{fused_forward.1} parent=1 // pred_region
      %s87 = ssub.s32 32, 32
      %88 = vsyncadd [#allocation8], %s87
      %s90 = sshll.u32 [#allocation7], 4
      %s91 = int_to_ptr.vmem [resolvable:$true] %s90
      %93 = dma.hbm_to_vmem [thread:$0]  %s8, 32, %s91, [#allocation8]
    $region37: #{fused_forward.1} parent=1 // pred_fallthru
      _
    // Predicated region
    $region38: #{fused_forward.1} parent=1 // pred_check
      _
    $region39: #{fused_forward.1} parent=1 // pred_check_branch
      %95 = sbr.rel (0) target = $region41
    $region40: #{fused_forward.1} parent=1 // pred_region
      %s97 = ssub.s32 32, 32
      %98 = vsyncadd [#allocation8], %s97
      %s100 = sshll.u32 [#allocation9], 4
      %s101 = int_to_ptr.vmem [resolvable:$true] %s100
      %103 = dma.hbm_to_vmem [thread:$0]  %s9, 32, %s101, [#allocation8]
    $region41: #{fused_forward.1} parent=1 // pred_fallthru
      _
    // Predicated region
    $region42: #{fused_forward.1} parent=1 // pred_check
      _
    $region43: #{fused_forward.1} parent=1 // pred_check_branch
      %105 = sbr.rel (0) target = $region45
    $region44: #{fused_forward.1} parent=1 // pred_region
      %s107 = ssub.s32 512, 512
      %108 = vsyncadd [#allocation11], %s107
      %s109 = sshll.u32 [#allocation10], 4
      %s110 = int_to_ptr.vmem [resolvable:$true] %s109
      %115 = dma.hbm_to_vmem [thread:$0]  %s10, 512, %s110, [#allocation11], 64, 64, 4
    $region45: #{fused_forward.1} parent=1 // pred_fallthru
      _
    // Predicated region
    $region46: #{fused_forward.1} parent=1 // pred_check
      _
    $region47: #{fused_forward.1} parent=1 // pred_check_branch
      %117 = sbr.rel (0) target = $region49
    $region48: #{fused_forward.1} parent=1 // pred_region
      _
    $region49: #{fused_forward.1} parent=1 // pred_fallthru
      _
    // Predicated region
    $region50: #{fused_forward.1} parent=1 // pred_check
      _
    $region51: #{fused_forward.1} parent=1 // pred_check_branch
      %119 = sbr.rel (0) target = $region53
    $region52: #{fused_forward.1} parent=1 // pred_region
      _
    $region53: #{fused_forward.1} parent=1 // pred_fallthru
      _
    // Predicated region
    $region54: #{fused_forward.1} parent=1 // pred_check
      _
    $region55: #{fused_forward.1} parent=1 // pred_check_branch
      %121 = sbr.rel (0) target = $region57
    $region56: #{fused_forward.1} parent=1 // pred_region
      %s123 = ssub.s32 1024, 1024
      %124 = vsyncadd [#allocation11], %s123
      %s125 = sshll.u32 [#allocation12], 4
      %s126 = int_to_ptr.vmem [resolvable:$true] %s125
      %131 = dma.hbm_to_vmem [thread:$0]  %s13, 1024, %s126, [#allocation11], 256, 256, 16
    $region57: #{fused_forward.1} parent=1 // pred_fallthru
      _
    // Predicated region
    $region58: #{fused_forward.1} parent=1 // pred_check
      _
    $region59: #{fused_forward.1} parent=1 // pred_check_branch
      %133 = sbr.rel (0) target = $region61
    $region60: #{fused_forward.1} parent=1 // pred_region
      _
    $region61: #{fused_forward.1} parent=1 // pred_fallthru
      _
    // Predicated region
    $region62: #{fused_forward.1} parent=1 // pred_check
      _
    $region63: #{fused_forward.1} parent=1 // pred_check_branch
      %135 = sbr.rel (0) target = $region65
    $region64: #{fused_forward.1} parent=1 // pred_region
      _
    $region65: #{fused_forward.1} parent=1 // pred_fallthru
      _
    // Predicated region
    $region66: #{fused_forward.1} parent=1 // pred_check
      _
    $region67: #{fused_forward.1} parent=1 // pred_check_branch
      %137 = sbr.rel (0) target = $region69
    $region68: #{fused_forward.1} parent=1 // pred_region
      %s139 = ssub.s32 256, 256
      %140 = vsyncadd [#allocation14], %s139
      %s141 = sshll.u32 [#allocation13], 4
      %s142 = int_to_ptr.vmem [resolvable:$true] %s141
      %147 = dma.hbm_to_vmem [thread:$0]  %s16, 256, %s142, [#allocation14], 64, 64, 4
    $region69: #{fused_forward.1} parent=1 // pred_fallthru
      _
    // Predicated region
    $region70: #{fused_forward.1} parent=1 // pred_check
      _
    $region71: #{fused_forward.1} parent=1 // pred_check_branch
      %149 = sbr.rel (0) target = $region73
    $region72: #{fused_forward.1} parent=1 // pred_region
      %s151 = ssub.s32 16384, 16384
      %152 = vsyncadd [#allocation14], %s151
      %s153 = sshll.u32 [#allocation15], 4
      %s154 = int_to_ptr.vmem [resolvable:$true] %s153
      %159 = dma.hbm_to_vmem [thread:$0]  %s17, 16384, %s154, [#allocation14], 128, 128, 8
    $region73: #{fused_forward.1} parent=1 // pred_fallthru
      _
    // Predicated region
    $region74: #{fused_forward.1} parent=1 // pred_check
      _
    $region75: #{fused_forward.1} parent=1 // pred_check_branch
      %161 = sbr.rel (0) target = $region77
    $region76: #{fused_forward.1} parent=1 // pred_region
      _
    $region77: #{fused_forward.1} parent=1 // pred_fallthru
      _
    // Predicated region
    $region78: #{fused_forward.1} parent=1 // pred_check
      _
    $region79: #{fused_forward.1} parent=1 // pred_check_branch
      %163 = sbr.rel (0) target = $region81
    $region80: #{fused_forward.1} parent=1 // pred_region
      %s165 = ssub.s32 2048, 2048
      %166 = vsyncadd [#allocation17], %s165
      %s167 = sshll.u32 [#allocation16], 4
      %s168 = int_to_ptr.vmem [resolvable:$true] %s167
      %173 = dma.hbm_to_vmem [thread:$0]  %s19, 2048, %s168, [#allocation17], 256, 256, 16
    $region81: #{fused_forward.1} parent=1 // pred_fallthru
      _
    // Predicated region
    $region82: #{fused_forward.1} parent=1 // pred_check
      _
    $region83: #{fused_forward.1} parent=1 // pred_check_branch
      %175 = sbr.rel (0) target = $region85
    $region84: #{fused_forward.1} parent=1 // pred_region
      %s177 = ssub.s32 32, 32
      %178 = vsyncadd [#allocation17], %s177
      %s180 = sshll.u32 [#allocation18], 4
      %s181 = int_to_ptr.vmem [resolvable:$true] %s180
      %183 = dma.hbm_to_vmem [thread:$0]  %s20, 32, %s181, [#allocation17]
    $region85: #{fused_forward.1} parent=1 // pred_fallthru
      _
    // Predicated region
    $region86: #{fused_forward.1} parent=1 // pred_check
      _
    $region87: #{fused_forward.1} parent=1 // pred_check_branch
      %185 = sbr.rel (0) target = $region89
    $region88: #{fused_forward.1} parent=1 // pred_region
      %s187 = ssub.s32 32, 32
      %188 = vsyncadd [#allocation20], %s187
      %s190 = sshll.u32 [#allocation19], 4
      %s191 = int_to_ptr.vmem [resolvable:$true] %s190
      %193 = dma.hbm_to_vmem [thread:$0]  %s21, 32, %s191, [#allocation20]
    $region89: #{fused_forward.1} parent=1 // pred_fallthru
      _
    // Predicated region
    $region90: #{fused_forward.1} parent=1 // pred_check
      _
    $region91: #{fused_forward.1} parent=1 // pred_check_branch
      %195 = sbr.rel (0) target = $region93
    $region92: #{fused_forward.1} parent=1 // pred_region
      %s197 = ssub.s32 64, 64
      %198 = vsyncadd [#allocation20], %s197
      %s199 = sshll.u32 [#allocation21], 4
      %s200 = int_to_ptr.vmem [resolvable:$true] %s199
      %205 = dma.hbm_to_vmem [thread:$0]  %s22, 64, %s200, [#allocation20], 16, 16, 1
    $region93: #{fused_forward.1} parent=1 // pred_fallthru
      _
    // Predicated region
    $region94: #{fused_forward.1} parent=1 // pred_check
      _
    $region95: #{fused_forward.1} parent=1 // pred_check_branch
      %207 = sbr.rel (0) target = $region97
    $region96: #{fused_forward.1} parent=1 // pred_region
      %s209 = ssub.s32 8192, 8192
      %210 = vsyncadd [#allocation23], %s209
      %s211 = sshll.u32 [#allocation22], 4
      %s212 = int_to_ptr.vmem [resolvable:$true] %s211
      %217 = dma.hbm_to_vmem [thread:$0]  %s23, 8192, %s212, [#allocation23], 64, 64, 4
    $region97: #{fused_forward.1} parent=1 // pred_fallthru
      _
    // Predicated region
    $region98: #{fused_forward.1} parent=1 // pred_check
      _
    $region99: #{fused_forward.1} parent=1 // pred_check_branch
      %219 = sbr.rel (0) target = $region101
    $region100: #{fused_forward.1} parent=1 // pred_region
      %s221 = ssub.s32 16, 16
      %222 = vsyncadd [#allocation23], %s221
      %s224 = sshll.u32 [#allocation24], 4
      %s225 = int_to_ptr.vmem [resolvable:$true] %s224
      %227 = dma.hbm_to_vmem [thread:$0]  %s24, 16, %s225, [#allocation23]
    $region101: #{fused_forward.1} parent=1 // pred_fallthru
      _
    // Predicated region
    $region102: #{fused_forward.1} parent=1 // pred_check
      _
    $region103: #{fused_forward.1} parent=1 // pred_check_branch
      %229 = sbr.rel (0) target = $region105
    $region104: #{fused_forward.1} parent=1 // pred_region
      %230 = dma.done [#allocation3], 2048
    $region105: #{fused_forward.1} parent=1 // pred_fallthru
      _
    // Predicated region
    $region106: #{fused_forward.1} parent=1 // pred_check
      _
    $region107: #{fused_forward.1} parent=1 // pred_check_branch
      %232 = sbr.rel (0) target = $region109
    $region108: #{fused_forward.1} parent=1 // pred_region
      %233 = dma.done [#allocation5], 1024
    $region109: #{fused_forward.1} parent=1 // pred_fallthru
      _
    // Predicated region
    $region110: #{fused_forward.1} parent=1 // pred_check
      _
    $region111: #{fused_forward.1} parent=1 // pred_check_branch
      %235 = sbr.rel (0) target = $region113
    $region112: #{fused_forward.1} parent=1 // pred_region
      %236 = dma.done [#allocation5], 512
    $region113: #{fused_forward.1} parent=1 // pred_fallthru
      _
    // Predicated region
    $region114: #{fused_forward.1} parent=1 // pred_check
      _
    $region115: #{fused_forward.1} parent=1 // pred_check_branch
      %238 = sbr.rel (0) target = $region117
    $region116: #{fused_forward.1} parent=1 // pred_region
      %239 = dma.done [#allocation8], 32
    $region117: #{fused_forward.1} parent=1 // pred_fallthru
      _
    // Predicated region
    $region118: #{fused_forward.1} parent=1 // pred_check
      _
    $region119: #{fused_forward.1} parent=1 // pred_check_branch
      %241 = sbr.rel (0) target = $region121
    $region120: #{fused_forward.1} parent=1 // pred_region
      %242 = dma.done [#allocation8], 32
    $region121: #{fused_forward.1} parent=1 // pred_fallthru
      _
    // Predicated region
    $region122: #{fused_forward.1} parent=1 // pred_check
      _
    $region123: #{fused_forward.1} parent=1 // pred_check_branch
      %244 = sbr.rel (0) target = $region125
    $region124: #{fused_forward.1} parent=1 // pred_region
      %245 = dma.done [#allocation11], 512
    $region125: #{fused_forward.1} parent=1 // pred_fallthru
      _
    // Predicated region
    $region126: #{fused_forward.1} parent=1 // pred_check
      _
    $region127: #{fused_forward.1} parent=1 // pred_check_branch
      %247 = sbr.rel (0) target = $region129
    $region128: #{fused_forward.1} parent=1 // pred_region
      %248 = dma.done [#allocation11], 1024
    $region129: #{fused_forward.1} parent=1 // pred_fallthru
      _
    // Predicated region
    $region130: #{fused_forward.1} parent=1 // pred_check
      _
    $region131: #{fused_forward.1} parent=1 // pred_check_branch
      %250 = sbr.rel (0) target = $region133
    $region132: #{fused_forward.1} parent=1 // pred_region
      %251 = dma.done [#allocation14], 256
    $region133: #{fused_forward.1} parent=1 // pred_fallthru
      _
    // Predicated region
    $region134: #{fused_forward.1} parent=1 // pred_check
      _
    $region135: #{fused_forward.1} parent=1 // pred_check_branch
      %253 = sbr.rel (0) target = $region137
    $region136: #{fused_forward.1} parent=1 // pred_region
      %254 = dma.done [#allocation14], 16384
    $region137: #{fused_forward.1} parent=1 // pred_fallthru
      _
    // Predicated region
    $region138: #{fused_forward.1} parent=1 // pred_check
      _
    $region139: #{fused_forward.1} parent=1 // pred_check_branch
      %256 = sbr.rel (0) target = $region141
    $region140: #{fused_forward.1} parent=1 // pred_region
      %257 = dma.done [#allocation17], 2048
    $region141: #{fused_forward.1} parent=1 // pred_fallthru
      _
    // Predicated region
    $region142: #{fused_forward.1} parent=1 // pred_check
      _
    $region143: #{fused_forward.1} parent=1 // pred_check_branch
      %259 = sbr.rel (0) target = $region145
    $region144: #{fused_forward.1} parent=1 // pred_region
      %260 = dma.done [#allocation17], 32
    $region145: #{fused_forward.1} parent=1 // pred_fallthru
      _
    // Predicated region
    $region146: #{fused_forward.1} parent=1 // pred_check
      _
    $region147: #{fused_forward.1} parent=1 // pred_check_branch
      %262 = sbr.rel (0) target = $region149
    $region148: #{fused_forward.1} parent=1 // pred_region
      %263 = dma.done [#allocation20], 32
    $region149: #{fused_forward.1} parent=1 // pred_fallthru
      _
    // Predicated region
    $region150: #{fused_forward.1} parent=1 // pred_check
      _
    $region151: #{fused_forward.1} parent=1 // pred_check_branch
      %265 = sbr.rel (0) target = $region153
    $region152: #{fused_forward.1} parent=1 // pred_region
      %266 = dma.done [#allocation20], 64
    $region153: #{fused_forward.1} parent=1 // pred_fallthru
      _
    // Predicated region
    $region154: #{fused_forward.1} parent=1 // pred_check
      _
    $region155: #{fused_forward.1} parent=1 // pred_check_branch
      %268 = sbr.rel (0) target = $region157
    $region156: #{fused_forward.1} parent=1 // pred_region
      %269 = dma.done [#allocation23], 8192
    $region157: #{fused_forward.1} parent=1 // pred_fallthru
      _
    // Predicated region
    $region158: #{fused_forward.1} parent=1 // pred_check
      _
    $region159: #{fused_forward.1} parent=1 // pred_check_branch
      %271 = sbr.rel (0) target = $region161
    $region160: #{fused_forward.1} parent=1 // pred_region
      %272 = dma.done [#allocation23], 16
    $region161: #{fused_forward.1} parent=1 // pred_fallthru
      _
    %v274 = vld [vmem:[%s0] sm:$0xff]
    %v275 = vld [vmem:[%s0 + $0x8] sm:$0xff]
    %v276 = vld [vmem:[%s0 + $0x10] sm:$0xff]
    %v277 = vld [vmem:[%s0 + $0x18] sm:$0xff]
    %v278 = vld [vmem:[%s0 + $0x20] sm:$0xff]
    %v279 = vld [vmem:[%s0 + $0x28] sm:$0xff]
    %v280 = vld [vmem:[%s0 + $0x30] sm:$0xff]
    %v281 = vld [vmem:[%s0 + $0x38] sm:$0xff]
    %v282 = vld [vmem:[%s0 + $0x40] sm:$0xff]
    %v283 = vld [vmem:[%s0 + $0x48] sm:$0xff]
    %v284 = vld [vmem:[%s0 + $0x50] sm:$0xff]
    %v285 = vld [vmem:[%s0 + $0x58] sm:$0xff]
    %v286 = vld [vmem:[%s0 + $0x60] sm:$0xff]
    %v287 = vld [vmem:[%s0 + $0x68] sm:$0xff]
    %v288 = vld [vmem:[%s0 + $0x70] sm:$0xff]
    %v289 = vld [vmem:[%s0 + $0x78] sm:$0xff]
    %v290 = vld [vmem:[%s0 + $0x80] sm:$0xff]
    %v291 = vld [vmem:[%s0 + $0x88] sm:$0xff]
    %v292 = vld [vmem:[%s0 + $0x90] sm:$0xff]
    %v293 = vld [vmem:[%s0 + $0x98] sm:$0xff]
    %v294 = vld [vmem:[%s0 + $0xa0] sm:$0xff]
    %v295 = vld [vmem:[%s0 + $0xa8] sm:$0xff]
    %v296 = vld [vmem:[%s0 + $0xb0] sm:$0xff]
    %v297 = vld [vmem:[%s0 + $0xb8] sm:$0xff]
    %v298 = vld [vmem:[%s0 + $0xc0] sm:$0xff]
    %v299 = vld [vmem:[%s0 + $0xc8] sm:$0xff]
    %v300 = vld [vmem:[%s0 + $0xd0] sm:$0xff]
    %v301 = vld [vmem:[%s0 + $0xd8] sm:$0xff]
    %v302 = vld [vmem:[%s0 + $0xe0] sm:$0xff]
    %v303 = vld [vmem:[%s0 + $0xe8] sm:$0xff]
    %v304 = vld [vmem:[%s0 + $0xf0] sm:$0xff]
    %v305 = vld [vmem:[%s0 + $0xf8] sm:$0xff]
    %v306 = vpack.c.bf16 %v276, %v274
    %v307 = vpack.c.bf16 %v277, %v275
    %v308 = vpack.c.bf16 %v280, %v278
    %v309 = vpack.c.bf16 %v281, %v279
    %v310 = vpack.c.bf16 %v284, %v282
    %v311 = vpack.c.bf16 %v285, %v283
    %v312 = vpack.c.bf16 %v288, %v286
    %v313 = vpack.c.bf16 %v289, %v287
    %v314 = vpack.c.bf16 %v292, %v290
    %v315 = vpack.c.bf16 %v293, %v291
    %v316 = vpack.c.bf16 %v296, %v294
    %v317 = vpack.c.bf16 %v297, %v295
    %v318 = vpack.c.bf16 %v300, %v298
    %v319 = vpack.c.bf16 %v301, %v299
    %v320 = vpack.c.bf16 %v304, %v302
    %v321 = vpack.c.bf16 %v305, %v303
    %v322 = vld [vmem:[#allocation2] sm:$0xf]
    %v323 = vld [vmem:[#allocation2 + $0x4] sm:$0xf]
    %v324 = vld [vmem:[#allocation2 + $0x8] sm:$0xf]
    %v325 = vld [vmem:[#allocation2 + $0xc] sm:$0xf]
    %v326 = vld [vmem:[#allocation2 + $0x10] sm:$0xf]
    %v327 = vld [vmem:[#allocation2 + $0x14] sm:$0xf]
    %v328 = vld [vmem:[#allocation2 + $0x18] sm:$0xf]
    %v329 = vld [vmem:[#allocation2 + $0x1c] sm:$0xf]
    %v338 = vunpack.c.l.b16 %v322
    %v339 = vunpack.c.l.b16 %v323
    %v340 = vunpack.c.l.b16 %v324
    %v341 = vunpack.c.l.b16 %v325
    %v342 = vunpack.c.l.b16 %v326
    %v343 = vunpack.c.l.b16 %v327
    %v344 = vunpack.c.l.b16 %v328
    %v345 = vunpack.c.l.b16 %v329
    %v346 = vpack.c.b16 %v339, %v338
    %v347 = vpack.c.b16 %v341, %v340
    %v348 = vpack.c.b16 %v343, %v342
    %v349 = vpack.c.b16 %v345, %v344
    %354 = vmatprep.subr.bf16.mxu0 %v307
    %355 = vmatpush1.bf16.msra.mxu0 %v306
    %356 = vmatprep.subr.bf16.mxu0 %v309
    %357 = vmatpush1.bf16.msra.mxu0 %v308
    %358 = vmatprep.subr.bf16.mxu0 %v311
    %359 = vmatpush1.bf16.msra.mxu0 %v310
    %360 = vmatprep.subr.bf16.mxu0 %v313
    %361 = vmatpush1.bf16.msra.mxu0 %v312
    %362 = vmatprep.subr.bf16.mxu0 %v315
    %363 = vmatpush1.bf16.msra.mxu0 %v314
    %364 = vmatprep.subr.bf16.mxu0 %v317
    %365 = vmatpush1.bf16.msra.mxu0 %v316
    %366 = vmatprep.subr.bf16.mxu0 %v319
    %367 = vmatpush1.bf16.msra.mxu0 %v318
    %368 = vmatprep.subr.bf16.mxu0 %v321
    %369 = vmatpush1.bf16.msra.mxu0 %v320
    %370 = vmatprep.subr.bf16.mxu0 0
    %371 = vmatpush1.bf16.msra.mxu0 0
    %372 = vmatprep.subr.bf16.mxu0 0
    %373 = vmatpush1.bf16.msra.mxu0 0
    %374 = vmatprep.subr.bf16.mxu0 0
    %375 = vmatpush1.bf16.msra.mxu0 0
    %376 = vmatprep.subr.bf16.mxu0 0
    %377 = vmatpush1.bf16.msra.mxu0 0
    %378 = vmatprep.subr.bf16.mxu0 0
    %379 = vmatpush1.bf16.msra.mxu0 0
    %380 = vmatprep.subr.bf16.mxu0 0
    %381 = vmatpush1.bf16.msra.mxu0 0
    %382 = vmatprep.subr.bf16.mxu0 0
    %383 = vmatpush1.bf16.msra.mxu0 0
    %384 = vmatprep.subr.bf16.mxu0 0
    %385 = vmatpush1.bf16.msra.mxu0 0
    %386 = vmatprep.mubr.bf16.mxu0 0
    %387 = vmatmul.mubr.bf16.gmra.mrb[0].mxu0 %v346
    %v388 = vpop.f32.mrb[0].mxu0
    %v389 = vadd.f32 0.0, %v388
    %v390 = vpop.f32.mrb[0].mxu0
    %v391 = vadd.f32 0.0, %v390
    %v392 = vpop.f32.mrb[0].mxu0
    %v393 = vadd.f32 0.0, %v392
    %v394 = vpop.f32.mrb[0].mxu0
    %v395 = vadd.f32 0.0, %v394
    %396 = vmatprep.mubr.bf16.mxu0 0
    %397 = vmatmul.mubr.bf16.gmra.mrb[0].mxu0 %v347
    %v398 = vpop.f32.mrb[0].mxu0
    %v399 = vadd.f32 0.0, %v398
    %v400 = vpop.f32.mrb[0].mxu0
    %v401 = vadd.f32 0.0, %v400
    %v402 = vpop.f32.mrb[0].mxu0
    %v403 = vadd.f32 0.0, %v402
    %v404 = vpop.f32.mrb[0].mxu0
    %v405 = vadd.f32 0.0, %v404
    %406 = vmatprep.mubr.bf16.mxu0 0
    %407 = vmatmul.mubr.bf16.gmra.mrb[0].mxu0 %v348
    %v408 = vpop.f32.mrb[0].mxu0
    %v409 = vadd.f32 0.0, %v408
    %v410 = vpop.f32.mrb[0].mxu0
    %v411 = vadd.f32 0.0, %v410
    %v412 = vpop.f32.mrb[0].mxu0
    %v413 = vadd.f32 0.0, %v412
    %v414 = vpop.f32.mrb[0].mxu0
    %v415 = vadd.f32 0.0, %v414
    %416 = vmatprep.mubr.bf16.mxu0 0
    %417 = vmatmul.mubr.bf16.gmra.mrb[0].mxu0 %v349
    %v418 = vpop.f32.mrb[0].mxu0
    %v419 = vadd.f32 0.0, %v418
    %v420 = vpop.f32.mrb[0].mxu0
    %v421 = vadd.f32 0.0, %v420
    %v422 = vpop.f32.mrb[0].mxu0
    %v423 = vadd.f32 0.0, %v422
    %v424 = vpop.f32.mrb[0].mxu0
    %v425 = vadd.f32 0.0, %v424
    %426 = vdwg.mxu0
    %v427 = vpack.c.bf16 %v393, %v389
    %v428 = vpack.c.bf16 %v395, %v391
    %v429 = vpack.c.bf16 %v403, %v399
    %v430 = vpack.c.bf16 %v405, %v401
    %v431 = vpack.c.bf16 %v413, %v409
    %v432 = vpack.c.bf16 %v415, %v411
    %v433 = vpack.c.bf16 %v423, %v419
    %v434 = vpack.c.bf16 %v425, %v421
    %v435 = vld [vmem:[%s2] sm:$0xff]
    %v436 = vld [vmem:[%s2 + $0x8] sm:$0xff]
    %v437 = vld [vmem:[%s2 + $0x10] sm:$0xff]
    %v438 = vld [vmem:[%s2 + $0x18] sm:$0xff]
    %v439 = vld [vmem:[%s2 + $0x20] sm:$0xff]
    %v440 = vld [vmem:[%s2 + $0x28] sm:$0xff]
    %v441 = vld [vmem:[%s2 + $0x30] sm:$0xff]
    %v442 = vld [vmem:[%s2 + $0x38] sm:$0xff]
    %v443 = vld [vmem:[%s2 + $0x40] sm:$0xff]
    %v444 = vld [vmem:[%s2 + $0x48] sm:$0xff]
    %v445 = vld [vmem:[%s2 + $0x50] sm:$0xff]
    %v446 = vld [vmem:[%s2 + $0x58] sm:$0xff]
    %v447 = vld [vmem:[%s2 + $0x60] sm:$0xff]
    %v448 = vld [vmem:[%s2 + $0x68] sm:$0xff]
    %v449 = vld [vmem:[%s2 + $0x70] sm:$0xff]
    %v450 = vld [vmem:[%s2 + $0x78] sm:$0xff]
    %v451 = vld [vmem:[%s2 + $0x80] sm:$0xff]
    %v452 = vld [vmem:[%s2 + $0x88] sm:$0xff]
    %v453 = vld [vmem:[%s2 + $0x90] sm:$0xff]
    %v454 = vld [vmem:[%s2 + $0x98] sm:$0xff]
    %v455 = vld [vmem:[%s2 + $0xa0] sm:$0xff]
    %v456 = vld [vmem:[%s2 + $0xa8] sm:$0xff]
    %v457 = vld [vmem:[%s2 + $0xb0] sm:$0xff]
    %v458 = vld [vmem:[%s2 + $0xb8] sm:$0xff]
    %s459 = scalar_lea.vmem [#allocation2], 32
    %v460 = vld [vmem:[%s459] sm:$0xf]
    %v461 = vld [vmem:[%s459 + $0x4] sm:$0xf]
    %v462 = vld [vmem:[%s459 + $0x8] sm:$0xf]
    %v463 = vld [vmem:[%s459 + $0xc] sm:$0xf]
    %v464 = vld [vmem:[%s459 + $0x10] sm:$0xf]
    %v465 = vld [vmem:[%s459 + $0x14] sm:$0xf]
    %v466 = vld [vmem:[%s459 + $0x18] sm:$0xf]
    %v467 = vld [vmem:[%s459 + $0x1c] sm:$0xf]
    %v476 = vunpack.c.l.b16 %v460
    %v477 = vunpack.c.l.b16 %v461
    %v478 = vunpack.c.l.b16 %v462
    %v479 = vunpack.c.l.b16 %v463
    %v480 = vunpack.c.l.b16 %v464
    %v481 = vunpack.c.l.b16 %v465
    %v482 = vunpack.c.l.b16 %v466
    %v483 = vunpack.c.l.b16 %v467
    %v484 = vpack.c.b16 %v477, %v476
    %v485 = vpack.c.b16 %v479, %v478
    %v486 = vpack.c.b16 %v481, %v480
    %v487 = vpack.c.b16 %v483, %v482
    %492 = vmatprep.subr.bf16.mxu0 %v307
    %493 = vmatpush1.bf16.msra.mxu0 %v306
    %494 = vmatprep.subr.bf16.mxu0 %v309
    %495 = vmatpush1.bf16.msra.mxu0 %v308
    %496 = vmatprep.subr.bf16.mxu0 %v311
    %497 = vmatpush1.bf16.msra.mxu0 %v310
    %498 = vmatprep.subr.bf16.mxu0 %v313
    %499 = vmatpush1.bf16.msra.mxu0 %v312
    %500 = vmatprep.subr.bf16.mxu0 %v315
    %501 = vmatpush1.bf16.msra.mxu0 %v314
    %502 = vmatprep.subr.bf16.mxu0 %v317
    %503 = vmatpush1.bf16.msra.mxu0 %v316
    %504 = vmatprep.subr.bf16.mxu0 %v319
    %505 = vmatpush1.bf16.msra.mxu0 %v318
    %506 = vmatprep.subr.bf16.mxu0 %v321
    %507 = vmatpush1.bf16.msra.mxu0 %v320
    %508 = vmatprep.subr.bf16.mxu0 0
    %509 = vmatpush1.bf16.msra.mxu0 0
    %510 = vmatprep.subr.bf16.mxu0 0
    %511 = vmatpush1.bf16.msra.mxu0 0
    %512 = vmatprep.subr.bf16.mxu0 0
    %513 = vmatpush1.bf16.msra.mxu0 0
    %514 = vmatprep.subr.bf16.mxu0 0
    %515 = vmatpush1.bf16.msra.mxu0 0
    %516 = vmatprep.subr.bf16.mxu0 0
    %517 = vmatpush1.bf16.msra.mxu0 0
    %518 = vmatprep.subr.bf16.mxu0 0
    %519 = vmatpush1.bf16.msra.mxu0 0
    %520 = vmatprep.subr.bf16.mxu0 0
    %521 = vmatpush1.bf16.msra.mxu0 0
    %522 = vmatprep.subr.bf16.mxu0 0
    %523 = vmatpush1.bf16.msra.mxu0 0
    %524 = vmatprep.mubr.bf16.mxu0 0
    %525 = vmatmul.mubr.bf16.gmra.mrb[0].mxu0 %v484
    %v526 = vpop.f32.mrb[0].mxu0
    %v527 = vadd.f32 0.0, %v526
    %v528 = vpop.f32.mrb[0].mxu0
    %v529 = vadd.f32 0.0, %v528
    %v530 = vpop.f32.mrb[0].mxu0
    %v531 = vadd.f32 0.0, %v530
    %v532 = vpop.f32.mrb[0].mxu0
    %v533 = vadd.f32 0.0, %v532
    %534 = vmatprep.mubr.bf16.mxu0 0
    %535 = vmatmul.mubr.bf16.gmra.mrb[0].mxu0 %v485
    %v536 = vpop.f32.mrb[0].mxu0
    %v537 = vadd.f32 0.0, %v536
    %v538 = vpop.f32.mrb[0].mxu0
    %v539 = vadd.f32 0.0, %v538
    %v540 = vpop.f32.mrb[0].mxu0
    %v541 = vadd.f32 0.0, %v540
    %v542 = vpop.f32.mrb[0].mxu0
    %v543 = vadd.f32 0.0, %v542
    %544 = vmatprep.mubr.bf16.mxu0 0
    %545 = vmatmul.mubr.bf16.gmra.mrb[0].mxu0 %v486
    %v546 = vpop.f32.mrb[0].mxu0
    %v547 = vadd.f32 0.0, %v546
    %v548 = vpop.f32.mrb[0].mxu0
    %v549 = vadd.f32 0.0, %v548
    %v550 = vpop.f32.mrb[0].mxu0
    %v551 = vadd.f32 0.0, %v550
    %v552 = vpop.f32.mrb[0].mxu0
    %v553 = vadd.f32 0.0, %v552
    %554 = vmatprep.mubr.bf16.mxu0 0
    %555 = vmatmul.mubr.bf16.gmra.mrb[0].mxu0 %v487
    %v556 = vpop.f32.mrb[0].mxu0
    %v557 = vadd.f32 0.0, %v556
    %v558 = vpop.f32.mrb[0].mxu0
    %v559 = vadd.f32 0.0, %v558
    %v560 = vpop.f32.mrb[0].mxu0
    %v561 = vadd.f32 0.0, %v560
    %v562 = vpop.f32.mrb[0].mxu0
    %v563 = vadd.f32 0.0, %v562
    %564 = vdwg.mxu0
    %v565 = vpack.c.bf16 %v531, %v527
    %v566 = vpack.c.bf16 %v533, %v529
    %v567 = vpack.c.bf16 %v541, %v537
    %v568 = vpack.c.bf16 %v543, %v539
    %v569 = vpack.c.bf16 %v551, %v547
    %v570 = vpack.c.bf16 %v553, %v549
    %v571 = vpack.c.bf16 %v561, %v557
    %v572 = vpack.c.bf16 %v563, %v559
    %s573 = scalar_lea.vmem %s2, 192
    %v574 = vld [vmem:[%s573] sm:$0xff]
    %v575 = vld [vmem:[%s573 + $0x8] sm:$0xff]
    %v576 = vld [vmem:[%s573 + $0x10] sm:$0xff]
    %v577 = vld [vmem:[%s573 + $0x18] sm:$0xff]
    %v578 = vld [vmem:[%s573 + $0x20] sm:$0xff]
    %v579 = vld [vmem:[%s573 + $0x28] sm:$0xff]
    %v580 = vld [vmem:[%s573 + $0x30] sm:$0xff]
    %v581 = vld [vmem:[%s573 + $0x38] sm:$0xff]
    %v582 = vld [vmem:[%s573 + $0x40] sm:$0xff]
    %v583 = vld [vmem:[%s573 + $0x48] sm:$0xff]
    %v584 = vld [vmem:[%s573 + $0x50] sm:$0xff]
    %v585 = vld [vmem:[%s573 + $0x58] sm:$0xff]
    %v586 = vld [vmem:[%s573 + $0x60] sm:$0xff]
    %v587 = vld [vmem:[%s573 + $0x68] sm:$0xff]
    %v588 = vld [vmem:[%s573 + $0x70] sm:$0xff]
    %v589 = vld [vmem:[%s573 + $0x78] sm:$0xff]
    %v590 = vld [vmem:[%s573 + $0x80] sm:$0xff]
    %v591 = vld [vmem:[%s573 + $0x88] sm:$0xff]
    %v592 = vld [vmem:[%s573 + $0x90] sm:$0xff]
    %v593 = vld [vmem:[%s573 + $0x98] sm:$0xff]
    %v594 = vld [vmem:[%s573 + $0xa0] sm:$0xff]
    %v595 = vld [vmem:[%s573 + $0xa8] sm:$0xff]
    %v596 = vld [vmem:[%s573 + $0xb0] sm:$0xff]
    %v597 = vld [vmem:[%s573 + $0xb8] sm:$0xff]
    %v622 = vunpack.c.l.b16 %v574
    %v623 = vunpack.c.h.b16 %v574
    %v624 = vunpack.c.l.b16 %v575
    %v625 = vunpack.c.h.b16 %v575
    %v626 = vunpack.c.l.b16 %v576
    %v627 = vunpack.c.h.b16 %v576
    %v628 = vunpack.c.l.b16 %v577
    %v629 = vunpack.c.h.b16 %v577
    %v630 = vunpack.c.l.b16 %v578
    %v631 = vunpack.c.h.b16 %v578
    %v632 = vunpack.c.l.b16 %v579
    %v633 = vunpack.c.h.b16 %v579
    %v634 = vunpack.c.l.b16 %v580
    %v635 = vunpack.c.h.b16 %v580
    %v636 = vunpack.c.l.b16 %v581
    %v637 = vunpack.c.h.b16 %v581
    %v638 = vunpack.c.l.b16 %v582
    %v639 = vunpack.c.h.b16 %v582
    %v640 = vunpack.c.l.b16 %v583
    %v641 = vunpack.c.h.b16 %v583
    %v642 = vunpack.c.l.b16 %v584
    %v643 = vunpack.c.h.b16 %v584
    %v644 = vunpack.c.l.b16 %v585
    %v645 = vunpack.c.h.b16 %v585
    %v646 = vunpack.c.l.b16 %v586
    %v647 = vunpack.c.h.b16 %v586
    %v648 = vunpack.c.l.b16 %v587
    %v649 = vunpack.c.h.b16 %v587
    %v650 = vunpack.c.l.b16 %v588
    %v651 = vunpack.c.h.b16 %v588
    %v652 = vunpack.c.l.b16 %v589
    %v653 = vunpack.c.h.b16 %v589
    %v654 = vunpack.c.l.b16 %v590
    %v655 = vunpack.c.h.b16 %v590
    %v656 = vunpack.c.l.b16 %v591
    %v657 = vunpack.c.h.b16 %v591
    %v658 = vunpack.c.l.b16 %v592
    %v659 = vunpack.c.h.b16 %v592
    %v660 = vunpack.c.l.b16 %v593
    %v661 = vunpack.c.h.b16 %v593
    %v662 = vunpack.c.l.b16 %v594
    %v663 = vunpack.c.h.b16 %v594
    %v664 = vunpack.c.l.b16 %v595
    %v665 = vunpack.c.h.b16 %v595
    %v666 = vunpack.c.l.b16 %v596
    %v667 = vunpack.c.h.b16 %v596
    %v668 = vunpack.c.l.b16 %v597
    %v669 = vunpack.c.h.b16 %v597
    %v670 = vpack.c.b16 %v624, %v622
    %v671 = vpack.c.b16 %v625, %v623
    %v672 = vpack.c.b16 %v628, %v626
    %v673 = vpack.c.b16 %v629, %v627
    %v674 = vpack.c.b16 %v632, %v630
    %v675 = vpack.c.b16 %v633, %v631
    %v676 = vpack.c.b16 %v636, %v634
    %v677 = vpack.c.b16 %v637, %v635
    %v678 = vpack.c.b16 %v640, %v638
    %v679 = vpack.c.b16 %v641, %v639
    %v680 = vpack.c.b16 %v644, %v642
    %v681 = vpack.c.b16 %v645, %v643
    %v682 = vpack.c.b16 %v648, %v646
    %v683 = vpack.c.b16 %v649, %v647
    %v684 = vpack.c.b16 %v652, %v650
    %v685 = vpack.c.b16 %v653, %v651
    %v686 = vpack.c.b16 %v656, %v654
    %v687 = vpack.c.b16 %v657, %v655
    %v688 = vpack.c.b16 %v660, %v658
    %v689 = vpack.c.b16 %v661, %v659
    %v690 = vpack.c.b16 %v664, %v662
    %v691 = vpack.c.b16 %v665, %v663
    %v692 = vpack.c.b16 %v668, %v666
    %v693 = vpack.c.b16 %v669, %v667
    %vm718 = vcmask 523264
    %v720 = vsel %vm718, %v566, 0
    %v723 = vsel %vm718, %v568, 0
    %v726 = vsel %vm718, %v570, 0
    %v729 = vsel %vm718, %v572, 0
    %731 = vmatprep.subr.bf16.mxu0 %v671
    %732 = vmatpush1.bf16.msra.mxu0 %v670
    %733 = vmatprep.subr.bf16.mxu0 %v673
    %734 = vmatpush1.bf16.msra.mxu0 %v672
    %735 = vmatprep.subr.bf16.mxu0 %v675
    %736 = vmatpush1.bf16.msra.mxu0 %v674
    %737 = vmatprep.subr.bf16.mxu0 %v677
    %738 = vmatpush1.bf16.msra.mxu0 %v676
    %739 = vmatprep.subr.bf16.mxu0 %v679
    %740 = vmatpush1.bf16.msra.mxu0 %v678
    %741 = vmatprep.subr.bf16.mxu0 %v681
    %742 = vmatpush1.bf16.msra.mxu0 %v680
    %743 = vmatprep.subr.bf16.mxu0 %v683
    %744 = vmatpush1.bf16.msra.mxu0 %v682
    %745 = vmatprep.subr.bf16.mxu0 %v685
    %746 = vmatpush1.bf16.msra.mxu0 %v684
    %747 = vmatprep.subr.bf16.mxu0 %v687
    %748 = vmatpush1.bf16.msra.mxu0 %v686
    %749 = vmatprep.subr.bf16.mxu0 %v689
    %750 = vmatpush1.bf16.msra.mxu0 %v688
    %751 = vmatprep.subr.bf16.mxu0 %v691
    %752 = vmatpush1.bf16.msra.mxu0 %v690
    %753 = vmatprep.subr.bf16.mxu0 %v693
    %754 = vmatpush1.bf16.msra.mxu0 %v692
    %755 = vmatprep.subr.bf16.mxu0 0
    %756 = vmatpush1.bf16.msra.mxu0 0
    %757 = vmatprep.subr.bf16.mxu0 0
    %758 = vmatpush1.bf16.msra.mxu0 0
    %759 = vmatprep.subr.bf16.mxu0 0
    %760 = vmatpush1.bf16.msra.mxu0 0
    %761 = vmatprep.subr.bf16.mxu0 0
    %762 = vmatpush1.bf16.msra.mxu0 0
    %763 = vmatprep.mubr.bf16.mxu0 %v720
    %764 = vmatmul.mubr.bf16.gmra.mrb[0].mxu0 %v565
    %v765 = vpop.f32.mrb[0].mxu0
    %v766 = vadd.f32 0.0, %v765
    %v767 = vpop.f32.mrb[0].mxu0
    %v768 = vadd.f32 0.0, %v767
    %v769 = vpop.f32.mrb[0].mxu0
    %v770 = vadd.f32 0.0, %v769
    %v771 = vpop.f32.mrb[0].mxu0
    %v772 = vadd.f32 0.0, %v771
    %773 = vmatprep.mubr.bf16.mxu0 %v723
    %774 = vmatmul.mubr.bf16.gmra.mrb[0].mxu0 %v567
    %v775 = vpop.f32.mrb[0].mxu0
    %v776 = vadd.f32 0.0, %v775
    %v777 = vpop.f32.mrb[0].mxu0
    %v778 = vadd.f32 0.0, %v777
    %v779 = vpop.f32.mrb[0].mxu0
    %v780 = vadd.f32 0.0, %v779
    %v781 = vpop.f32.mrb[0].mxu0
    %v782 = vadd.f32 0.0, %v781
    %783 = vmatprep.mubr.bf16.mxu0 %v726
    %784 = vmatmul.mubr.bf16.gmra.mrb[0].mxu0 %v569
    %v785 = vpop.f32.mrb[0].mxu0
    %v786 = vadd.f32 0.0, %v785
    %v787 = vpop.f32.mrb[0].mxu0
    %v788 = vadd.f32 0.0, %v787
    %v789 = vpop.f32.mrb[0].mxu0
    %v790 = vadd.f32 0.0, %v789
    %v791 = vpop.f32.mrb[0].mxu0
    %v792 = vadd.f32 0.0, %v791
    %793 = vmatprep.mubr.bf16.mxu0 %v729
    %794 = vmatmul.mubr.bf16.gmra.mrb[0].mxu0 %v571
    %v795 = vpop.f32.mrb[0].mxu0
    %v796 = vadd.f32 0.0, %v795
    %v797 = vpop.f32.mrb[0].mxu0
    %v798 = vadd.f32 0.0, %v797
    %v799 = vpop.f32.mrb[0].mxu0
    %v800 = vadd.f32 0.0, %v799
    %v801 = vpop.f32.mrb[0].mxu0
    %v802 = vadd.f32 0.0, %v801
    %803 = vdwg.mxu0
    %v828 = vunpack.c.l.b16 %v435
    %v829 = vunpack.c.h.b16 %v435
    %v830 = vunpack.c.l.b16 %v436
    %v831 = vunpack.c.h.b16 %v436
    %v832 = vunpack.c.l.b16 %v437
    %v833 = vunpack.c.h.b16 %v437
    %v834 = vunpack.c.l.b16 %v438
    %v835 = vunpack.c.h.b16 %v438
    %v836 = vunpack.c.l.b16 %v439
    %v837 = vunpack.c.h.b16 %v439
    %v838 = vunpack.c.l.b16 %v440
    %v839 = vunpack.c.h.b16 %v440
    %v840 = vunpack.c.l.b16 %v441
    %v841 = vunpack.c.h.b16 %v441
    %v842 = vunpack.c.l.b16 %v442
    %v843 = vunpack.c.h.b16 %v442
    %v844 = vunpack.c.l.b16 %v443
    %v845 = vunpack.c.h.b16 %v443
    %v846 = vunpack.c.l.b16 %v444
    %v847 = vunpack.c.h.b16 %v444
    %v848 = vunpack.c.l.b16 %v445
    %v849 = vunpack.c.h.b16 %v445
    %v850 = vunpack.c.l.b16 %v446
    %v851 = vunpack.c.h.b16 %v446
    %v852 = vunpack.c.l.b16 %v447
    %v853 = vunpack.c.h.b16 %v447
    %v854 = vunpack.c.l.b16 %v448
    %v855 = vunpack.c.h.b16 %v448
    %v856 = vunpack.c.l.b16 %v449
    %v857 = vunpack.c.h.b16 %v449
    %v858 = vunpack.c.l.b16 %v450
    %v859 = vunpack.c.h.b16 %v450
    %v860 = vunpack.c.l.b16 %v451
    %v861 = vunpack.c.h.b16 %v451
    %v862 = vunpack.c.l.b16 %v452
    %v863 = vunpack.c.h.b16 %v452
    %v864 = vunpack.c.l.b16 %v453
    %v865 = vunpack.c.h.b16 %v453
    %v866 = vunpack.c.l.b16 %v454
    %v867 = vunpack.c.h.b16 %v454
    %v868 = vunpack.c.l.b16 %v455
    %v869 = vunpack.c.h.b16 %v455
    %v870 = vunpack.c.l.b16 %v456
    %v871 = vunpack.c.h.b16 %v456
    %v872 = vunpack.c.l.b16 %v457
    %v873 = vunpack.c.h.b16 %v457
    %v874 = vunpack.c.l.b16 %v458
    %v875 = vunpack.c.h.b16 %v458
    %v876 = vpack.c.b16 %v830, %v828
    %v877 = vpack.c.b16 %v831, %v829
    %v878 = vpack.c.b16 %v834, %v832
    %v879 = vpack.c.b16 %v835, %v833
    %v880 = vpack.c.b16 %v838, %v836
    %v881 = vpack.c.b16 %v839, %v837
    %v882 = vpack.c.b16 %v842, %v840
    %v883 = vpack.c.b16 %v843, %v841
    %v884 = vpack.c.b16 %v846, %v844
    %v885 = vpack.c.b16 %v847, %v845
    %v886 = vpack.c.b16 %v850, %v848
    %v887 = vpack.c.b16 %v851, %v849
    %v888 = vpack.c.b16 %v854, %v852
    %v889 = vpack.c.b16 %v855, %v853
    %v890 = vpack.c.b16 %v858, %v856
    %v891 = vpack.c.b16 %v859, %v857
    %v892 = vpack.c.b16 %v862, %v860
    %v893 = vpack.c.b16 %v863, %v861
    %v894 = vpack.c.b16 %v866, %v864
    %v895 = vpack.c.b16 %v867, %v865
    %v896 = vpack.c.b16 %v870, %v868
    %v897 = vpack.c.b16 %v871, %v869
    %v898 = vpack.c.b16 %v874, %v872
    %v899 = vpack.c.b16 %v875, %v873
    %v925 = vsel %vm718, %v428, 0
    %v928 = vsel %vm718, %v430, 0
    %v931 = vsel %vm718, %v432, 0
    %v934 = vsel %vm718, %v434, 0
    %936 = vmatprep.subr.bf16.mxu0 %v877
    %937 = vmatpush1.bf16.msra.mxu0 %v876
    %938 = vmatprep.subr.bf16.mxu0 %v879
    %939 = vmatpush1.bf16.msra.mxu0 %v878
    %940 = vmatprep.subr.bf16.mxu0 %v881
    %941 = vmatpush1.bf16.msra.mxu0 %v880
    %942 = vmatprep.subr.bf16.mxu0 %v883
    %943 = vmatpush1.bf16.msra.mxu0 %v882
    %944 = vmatprep.subr.bf16.mxu0 %v885
    %945 = vmatpush1.bf16.msra.mxu0 %v884
    %946 = vmatprep.subr.bf16.mxu0 %v887
    %947 = vmatpush1.bf16.msra.mxu0 %v886
    %948 = vmatprep.subr.bf16.mxu0 %v889
    %949 = vmatpush1.bf16.msra.mxu0 %v888
    %950 = vmatprep.subr.bf16.mxu0 %v891
    %951 = vmatpush1.bf16.msra.mxu0 %v890
    %952 = vmatprep.subr.bf16.mxu0 %v893
    %953 = vmatpush1.bf16.msra.mxu0 %v892
    %954 = vmatprep.subr.bf16.mxu0 %v895
    %955 = vmatpush1.bf16.msra.mxu0 %v894
    %956 = vmatprep.subr.bf16.mxu0 %v897
    %957 = vmatpush1.bf16.msra.mxu0 %v896
    %958 = vmatprep.subr.bf16.mxu0 %v899
    %959 = vmatpush1.bf16.msra.mxu0 %v898
    %960 = vmatprep.subr.bf16.mxu0 0
    %961 = vmatpush1.bf16.msra.mxu0 0
    %962 = vmatprep.subr.bf16.mxu0 0
    %963 = vmatpush1.bf16.msra.mxu0 0
    %964 = vmatprep.subr.bf16.mxu0 0
    %965 = vmatpush1.bf16.msra.mxu0 0
    %966 = vmatprep.subr.bf16.mxu0 0
    %967 = vmatpush1.bf16.msra.mxu0 0
    %968 = vmatprep.mubr.bf16.mxu0 %v925
    %969 = vmatmul.mubr.bf16.gmra.mrb[0].mxu0 %v427
    %v970 = vpop.f32.mrb[0].mxu0
    %v971 = vadd.f32 %v766, %v970
    %v972 = vpop.f32.mrb[0].mxu0
    %v973 = vadd.f32 %v768, %v972
    %v974 = vpop.f32.mrb[0].mxu0
    %v975 = vadd.f32 %v770, %v974
    %v976 = vpop.f32.mrb[0].mxu0
    %v977 = vadd.f32 %v772, %v976
    %978 = vmatprep.mubr.bf16.mxu0 %v928
    %979 = vmatmul.mubr.bf16.gmra.mrb[0].mxu0 %v429
    %v980 = vpop.f32.mrb[0].mxu0
    %v981 = vadd.f32 %v776, %v980
    %v982 = vpop.f32.mrb[0].mxu0
    %v983 = vadd.f32 %v778, %v982
    %v984 = vpop.f32.mrb[0].mxu0
    %v985 = vadd.f32 %v780, %v984
    %v986 = vpop.f32.mrb[0].mxu0
    %v987 = vadd.f32 %v782, %v986
    %988 = vmatprep.mubr.bf16.mxu0 %v931
    %989 = vmatmul.mubr.bf16.gmra.mrb[0].mxu0 %v431
    %v990 = vpop.f32.mrb[0].mxu0
    %v991 = vadd.f32 %v786, %v990
    %v992 = vpop.f32.mrb[0].mxu0
    %v993 = vadd.f32 %v788, %v992
    %v994 = vpop.f32.mrb[0].mxu0
    %v995 = vadd.f32 %v790, %v994
    %v996 = vpop.f32.mrb[0].mxu0
    %v997 = vadd.f32 %v792, %v996
    %998 = vmatprep.mubr.bf16.mxu0 %v934
    %999 = vmatmul.mubr.bf16.gmra.mrb[0].mxu0 %v433
    %v1000 = vpop.f32.mrb[0].mxu0
    %v1001 = vadd.f32 %v796, %v1000
    %v1002 = vpop.f32.mrb[0].mxu0
    %v1003 = vadd.f32 %v798, %v1002
    %v1004 = vpop.f32.mrb[0].mxu0
    %v1005 = vadd.f32 %v800, %v1004
    %v1006 = vpop.f32.mrb[0].mxu0
    %v1007 = vadd.f32 %v802, %v1006
    %1008 = vdwg.mxu0
    %s1009 = scalar_lea.vmem [#allocation2], 64
    %v1010 = vld [vmem:[%s1009] sm:$0xf]
    %v1011 = vld [vmem:[%s1009 + $0x4] sm:$0xf]
    %v1012 = vld [vmem:[%s1009 + $0x8] sm:$0xf]
    %v1013 = vld [vmem:[%s1009 + $0xc] sm:$0xf]
    %v1014 = vld [vmem:[%s1009 + $0x10] sm:$0xf]
    %v1015 = vld [vmem:[%s1009 + $0x14] sm:$0xf]
    %v1016 = vld [vmem:[%s1009 + $0x18] sm:$0xf]
    %v1017 = vld [vmem:[%s1009 + $0x1c] sm:$0xf]
    %v1026 = vunpack.c.l.b16 %v1010
    %v1027 = vunpack.c.l.b16 %v1011
    %v1028 = vunpack.c.l.b16 %v1012
    %v1029 = vunpack.c.l.b16 %v1013
    %v1030 = vunpack.c.l.b16 %v1014
    %v1031 = vunpack.c.l.b16 %v1015
    %v1032 = vunpack.c.l.b16 %v1016
    %v1033 = vunpack.c.l.b16 %v1017
    %v1034 = vpack.c.b16 %v1027, %v1026
    %v1035 = vpack.c.b16 %v1029, %v1028
    %v1036 = vpack.c.b16 %v1031, %v1030
    %v1037 = vpack.c.b16 %v1033, %v1032
    %1042 = vmatprep.subr.bf16.mxu0 %v307
    %1043 = vmatpush1.bf16.msra.mxu0 %v306
    %1044 = vmatprep.subr.bf16.mxu0 %v309
    %1045 = vmatpush1.bf16.msra.mxu0 %v308
    %1046 = vmatprep.subr.bf16.mxu0 %v311
    %1047 = vmatpush1.bf16.msra.mxu0 %v310
    %1048 = vmatprep.subr.bf16.mxu0 %v313
    %1049 = vmatpush1.bf16.msra.mxu0 %v312
    %1050 = vmatprep.subr.bf16.mxu0 %v315
    %1051 = vmatpush1.bf16.msra.mxu0 %v314
    %1052 = vmatprep.subr.bf16.mxu0 %v317
    %1053 = vmatpush1.bf16.msra.mxu0 %v316
    %1054 = vmatprep.subr.bf16.mxu0 %v319
    %1055 = vmatpush1.bf16.msra.mxu0 %v318
    %1056 = vmatprep.subr.bf16.mxu0 %v321
    %1057 = vmatpush1.bf16.msra.mxu0 %v320
    %1058 = vmatprep.subr.bf16.mxu0 0
    %1059 = vmatpush1.bf16.msra.mxu0 0
    %1060 = vmatprep.subr.bf16.mxu0 0
    %1061 = vmatpush1.bf16.msra.mxu0 0
    %1062 = vmatprep.subr.bf16.mxu0 0
    %1063 = vmatpush1.bf16.msra.mxu0 0
    %1064 = vmatprep.subr.bf16.mxu0 0
    %1065 = vmatpush1.bf16.msra.mxu0 0
    %1066 = vmatprep.subr.bf16.mxu0 0
    %1067 = vmatpush1.bf16.msra.mxu0 0
    %1068 = vmatprep.subr.bf16.mxu0 0
    %1069 = vmatpush1.bf16.msra.mxu0 0
    %1070 = vmatprep.subr.bf16.mxu0 0
    %1071 = vmatpush1.bf16.msra.mxu0 0
    %1072 = vmatprep.subr.bf16.mxu0 0
    %1073 = vmatpush1.bf16.msra.mxu0 0
    %1074 = vmatprep.mubr.bf16.mxu0 0
    %1075 = vmatmul.mubr.bf16.gmra.mrb[0].mxu0 %v1034
    %v1076 = vpop.f32.mrb[0].mxu0
    %v1077 = vadd.f32 0.0, %v1076
    %v1078 = vpop.f32.mrb[0].mxu0
    %v1079 = vadd.f32 0.0, %v1078
    %v1080 = vpop.f32.mrb[0].mxu0
    %v1081 = vadd.f32 0.0, %v1080
    %v1082 = vpop.f32.mrb[0].mxu0
    %v1083 = vadd.f32 0.0, %v1082
    %1084 = vmatprep.mubr.bf16.mxu0 0
    %1085 = vmatmul.mubr.bf16.gmra.mrb[0].mxu0 %v1035
    %v1086 = vpop.f32.mrb[0].mxu0
    %v1087 = vadd.f32 0.0, %v1086
    %v1088 = vpop.f32.mrb[0].mxu0
    %v1089 = vadd.f32 0.0, %v1088
    %v1090 = vpop.f32.mrb[0].mxu0
    %v1091 = vadd.f32 0.0, %v1090
    %v1092 = vpop.f32.mrb[0].mxu0
    %v1093 = vadd.f32 0.0, %v1092
    %1094 = vmatprep.mubr.bf16.mxu0 0
    %1095 = vmatmul.mubr.bf16.gmra.mrb[0].mxu0 %v1036
    %v1096 = vpop.f32.mrb[0].mxu0
    %v1097 = vadd.f32 0.0, %v1096
    %v1098 = vpop.f32.mrb[0].mxu0
    %v1099 = vadd.f32 0.0, %v1098
    %v1100 = vpop.f32.mrb[0].mxu0
    %v1101 = vadd.f32 0.0, %v1100
    %v1102 = vpop.f32.mrb[0].mxu0
    %v1103 = vadd.f32 0.0, %v1102
    %1104 = vmatprep.mubr.bf16.mxu0 0
    %1105 = vmatmul.mubr.bf16.gmra.mrb[0].mxu0 %v1037
    %v1106 = vpop.f32.mrb[0].mxu0
    %v1107 = vadd.f32 0.0, %v1106
    %v1108 = vpop.f32.mrb[0].mxu0
    %v1109 = vadd.f32 0.0, %v1108
    %v1110 = vpop.f32.mrb[0].mxu0
    %v1111 = vadd.f32 0.0, %v1110
    %v1112 = vpop.f32.mrb[0].mxu0
    %v1113 = vadd.f32 0.0, %v1112
    %1114 = vdwg.mxu0
    %v1115 = vpack.c.bf16 %v1081, %v1077
    %v1116 = vpack.c.bf16 %v1083, %v1079
    %v1117 = vpack.c.bf16 %v1091, %v1087
    %v1118 = vpack.c.bf16 %v1093, %v1089
    %v1119 = vpack.c.bf16 %v1101, %v1097
    %v1120 = vpack.c.bf16 %v1103, %v1099
    %v1121 = vpack.c.bf16 %v1111, %v1107
    %v1122 = vpack.c.bf16 %v1113, %v1109
    %s1123 = scalar_lea.vmem %s2, 384
    %v1124 = vld [vmem:[%s1123] sm:$0xff]
    %v1125 = vld [vmem:[%s1123 + $0x8] sm:$0xff]
    %v1126 = vld [vmem:[%s1123 + $0x10] sm:$0xff]
    %v1127 = vld [vmem:[%s1123 + $0x18] sm:$0xff]
    %v1128 = vld [vmem:[%s1123 + $0x20] sm:$0xff]
    %v1129 = vld [vmem:[%s1123 + $0x28] sm:$0xff]
    %v1130 = vld [vmem:[%s1123 + $0x30] sm:$0xff]
    %v1131 = vld [vmem:[%s1123 + $0x38] sm:$0xff]
    %v1132 = vld [vmem:[%s1123 + $0x40] sm:$0xff]
    %v1133 = vld [vmem:[%s1123 + $0x48] sm:$0xff]
    %v1134 = vld [vmem:[%s1123 + $0x50] sm:$0xff]
    %v1135 = vld [vmem:[%s1123 + $0x58] sm:$0xff]
    %v1136 = vld [vmem:[%s1123 + $0x60] sm:$0xff]
    %v1137 = vld [vmem:[%s1123 + $0x68] sm:$0xff]
    %v1138 = vld [vmem:[%s1123 + $0x70] sm:$0xff]
    %v1139 = vld [vmem:[%s1123 + $0x78] sm:$0xff]
    %v1140 = vld [vmem:[%s1123 + $0x80] sm:$0xff]
    %v1141 = vld [vmem:[%s1123 + $0x88] sm:$0xff]
    %v1142 = vld [vmem:[%s1123 + $0x90] sm:$0xff]
    %v1143 = vld [vmem:[%s1123 + $0x98] sm:$0xff]
    %v1144 = vld [vmem:[%s1123 + $0xa0] sm:$0xff]
    %v1145 = vld [vmem:[%s1123 + $0xa8] sm:$0xff]
    %v1146 = vld [vmem:[%s1123 + $0xb0] sm:$0xff]
    %v1147 = vld [vmem:[%s1123 + $0xb8] sm:$0xff]
    %v1172 = vunpack.c.l.b16 %v1124
    %v1173 = vunpack.c.h.b16 %v1124
    %v1174 = vunpack.c.l.b16 %v1125
    %v1175 = vunpack.c.h.b16 %v1125
    %v1176 = vunpack.c.l.b16 %v1126
    %v1177 = vunpack.c.h.b16 %v1126
    %v1178 = vunpack.c.l.b16 %v1127
    %v1179 = vunpack.c.h.b16 %v1127
    %v1180 = vunpack.c.l.b16 %v1128
    %v1181 = vunpack.c.h.b16 %v1128
    %v1182 = vunpack.c.l.b16 %v1129
    %v1183 = vunpack.c.h.b16 %v1129
    %v1184 = vunpack.c.l.b16 %v1130
    %v1185 = vunpack.c.h.b16 %v1130
    %v1186 = vunpack.c.l.b16 %v1131
    %v1187 = vunpack.c.h.b16 %v1131
    %v1188 = vunpack.c.l.b16 %v1132
    %v1189 = vunpack.c.h.b16 %v1132
    %v1190 = vunpack.c.l.b16 %v1133
    %v1191 = vunpack.c.h.b16 %v1133
    %v1192 = vunpack.c.l.b16 %v1134
    %v1193 = vunpack.c.h.b16 %v1134
    %v1194 = vunpack.c.l.b16 %v1135
    %v1195 = vunpack.c.h.b16 %v1135
    %v1196 = vunpack.c.l.b16 %v1136
    %v1197 = vunpack.c.h.b16 %v1136
    %v1198 = vunpack.c.l.b16 %v1137
    %v1199 = vunpack.c.h.b16 %v1137
    %v1200 = vunpack.c.l.b16 %v1138
    %v1201 = vunpack.c.h.b16 %v1138
    %v1202 = vunpack.c.l.b16 %v1139
    %v1203 = vunpack.c.h.b16 %v1139
    %v1204 = vunpack.c.l.b16 %v1140
    %v1205 = vunpack.c.h.b16 %v1140
    %v1206 = vunpack.c.l.b16 %v1141
    %v1207 = vunpack.c.h.b16 %v1141
    %v1208 = vunpack.c.l.b16 %v1142
    %v1209 = vunpack.c.h.b16 %v1142
    %v1210 = vunpack.c.l.b16 %v1143
    %v1211 = vunpack.c.h.b16 %v1143
    %v1212 = vunpack.c.l.b16 %v1144
    %v1213 = vunpack.c.h.b16 %v1144
    %v1214 = vunpack.c.l.b16 %v1145
    %v1215 = vunpack.c.h.b16 %v1145
    %v1216 = vunpack.c.l.b16 %v1146
    %v1217 = vunpack.c.h.b16 %v1146
    %v1218 = vunpack.c.l.b16 %v1147
    %v1219 = vunpack.c.h.b16 %v1147
    %v1220 = vpack.c.b16 %v1174, %v1172
    %v1221 = vpack.c.b16 %v1175, %v1173
    %v1222 = vpack.c.b16 %v1178, %v1176
    %v1223 = vpack.c.b16 %v1179, %v1177
    %v1224 = vpack.c.b16 %v1182, %v1180
    %v1225 = vpack.c.b16 %v1183, %v1181
    %v1226 = vpack.c.b16 %v1186, %v1184
    %v1227 = vpack.c.b16 %v1187, %v1185
    %v1228 = vpack.c.b16 %v1190, %v1188
    %v1229 = vpack.c.b16 %v1191, %v1189
    %v1230 = vpack.c.b16 %v1194, %v1192
    %v1231 = vpack.c.b16 %v1195, %v1193
    %v1232 = vpack.c.b16 %v1198, %v1196
    %v1233 = vpack.c.b16 %v1199, %v1197
    %v1234 = vpack.c.b16 %v1202, %v1200
    %v1235 = vpack.c.b16 %v1203, %v1201
    %v1236 = vpack.c.b16 %v1206, %v1204
    %v1237 = vpack.c.b16 %v1207, %v1205
    %v1238 = vpack.c.b16 %v1210, %v1208
    %v1239 = vpack.c.b16 %v1211, %v1209
    %v1240 = vpack.c.b16 %v1214, %v1212
    %v1241 = vpack.c.b16 %v1215, %v1213
    %v1242 = vpack.c.b16 %v1218, %v1216
    %v1243 = vpack.c.b16 %v1219, %v1217
    %v1269 = vsel %vm718, %v1116, 0
    %v1272 = vsel %vm718, %v1118, 0
    %v1275 = vsel %vm718, %v1120, 0
    %v1278 = vsel %vm718, %v1122, 0
    %1280 = vmatprep.subr.bf16.mxu0 %v1221
    %1281 = vmatpush1.bf16.msra.mxu0 %v1220
    %1282 = vmatprep.subr.bf16.mxu0 %v1223
    %1283 = vmatpush1.bf16.msra.mxu0 %v1222
    %1284 = vmatprep.subr.bf16.mxu0 %v1225
    %1285 = vmatpush1.bf16.msra.mxu0 %v1224
    %1286 = vmatprep.subr.bf16.mxu0 %v1227
    %1287 = vmatpush1.bf16.msra.mxu0 %v1226
    %1288 = vmatprep.subr.bf16.mxu0 %v1229
    %1289 = vmatpush1.bf16.msra.mxu0 %v1228
    %1290 = vmatprep.subr.bf16.mxu0 %v1231
    %1291 = vmatpush1.bf16.msra.mxu0 %v1230
    %1292 = vmatprep.subr.bf16.mxu0 %v1233
    %1293 = vmatpush1.bf16.msra.mxu0 %v1232
    %1294 = vmatprep.subr.bf16.mxu0 %v1235
    %1295 = vmatpush1.bf16.msra.mxu0 %v1234
    %1296 = vmatprep.subr.bf16.mxu0 %v1237
    %1297 = vmatpush1.bf16.msra.mxu0 %v1236
    %1298 = vmatprep.subr.bf16.mxu0 %v1239
    %1299 = vmatpush1.bf16.msra.mxu0 %v1238
    %1300 = vmatprep.subr.bf16.mxu0 %v1241
    %1301 = vmatpush1.bf16.msra.mxu0 %v1240
    %1302 = vmatprep.subr.bf16.mxu0 %v1243
    %1303 = vmatpush1.bf16.msra.mxu0 %v1242
    %1304 = vmatprep.subr.bf16.mxu0 0
    %1305 = vmatpush1.bf16.msra.mxu0 0
    %1306 = vmatprep.subr.bf16.mxu0 0
    %1307 = vmatpush1.bf16.msra.mxu0 0
    %1308 = vmatprep.subr.bf16.mxu0 0
    %1309 = vmatpush1.bf16.msra.mxu0 0
    %1310 = vmatprep.subr.bf16.mxu0 0
    %1311 = vmatpush1.bf16.msra.mxu0 0
    %1312 = vmatprep.mubr.bf16.mxu0 %v1269
    %1313 = vmatmul.mubr.bf16.gmra.mrb[0].mxu0 %v1115
    %v1314 = vpop.f32.mrb[0].mxu0
    %v1315 = vadd.f32 0.0, %v1314
    %v1316 = vpop.f32.mrb[0].mxu0
    %v1317 = vadd.f32 0.0, %v1316
    %v1318 = vpop.f32.mrb[0].mxu0
    %v1319 = vadd.f32 0.0, %v1318
    %v1320 = vpop.f32.mrb[0].mxu0
    %v1321 = vadd.f32 0.0, %v1320
    %1322 = vmatprep.mubr.bf16.mxu0 %v1272
    %1323 = vmatmul.mubr.bf16.gmra.mrb[0].mxu0 %v1117
    %v1324 = vpop.f32.mrb[0].mxu0
    %v1325 = vadd.f32 0.0, %v1324
    %v1326 = vpop.f32.mrb[0].mxu0
    %v1327 = vadd.f32 0.0, %v1326
    %v1328 = vpop.f32.mrb[0].mxu0
    %v1329 = vadd.f32 0.0, %v1328
    %v1330 = vpop.f32.mrb[0].mxu0
    %v1331 = vadd.f32 0.0, %v1330
    %1332 = vmatprep.mubr.bf16.mxu0 %v1275
    %1333 = vmatmul.mubr.bf16.gmra.mrb[0].mxu0 %v1119
    %v1334 = vpop.f32.mrb[0].mxu0
    %v1335 = vadd.f32 0.0, %v1334
    %v1336 = vpop.f32.mrb[0].mxu0
    %v1337 = vadd.f32 0.0, %v1336
    %v1338 = vpop.f32.mrb[0].mxu0
    %v1339 = vadd.f32 0.0, %v1338
    %v1340 = vpop.f32.mrb[0].mxu0
    %v1341 = vadd.f32 0.0, %v1340
    %1342 = vmatprep.mubr.bf16.mxu0 %v1278
    %1343 = vmatmul.mubr.bf16.gmra.mrb[0].mxu0 %v1121
    %v1344 = vpop.f32.mrb[0].mxu0
    %v1345 = vadd.f32 0.0, %v1344
    %v1346 = vpop.f32.mrb[0].mxu0
    %v1347 = vadd.f32 0.0, %v1346
    %v1348 = vpop.f32.mrb[0].mxu0
    %v1349 = vadd.f32 0.0, %v1348
    %v1350 = vpop.f32.mrb[0].mxu0
    %v1351 = vadd.f32 0.0, %v1350
    %1352 = vdwg.mxu0
    %v1353 = vadd.f32 %v971, %v1315
    %v1354 = vadd.f32 %v973, %v1317
    %v1355 = vadd.f32 %v975, %v1319
    %v1356 = vadd.f32 %v977, %v1321
    %v1357 = vadd.f32 %v981, %v1325
    %v1358 = vadd.f32 %v983, %v1327
    %v1359 = vadd.f32 %v985, %v1329
    %v1360 = vadd.f32 %v987, %v1331
    %v1361 = vadd.f32 %v991, %v1335
    %v1362 = vadd.f32 %v993, %v1337
    %v1363 = vadd.f32 %v995, %v1339
    %v1364 = vadd.f32 %v997, %v1341
    %v1365 = vadd.f32 %v1001, %v1345
    %v1366 = vadd.f32 %v1003, %v1347
    %v1367 = vadd.f32 %v1005, %v1349
    %v1368 = vadd.f32 %v1007, %v1351
    %s1369 = scalar_lea.vmem [#allocation2], 96
    %v1370 = vld [vmem:[%s1369] sm:$0xf]
    %v1371 = vld [vmem:[%s1369 + $0x4] sm:$0xf]
    %v1372 = vld [vmem:[%s1369 + $0x8] sm:$0xf]
    %v1373 = vld [vmem:[%s1369 + $0xc] sm:$0xf]
    %v1374 = vld [vmem:[%s1369 + $0x10] sm:$0xf]
    %v1375 = vld [vmem:[%s1369 + $0x14] sm:$0xf]
    %v1376 = vld [vmem:[%s1369 + $0x18] sm:$0xf]
    %v1377 = vld [vmem:[%s1369 + $0x1c] sm:$0xf]
    %v1386 = vunpack.c.l.b16 %v1370
    %v1387 = vunpack.c.l.b16 %v1371
    %v1388 = vunpack.c.l.b16 %v1372
    %v1389 = vunpack.c.l.b16 %v1373
    %v1390 = vunpack.c.l.b16 %v1374
    %v1391 = vunpack.c.l.b16 %v1375
    %v1392 = vunpack.c.l.b16 %v1376
    %v1393 = vunpack.c.l.b16 %v1377
    %v1394 = vpack.c.b16 %v1387, %v1386
    %v1395 = vpack.c.b16 %v1389, %v1388
    %v1396 = vpack.c.b16 %v1391, %v1390
    %v1397 = vpack.c.b16 %v1393, %v1392
    %1402 = vmatprep.subr.bf16.mxu0 %v307
    %1403 = vmatpush1.bf16.msra.mxu0 %v306
    %1404 = vmatprep.subr.bf16.mxu0 %v309
    %1405 = vmatpush1.bf16.msra.mxu0 %v308
    %1406 = vmatprep.subr.bf16.mxu0 %v311
    %1407 = vmatpush1.bf16.msra.mxu0 %v310
    %1408 = vmatprep.subr.bf16.mxu0 %v313
    %1409 = vmatpush1.bf16.msra.mxu0 %v312
    %1410 = vmatprep.subr.bf16.mxu0 %v315
    %1411 = vmatpush1.bf16.msra.mxu0 %v314
    %1412 = vmatprep.subr.bf16.mxu0 %v317
    %1413 = vmatpush1.bf16.msra.mxu0 %v316
    %1414 = vmatprep.subr.bf16.mxu0 %v319
    %1415 = vmatpush1.bf16.msra.mxu0 %v318
    %1416 = vmatprep.subr.bf16.mxu0 %v321
    %1417 = vmatpush1.bf16.msra.mxu0 %v320
    %1418 = vmatprep.subr.bf16.mxu0 0
    %1419 = vmatpush1.bf16.msra.mxu0 0
    %1420 = vmatprep.subr.bf16.mxu0 0
    %1421 = vmatpush1.bf16.msra.mxu0 0
    %1422 = vmatprep.subr.bf16.mxu0 0
    %1423 = vmatpush1.bf16.msra.mxu0 0
    %1424 = vmatprep.subr.bf16.mxu0 0
    %1425 = vmatpush1.bf16.msra.mxu0 0
    %1426 = vmatprep.subr.bf16.mxu0 0
    %1427 = vmatpush1.bf16.msra.mxu0 0
    %1428 = vmatprep.subr.bf16.mxu0 0
    %1429 = vmatpush1.bf16.msra.mxu0 0
    %1430 = vmatprep.subr.bf16.mxu0 0
    %1431 = vmatpush1.bf16.msra.mxu0 0
    %1432 = vmatprep.subr.bf16.mxu0 0
    %1433 = vmatpush1.bf16.msra.mxu0 0
    %1434 = vmatprep.mubr.bf16.mxu0 0
    %1435 = vmatmul.mubr.bf16.gmra.mrb[0].mxu0 %v1394
    %v1436 = vpop.f32.mrb[0].mxu0
    %v1437 = vadd.f32 0.0, %v1436
    %v1438 = vpop.f32.mrb[0].mxu0
    %v1439 = vadd.f32 0.0, %v1438
    %v1440 = vpop.f32.mrb[0].mxu0
    %v1441 = vadd.f32 0.0, %v1440
    %v1442 = vpop.f32.mrb[0].mxu0
    %v1443 = vadd.f32 0.0, %v1442
    %1444 = vmatprep.mubr.bf16.mxu0 0
    %1445 = vmatmul.mubr.bf16.gmra.mrb[0].mxu0 %v1395
    %v1446 = vpop.f32.mrb[0].mxu0
    %v1447 = vadd.f32 0.0, %v1446
    %v1448 = vpop.f32.mrb[0].mxu0
    %v1449 = vadd.f32 0.0, %v1448
    %v1450 = vpop.f32.mrb[0].mxu0
    %v1451 = vadd.f32 0.0, %v1450
    %v1452 = vpop.f32.mrb[0].mxu0
    %v1453 = vadd.f32 0.0, %v1452
    %1454 = vmatprep.mubr.bf16.mxu0 0
    %1455 = vmatmul.mubr.bf16.gmra.mrb[0].mxu0 %v1396
    %v1456 = vpop.f32.mrb[0].mxu0
    %v1457 = vadd.f32 0.0, %v1456
    %v1458 = vpop.f32.mrb[0].mxu0
    %v1459 = vadd.f32 0.0, %v1458
    %v1460 = vpop.f32.mrb[0].mxu0
    %v1461 = vadd.f32 0.0, %v1460
    %v1462 = vpop.f32.mrb[0].mxu0
    %v1463 = vadd.f32 0.0, %v1462
    %1464 = vmatprep.mubr.bf16.mxu0 0
    %1465 = vmatmul.mubr.bf16.gmra.mrb[0].mxu0 %v1397
    %v1466 = vpop.f32.mrb[0].mxu0
    %v1467 = vadd.f32 0.0, %v1466
    %v1468 = vpop.f32.mrb[0].mxu0
    %v1469 = vadd.f32 0.0, %v1468
    %v1470 = vpop.f32.mrb[0].mxu0
    %v1471 = vadd.f32 0.0, %v1470
    %v1472 = vpop.f32.mrb[0].mxu0
    %v1473 = vadd.f32 0.0, %v1472
    %1474 = vdwg.mxu0
    %v1475 = vpack.c.bf16 %v1441, %v1437
    %v1476 = vpack.c.bf16 %v1443, %v1439
    %v1477 = vpack.c.bf16 %v1451, %v1447
    %v1478 = vpack.c.bf16 %v1453, %v1449
    %v1479 = vpack.c.bf16 %v1461, %v1457
    %v1480 = vpack.c.bf16 %v1463, %v1459
    %v1481 = vpack.c.bf16 %v1471, %v1467
    %v1482 = vpack.c.bf16 %v1473, %v1469
    %s1483 = scalar_lea.vmem %s2, 576
    %v1484 = vld [vmem:[%s1483] sm:$0xff]
    %v1485 = vld [vmem:[%s1483 + $0x8] sm:$0xff]
    %v1486 = vld [vmem:[%s1483 + $0x10] sm:$0xff]
    %v1487 = vld [vmem:[%s1483 + $0x18] sm:$0xff]
    %v1488 = vld [vmem:[%s1483 + $0x20] sm:$0xff]
    %v1489 = vld [vmem:[%s1483 + $0x28] sm:$0xff]
    %v1490 = vld [vmem:[%s1483 + $0x30] sm:$0xff]
    %v1491 = vld [vmem:[%s1483 + $0x38] sm:$0xff]
    %v1492 = vld [vmem:[%s1483 + $0x40] sm:$0xff]
    %v1493 = vld [vmem:[%s1483 + $0x48] sm:$0xff]
    %v1494 = vld [vmem:[%s1483 + $0x50] sm:$0xff]
    %v1495 = vld [vmem:[%s1483 + $0x58] sm:$0xff]
    %v1496 = vld [vmem:[%s1483 + $0x60] sm:$0xff]
    %v1497 = vld [vmem:[%s1483 + $0x68] sm:$0xff]
    %v1498 = vld [vmem:[%s1483 + $0x70] sm:$0xff]
    %v1499 = vld [vmem:[%s1483 + $0x78] sm:$0xff]
    %v1500 = vld [vmem:[%s1483 + $0x80] sm:$0xff]
    %v1501 = vld [vmem:[%s1483 + $0x88] sm:$0xff]
    %v1502 = vld [vmem:[%s1483 + $0x90] sm:$0xff]
    %v1503 = vld [vmem:[%s1483 + $0x98] sm:$0xff]
    %v1504 = vld [vmem:[%s1483 + $0xa0] sm:$0xff]
    %v1505 = vld [vmem:[%s1483 + $0xa8] sm:$0xff]
    %v1506 = vld [vmem:[%s1483 + $0xb0] sm:$0xff]
    %v1507 = vld [vmem:[%s1483 + $0xb8] sm:$0xff]
    %v1532 = vunpack.c.l.b16 %v1484
    %v1533 = vunpack.c.h.b16 %v1484
    %v1534 = vunpack.c.l.b16 %v1485
    %v1535 = vunpack.c.h.b16 %v1485
    %v1536 = vunpack.c.l.b16 %v1486
    %v1537 = vunpack.c.h.b16 %v1486
    %v1538 = vunpack.c.l.b16 %v1487
    %v1539 = vunpack.c.h.b16 %v1487
    %v1540 = vunpack.c.l.b16 %v1488
    %v1541 = vunpack.c.h.b16 %v1488
    %v1542 = vunpack.c.l.b16 %v1489
    %v1543 = vunpack.c.h.b16 %v1489
    %v1544 = vunpack.c.l.b16 %v1490
    %v1545 = vunpack.c.h.b16 %v1490
    %v1546 = vunpack.c.l.b16 %v1491
    %v1547 = vunpack.c.h.b16 %v1491
    %v1548 = vunpack.c.l.b16 %v1492
    %v1549 = vunpack.c.h.b16 %v1492
    %v1550 = vunpack.c.l.b16 %v1493
    %v1551 = vunpack.c.h.b16 %v1493
    %v1552 = vunpack.c.l.b16 %v1494
    %v1553 = vunpack.c.h.b16 %v1494
    %v1554 = vunpack.c.l.b16 %v1495
    %v1555 = vunpack.c.h.b16 %v1495
    %v1556 = vunpack.c.l.b16 %v1496
    %v1557 = vunpack.c.h.b16 %v1496
    %v1558 = vunpack.c.l.b16 %v1497
    %v1559 = vunpack.c.h.b16 %v1497
    %v1560 = vunpack.c.l.b16 %v1498
    %v1561 = vunpack.c.h.b16 %v1498
    %v1562 = vunpack.c.l.b16 %v1499
    %v1563 = vunpack.c.h.b16 %v1499
    %v1564 = vunpack.c.l.b16 %v1500
    %v1565 = vunpack.c.h.b16 %v1500
    %v1566 = vunpack.c.l.b16 %v1501
    %v1567 = vunpack.c.h.b16 %v1501
    %v1568 = vunpack.c.l.b16 %v1502
    %v1569 = vunpack.c.h.b16 %v1502
    %v1570 = vunpack.c.l.b16 %v1503
    %v1571 = vunpack.c.h.b16 %v1503
    %v1572 = vunpack.c.l.b16 %v1504
    %v1573 = vunpack.c.h.b16 %v1504
    %v1574 = vunpack.c.l.b16 %v1505
    %v1575 = vunpack.c.h.b16 %v1505
    %v1576 = vunpack.c.l.b16 %v1506
    %v1577 = vunpack.c.h.b16 %v1506
    %v1578 = vunpack.c.l.b16 %v1507
    %v1579 = vunpack.c.h.b16 %v1507
    %v1580 = vpack.c.b16 %v1534, %v1532
    %v1581 = vpack.c.b16 %v1535, %v1533
    %v1582 = vpack.c.b16 %v1538, %v1536
    %v1583 = vpack.c.b16 %v1539, %v1537
    %v1584 = vpack.c.b16 %v1542, %v1540
    %v1585 = vpack.c.b16 %v1543, %v1541
    %v1586 = vpack.c.b16 %v1546, %v1544
    %v1587 = vpack.c.b16 %v1547, %v1545
    %v1588 = vpack.c.b16 %v1550, %v1548
    %v1589 = vpack.c.b16 %v1551, %v1549
    %v1590 = vpack.c.b16 %v1554, %v1552
    %v1591 = vpack.c.b16 %v1555, %v1553
    %v1592 = vpack.c.b16 %v1558, %v1556
    %v1593 = vpack.c.b16 %v1559, %v1557
    %v1594 = vpack.c.b16 %v1562, %v1560
    %v1595 = vpack.c.b16 %v1563, %v1561
    %v1596 = vpack.c.b16 %v1566, %v1564
    %v1597 = vpack.c.b16 %v1567, %v1565
    %v1598 = vpack.c.b16 %v1570, %v1568
    %v1599 = vpack.c.b16 %v1571, %v1569
    %v1600 = vpack.c.b16 %v1574, %v1572
    %v1601 = vpack.c.b16 %v1575, %v1573
    %v1602 = vpack.c.b16 %v1578, %v1576
    %v1603 = vpack.c.b16 %v1579, %v1577
    %v1629 = vsel %vm718, %v1476, 0
    %v1632 = vsel %vm718, %v1478, 0
    %v1635 = vsel %vm718, %v1480, 0
    %v1638 = vsel %vm718, %v1482, 0
    %1640 = vmatprep.subr.bf16.mxu0 %v1581
    %1641 = vmatpush1.bf16.msra.mxu0 %v1580
    %1642 = vmatprep.subr.bf16.mxu0 %v1583
    %1643 = vmatpush1.bf16.msra.mxu0 %v1582
    %1644 = vmatprep.subr.bf16.mxu0 %v1585
    %1645 = vmatpush1.bf16.msra.mxu0 %v1584
    %1646 = vmatprep.subr.bf16.mxu0 %v1587
    %1647 = vmatpush1.bf16.msra.mxu0 %v1586
    %1648 = vmatprep.subr.bf16.mxu0 %v1589
    %1649 = vmatpush1.bf16.msra.mxu0 %v1588
    %1650 = vmatprep.subr.bf16.mxu0 %v1591
    %1651 = vmatpush1.bf16.msra.mxu0 %v1590
    %1652 = vmatprep.subr.bf16.mxu0 %v1593
    %1653 = vmatpush1.bf16.msra.mxu0 %v1592
    %1654 = vmatprep.subr.bf16.mxu0 %v1595
    %1655 = vmatpush1.bf16.msra.mxu0 %v1594
    %1656 = vmatprep.subr.bf16.mxu0 %v1597
    %1657 = vmatpush1.bf16.msra.mxu0 %v1596
    %1658 = vmatprep.subr.bf16.mxu0 %v1599
    %1659 = vmatpush1.bf16.msra.mxu0 %v1598
    %1660 = vmatprep.subr.bf16.mxu0 %v1601
    %1661 = vmatpush1.bf16.msra.mxu0 %v1600
    %1662 = vmatprep.subr.bf16.mxu0 %v1603
    %1663 = vmatpush1.bf16.msra.mxu0 %v1602
    %1664 = vmatprep.subr.bf16.mxu0 0
    %1665 = vmatpush1.bf16.msra.mxu0 0
    %1666 = vmatprep.subr.bf16.mxu0 0
    %1667 = vmatpush1.bf16.msra.mxu0 0
    %1668 = vmatprep.subr.bf16.mxu0 0
    %1669 = vmatpush1.bf16.msra.mxu0 0
    %1670 = vmatprep.subr.bf16.mxu0 0
    %1671 = vmatpush1.bf16.msra.mxu0 0
    %1672 = vmatprep.mubr.bf16.mxu0 %v1629
    %1673 = vmatmul.mubr.bf16.gmra.mrb[0].mxu0 %v1475
    %v1674 = vpop.f32.mrb[0].mxu0
    %v1675 = vadd.f32 0.0, %v1674
    %v1676 = vpop.f32.mrb[0].mxu0
    %v1677 = vadd.f32 0.0, %v1676
    %v1678 = vpop.f32.mrb[0].mxu0
    %v1679 = vadd.f32 0.0, %v1678
    %v1680 = vpop.f32.mrb[0].mxu0
    %v1681 = vadd.f32 0.0, %v1680
    %1682 = vmatprep.mubr.bf16.mxu0 %v1632
    %1683 = vmatmul.mubr.bf16.gmra.mrb[0].mxu0 %v1477
    %v1684 = vpop.f32.mrb[0].mxu0
    %v1685 = vadd.f32 0.0, %v1684
    %v1686 = vpop.f32.mrb[0].mxu0
    %v1687 = vadd.f32 0.0, %v1686
    %v1688 = vpop.f32.mrb[0].mxu0
    %v1689 = vadd.f32 0.0, %v1688
    %v1690 = vpop.f32.mrb[0].mxu0
    %v1691 = vadd.f32 0.0, %v1690
    %1692 = vmatprep.mubr.bf16.mxu0 %v1635
    %1693 = vmatmul.mubr.bf16.gmra.mrb[0].mxu0 %v1479
    %v1694 = vpop.f32.mrb[0].mxu0
    %v1695 = vadd.f32 0.0, %v1694
    %v1696 = vpop.f32.mrb[0].mxu0
    %v1697 = vadd.f32 0.0, %v1696
    %v1698 = vpop.f32.mrb[0].mxu0
    %v1699 = vadd.f32 0.0, %v1698
    %v1700 = vpop.f32.mrb[0].mxu0
    %v1701 = vadd.f32 0.0, %v1700
    %1702 = vmatprep.mubr.bf16.mxu0 %v1638
    %1703 = vmatmul.mubr.bf16.gmra.mrb[0].mxu0 %v1481
    %v1704 = vpop.f32.mrb[0].mxu0
    %v1705 = vadd.f32 0.0, %v1704
    %v1706 = vpop.f32.mrb[0].mxu0
    %v1707 = vadd.f32 0.0, %v1706
    %v1708 = vpop.f32.mrb[0].mxu0
    %v1709 = vadd.f32 0.0, %v1708
    %v1710 = vpop.f32.mrb[0].mxu0
    %v1711 = vadd.f32 0.0, %v1710
    %1712 = vdwg.mxu0
    %v1713 = vadd.f32 %v1353, %v1675
    %v1714 = vadd.f32 %v1354, %v1677
    %v1715 = vadd.f32 %v1355, %v1679
    %v1716 = vadd.f32 %v1356, %v1681
    %v1717 = vadd.f32 %v1357, %v1685
    %v1718 = vadd.f32 %v1358, %v1687
    %v1719 = vadd.f32 %v1359, %v1689
    %v1720 = vadd.f32 %v1360, %v1691
    %v1721 = vadd.f32 %v1361, %v1695
    %v1722 = vadd.f32 %v1362, %v1697
    %v1723 = vadd.f32 %v1363, %v1699
    %v1724 = vadd.f32 %v1364, %v1701
    %v1725 = vadd.f32 %v1365, %v1705
    %v1726 = vadd.f32 %v1366, %v1707
    %v1727 = vadd.f32 %v1367, %v1709
    %v1728 = vadd.f32 %v1368, %v1711
    %v1729 = vld [vmem:[%s3] sm:$0x3]
    %v1731 = vlaneseq
    %v1732 = vshrl.u32 %v1731, 7
    %v1733 = vsub.s32 0, %v1732
    %v1734 = vrot.slane %v1729, %v1733
    %v1735 = vlaneseq
    %v1736 = vshrl.u32 %v1735, 7
    %v1737 = vsub.s32 1, %v1736
    %v1738 = vrot.slane %v1729, %v1737
    %v1741 = vadd.f32 %v1713, %v1734
    %v1742 = vadd.f32 %v1714, %v1738
    %v1743 = vadd.f32 %v1715, %v1734
    %v1744 = vadd.f32 %v1716, %v1738
    %v1745 = vadd.f32 %v1717, %v1734
    %v1746 = vadd.f32 %v1718, %v1738
    %v1747 = vadd.f32 %v1719, %v1734
    %v1748 = vadd.f32 %v1720, %v1738
    %v1749 = vadd.f32 %v1721, %v1734
    %v1750 = vadd.f32 %v1722, %v1738
    %v1751 = vadd.f32 %v1723, %v1734
    %v1752 = vadd.f32 %v1724, %v1738
    %v1753 = vadd.f32 %v1725, %v1734
    %v1754 = vadd.f32 %v1726, %v1738
    %v1755 = vadd.f32 %v1727, %v1734
    %v1756 = vadd.f32 %v1728, %v1738
    %vm1757 = vcmp.ge.f32.partialorder %v1741, 0.0
    %vm1758 = vcmp.ge.f32.partialorder %v1742, 0.0
    %vm1759 = vcmp.ge.f32.partialorder %v1743, 0.0
    %vm1760 = vcmp.ge.f32.partialorder %v1744, 0.0
    %vm1761 = vcmp.ge.f32.partialorder %v1745, 0.0
    %vm1762 = vcmp.ge.f32.partialorder %v1746, 0.0
    %vm1763 = vcmp.ge.f32.partialorder %v1747, 0.0
    %vm1764 = vcmp.ge.f32.partialorder %v1748, 0.0
    %vm1765 = vcmp.ge.f32.partialorder %v1749, 0.0
    %vm1766 = vcmp.ge.f32.partialorder %v1750, 0.0
    %vm1767 = vcmp.ge.f32.partialorder %v1751, 0.0
    %vm1768 = vcmp.ge.f32.partialorder %v1752, 0.0
    %vm1769 = vcmp.ge.f32.partialorder %v1753, 0.0
    %vm1770 = vcmp.ge.f32.partialorder %v1754, 0.0
    %vm1771 = vcmp.ge.f32.partialorder %v1755, 0.0
    %vm1772 = vcmp.ge.f32.partialorder %v1756, 0.0
    %v1773 = vmul.f32 %v1741, 0.2
    %v1774 = vmul.f32 %v1742, 0.2
    %v1775 = vmul.f32 %v1743, 0.2
    %v1776 = vmul.f32 %v1744, 0.2
    %v1777 = vmul.f32 %v1745, 0.2
    %v1778 = vmul.f32 %v1746, 0.2
    %v1779 = vmul.f32 %v1747, 0.2
    %v1780 = vmul.f32 %v1748, 0.2
    %v1781 = vmul.f32 %v1749, 0.2
    %v1782 = vmul.f32 %v1750, 0.2
    %v1783 = vmul.f32 %v1751, 0.2
    %v1784 = vmul.f32 %v1752, 0.2
    %v1785 = vmul.f32 %v1753, 0.2
    %v1786 = vmul.f32 %v1754, 0.2
    %v1787 = vmul.f32 %v1755, 0.2
    %v1788 = vmul.f32 %v1756, 0.2
    %v1789 = vsel %vm1757, %v1741, %v1773
    %v1790 = vsel %vm1758, %v1742, %v1774
    %v1791 = vsel %vm1759, %v1743, %v1775
    %v1792 = vsel %vm1760, %v1744, %v1776
    %v1793 = vsel %vm1761, %v1745, %v1777
    %v1794 = vsel %vm1762, %v1746, %v1778
    %v1795 = vsel %vm1763, %v1747, %v1779
    %v1796 = vsel %vm1764, %v1748, %v1780
    %v1797 = vsel %vm1765, %v1749, %v1781
    %v1798 = vsel %vm1766, %v1750, %v1782
    %v1799 = vsel %vm1767, %v1751, %v1783
    %v1800 = vsel %vm1768, %v1752, %v1784
    %v1801 = vsel %vm1769, %v1753, %v1785
    %v1802 = vsel %vm1770, %v1754, %v1786
    %v1803 = vsel %vm1771, %v1755, %v1787
    %v1804 = vsel %vm1772, %v1756, %v1788
    %v1805 = vpack.c.bf16 %v1791, %v1789
    %v1806 = vpack.c.bf16 %v1792, %v1790
    %v1807 = vpack.c.bf16 %v1795, %v1793
    %v1808 = vpack.c.bf16 %v1796, %v1794
    %v1809 = vpack.c.bf16 %v1799, %v1797
    %v1810 = vpack.c.bf16 %v1800, %v1798
    %v1811 = vpack.c.bf16 %v1803, %v1801
    %v1812 = vpack.c.bf16 %v1804, %v1802
    %v1813 = vld [vmem:[#allocation4] sm:$0xf]
    %v1814 = vld [vmem:[#allocation4 + $0x4] sm:$0xf]
    %v1815 = vld [vmem:[#allocation4 + $0x8] sm:$0xf]
    %v1816 = vld [vmem:[#allocation4 + $0xc] sm:$0xf]
    %v1821 = vunpack.c.l.b16 %v1813
    %v1822 = vunpack.c.l.b16 %v1814
    %v1823 = vunpack.c.l.b16 %v1815
    %v1824 = vunpack.c.l.b16 %v1816
    %v1825 = vpack.c.b16 %v1822, %v1821
    %v1826 = vpack.c.b16 %v1824, %v1823
    %v1828 = vsel %vm718, %v1825, 0
    %v1831 = vsel %vm718, %v1826, 0
    %1833 = vmatprep.subr.bf16.mxu0 %v1806
    %1834 = vmatpush1.bf16.msra.mxu0 %v1805
    %1835 = vmatprep.subr.bf16.mxu0 %v1808
    %1836 = vmatpush1.bf16.msra.mxu0 %v1807
    %1837 = vmatprep.subr.bf16.mxu0 %v1810
    %1838 = vmatpush1.bf16.msra.mxu0 %v1809
    %1839 = vmatprep.subr.bf16.mxu0 %v1812
    %1840 = vmatpush1.bf16.msra.mxu0 %v1811
    %1841 = vmatprep.subr.bf16.mxu0 0
    %1842 = vmatpush1.bf16.msra.mxu0 0
    %1843 = vmatprep.subr.bf16.mxu0 0
    %1844 = vmatpush1.bf16.msra.mxu0 0
    %1845 = vmatprep.subr.bf16.mxu0 0
    %1846 = vmatpush1.bf16.msra.mxu0 0
    %1847 = vmatprep.subr.bf16.mxu0 0
    %1848 = vmatpush1.bf16.msra.mxu0 0
    %1849 = vmatprep.subr.bf16.mxu0 0
    %1850 = vmatpush1.bf16.msra.mxu0 0
    %1851 = vmatprep.subr.bf16.mxu0 0
    %1852 = vmatpush1.bf16.msra.mxu0 0
    %1853 = vmatprep.subr.bf16.mxu0 0
    %1854 = vmatpush1.bf16.msra.mxu0 0
    %1855 = vmatprep.subr.bf16.mxu0 0
    %1856 = vmatpush1.bf16.msra.mxu0 0
    %1857 = vmatprep.subr.bf16.mxu0 0
    %1858 = vmatpush1.bf16.msra.mxu0 0
    %1859 = vmatprep.subr.bf16.mxu0 0
    %1860 = vmatpush1.bf16.msra.mxu0 0
    %1861 = vmatprep.subr.bf16.mxu0 0
    %1862 = vmatpush1.bf16.msra.mxu0 0
    %1863 = vmatprep.subr.bf16.mxu0 0
    %1864 = vmatpush1.bf16.msra.mxu0 0
    %1865 = vmatprep.mubr.bf16.mxu0 0
    %1866 = vmatmul.mubr.bf16.gmra.mrb[0].mxu0 %v1828
    %v1867 = vpop.f32.mrb[0].mxu0
    %v1868 = vadd.f32 0.0, %v1867
    %v1869 = vpop.f32.mrb[0].mxu0
    %v1870 = vadd.f32 0.0, %v1869
    %v1871 = vpop.f32.mrb[0].mxu0
    %v1872 = vadd.f32 0.0, %v1871
    %v1873 = vpop.f32.mrb[0].mxu0
    %v1874 = vadd.f32 0.0, %v1873
    %1875 = vmatprep.mubr.bf16.mxu0 0
    %1876 = vmatmul.mubr.bf16.gmra.mrb[0].mxu0 %v1831
    %v1877 = vpop.f32.mrb[0].mxu0
    %v1878 = vadd.f32 0.0, %v1877
    %v1879 = vpop.f32.mrb[0].mxu0
    %v1880 = vadd.f32 0.0, %v1879
    %v1881 = vpop.f32.mrb[0].mxu0
    %v1882 = vadd.f32 0.0, %v1881
    %v1883 = vpop.f32.mrb[0].mxu0
    %v1884 = vadd.f32 0.0, %v1883
    %1885 = vdwg.mxu0
    %v1886 = vpack.c.bf16 %v1872, %v1868
    %v1887 = vpack.c.bf16 %v1874, %v1870
    %v1888 = vpack.c.bf16 %v1882, %v1878
    %v1889 = vpack.c.bf16 %v1884, %v1880
    %v1890 = vld [vmem:[%s5] sm:$0xff]
    %v1891 = vld [vmem:[%s5 + $0x8] sm:$0xff]
    %v1892 = vld [vmem:[%s5 + $0x10] sm:$0xff]
    %v1893 = vld [vmem:[%s5 + $0x18] sm:$0xff]
    %v1894 = vld [vmem:[%s5 + $0x20] sm:$0xff]
    %v1895 = vld [vmem:[%s5 + $0x28] sm:$0xff]
    %v1896 = vld [vmem:[%s5 + $0x30] sm:$0xff]
    %v1897 = vld [vmem:[%s5 + $0x38] sm:$0xff]
    %v1898 = vld [vmem:[%s5 + $0x40] sm:$0xff]
    %v1899 = vld [vmem:[%s5 + $0x48] sm:$0xff]
    %v1900 = vld [vmem:[%s5 + $0x50] sm:$0xff]
    %v1901 = vld [vmem:[%s5 + $0x58] sm:$0xff]
    %v1902 = vld [vmem:[%s5 + $0x60] sm:$0xff]
    %v1903 = vld [vmem:[%s5 + $0x68] sm:$0xff]
    %v1904 = vld [vmem:[%s5 + $0x70] sm:$0xff]
    %v1905 = vld [vmem:[%s5 + $0x78] sm:$0xff]
    %v1906 = vld [vmem:[%s5 + $0x80] sm:$0xff]
    %v1907 = vld [vmem:[%s5 + $0x88] sm:$0xff]
    %v1908 = vld [vmem:[%s5 + $0x90] sm:$0xff]
    %v1909 = vld [vmem:[%s5 + $0x98] sm:$0xff]
    %v1910 = vld [vmem:[%s5 + $0xa0] sm:$0xff]
    %v1911 = vld [vmem:[%s5 + $0xa8] sm:$0xff]
    %v1912 = vld [vmem:[%s5 + $0xb0] sm:$0xff]
    %v1913 = vld [vmem:[%s5 + $0xb8] sm:$0xff]
    %v1914 = vld [vmem:[%s5 + $0xc0] sm:$0xff]
    %v1915 = vld [vmem:[%s5 + $0xc8] sm:$0xff]
    %v1916 = vld [vmem:[%s5 + $0xd0] sm:$0xff]
    %v1917 = vld [vmem:[%s5 + $0xd8] sm:$0xff]
    %v1918 = vld [vmem:[%s5 + $0xe0] sm:$0xff]
    %v1919 = vld [vmem:[%s5 + $0xe8] sm:$0xff]
    %v1920 = vld [vmem:[%s5 + $0xf0] sm:$0xff]
    %v1921 = vld [vmem:[%s5 + $0xf8] sm:$0xff]
    %s1922 = scalar_lea.vmem [#allocation4], 16
    %v1923 = vld [vmem:[%s1922] sm:$0xf]
    %v1924 = vld [vmem:[%s1922 + $0x4] sm:$0xf]
    %v1925 = vld [vmem:[%s1922 + $0x8] sm:$0xf]
    %v1926 = vld [vmem:[%s1922 + $0xc] sm:$0xf]
    %v1931 = vunpack.c.l.b16 %v1923
    %v1932 = vunpack.c.l.b16 %v1924
    %v1933 = vunpack.c.l.b16 %v1925
    %v1934 = vunpack.c.l.b16 %v1926
    %v1935 = vpack.c.b16 %v1932, %v1931
    %v1936 = vpack.c.b16 %v1934, %v1933
    %v1938 = vsel %vm718, %v1935, 0
    %v1941 = vsel %vm718, %v1936, 0
    %1943 = vmatprep.subr.bf16.mxu0 %v1806
    %1944 = vmatpush1.bf16.msra.mxu0 %v1805
    %1945 = vmatprep.subr.bf16.mxu0 %v1808
    %1946 = vmatpush1.bf16.msra.mxu0 %v1807
    %1947 = vmatprep.subr.bf16.mxu0 %v1810
    %1948 = vmatpush1.bf16.msra.mxu0 %v1809
    %1949 = vmatprep.subr.bf16.mxu0 %v1812
    %1950 = vmatpush1.bf16.msra.mxu0 %v1811
    %1951 = vmatprep.subr.bf16.mxu0 0
    %1952 = vmatpush1.bf16.msra.mxu0 0
    %1953 = vmatprep.subr.bf16.mxu0 0
    %1954 = vmatpush1.bf16.msra.mxu0 0
    %1955 = vmatprep.subr.bf16.mxu0 0
    %1956 = vmatpush1.bf16.msra.mxu0 0
    %1957 = vmatprep.subr.bf16.mxu0 0
    %1958 = vmatpush1.bf16.msra.mxu0 0
    %1959 = vmatprep.subr.bf16.mxu0 0
    %1960 = vmatpush1.bf16.msra.mxu0 0
    %1961 = vmatprep.subr.bf16.mxu0 0
    %1962 = vmatpush1.bf16.msra.mxu0 0
    %1963 = vmatprep.subr.bf16.mxu0 0
    %1964 = vmatpush1.bf16.msra.mxu0 0
    %1965 = vmatprep.subr.bf16.mxu0 0
    %1966 = vmatpush1.bf16.msra.mxu0 0
    %1967 = vmatprep.subr.bf16.mxu0 0
    %1968 = vmatpush1.bf16.msra.mxu0 0
    %1969 = vmatprep.subr.bf16.mxu0 0
    %1970 = vmatpush1.bf16.msra.mxu0 0
    %1971 = vmatprep.subr.bf16.mxu0 0
    %1972 = vmatpush1.bf16.msra.mxu0 0
    %1973 = vmatprep.subr.bf16.mxu0 0
    %1974 = vmatpush1.bf16.msra.mxu0 0
    %1975 = vmatprep.mubr.bf16.mxu0 0
    %1976 = vmatmul.mubr.bf16.gmra.mrb[0].mxu0 %v1938
    %v1977 = vpop.f32.mrb[0].mxu0
    %v1978 = vadd.f32 0.0, %v1977
    %v1979 = vpop.f32.mrb[0].mxu0
    %v1980 = vadd.f32 0.0, %v1979
    %v1981 = vpop.f32.mrb[0].mxu0
    %v1982 = vadd.f32 0.0, %v1981
    %v1983 = vpop.f32.mrb[0].mxu0
    %v1984 = vadd.f32 0.0, %v1983
    %1985 = vmatprep.mubr.bf16.mxu0 0
    %1986 = vmatmul.mubr.bf16.gmra.mrb[0].mxu0 %v1941
    %v1987 = vpop.f32.mrb[0].mxu0
    %v1988 = vadd.f32 0.0, %v1987
    %v1989 = vpop.f32.mrb[0].mxu0
    %v1990 = vadd.f32 0.0, %v1989
    %v1991 = vpop.f32.mrb[0].mxu0
    %v1992 = vadd.f32 0.0, %v1991
    %v1993 = vpop.f32.mrb[0].mxu0
    %v1994 = vadd.f32 0.0, %v1993
    %1995 = vdwg.mxu0
    %v1996 = vpack.c.bf16 %v1982, %v1978
    %v1997 = vpack.c.bf16 %v1984, %v1980
    %v1998 = vpack.c.bf16 %v1992, %v1988
    %v1999 = vpack.c.bf16 %v1994, %v1990
    %s2000 = scalar_lea.vmem %s5, 256
    %v2001 = vld [vmem:[%s2000] sm:$0xff]
    %v2002 = vld [vmem:[%s2000 + $0x8] sm:$0xff]
    %v2003 = vld [vmem:[%s2000 + $0x10] sm:$0xff]
    %v2004 = vld [vmem:[%s2000 + $0x18] sm:$0xff]
    %v2005 = vld [vmem:[%s2000 + $0x20] sm:$0xff]
    %v2006 = vld [vmem:[%s2000 + $0x28] sm:$0xff]
    %v2007 = vld [vmem:[%s2000 + $0x30] sm:$0xff]
    %v2008 = vld [vmem:[%s2000 + $0x38] sm:$0xff]
    %v2009 = vld [vmem:[%s2000 + $0x40] sm:$0xff]
    %v2010 = vld [vmem:[%s2000 + $0x48] sm:$0xff]
    %v2011 = vld [vmem:[%s2000 + $0x50] sm:$0xff]
    %v2012 = vld [vmem:[%s2000 + $0x58] sm:$0xff]
    %v2013 = vld [vmem:[%s2000 + $0x60] sm:$0xff]
    %v2014 = vld [vmem:[%s2000 + $0x68] sm:$0xff]
    %v2015 = vld [vmem:[%s2000 + $0x70] sm:$0xff]
    %v2016 = vld [vmem:[%s2000 + $0x78] sm:$0xff]
    %v2017 = vld [vmem:[%s2000 + $0x80] sm:$0xff]
    %v2018 = vld [vmem:[%s2000 + $0x88] sm:$0xff]
    %v2019 = vld [vmem:[%s2000 + $0x90] sm:$0xff]
    %v2020 = vld [vmem:[%s2000 + $0x98] sm:$0xff]
    %v2021 = vld [vmem:[%s2000 + $0xa0] sm:$0xff]
    %v2022 = vld [vmem:[%s2000 + $0xa8] sm:$0xff]
    %v2023 = vld [vmem:[%s2000 + $0xb0] sm:$0xff]
    %v2024 = vld [vmem:[%s2000 + $0xb8] sm:$0xff]
    %v2025 = vld [vmem:[%s2000 + $0xc0] sm:$0xff]
    %v2026 = vld [vmem:[%s2000 + $0xc8] sm:$0xff]
    %v2027 = vld [vmem:[%s2000 + $0xd0] sm:$0xff]
    %v2028 = vld [vmem:[%s2000 + $0xd8] sm:$0xff]
    %v2029 = vld [vmem:[%s2000 + $0xe0] sm:$0xff]
    %v2030 = vld [vmem:[%s2000 + $0xe8] sm:$0xff]
    %v2031 = vld [vmem:[%s2000 + $0xf0] sm:$0xff]
    %v2032 = vld [vmem:[%s2000 + $0xf8] sm:$0xff]
    %v2065 = vunpack.c.l.b16 %v2001
    %v2066 = vunpack.c.h.b16 %v2001
    %v2067 = vunpack.c.l.b16 %v2002
    %v2068 = vunpack.c.h.b16 %v2002
    %v2069 = vunpack.c.l.b16 %v2003
    %v2070 = vunpack.c.h.b16 %v2003
    %v2071 = vunpack.c.l.b16 %v2004
    %v2072 = vunpack.c.h.b16 %v2004
    %v2073 = vunpack.c.l.b16 %v2005
    %v2074 = vunpack.c.h.b16 %v2005
    %v2075 = vunpack.c.l.b16 %v2006
    %v2076 = vunpack.c.h.b16 %v2006
    %v2077 = vunpack.c.l.b16 %v2007
    %v2078 = vunpack.c.h.b16 %v2007
    %v2079 = vunpack.c.l.b16 %v2008
    %v2080 = vunpack.c.h.b16 %v2008
    %v2081 = vunpack.c.l.b16 %v2009
    %v2082 = vunpack.c.h.b16 %v2009
    %v2083 = vunpack.c.l.b16 %v2010
    %v2084 = vunpack.c.h.b16 %v2010
    %v2085 = vunpack.c.l.b16 %v2011
    %v2086 = vunpack.c.h.b16 %v2011
    %v2087 = vunpack.c.l.b16 %v2012
    %v2088 = vunpack.c.h.b16 %v2012
    %v2089 = vunpack.c.l.b16 %v2013
    %v2090 = vunpack.c.h.b16 %v2013
    %v2091 = vunpack.c.l.b16 %v2014
    %v2092 = vunpack.c.h.b16 %v2014
    %v2093 = vunpack.c.l.b16 %v2015
    %v2094 = vunpack.c.h.b16 %v2015
    %v2095 = vunpack.c.l.b16 %v2016
    %v2096 = vunpack.c.h.b16 %v2016
    %v2097 = vunpack.c.l.b16 %v2017
    %v2098 = vunpack.c.h.b16 %v2017
    %v2099 = vunpack.c.l.b16 %v2018
    %v2100 = vunpack.c.h.b16 %v2018
    %v2101 = vunpack.c.l.b16 %v2019
    %v2102 = vunpack.c.h.b16 %v2019
    %v2103 = vunpack.c.l.b16 %v2020
    %v2104 = vunpack.c.h.b16 %v2020
    %v2105 = vunpack.c.l.b16 %v2021
    %v2106 = vunpack.c.h.b16 %v2021
    %v2107 = vunpack.c.l.b16 %v2022
    %v2108 = vunpack.c.h.b16 %v2022
    %v2109 = vunpack.c.l.b16 %v2023
    %v2110 = vunpack.c.h.b16 %v2023
    %v2111 = vunpack.c.l.b16 %v2024
    %v2112 = vunpack.c.h.b16 %v2024
    %v2113 = vunpack.c.l.b16 %v2025
    %v2114 = vunpack.c.h.b16 %v2025
    %v2115 = vunpack.c.l.b16 %v2026
    %v2116 = vunpack.c.h.b16 %v2026
    %v2117 = vunpack.c.l.b16 %v2027
    %v2118 = vunpack.c.h.b16 %v2027
    %v2119 = vunpack.c.l.b16 %v2028
    %v2120 = vunpack.c.h.b16 %v2028
    %v2121 = vunpack.c.l.b16 %v2029
    %v2122 = vunpack.c.h.b16 %v2029
    %v2123 = vunpack.c.l.b16 %v2030
    %v2124 = vunpack.c.h.b16 %v2030
    %v2125 = vunpack.c.l.b16 %v2031
    %v2126 = vunpack.c.h.b16 %v2031
    %v2127 = vunpack.c.l.b16 %v2032
    %v2128 = vunpack.c.h.b16 %v2032
    %v2129 = vpack.c.b16 %v2067, %v2065
    %v2130 = vpack.c.b16 %v2068, %v2066
    %v2131 = vpack.c.b16 %v2071, %v2069
    %v2132 = vpack.c.b16 %v2072, %v2070
    %v2133 = vpack.c.b16 %v2075, %v2073
    %v2134 = vpack.c.b16 %v2076, %v2074
    %v2135 = vpack.c.b16 %v2079, %v2077
    %v2136 = vpack.c.b16 %v2080, %v2078
    %v2137 = vpack.c.b16 %v2083, %v2081
    %v2138 = vpack.c.b16 %v2084, %v2082
    %v2139 = vpack.c.b16 %v2087, %v2085
    %v2140 = vpack.c.b16 %v2088, %v2086
    %v2141 = vpack.c.b16 %v2091, %v2089
    %v2142 = vpack.c.b16 %v2092, %v2090
    %v2143 = vpack.c.b16 %v2095, %v2093
    %v2144 = vpack.c.b16 %v2096, %v2094
    %v2145 = vpack.c.b16 %v2099, %v2097
    %v2146 = vpack.c.b16 %v2100, %v2098
    %v2147 = vpack.c.b16 %v2103, %v2101
    %v2148 = vpack.c.b16 %v2104, %v2102
    %v2149 = vpack.c.b16 %v2107, %v2105
    %v2150 = vpack.c.b16 %v2108, %v2106
    %v2151 = vpack.c.b16 %v2111, %v2109
    %v2152 = vpack.c.b16 %v2112, %v2110
    %v2153 = vpack.c.b16 %v2115, %v2113
    %v2154 = vpack.c.b16 %v2116, %v2114
    %v2155 = vpack.c.b16 %v2119, %v2117
    %v2156 = vpack.c.b16 %v2120, %v2118
    %v2157 = vpack.c.b16 %v2123, %v2121
    %v2158 = vpack.c.b16 %v2124, %v2122
    %v2159 = vpack.c.b16 %v2127, %v2125
    %v2160 = vpack.c.b16 %v2128, %v2126
    %2193 = vmatprep.subr.bf16.mxu0 %v2130
    %2194 = vmatpush1.bf16.msra.mxu0 %v2129
    %2195 = vmatprep.subr.bf16.mxu0 %v2132
    %2196 = vmatpush1.bf16.msra.mxu0 %v2131
    %2197 = vmatprep.subr.bf16.mxu0 %v2134
    %2198 = vmatpush1.bf16.msra.mxu0 %v2133
    %2199 = vmatprep.subr.bf16.mxu0 %v2136
    %2200 = vmatpush1.bf16.msra.mxu0 %v2135
    %2201 = vmatprep.subr.bf16.mxu0 %v2138
    %2202 = vmatpush1.bf16.msra.mxu0 %v2137
    %2203 = vmatprep.subr.bf16.mxu0 %v2140
    %2204 = vmatpush1.bf16.msra.mxu0 %v2139
    %2205 = vmatprep.subr.bf16.mxu0 %v2142
    %2206 = vmatpush1.bf16.msra.mxu0 %v2141
    %2207 = vmatprep.subr.bf16.mxu0 %v2144
    %2208 = vmatpush1.bf16.msra.mxu0 %v2143
    %2209 = vmatprep.subr.bf16.mxu0 %v2146
    %2210 = vmatpush1.bf16.msra.mxu0 %v2145
    %2211 = vmatprep.subr.bf16.mxu0 %v2148
    %2212 = vmatpush1.bf16.msra.mxu0 %v2147
    %2213 = vmatprep.subr.bf16.mxu0 %v2150
    %2214 = vmatpush1.bf16.msra.mxu0 %v2149
    %2215 = vmatprep.subr.bf16.mxu0 %v2152
    %2216 = vmatpush1.bf16.msra.mxu0 %v2151
    %2217 = vmatprep.subr.bf16.mxu0 %v2154
    %2218 = vmatpush1.bf16.msra.mxu0 %v2153
    %2219 = vmatprep.subr.bf16.mxu0 %v2156
    %2220 = vmatpush1.bf16.msra.mxu0 %v2155
    %2221 = vmatprep.subr.bf16.mxu0 %v2158
    %2222 = vmatpush1.bf16.msra.mxu0 %v2157
    %2223 = vmatprep.subr.bf16.mxu0 %v2160
    %2224 = vmatpush1.bf16.msra.mxu0 %v2159
    %2225 = vmatprep.mubr.bf16.mxu0 %v1997
    %2226 = vmatmul.mubr.bf16.gmra.mrb[0].mxu0 %v1996
    %v2227 = vpop.f32.mrb[0].mxu0
    %v2228 = vadd.f32 0.0, %v2227
    %v2229 = vpop.f32.mrb[0].mxu0
    %v2230 = vadd.f32 0.0, %v2229
    %v2231 = vpop.f32.mrb[0].mxu0
    %v2232 = vadd.f32 0.0, %v2231
    %v2233 = vpop.f32.mrb[0].mxu0
    %v2234 = vadd.f32 0.0, %v2233
    %2235 = vmatprep.mubr.bf16.mxu0 %v1999
    %2236 = vmatmul.mubr.bf16.gmra.mrb[0].mxu0 %v1998
    %v2237 = vpop.f32.mrb[0].mxu0
    %v2238 = vadd.f32 0.0, %v2237
    %v2239 = vpop.f32.mrb[0].mxu0
    %v2240 = vadd.f32 0.0, %v2239
    %v2241 = vpop.f32.mrb[0].mxu0
    %v2242 = vadd.f32 0.0, %v2241
    %v2243 = vpop.f32.mrb[0].mxu0
    %v2244 = vadd.f32 0.0, %v2243
    %2245 = vdwg.mxu0
    %v2278 = vunpack.c.l.b16 %v1890
    %v2279 = vunpack.c.h.b16 %v1890
    %v2280 = vunpack.c.l.b16 %v1891
    %v2281 = vunpack.c.h.b16 %v1891
    %v2282 = vunpack.c.l.b16 %v1892
    %v2283 = vunpack.c.h.b16 %v1892
    %v2284 = vunpack.c.l.b16 %v1893
    %v2285 = vunpack.c.h.b16 %v1893
    %v2286 = vunpack.c.l.b16 %v1894
    %v2287 = vunpack.c.h.b16 %v1894
    %v2288 = vunpack.c.l.b16 %v1895
    %v2289 = vunpack.c.h.b16 %v1895
    %v2290 = vunpack.c.l.b16 %v1896
    %v2291 = vunpack.c.h.b16 %v1896
    %v2292 = vunpack.c.l.b16 %v1897
    %v2293 = vunpack.c.h.b16 %v1897
    %v2294 = vunpack.c.l.b16 %v1898
    %v2295 = vunpack.c.h.b16 %v1898
    %v2296 = vunpack.c.l.b16 %v1899
    %v2297 = vunpack.c.h.b16 %v1899
    %v2298 = vunpack.c.l.b16 %v1900
    %v2299 = vunpack.c.h.b16 %v1900
    %v2300 = vunpack.c.l.b16 %v1901
    %v2301 = vunpack.c.h.b16 %v1901
    %v2302 = vunpack.c.l.b16 %v1902
    %v2303 = vunpack.c.h.b16 %v1902
    %v2304 = vunpack.c.l.b16 %v1903
    %v2305 = vunpack.c.h.b16 %v1903
    %v2306 = vunpack.c.l.b16 %v1904
    %v2307 = vunpack.c.h.b16 %v1904
    %v2308 = vunpack.c.l.b16 %v1905
    %v2309 = vunpack.c.h.b16 %v1905
    %v2310 = vunpack.c.l.b16 %v1906
    %v2311 = vunpack.c.h.b16 %v1906
    %v2312 = vunpack.c.l.b16 %v1907
    %v2313 = vunpack.c.h.b16 %v1907
    %v2314 = vunpack.c.l.b16 %v1908
    %v2315 = vunpack.c.h.b16 %v1908
    %v2316 = vunpack.c.l.b16 %v1909
    %v2317 = vunpack.c.h.b16 %v1909
    %v2318 = vunpack.c.l.b16 %v1910
    %v2319 = vunpack.c.h.b16 %v1910
    %v2320 = vunpack.c.l.b16 %v1911
    %v2321 = vunpack.c.h.b16 %v1911
    %v2322 = vunpack.c.l.b16 %v1912
    %v2323 = vunpack.c.h.b16 %v1912
    %v2324 = vunpack.c.l.b16 %v1913
    %v2325 = vunpack.c.h.b16 %v1913
    %v2326 = vunpack.c.l.b16 %v1914
    %v2327 = vunpack.c.h.b16 %v1914
    %v2328 = vunpack.c.l.b16 %v1915
    %v2329 = vunpack.c.h.b16 %v1915
    %v2330 = vunpack.c.l.b16 %v1916
    %v2331 = vunpack.c.h.b16 %v1916
    %v2332 = vunpack.c.l.b16 %v1917
    %v2333 = vunpack.c.h.b16 %v1917
    %v2334 = vunpack.c.l.b16 %v1918
    %v2335 = vunpack.c.h.b16 %v1918
    %v2336 = vunpack.c.l.b16 %v1919
    %v2337 = vunpack.c.h.b16 %v1919
    %v2338 = vunpack.c.l.b16 %v1920
    %v2339 = vunpack.c.h.b16 %v1920
    %v2340 = vunpack.c.l.b16 %v1921
    %v2341 = vunpack.c.h.b16 %v1921
    %v2342 = vpack.c.b16 %v2280, %v2278
    %v2343 = vpack.c.b16 %v2281, %v2279
    %v2344 = vpack.c.b16 %v2284, %v2282
    %v2345 = vpack.c.b16 %v2285, %v2283
    %v2346 = vpack.c.b16 %v2288, %v2286
    %v2347 = vpack.c.b16 %v2289, %v2287
    %v2348 = vpack.c.b16 %v2292, %v2290
    %v2349 = vpack.c.b16 %v2293, %v2291
    %v2350 = vpack.c.b16 %v2296, %v2294
    %v2351 = vpack.c.b16 %v2297, %v2295
    %v2352 = vpack.c.b16 %v2300, %v2298
    %v2353 = vpack.c.b16 %v2301, %v2299
    %v2354 = vpack.c.b16 %v2304, %v2302
    %v2355 = vpack.c.b16 %v2305, %v2303
    %v2356 = vpack.c.b16 %v2308, %v2306
    %v2357 = vpack.c.b16 %v2309, %v2307
    %v2358 = vpack.c.b16 %v2312, %v2310
    %v2359 = vpack.c.b16 %v2313, %v2311
    %v2360 = vpack.c.b16 %v2316, %v2314
    %v2361 = vpack.c.b16 %v2317, %v2315
    %v2362 = vpack.c.b16 %v2320, %v2318
    %v2363 = vpack.c.b16 %v2321, %v2319
    %v2364 = vpack.c.b16 %v2324, %v2322
    %v2365 = vpack.c.b16 %v2325, %v2323
    %v2366 = vpack.c.b16 %v2328, %v2326
    %v2367 = vpack.c.b16 %v2329, %v2327
    %v2368 = vpack.c.b16 %v2332, %v2330
    %v2369 = vpack.c.b16 %v2333, %v2331
    %v2370 = vpack.c.b16 %v2336, %v2334
    %v2371 = vpack.c.b16 %v2337, %v2335
    %v2372 = vpack.c.b16 %v2340, %v2338
    %v2373 = vpack.c.b16 %v2341, %v2339
    %2406 = vmatprep.subr.bf16.mxu0 %v2343
    %2407 = vmatpush1.bf16.msra.mxu0 %v2342
    %2408 = vmatprep.subr.bf16.mxu0 %v2345
    %2409 = vmatpush1.bf16.msra.mxu0 %v2344
    %2410 = vmatprep.subr.bf16.mxu0 %v2347
    %2411 = vmatpush1.bf16.msra.mxu0 %v2346
    %2412 = vmatprep.subr.bf16.mxu0 %v2349
    %2413 = vmatpush1.bf16.msra.mxu0 %v2348
    %2414 = vmatprep.subr.bf16.mxu0 %v2351
    %2415 = vmatpush1.bf16.msra.mxu0 %v2350
    %2416 = vmatprep.subr.bf16.mxu0 %v2353
    %2417 = vmatpush1.bf16.msra.mxu0 %v2352
    %2418 = vmatprep.subr.bf16.mxu0 %v2355
    %2419 = vmatpush1.bf16.msra.mxu0 %v2354
    %2420 = vmatprep.subr.bf16.mxu0 %v2357
    %2421 = vmatpush1.bf16.msra.mxu0 %v2356
    %2422 = vmatprep.subr.bf16.mxu0 %v2359
    %2423 = vmatpush1.bf16.msra.mxu0 %v2358
    %2424 = vmatprep.subr.bf16.mxu0 %v2361
    %2425 = vmatpush1.bf16.msra.mxu0 %v2360
    %2426 = vmatprep.subr.bf16.mxu0 %v2363
    %2427 = vmatpush1.bf16.msra.mxu0 %v2362
    %2428 = vmatprep.subr.bf16.mxu0 %v2365
    %2429 = vmatpush1.bf16.msra.mxu0 %v2364
    %2430 = vmatprep.subr.bf16.mxu0 %v2367
    %2431 = vmatpush1.bf16.msra.mxu0 %v2366
    %2432 = vmatprep.subr.bf16.mxu0 %v2369
    %2433 = vmatpush1.bf16.msra.mxu0 %v2368
    %2434 = vmatprep.subr.bf16.mxu0 %v2371
    %2435 = vmatpush1.bf16.msra.mxu0 %v2370
    %2436 = vmatprep.subr.bf16.mxu0 %v2373
    %2437 = vmatpush1.bf16.msra.mxu0 %v2372
    %2438 = vmatprep.mubr.bf16.mxu0 %v1887
    %2439 = vmatmul.mubr.bf16.gmra.mrb[0].mxu0 %v1886
    %v2440 = vpop.f32.mrb[0].mxu0
    %v2441 = vadd.f32 %v2228, %v2440
    %v2442 = vpop.f32.mrb[0].mxu0
    %v2443 = vadd.f32 %v2230, %v2442
    %v2444 = vpop.f32.mrb[0].mxu0
    %v2445 = vadd.f32 %v2232, %v2444
    %v2446 = vpop.f32.mrb[0].mxu0
    %v2447 = vadd.f32 %v2234, %v2446
    %2448 = vmatprep.mubr.bf16.mxu0 %v1889
    %2449 = vmatmul.mubr.bf16.gmra.mrb[0].mxu0 %v1888
    %v2450 = vpop.f32.mrb[0].mxu0
    %v2451 = vadd.f32 %v2238, %v2450
    %v2452 = vpop.f32.mrb[0].mxu0
    %v2453 = vadd.f32 %v2240, %v2452
    %v2454 = vpop.f32.mrb[0].mxu0
    %v2455 = vadd.f32 %v2242, %v2454
    %v2456 = vpop.f32.mrb[0].mxu0
    %v2457 = vadd.f32 %v2244, %v2456
    %2458 = vdwg.mxu0
    %s2459 = scalar_lea.vmem [#allocation4], 32
    %v2460 = vld [vmem:[%s2459] sm:$0xf]
    %v2461 = vld [vmem:[%s2459 + $0x4] sm:$0xf]
    %v2462 = vld [vmem:[%s2459 + $0x8] sm:$0xf]
    %v2463 = vld [vmem:[%s2459 + $0xc] sm:$0xf]
    %v2468 = vunpack.c.l.b16 %v2460
    %v2469 = vunpack.c.l.b16 %v2461
    %v2470 = vunpack.c.l.b16 %v2462
    %v2471 = vunpack.c.l.b16 %v2463
    %v2472 = vpack.c.b16 %v2469, %v2468
    %v2473 = vpack.c.b16 %v2471, %v2470
    %v2475 = vsel %vm718, %v2472, 0
    %v2478 = vsel %vm718, %v2473, 0
    %2480 = vmatprep.subr.bf16.mxu0 %v1806
    %2481 = vmatpush1.bf16.msra.mxu0 %v1805
    %2482 = vmatprep.subr.bf16.mxu0 %v1808
    %2483 = vmatpush1.bf16.msra.mxu0 %v1807
    %2484 = vmatprep.subr.bf16.mxu0 %v1810
    %2485 = vmatpush1.bf16.msra.mxu0 %v1809
    %2486 = vmatprep.subr.bf16.mxu0 %v1812
    %2487 = vmatpush1.bf16.msra.mxu0 %v1811
    %2488 = vmatprep.subr.bf16.mxu0 0
    %2489 = vmatpush1.bf16.msra.mxu0 0
    %2490 = vmatprep.subr.bf16.mxu0 0
    %2491 = vmatpush1.bf16.msra.mxu0 0
    %2492 = vmatprep.subr.bf16.mxu0 0
    %2493 = vmatpush1.bf16.msra.mxu0 0
    %2494 = vmatprep.subr.bf16.mxu0 0
    %2495 = vmatpush1.bf16.msra.mxu0 0
    %2496 = vmatprep.subr.bf16.mxu0 0
    %2497 = vmatpush1.bf16.msra.mxu0 0
    %2498 = vmatprep.subr.bf16.mxu0 0
    %2499 = vmatpush1.bf16.msra.mxu0 0
    %2500 = vmatprep.subr.bf16.mxu0 0
    %2501 = vmatpush1.bf16.msra.mxu0 0
    %2502 = vmatprep.subr.bf16.mxu0 0
    %2503 = vmatpush1.bf16.msra.mxu0 0
    %2504 = vmatprep.subr.bf16.mxu0 0
    %2505 = vmatpush1.bf16.msra.mxu0 0
    %2506 = vmatprep.subr.bf16.mxu0 0
    %2507 = vmatpush1.bf16.msra.mxu0 0
    %2508 = vmatprep.subr.bf16.mxu0 0
    %2509 = vmatpush1.bf16.msra.mxu0 0
    %2510 = vmatprep.subr.bf16.mxu0 0
    %2511 = vmatpush1.bf16.msra.mxu0 0
    %2512 = vmatprep.mubr.bf16.mxu0 0
    %2513 = vmatmul.mubr.bf16.gmra.mrb[0].mxu0 %v2475
    %v2514 = vpop.f32.mrb[0].mxu0
    %v2515 = vadd.f32 0.0, %v2514
    %v2516 = vpop.f32.mrb[0].mxu0
    %v2517 = vadd.f32 0.0, %v2516
    %v2518 = vpop.f32.mrb[0].mxu0
    %v2519 = vadd.f32 0.0, %v2518
    %v2520 = vpop.f32.mrb[0].mxu0
    %v2521 = vadd.f32 0.0, %v2520
    %2522 = vmatprep.mubr.bf16.mxu0 0
    %2523 = vmatmul.mubr.bf16.gmra.mrb[0].mxu0 %v2478
    %v2524 = vpop.f32.mrb[0].mxu0
    %v2525 = vadd.f32 0.0, %v2524
    %v2526 = vpop.f32.mrb[0].mxu0
    %v2527 = vadd.f32 0.0, %v2526
    %v2528 = vpop.f32.mrb[0].mxu0
    %v2529 = vadd.f32 0.0, %v2528
    %v2530 = vpop.f32.mrb[0].mxu0
    %v2531 = vadd.f32 0.0, %v2530
    %2532 = vdwg.mxu0
    %v2533 = vpack.c.bf16 %v2519, %v2515
    %v2534 = vpack.c.bf16 %v2521, %v2517
    %v2535 = vpack.c.bf16 %v2529, %v2525
    %v2536 = vpack.c.bf16 %v2531, %v2527
    %s2537 = scalar_lea.vmem %s5, 512
    %v2538 = vld [vmem:[%s2537] sm:$0xff]
    %v2539 = vld [vmem:[%s2537 + $0x8] sm:$0xff]
    %v2540 = vld [vmem:[%s2537 + $0x10] sm:$0xff]
    %v2541 = vld [vmem:[%s2537 + $0x18] sm:$0xff]
    %v2542 = vld [vmem:[%s2537 + $0x20] sm:$0xff]
    %v2543 = vld [vmem:[%s2537 + $0x28] sm:$0xff]
    %v2544 = vld [vmem:[%s2537 + $0x30] sm:$0xff]
    %v2545 = vld [vmem:[%s2537 + $0x38] sm:$0xff]
    %v2546 = vld [vmem:[%s2537 + $0x40] sm:$0xff]
    %v2547 = vld [vmem:[%s2537 + $0x48] sm:$0xff]
    %v2548 = vld [vmem:[%s2537 + $0x50] sm:$0xff]
    %v2549 = vld [vmem:[%s2537 + $0x58] sm:$0xff]
    %v2550 = vld [vmem:[%s2537 + $0x60] sm:$0xff]
    %v2551 = vld [vmem:[%s2537 + $0x68] sm:$0xff]
    %v2552 = vld [vmem:[%s2537 + $0x70] sm:$0xff]
    %v2553 = vld [vmem:[%s2537 + $0x78] sm:$0xff]
    %v2554 = vld [vmem:[%s2537 + $0x80] sm:$0xff]
    %v2555 = vld [vmem:[%s2537 + $0x88] sm:$0xff]
    %v2556 = vld [vmem:[%s2537 + $0x90] sm:$0xff]
    %v2557 = vld [vmem:[%s2537 + $0x98] sm:$0xff]
    %v2558 = vld [vmem:[%s2537 + $0xa0] sm:$0xff]
    %v2559 = vld [vmem:[%s2537 + $0xa8] sm:$0xff]
    %v2560 = vld [vmem:[%s2537 + $0xb0] sm:$0xff]
    %v2561 = vld [vmem:[%s2537 + $0xb8] sm:$0xff]
    %v2562 = vld [vmem:[%s2537 + $0xc0] sm:$0xff]
    %v2563 = vld [vmem:[%s2537 + $0xc8] sm:$0xff]
    %v2564 = vld [vmem:[%s2537 + $0xd0] sm:$0xff]
    %v2565 = vld [vmem:[%s2537 + $0xd8] sm:$0xff]
    %v2566 = vld [vmem:[%s2537 + $0xe0] sm:$0xff]
    %v2567 = vld [vmem:[%s2537 + $0xe8] sm:$0xff]
    %v2568 = vld [vmem:[%s2537 + $0xf0] sm:$0xff]
    %v2569 = vld [vmem:[%s2537 + $0xf8] sm:$0xff]
    %v2602 = vunpack.c.l.b16 %v2538
    %v2603 = vunpack.c.h.b16 %v2538
    %v2604 = vunpack.c.l.b16 %v2539
    %v2605 = vunpack.c.h.b16 %v2539
    %v2606 = vunpack.c.l.b16 %v2540
    %v2607 = vunpack.c.h.b16 %v2540
    %v2608 = vunpack.c.l.b16 %v2541
    %v2609 = vunpack.c.h.b16 %v2541
    %v2610 = vunpack.c.l.b16 %v2542
    %v2611 = vunpack.c.h.b16 %v2542
    %v2612 = vunpack.c.l.b16 %v2543
    %v2613 = vunpack.c.h.b16 %v2543
    %v2614 = vunpack.c.l.b16 %v2544
    %v2615 = vunpack.c.h.b16 %v2544
    %v2616 = vunpack.c.l.b16 %v2545
    %v2617 = vunpack.c.h.b16 %v2545
    %v2618 = vunpack.c.l.b16 %v2546
    %v2619 = vunpack.c.h.b16 %v2546
    %v2620 = vunpack.c.l.b16 %v2547
    %v2621 = vunpack.c.h.b16 %v2547
    %v2622 = vunpack.c.l.b16 %v2548
    %v2623 = vunpack.c.h.b16 %v2548
    %v2624 = vunpack.c.l.b16 %v2549
    %v2625 = vunpack.c.h.b16 %v2549
    %v2626 = vunpack.c.l.b16 %v2550
    %v2627 = vunpack.c.h.b16 %v2550
    %v2628 = vunpack.c.l.b16 %v2551
    %v2629 = vunpack.c.h.b16 %v2551
    %v2630 = vunpack.c.l.b16 %v2552
    %v2631 = vunpack.c.h.b16 %v2552
    %v2632 = vunpack.c.l.b16 %v2553
    %v2633 = vunpack.c.h.b16 %v2553
    %v2634 = vunpack.c.l.b16 %v2554
    %v2635 = vunpack.c.h.b16 %v2554
    %v2636 = vunpack.c.l.b16 %v2555
    %v2637 = vunpack.c.h.b16 %v2555
    %v2638 = vunpack.c.l.b16 %v2556
    %v2639 = vunpack.c.h.b16 %v2556
    %v2640 = vunpack.c.l.b16 %v2557
    %v2641 = vunpack.c.h.b16 %v2557
    %v2642 = vunpack.c.l.b16 %v2558
    %v2643 = vunpack.c.h.b16 %v2558
    %v2644 = vunpack.c.l.b16 %v2559
    %v2645 = vunpack.c.h.b16 %v2559
    %v2646 = vunpack.c.l.b16 %v2560
    %v2647 = vunpack.c.h.b16 %v2560
    %v2648 = vunpack.c.l.b16 %v2561
    %v2649 = vunpack.c.h.b16 %v2561
    %v2650 = vunpack.c.l.b16 %v2562
    %v2651 = vunpack.c.h.b16 %v2562
    %v2652 = vunpack.c.l.b16 %v2563
    %v2653 = vunpack.c.h.b16 %v2563
    %v2654 = vunpack.c.l.b16 %v2564
    %v2655 = vunpack.c.h.b16 %v2564
    %v2656 = vunpack.c.l.b16 %v2565
    %v2657 = vunpack.c.h.b16 %v2565
    %v2658 = vunpack.c.l.b16 %v2566
    %v2659 = vunpack.c.h.b16 %v2566
    %v2660 = vunpack.c.l.b16 %v2567
    %v2661 = vunpack.c.h.b16 %v2567
    %v2662 = vunpack.c.l.b16 %v2568
    %v2663 = vunpack.c.h.b16 %v2568
    %v2664 = vunpack.c.l.b16 %v2569
    %v2665 = vunpack.c.h.b16 %v2569
    %v2666 = vpack.c.b16 %v2604, %v2602
    %v2667 = vpack.c.b16 %v2605, %v2603
    %v2668 = vpack.c.b16 %v2608, %v2606
    %v2669 = vpack.c.b16 %v2609, %v2607
    %v2670 = vpack.c.b16 %v2612, %v2610
    %v2671 = vpack.c.b16 %v2613, %v2611
    %v2672 = vpack.c.b16 %v2616, %v2614
    %v2673 = vpack.c.b16 %v2617, %v2615
    %v2674 = vpack.c.b16 %v2620, %v2618
    %v2675 = vpack.c.b16 %v2621, %v2619
    %v2676 = vpack.c.b16 %v2624, %v2622
    %v2677 = vpack.c.b16 %v2625, %v2623
    %v2678 = vpack.c.b16 %v2628, %v2626
    %v2679 = vpack.c.b16 %v2629, %v2627
    %v2680 = vpack.c.b16 %v2632, %v2630
    %v2681 = vpack.c.b16 %v2633, %v2631
    %v2682 = vpack.c.b16 %v2636, %v2634
    %v2683 = vpack.c.b16 %v2637, %v2635
    %v2684 = vpack.c.b16 %v2640, %v2638
    %v2685 = vpack.c.b16 %v2641, %v2639
    %v2686 = vpack.c.b16 %v2644, %v2642
    %v2687 = vpack.c.b16 %v2645, %v2643
    %v2688 = vpack.c.b16 %v2648, %v2646
    %v2689 = vpack.c.b16 %v2649, %v2647
    %v2690 = vpack.c.b16 %v2652, %v2650
    %v2691 = vpack.c.b16 %v2653, %v2651
    %v2692 = vpack.c.b16 %v2656, %v2654
    %v2693 = vpack.c.b16 %v2657, %v2655
    %v2694 = vpack.c.b16 %v2660, %v2658
    %v2695 = vpack.c.b16 %v2661, %v2659
    %v2696 = vpack.c.b16 %v2664, %v2662
    %v2697 = vpack.c.b16 %v2665, %v2663
    %2730 = vmatprep.subr.bf16.mxu0 %v2667
    %2731 = vmatpush1.bf16.msra.mxu0 %v2666
    %2732 = vmatprep.subr.bf16.mxu0 %v2669
    %2733 = vmatpush1.bf16.msra.mxu0 %v2668
    %2734 = vmatprep.subr.bf16.mxu0 %v2671
    %2735 = vmatpush1.bf16.msra.mxu0 %v2670
    %2736 = vmatprep.subr.bf16.mxu0 %v2673
    %2737 = vmatpush1.bf16.msra.mxu0 %v2672
    %2738 = vmatprep.subr.bf16.mxu0 %v2675
    %2739 = vmatpush1.bf16.msra.mxu0 %v2674
    %2740 = vmatprep.subr.bf16.mxu0 %v2677
    %2741 = vmatpush1.bf16.msra.mxu0 %v2676
    %2742 = vmatprep.subr.bf16.mxu0 %v2679
    %2743 = vmatpush1.bf16.msra.mxu0 %v2678
    %2744 = vmatprep.subr.bf16.mxu0 %v2681
    %2745 = vmatpush1.bf16.msra.mxu0 %v2680
    %2746 = vmatprep.subr.bf16.mxu0 %v2683
    %2747 = vmatpush1.bf16.msra.mxu0 %v2682
    %2748 = vmatprep.subr.bf16.mxu0 %v2685
    %2749 = vmatpush1.bf16.msra.mxu0 %v2684
    %2750 = vmatprep.subr.bf16.mxu0 %v2687
    %2751 = vmatpush1.bf16.msra.mxu0 %v2686
    %2752 = vmatprep.subr.bf16.mxu0 %v2689
    %2753 = vmatpush1.bf16.msra.mxu0 %v2688
    %2754 = vmatprep.subr.bf16.mxu0 %v2691
    %2755 = vmatpush1.bf16.msra.mxu0 %v2690
    %2756 = vmatprep.subr.bf16.mxu0 %v2693
    %2757 = vmatpush1.bf16.msra.mxu0 %v2692
    %2758 = vmatprep.subr.bf16.mxu0 %v2695
    %2759 = vmatpush1.bf16.msra.mxu0 %v2694
    %2760 = vmatprep.subr.bf16.mxu0 %v2697
    %2761 = vmatpush1.bf16.msra.mxu0 %v2696
    %2762 = vmatprep.mubr.bf16.mxu0 %v2534
    %2763 = vmatmul.mubr.bf16.gmra.mrb[0].mxu0 %v2533
    %v2764 = vpop.f32.mrb[0].mxu0
    %v2765 = vadd.f32 0.0, %v2764
    %v2766 = vpop.f32.mrb[0].mxu0
    %v2767 = vadd.f32 0.0, %v2766
    %v2768 = vpop.f32.mrb[0].mxu0
    %v2769 = vadd.f32 0.0, %v2768
    %v2770 = vpop.f32.mrb[0].mxu0
    %v2771 = vadd.f32 0.0, %v2770
    %2772 = vmatprep.mubr.bf16.mxu0 %v2536
    %2773 = vmatmul.mubr.bf16.gmra.mrb[0].mxu0 %v2535
    %v2774 = vpop.f32.mrb[0].mxu0
    %v2775 = vadd.f32 0.0, %v2774
    %v2776 = vpop.f32.mrb[0].mxu0
    %v2777 = vadd.f32 0.0, %v2776
    %v2778 = vpop.f32.mrb[0].mxu0
    %v2779 = vadd.f32 0.0, %v2778
    %v2780 = vpop.f32.mrb[0].mxu0
    %v2781 = vadd.f32 0.0, %v2780
    %2782 = vdwg.mxu0
    %v2783 = vadd.f32 %v2441, %v2765
    %v2784 = vadd.f32 %v2443, %v2767
    %v2785 = vadd.f32 %v2445, %v2769
    %v2786 = vadd.f32 %v2447, %v2771
    %v2787 = vadd.f32 %v2451, %v2775
    %v2788 = vadd.f32 %v2453, %v2777
    %v2789 = vadd.f32 %v2455, %v2779
    %v2790 = vadd.f32 %v2457, %v2781
    %s2791 = scalar_lea.vmem [#allocation4], 48
    %v2792 = vld [vmem:[%s2791] sm:$0xf]
    %v2793 = vld [vmem:[%s2791 + $0x4] sm:$0xf]
    %v2794 = vld [vmem:[%s2791 + $0x8] sm:$0xf]
    %v2795 = vld [vmem:[%s2791 + $0xc] sm:$0xf]
    %v2800 = vunpack.c.l.b16 %v2792
    %v2801 = vunpack.c.l.b16 %v2793
    %v2802 = vunpack.c.l.b16 %v2794
    %v2803 = vunpack.c.l.b16 %v2795
    %v2804 = vpack.c.b16 %v2801, %v2800
    %v2805 = vpack.c.b16 %v2803, %v2802
    %v2807 = vsel %vm718, %v2804, 0
    %v2810 = vsel %vm718, %v2805, 0
    %2812 = vmatprep.subr.bf16.mxu0 %v1806
    %2813 = vmatpush1.bf16.msra.mxu0 %v1805
    %2814 = vmatprep.subr.bf16.mxu0 %v1808
    %2815 = vmatpush1.bf16.msra.mxu0 %v1807
    %2816 = vmatprep.subr.bf16.mxu0 %v1810
    %2817 = vmatpush1.bf16.msra.mxu0 %v1809
    %2818 = vmatprep.subr.bf16.mxu0 %v1812
    %2819 = vmatpush1.bf16.msra.mxu0 %v1811
    %2820 = vmatprep.subr.bf16.mxu0 0
    %2821 = vmatpush1.bf16.msra.mxu0 0
    %2822 = vmatprep.subr.bf16.mxu0 0
    %2823 = vmatpush1.bf16.msra.mxu0 0
    %2824 = vmatprep.subr.bf16.mxu0 0
    %2825 = vmatpush1.bf16.msra.mxu0 0
    %2826 = vmatprep.subr.bf16.mxu0 0
    %2827 = vmatpush1.bf16.msra.mxu0 0
    %2828 = vmatprep.subr.bf16.mxu0 0
    %2829 = vmatpush1.bf16.msra.mxu0 0
    %2830 = vmatprep.subr.bf16.mxu0 0
    %2831 = vmatpush1.bf16.msra.mxu0 0
    %2832 = vmatprep.subr.bf16.mxu0 0
    %2833 = vmatpush1.bf16.msra.mxu0 0
    %2834 = vmatprep.subr.bf16.mxu0 0
    %2835 = vmatpush1.bf16.msra.mxu0 0
    %2836 = vmatprep.subr.bf16.mxu0 0
    %2837 = vmatpush1.bf16.msra.mxu0 0
    %2838 = vmatprep.subr.bf16.mxu0 0
    %2839 = vmatpush1.bf16.msra.mxu0 0
    %2840 = vmatprep.subr.bf16.mxu0 0
    %2841 = vmatpush1.bf16.msra.mxu0 0
    %2842 = vmatprep.subr.bf16.mxu0 0
    %2843 = vmatpush1.bf16.msra.mxu0 0
    %2844 = vmatprep.mubr.bf16.mxu0 0
    %2845 = vmatmul.mubr.bf16.gmra.mrb[0].mxu0 %v2807
    %v2846 = vpop.f32.mrb[0].mxu0
    %v2847 = vadd.f32 0.0, %v2846
    %v2848 = vpop.f32.mrb[0].mxu0
    %v2849 = vadd.f32 0.0, %v2848
    %v2850 = vpop.f32.mrb[0].mxu0
    %v2851 = vadd.f32 0.0, %v2850
    %v2852 = vpop.f32.mrb[0].mxu0
    %v2853 = vadd.f32 0.0, %v2852
    %2854 = vmatprep.mubr.bf16.mxu0 0
    %2855 = vmatmul.mubr.bf16.gmra.mrb[0].mxu0 %v2810
    %v2856 = vpop.f32.mrb[0].mxu0
    %v2857 = vadd.f32 0.0, %v2856
    %v2858 = vpop.f32.mrb[0].mxu0
    %v2859 = vadd.f32 0.0, %v2858
    %v2860 = vpop.f32.mrb[0].mxu0
    %v2861 = vadd.f32 0.0, %v2860
    %v2862 = vpop.f32.mrb[0].mxu0
    %v2863 = vadd.f32 0.0, %v2862
    %2864 = vdwg.mxu0
    %v2865 = vpack.c.bf16 %v2851, %v2847
    %v2866 = vpack.c.bf16 %v2853, %v2849
    %v2867 = vpack.c.bf16 %v2861, %v2857
    %v2868 = vpack.c.bf16 %v2863, %v2859
    %s2869 = scalar_lea.vmem %s5, 768
    %v2870 = vld [vmem:[%s2869] sm:$0xff]
    %v2871 = vld [vmem:[%s2869 + $0x8] sm:$0xff]
    %v2872 = vld [vmem:[%s2869 + $0x10] sm:$0xff]
    %v2873 = vld [vmem:[%s2869 + $0x18] sm:$0xff]
    %v2874 = vld [vmem:[%s2869 + $0x20] sm:$0xff]
    %v2875 = vld [vmem:[%s2869 + $0x28] sm:$0xff]
    %v2876 = vld [vmem:[%s2869 + $0x30] sm:$0xff]
    %v2877 = vld [vmem:[%s2869 + $0x38] sm:$0xff]
    %v2878 = vld [vmem:[%s2869 + $0x40] sm:$0xff]
    %v2879 = vld [vmem:[%s2869 + $0x48] sm:$0xff]
    %v2880 = vld [vmem:[%s2869 + $0x50] sm:$0xff]
    %v2881 = vld [vmem:[%s2869 + $0x58] sm:$0xff]
    %v2882 = vld [vmem:[%s2869 + $0x60] sm:$0xff]
    %v2883 = vld [vmem:[%s2869 + $0x68] sm:$0xff]
    %v2884 = vld [vmem:[%s2869 + $0x70] sm:$0xff]
    %v2885 = vld [vmem:[%s2869 + $0x78] sm:$0xff]
    %v2886 = vld [vmem:[%s2869 + $0x80] sm:$0xff]
    %v2887 = vld [vmem:[%s2869 + $0x88] sm:$0xff]
    %v2888 = vld [vmem:[%s2869 + $0x90] sm:$0xff]
    %v2889 = vld [vmem:[%s2869 + $0x98] sm:$0xff]
    %v2890 = vld [vmem:[%s2869 + $0xa0] sm:$0xff]
    %v2891 = vld [vmem:[%s2869 + $0xa8] sm:$0xff]
    %v2892 = vld [vmem:[%s2869 + $0xb0] sm:$0xff]
    %v2893 = vld [vmem:[%s2869 + $0xb8] sm:$0xff]
    %v2894 = vld [vmem:[%s2869 + $0xc0] sm:$0xff]
    %v2895 = vld [vmem:[%s2869 + $0xc8] sm:$0xff]
    %v2896 = vld [vmem:[%s2869 + $0xd0] sm:$0xff]
    %v2897 = vld [vmem:[%s2869 + $0xd8] sm:$0xff]
    %v2898 = vld [vmem:[%s2869 + $0xe0] sm:$0xff]
    %v2899 = vld [vmem:[%s2869 + $0xe8] sm:$0xff]
    %v2900 = vld [vmem:[%s2869 + $0xf0] sm:$0xff]
    %v2901 = vld [vmem:[%s2869 + $0xf8] sm:$0xff]
    %v2934 = vunpack.c.l.b16 %v2870
    %v2935 = vunpack.c.h.b16 %v2870
    %v2936 = vunpack.c.l.b16 %v2871
    %v2937 = vunpack.c.h.b16 %v2871
    %v2938 = vunpack.c.l.b16 %v2872
    %v2939 = vunpack.c.h.b16 %v2872
    %v2940 = vunpack.c.l.b16 %v2873
    %v2941 = vunpack.c.h.b16 %v2873
    %v2942 = vunpack.c.l.b16 %v2874
    %v2943 = vunpack.c.h.b16 %v2874
    %v2944 = vunpack.c.l.b16 %v2875
    %v2945 = vunpack.c.h.b16 %v2875
    %v2946 = vunpack.c.l.b16 %v2876
    %v2947 = vunpack.c.h.b16 %v2876
    %v2948 = vunpack.c.l.b16 %v2877
    %v2949 = vunpack.c.h.b16 %v2877
    %v2950 = vunpack.c.l.b16 %v2878
    %v2951 = vunpack.c.h.b16 %v2878
    %v2952 = vunpack.c.l.b16 %v2879
    %v2953 = vunpack.c.h.b16 %v2879
    %v2954 = vunpack.c.l.b16 %v2880
    %v2955 = vunpack.c.h.b16 %v2880
    %v2956 = vunpack.c.l.b16 %v2881
    %v2957 = vunpack.c.h.b16 %v2881
    %v2958 = vunpack.c.l.b16 %v2882
    %v2959 = vunpack.c.h.b16 %v2882
    %v2960 = vunpack.c.l.b16 %v2883
    %v2961 = vunpack.c.h.b16 %v2883
    %v2962 = vunpack.c.l.b16 %v2884
    %v2963 = vunpack.c.h.b16 %v2884
    %v2964 = vunpack.c.l.b16 %v2885
    %v2965 = vunpack.c.h.b16 %v2885
    %v2966 = vunpack.c.l.b16 %v2886
    %v2967 = vunpack.c.h.b16 %v2886
    %v2968 = vunpack.c.l.b16 %v2887
    %v2969 = vunpack.c.h.b16 %v2887
    %v2970 = vunpack.c.l.b16 %v2888
    %v2971 = vunpack.c.h.b16 %v2888
    %v2972 = vunpack.c.l.b16 %v2889
    %v2973 = vunpack.c.h.b16 %v2889
    %v2974 = vunpack.c.l.b16 %v2890
    %v2975 = vunpack.c.h.b16 %v2890
    %v2976 = vunpack.c.l.b16 %v2891
    %v2977 = vunpack.c.h.b16 %v2891
    %v2978 = vunpack.c.l.b16 %v2892
    %v2979 = vunpack.c.h.b16 %v2892
    %v2980 = vunpack.c.l.b16 %v2893
    %v2981 = vunpack.c.h.b16 %v2893
    %v2982 = vunpack.c.l.b16 %v2894
    %v2983 = vunpack.c.h.b16 %v2894
    %v2984 = vunpack.c.l.b16 %v2895
    %v2985 = vunpack.c.h.b16 %v2895
    %v2986 = vunpack.c.l.b16 %v2896
    %v2987 = vunpack.c.h.b16 %v2896
    %v2988 = vunpack.c.l.b16 %v2897
    %v2989 = vunpack.c.h.b16 %v2897
    %v2990 = vunpack.c.l.b16 %v2898
    %v2991 = vunpack.c.h.b16 %v2898
    %v2992 = vunpack.c.l.b16 %v2899
    %v2993 = vunpack.c.h.b16 %v2899
    %v2994 = vunpack.c.l.b16 %v2900
    %v2995 = vunpack.c.h.b16 %v2900
    %v2996 = vunpack.c.l.b16 %v2901
    %v2997 = vunpack.c.h.b16 %v2901
    %v2998 = vpack.c.b16 %v2936, %v2934
    %v2999 = vpack.c.b16 %v2937, %v2935
    %v3000 = vpack.c.b16 %v2940, %v2938
    %v3001 = vpack.c.b16 %v2941, %v2939
    %v3002 = vpack.c.b16 %v2944, %v2942
    %v3003 = vpack.c.b16 %v2945, %v2943
    %v3004 = vpack.c.b16 %v2948, %v2946
    %v3005 = vpack.c.b16 %v2949, %v2947
    %v3006 = vpack.c.b16 %v2952, %v2950
    %v3007 = vpack.c.b16 %v2953, %v2951
    %v3008 = vpack.c.b16 %v2956, %v2954
    %v3009 = vpack.c.b16 %v2957, %v2955
    %v3010 = vpack.c.b16 %v2960, %v2958
    %v3011 = vpack.c.b16 %v2961, %v2959
    %v3012 = vpack.c.b16 %v2964, %v2962
    %v3013 = vpack.c.b16 %v2965, %v2963
    %v3014 = vpack.c.b16 %v2968, %v2966
    %v3015 = vpack.c.b16 %v2969, %v2967
    %v3016 = vpack.c.b16 %v2972, %v2970
    %v3017 = vpack.c.b16 %v2973, %v2971
    %v3018 = vpack.c.b16 %v2976, %v2974
    %v3019 = vpack.c.b16 %v2977, %v2975
    %v3020 = vpack.c.b16 %v2980, %v2978
    %v3021 = vpack.c.b16 %v2981, %v2979
    %v3022 = vpack.c.b16 %v2984, %v2982
    %v3023 = vpack.c.b16 %v2985, %v2983
    %v3024 = vpack.c.b16 %v2988, %v2986
    %v3025 = vpack.c.b16 %v2989, %v2987
    %v3026 = vpack.c.b16 %v2992, %v2990
    %v3027 = vpack.c.b16 %v2993, %v2991
    %v3028 = vpack.c.b16 %v2996, %v2994
    %v3029 = vpack.c.b16 %v2997, %v2995
    %3062 = vmatprep.subr.bf16.mxu0 %v2999
    %3063 = vmatpush1.bf16.msra.mxu0 %v2998
    %3064 = vmatprep.subr.bf16.mxu0 %v3001
    %3065 = vmatpush1.bf16.msra.mxu0 %v3000
    %3066 = vmatprep.subr.bf16.mxu0 %v3003
    %3067 = vmatpush1.bf16.msra.mxu0 %v3002
    %3068 = vmatprep.subr.bf16.mxu0 %v3005
    %3069 = vmatpush1.bf16.msra.mxu0 %v3004
    %3070 = vmatprep.subr.bf16.mxu0 %v3007
    %3071 = vmatpush1.bf16.msra.mxu0 %v3006
    %3072 = vmatprep.subr.bf16.mxu0 %v3009
    %3073 = vmatpush1.bf16.msra.mxu0 %v3008
    %3074 = vmatprep.subr.bf16.mxu0 %v3011
    %3075 = vmatpush1.bf16.msra.mxu0 %v3010
    %3076 = vmatprep.subr.bf16.mxu0 %v3013
    %3077 = vmatpush1.bf16.msra.mxu0 %v3012
    %3078 = vmatprep.subr.bf16.mxu0 %v3015
    %3079 = vmatpush1.bf16.msra.mxu0 %v3014
    %3080 = vmatprep.subr.bf16.mxu0 %v3017
    %3081 = vmatpush1.bf16.msra.mxu0 %v3016
    %3082 = vmatprep.subr.bf16.mxu0 %v3019
    %3083 = vmatpush1.bf16.msra.mxu0 %v3018
    %3084 = vmatprep.subr.bf16.mxu0 %v3021
    %3085 = vmatpush1.bf16.msra.mxu0 %v3020
    %3086 = vmatprep.subr.bf16.mxu0 %v3023
    %3087 = vmatpush1.bf16.msra.mxu0 %v3022
    %3088 = vmatprep.subr.bf16.mxu0 %v3025
    %3089 = vmatpush1.bf16.msra.mxu0 %v3024
    %3090 = vmatprep.subr.bf16.mxu0 %v3027
    %3091 = vmatpush1.bf16.msra.mxu0 %v3026
    %3092 = vmatprep.subr.bf16.mxu0 %v3029
    %3093 = vmatpush1.bf16.msra.mxu0 %v3028
    %3094 = vmatprep.mubr.bf16.mxu0 %v2866
    %3095 = vmatmul.mubr.bf16.gmra.mrb[0].mxu0 %v2865
    %v3096 = vpop.f32.mrb[0].mxu0
    %v3097 = vadd.f32 0.0, %v3096
    %v3098 = vpop.f32.mrb[0].mxu0
    %v3099 = vadd.f32 0.0, %v3098
    %v3100 = vpop.f32.mrb[0].mxu0
    %v3101 = vadd.f32 0.0, %v3100
    %v3102 = vpop.f32.mrb[0].mxu0
    %v3103 = vadd.f32 0.0, %v3102
    %3104 = vmatprep.mubr.bf16.mxu0 %v2868
    %3105 = vmatmul.mubr.bf16.gmra.mrb[0].mxu0 %v2867
    %v3106 = vpop.f32.mrb[0].mxu0
    %v3107 = vadd.f32 0.0, %v3106
    %v3108 = vpop.f32.mrb[0].mxu0
    %v3109 = vadd.f32 0.0, %v3108
    %v3110 = vpop.f32.mrb[0].mxu0
    %v3111 = vadd.f32 0.0, %v3110
    %v3112 = vpop.f32.mrb[0].mxu0
    %v3113 = vadd.f32 0.0, %v3112
    %3114 = vdwg.mxu0
    %v3115 = vadd.f32 %v2783, %v3097
    %v3116 = vadd.f32 %v2784, %v3099
    %v3117 = vadd.f32 %v2785, %v3101
    %v3118 = vadd.f32 %v2786, %v3103
    %v3119 = vadd.f32 %v2787, %v3107
    %v3120 = vadd.f32 %v2788, %v3109
    %v3121 = vadd.f32 %v2789, %v3111
    %v3122 = vadd.f32 %v2790, %v3113
    %v3123 = vld [vmem:[%s6] sm:$0xff]
    %v3124 = vld [vmem:[%s6 + $0x8] sm:$0xff]
    %v3125 = vld [vmem:[%s6 + $0x10] sm:$0xff]
    %v3126 = vld [vmem:[%s6 + $0x18] sm:$0xff]
    %v3127 = vld [vmem:[%s6 + $0x20] sm:$0xff]
    %v3128 = vld [vmem:[%s6 + $0x28] sm:$0xff]
    %v3129 = vld [vmem:[%s6 + $0x30] sm:$0xff]
    %v3130 = vld [vmem:[%s6 + $0x38] sm:$0xff]
    %v3131 = vld [vmem:[%s6 + $0x40] sm:$0xff]
    %v3132 = vld [vmem:[%s6 + $0x48] sm:$0xff]
    %v3133 = vld [vmem:[%s6 + $0x50] sm:$0xff]
    %v3134 = vld [vmem:[%s6 + $0x58] sm:$0xff]
    %v3135 = vld [vmem:[%s6 + $0x60] sm:$0xff]
    %v3136 = vld [vmem:[%s6 + $0x68] sm:$0xff]
    %v3137 = vld [vmem:[%s6 + $0x70] sm:$0xff]
    %v3138 = vld [vmem:[%s6 + $0x78] sm:$0xff]
    %v3139 = vld [vmem:[%s6 + $0x80] sm:$0xff]
    %v3140 = vld [vmem:[%s6 + $0x88] sm:$0xff]
    %v3141 = vld [vmem:[%s6 + $0x90] sm:$0xff]
    %v3142 = vld [vmem:[%s6 + $0x98] sm:$0xff]
    %v3143 = vld [vmem:[%s6 + $0xa0] sm:$0xff]
    %v3144 = vld [vmem:[%s6 + $0xa8] sm:$0xff]
    %v3145 = vld [vmem:[%s6 + $0xb0] sm:$0xff]
    %v3146 = vld [vmem:[%s6 + $0xb8] sm:$0xff]
    %v3147 = vld [vmem:[%s6 + $0xc0] sm:$0xff]
    %v3148 = vld [vmem:[%s6 + $0xc8] sm:$0xff]
    %v3149 = vld [vmem:[%s6 + $0xd0] sm:$0xff]
    %v3150 = vld [vmem:[%s6 + $0xd8] sm:$0xff]
    %v3151 = vld [vmem:[%s6 + $0xe0] sm:$0xff]
    %v3152 = vld [vmem:[%s6 + $0xe8] sm:$0xff]
    %v3153 = vld [vmem:[%s6 + $0xf0] sm:$0xff]
    %v3154 = vld [vmem:[%s6 + $0xf8] sm:$0xff]
    %v3155 = vld [vmem:[#allocation6] sm:$0xff]
    %v3156 = vld [vmem:[#allocation6 + $0x8] sm:$0xff]
    %v3157 = vld [vmem:[#allocation6 + $0x10] sm:$0xff]
    %v3158 = vld [vmem:[#allocation6 + $0x18] sm:$0xff]
    %v3159 = vadd.f32 %v3115, %v3117
    %v3160 = vadd.f32 %v3159, %v3119
    %v3161 = vadd.f32 %v3160, %v3121
    %v3162 = vrot.slane %v3161, 4
    %v3163 = vadd.f32 %v3161, %v3162
    %v3164 = vrot.slane %v3163, 2
    %v3165 = vadd.f32 %v3163, %v3164
    %v3166 = vrot.slane %v3165, 1
    %v3167 = vadd.f32 %v3165, %v3166
    %v3168 = vadd.f32 %v3116, %v3118
    %v3169 = vadd.f32 %v3168, %v3120
    %v3170 = vadd.f32 %v3169, %v3122
    %v3171 = vrot.slane %v3170, 4
    %v3172 = vadd.f32 %v3170, %v3171
    %v3173 = vrot.slane %v3172, 2
    %v3174 = vadd.f32 %v3172, %v3173
    %v3175 = vrot.slane %v3174, 1
    %v3176 = vadd.f32 %v3174, %v3175
    %3177 = vmatprep.subr.mxu0 0.0
    %3178 = vmatpush1.msra.mxu0 %v3123
    %3179 = vmatprep.subr.mxu0 0.0
    %3180 = vmatpush1.msra.mxu0 %v3124
    %3181 = vmatprep.subr.mxu0 0.0
    %3182 = vmatpush1.msra.mxu0 %v3125
    %3183 = vmatprep.subr.mxu0 0.0
    %3184 = vmatpush1.msra.mxu0 %v3126
    %3185 = vmatprep.subr.mxu0 0.0
    %3186 = vmatpush1.msra.mxu0 %v3127
    %3187 = vmatprep.subr.mxu0 0.0
    %3188 = vmatpush1.msra.mxu0 %v3128
    %3189 = vmatprep.subr.mxu0 0.0
    %3190 = vmatpush1.msra.mxu0 %v3129
    %3191 = vmatprep.subr.mxu0 0.0
    %3192 = vmatpush1.msra.mxu0 %v3130
    %3193 = vmatprep.subr.mxu0 0.0
    %3194 = vmatpush1.msra.mxu0 %v3131
    %3195 = vmatprep.subr.mxu0 0.0
    %3196 = vmatpush1.msra.mxu0 %v3132
    %3197 = vmatprep.subr.mxu0 0.0
    %3198 = vmatpush1.msra.mxu0 %v3133
    %3199 = vmatprep.subr.mxu0 0.0
    %3200 = vmatpush1.msra.mxu0 %v3134
    %3201 = vmatprep.subr.mxu0 0.0
    %3202 = vmatpush1.msra.mxu0 %v3135
    %3203 = vmatprep.subr.mxu0 0.0
    %3204 = vmatpush1.msra.mxu0 %v3136
    %3205 = vmatprep.subr.mxu0 0.0
    %3206 = vmatpush1.msra.mxu0 %v3137
    %3207 = vmatprep.subr.mxu0 0.0
    %3208 = vmatpush1.msra.mxu0 %v3138
    %3209 = vmatprep.subr.mxu0 0.0
    %3210 = vmatpush1.msra.mxu0 %v3139
    %3211 = vmatprep.subr.mxu0 0.0
    %3212 = vmatpush1.msra.mxu0 %v3140
    %3213 = vmatprep.subr.mxu0 0.0
    %3214 = vmatpush1.msra.mxu0 %v3141
    %3215 = vmatprep.subr.mxu0 0.0
    %3216 = vmatpush1.msra.mxu0 %v3142
    %3217 = vmatprep.subr.mxu0 0.0
    %3218 = vmatpush1.msra.mxu0 %v3143
    %3219 = vmatprep.subr.mxu0 0.0
    %3220 = vmatpush1.msra.mxu0 %v3144
    %3221 = vmatprep.subr.mxu0 0.0
    %3222 = vmatpush1.msra.mxu0 %v3145
    %3223 = vmatprep.subr.mxu0 0.0
    %3224 = vmatpush1.msra.mxu0 %v3146
    %3225 = vmatprep.subr.mxu0 0.0
    %3226 = vmatpush1.msra.mxu0 %v3147
    %3227 = vmatprep.subr.mxu0 0.0
    %3228 = vmatpush1.msra.mxu0 %v3148
    %3229 = vmatprep.subr.mxu0 0.0
    %3230 = vmatpush1.msra.mxu0 %v3149
    %3231 = vmatprep.subr.mxu0 0.0
    %3232 = vmatpush1.msra.mxu0 %v3150
    %3233 = vmatprep.subr.mxu0 0.0
    %3234 = vmatpush1.msra.mxu0 %v3151
    %3235 = vmatprep.subr.mxu0 0.0
    %3236 = vmatpush1.msra.mxu0 %v3152
    %3237 = vmatprep.subr.mxu0 0.0
    %3238 = vmatpush1.msra.mxu0 %v3153
    %3239 = vmatprep.subr.mxu0 0.0
    %3240 = vmatpush1.msra.mxu0 %v3154
    %3241 = vmatprep.mubr.f32.mxu0 %v3176
    %3242 = vmatmul.mubr.f32.gmra.mrb[0].mxu0 %v3167
    %v3243 = vpop.f32.mrb[0].mxu0
    %v3244 = vadd.f32 0.0, %v3243
    %v3245 = vpop.f32.mrb[0].mxu0
    %3246 = vdwg.mxu0
    %v3247 = vmul.f32 %v3244, 0.001953125
    %vm3248 = vcmask 130048
    %v3250 = vsel %vm3248, %v3247, 0
    %3252 = vmatprep.subr.mxu0 %v3156
    %3253 = vmatpush1.msra.mxu0 %v3155
    %3254 = vmatprep.subr.mxu0 %v3158
    %3255 = vmatpush1.msra.mxu0 %v3157
    %3256 = vmatprep.subr.mxu0 0.0
    %3257 = vmatpush1.msra.mxu0 0.0
    %3258 = vmatprep.subr.mxu0 0.0
    %3259 = vmatpush1.msra.mxu0 0.0
    %3260 = vmatprep.subr.mxu0 0.0
    %3261 = vmatpush1.msra.mxu0 0.0
    %3262 = vmatprep.subr.mxu0 0.0
    %3263 = vmatpush1.msra.mxu0 0.0
    %3264 = vmatprep.subr.mxu0 0.0
    %3265 = vmatpush1.msra.mxu0 0.0
    %3266 = vmatprep.subr.mxu0 0.0
    %3267 = vmatpush1.msra.mxu0 0.0
    %3268 = vmatprep.subr.mxu0 0.0
    %3269 = vmatpush1.msra.mxu0 0.0
    %3270 = vmatprep.subr.mxu0 0.0
    %3271 = vmatpush1.msra.mxu0 0.0
    %3272 = vmatprep.subr.mxu0 0.0
    %3273 = vmatpush1.msra.mxu0 0.0
    %3274 = vmatprep.subr.mxu0 0.0
    %3275 = vmatpush1.msra.mxu0 0.0
    %3276 = vmatprep.subr.mxu0 0.0
    %3277 = vmatpush1.msra.mxu0 0.0
    %3278 = vmatprep.subr.mxu0 0.0
    %3279 = vmatpush1.msra.mxu0 0.0
    %3280 = vmatprep.subr.mxu0 0.0
    %3281 = vmatpush1.msra.mxu0 0.0
    %3282 = vmatprep.subr.mxu0 0.0
    %3283 = vmatpush1.msra.mxu0 0.0
    %3284 = vmatprep.subr.mxu0 0.0
    %3285 = vmatpush1.msra.mxu0 0.0
    %3286 = vmatprep.subr.mxu0 0.0
    %3287 = vmatpush1.msra.mxu0 0.0
    %3288 = vmatprep.subr.mxu0 0.0
    %3289 = vmatpush1.msra.mxu0 0.0
    %3290 = vmatprep.subr.mxu0 0.0
    %3291 = vmatpush1.msra.mxu0 0.0
    %3292 = vmatprep.subr.mxu0 0.0
    %3293 = vmatpush1.msra.mxu0 0.0
    %3294 = vmatprep.subr.mxu0 0.0
    %3295 = vmatpush1.msra.mxu0 0.0
    %3296 = vmatprep.subr.mxu0 0.0
    %3297 = vmatpush1.msra.mxu0 0.0
    %3298 = vmatprep.subr.mxu0 0.0
    %3299 = vmatpush1.msra.mxu0 0.0
    %3300 = vmatprep.subr.mxu0 0.0
    %3301 = vmatpush1.msra.mxu0 0.0
    %3302 = vmatprep.subr.mxu0 0.0
    %3303 = vmatpush1.msra.mxu0 0.0
    %3304 = vmatprep.subr.mxu0 0.0
    %3305 = vmatpush1.msra.mxu0 0.0
    %3306 = vmatprep.subr.mxu0 0.0
    %3307 = vmatpush1.msra.mxu0 0.0
    %3308 = vmatprep.subr.mxu0 0.0
    %3309 = vmatpush1.msra.mxu0 0.0
    %3310 = vmatprep.subr.mxu0 0.0
    %3311 = vmatpush1.msra.mxu0 0.0
    %3312 = vmatprep.subr.mxu0 0.0
    %3313 = vmatpush1.msra.mxu0 0.0
    %3314 = vmatprep.subr.mxu0 0.0
    %3315 = vmatpush1.msra.mxu0 0.0
    %3316 = vmatprep.mubr.f32.mxu0 0.0
    %3317 = vmatmul.mubr.f32.gmra.mrb[0].mxu0 %v3250
    %v3318 = vpop.f32.mrb[0].mxu0
    %v3319 = vadd.f32 0.0, %v3318
    %v3320 = vpop.f32.mrb[0].mxu0
    %v3321 = vadd.f32 0.0, %v3320
    %3322 = vdwg.mxu0
    %v3323 = vlaneseq
    %v3324 = vshrl.u32 %v3323, 7
    %v3325 = vsub.s32 0, %v3324
    %v3326 = vrot.slane %v3319, %v3325
    %v3327 = vlaneseq
    %v3328 = vshrl.u32 %v3327, 7
    %v3329 = vsub.s32 0, %v3328
    %v3330 = vrot.slane %v3321, %v3329
    %v3331 = vsub.f32 %v3115, %v3326
    %v3332 = vsub.f32 %v3116, %v3330
    %v3333 = vsub.f32 %v3117, %v3326
    %v3334 = vsub.f32 %v3118, %v3330
    %v3335 = vsub.f32 %v3119, %v3326
    %v3336 = vsub.f32 %v3120, %v3330
    %v3337 = vsub.f32 %v3121, %v3326
    %v3338 = vsub.f32 %v3122, %v3330
    %v3339 = vmul.f32 %v3331, %v3331
    %v3340 = vmul.f32 %v3332, %v3332
    %v3341 = vmul.f32 %v3333, %v3333
    %v3342 = vmul.f32 %v3334, %v3334
    %v3343 = vmul.f32 %v3335, %v3335
    %v3344 = vmul.f32 %v3336, %v3336
    %v3345 = vmul.f32 %v3337, %v3337
    %v3346 = vmul.f32 %v3338, %v3338
    %v3347 = vadd.f32 %v3339, %v3341
    %v3348 = vadd.f32 %v3347, %v3343
    %v3349 = vadd.f32 %v3348, %v3345
    %v3350 = vrot.slane %v3349, 4
    %v3351 = vadd.f32 %v3349, %v3350
    %v3352 = vrot.slane %v3351, 2
    %v3353 = vadd.f32 %v3351, %v3352
    %v3354 = vrot.slane %v3353, 1
    %v3355 = vadd.f32 %v3353, %v3354
    %v3356 = vadd.f32 %v3340, %v3342
    %v3357 = vadd.f32 %v3356, %v3344
    %v3358 = vadd.f32 %v3357, %v3346
    %v3359 = vrot.slane %v3358, 4
    %v3360 = vadd.f32 %v3358, %v3359
    %v3361 = vrot.slane %v3360, 2
    %v3362 = vadd.f32 %v3360, %v3361
    %v3363 = vrot.slane %v3362, 1
    %v3364 = vadd.f32 %v3362, %v3363
    %3365 = vmatprep.subr.mxu0 0.0
    %3366 = vmatpush1.msra.mxu0 %v3123
    %3367 = vmatprep.subr.mxu0 0.0
    %3368 = vmatpush1.msra.mxu0 %v3124
    %3369 = vmatprep.subr.mxu0 0.0
    %3370 = vmatpush1.msra.mxu0 %v3125
    %3371 = vmatprep.subr.mxu0 0.0
    %3372 = vmatpush1.msra.mxu0 %v3126
    %3373 = vmatprep.subr.mxu0 0.0
    %3374 = vmatpush1.msra.mxu0 %v3127
    %3375 = vmatprep.subr.mxu0 0.0
    %3376 = vmatpush1.msra.mxu0 %v3128
    %3377 = vmatprep.subr.mxu0 0.0
    %3378 = vmatpush1.msra.mxu0 %v3129
    %3379 = vmatprep.subr.mxu0 0.0
    %3380 = vmatpush1.msra.mxu0 %v3130
    %3381 = vmatprep.subr.mxu0 0.0
    %3382 = vmatpush1.msra.mxu0 %v3131
    %3383 = vmatprep.subr.mxu0 0.0
    %3384 = vmatpush1.msra.mxu0 %v3132
    %3385 = vmatprep.subr.mxu0 0.0
    %3386 = vmatpush1.msra.mxu0 %v3133
    %3387 = vmatprep.subr.mxu0 0.0
    %3388 = vmatpush1.msra.mxu0 %v3134
    %3389 = vmatprep.subr.mxu0 0.0
    %3390 = vmatpush1.msra.mxu0 %v3135
    %3391 = vmatprep.subr.mxu0 0.0
    %3392 = vmatpush1.msra.mxu0 %v3136
    %3393 = vmatprep.subr.mxu0 0.0
    %3394 = vmatpush1.msra.mxu0 %v3137
    %3395 = vmatprep.subr.mxu0 0.0
    %3396 = vmatpush1.msra.mxu0 %v3138
    %3397 = vmatprep.subr.mxu0 0.0
    %3398 = vmatpush1.msra.mxu0 %v3139
    %3399 = vmatprep.subr.mxu0 0.0
    %3400 = vmatpush1.msra.mxu0 %v3140
    %3401 = vmatprep.subr.mxu0 0.0
    %3402 = vmatpush1.msra.mxu0 %v3141
    %3403 = vmatprep.subr.mxu0 0.0
    %3404 = vmatpush1.msra.mxu0 %v3142
    %3405 = vmatprep.subr.mxu0 0.0
    %3406 = vmatpush1.msra.mxu0 %v3143
    %3407 = vmatprep.subr.mxu0 0.0
    %3408 = vmatpush1.msra.mxu0 %v3144
    %3409 = vmatprep.subr.mxu0 0.0
    %3410 = vmatpush1.msra.mxu0 %v3145
    %3411 = vmatprep.subr.mxu0 0.0
    %3412 = vmatpush1.msra.mxu0 %v3146
    %3413 = vmatprep.subr.mxu0 0.0
    %3414 = vmatpush1.msra.mxu0 %v3147
    %3415 = vmatprep.subr.mxu0 0.0
    %3416 = vmatpush1.msra.mxu0 %v3148
    %3417 = vmatprep.subr.mxu0 0.0
    %3418 = vmatpush1.msra.mxu0 %v3149
    %3419 = vmatprep.subr.mxu0 0.0
    %3420 = vmatpush1.msra.mxu0 %v3150
    %3421 = vmatprep.subr.mxu0 0.0
    %3422 = vmatpush1.msra.mxu0 %v3151
    %3423 = vmatprep.subr.mxu0 0.0
    %3424 = vmatpush1.msra.mxu0 %v3152
    %3425 = vmatprep.subr.mxu0 0.0
    %3426 = vmatpush1.msra.mxu0 %v3153
    %3427 = vmatprep.subr.mxu0 0.0
    %3428 = vmatpush1.msra.mxu0 %v3154
    %3429 = vmatprep.mubr.f32.mxu0 %v3364
    %3430 = vmatmul.mubr.f32.gmra.mrb[0].mxu0 %v3355
    %v3431 = vpop.f32.mrb[0].mxu0
    %v3432 = vadd.f32 0.0, %v3431
    %v3433 = vpop.f32.mrb[0].mxu0
    %3434 = vdwg.mxu0
    %v3435 = vmul.f32 %v3432, 0.001953125
    %v3437 = vsel %vm3248, %v3435, 0
    %3439 = vmatprep.subr.mxu0 %v3156
    %3440 = vmatpush1.msra.mxu0 %v3155
    %3441 = vmatprep.subr.mxu0 %v3158
    %3442 = vmatpush1.msra.mxu0 %v3157
    %3443 = vmatprep.subr.mxu0 0.0
    %3444 = vmatpush1.msra.mxu0 0.0
    %3445 = vmatprep.subr.mxu0 0.0
    %3446 = vmatpush1.msra.mxu0 0.0
    %3447 = vmatprep.subr.mxu0 0.0
    %3448 = vmatpush1.msra.mxu0 0.0
    %3449 = vmatprep.subr.mxu0 0.0
    %3450 = vmatpush1.msra.mxu0 0.0
    %3451 = vmatprep.subr.mxu0 0.0
    %3452 = vmatpush1.msra.mxu0 0.0
    %3453 = vmatprep.subr.mxu0 0.0
    %3454 = vmatpush1.msra.mxu0 0.0
    %3455 = vmatprep.subr.mxu0 0.0
    %3456 = vmatpush1.msra.mxu0 0.0
    %3457 = vmatprep.subr.mxu0 0.0
    %3458 = vmatpush1.msra.mxu0 0.0
    %3459 = vmatprep.subr.mxu0 0.0
    %3460 = vmatpush1.msra.mxu0 0.0
    %3461 = vmatprep.subr.mxu0 0.0
    %3462 = vmatpush1.msra.mxu0 0.0
    %3463 = vmatprep.subr.mxu0 0.0
    %3464 = vmatpush1.msra.mxu0 0.0
    %3465 = vmatprep.subr.mxu0 0.0
    %3466 = vmatpush1.msra.mxu0 0.0
    %3467 = vmatprep.subr.mxu0 0.0
    %3468 = vmatpush1.msra.mxu0 0.0
    %3469 = vmatprep.subr.mxu0 0.0
    %3470 = vmatpush1.msra.mxu0 0.0
    %3471 = vmatprep.subr.mxu0 0.0
    %3472 = vmatpush1.msra.mxu0 0.0
    %3473 = vmatprep.subr.mxu0 0.0
    %3474 = vmatpush1.msra.mxu0 0.0
    %3475 = vmatprep.subr.mxu0 0.0
    %3476 = vmatpush1.msra.mxu0 0.0
    %3477 = vmatprep.subr.mxu0 0.0
    %3478 = vmatpush1.msra.mxu0 0.0
    %3479 = vmatprep.subr.mxu0 0.0
    %3480 = vmatpush1.msra.mxu0 0.0
    %3481 = vmatprep.subr.mxu0 0.0
    %3482 = vmatpush1.msra.mxu0 0.0
    %3483 = vmatprep.subr.mxu0 0.0
    %3484 = vmatpush1.msra.mxu0 0.0
    %3485 = vmatprep.subr.mxu0 0.0
    %3486 = vmatpush1.msra.mxu0 0.0
    %3487 = vmatprep.subr.mxu0 0.0
    %3488 = vmatpush1.msra.mxu0 0.0
    %3489 = vmatprep.subr.mxu0 0.0
    %3490 = vmatpush1.msra.mxu0 0.0
    %3491 = vmatprep.subr.mxu0 0.0
    %3492 = vmatpush1.msra.mxu0 0.0
    %3493 = vmatprep.subr.mxu0 0.0
    %3494 = vmatpush1.msra.mxu0 0.0
    %3495 = vmatprep.subr.mxu0 0.0
    %3496 = vmatpush1.msra.mxu0 0.0
    %3497 = vmatprep.subr.mxu0 0.0
    %3498 = vmatpush1.msra.mxu0 0.0
    %3499 = vmatprep.subr.mxu0 0.0
    %3500 = vmatpush1.msra.mxu0 0.0
    %3501 = vmatprep.subr.mxu0 0.0
    %3502 = vmatpush1.msra.mxu0 0.0
    %3503 = vmatprep.mubr.f32.mxu0 0.0
    %3504 = vmatmul.mubr.f32.gmra.mrb[0].mxu0 %v3437
    %v3505 = vpop.f32.mrb[0].mxu0
    %v3506 = vadd.f32 1e-05, %v3505
    %v3507 = vpop.f32.mrb[0].mxu0
    %v3508 = vadd.f32 1e-05, %v3507
    %3509 = vdwg.mxu0
    %v3510 = vrsqrt.pop %v3506
    %v3511 = vrsqrt.pop %v3508
    %v3512 = vlaneseq
    %v3513 = vshrl.u32 %v3512, 7
    %v3514 = vsub.s32 0, %v3513
    %v3515 = vrot.slane %v3510, %v3514
    %v3516 = vlaneseq
    %v3517 = vshrl.u32 %v3516, 7
    %v3518 = vsub.s32 0, %v3517
    %v3519 = vrot.slane %v3511, %v3518
    %v3520 = vmul.f32 %v3331, %v3515
    %v3521 = vmul.f32 %v3332, %v3519
    %v3522 = vmul.f32 %v3333, %v3515
    %v3523 = vmul.f32 %v3334, %v3519
    %v3524 = vmul.f32 %v3335, %v3515
    %v3525 = vmul.f32 %v3336, %v3519
    %v3526 = vmul.f32 %v3337, %v3515
    %v3527 = vmul.f32 %v3338, %v3519
    %v3528 = vld [vmem:[#allocation7] sm:$0x3]
    %v3530 = vlaneseq
    %v3531 = vshrl.u32 %v3530, 7
    %v3532 = vsub.s32 0, %v3531
    %v3533 = vrot.slane %v3528, %v3532
    %v3534 = vlaneseq
    %v3535 = vshrl.u32 %v3534, 7
    %v3536 = vsub.s32 1, %v3535
    %v3537 = vrot.slane %v3528, %v3536
    %v3540 = vmul.f32 %v3520, %v3533
    %v3541 = vmul.f32 %v3521, %v3537
    %v3542 = vmul.f32 %v3522, %v3533
    %v3543 = vmul.f32 %v3523, %v3537
    %v3544 = vmul.f32 %v3524, %v3533
    %v3545 = vmul.f32 %v3525, %v3537
    %v3546 = vmul.f32 %v3526, %v3533
    %v3547 = vmul.f32 %v3527, %v3537
    %v3548 = vld [vmem:[#allocation9] sm:$0x3]
    %v3550 = vlaneseq
    %v3551 = vshrl.u32 %v3550, 7
    %v3552 = vsub.s32 0, %v3551
    %v3553 = vrot.slane %v3548, %v3552
    %v3554 = vlaneseq
    %v3555 = vshrl.u32 %v3554, 7
    %v3556 = vsub.s32 1, %v3555
    %v3557 = vrot.slane %v3548, %v3556
    %v3560 = vadd.f32 %v3540, %v3553
    %v3561 = vadd.f32 %v3541, %v3557
    %v3562 = vadd.f32 %v3542, %v3553
    %v3563 = vadd.f32 %v3543, %v3557
    %v3564 = vadd.f32 %v3544, %v3553
    %v3565 = vadd.f32 %v3545, %v3557
    %v3566 = vadd.f32 %v3546, %v3553
    %v3567 = vadd.f32 %v3547, %v3557
    %vm3568 = vcmp.ge.f32.partialorder %v3560, 0.0
    %vm3569 = vcmp.ge.f32.partialorder %v3561, 0.0
    %vm3570 = vcmp.ge.f32.partialorder %v3562, 0.0
    %vm3571 = vcmp.ge.f32.partialorder %v3563, 0.0
    %vm3572 = vcmp.ge.f32.partialorder %v3564, 0.0
    %vm3573 = vcmp.ge.f32.partialorder %v3565, 0.0
    %vm3574 = vcmp.ge.f32.partialorder %v3566, 0.0
    %vm3575 = vcmp.ge.f32.partialorder %v3567, 0.0
    %v3576 = vmul.f32 %v3560, 0.2
    %v3577 = vmul.f32 %v3561, 0.2
    %v3578 = vmul.f32 %v3562, 0.2
    %v3579 = vmul.f32 %v3563, 0.2
    %v3580 = vmul.f32 %v3564, 0.2
    %v3581 = vmul.f32 %v3565, 0.2
    %v3582 = vmul.f32 %v3566, 0.2
    %v3583 = vmul.f32 %v3567, 0.2
    %v3584 = vsel %vm3568, %v3560, %v3576
    %v3585 = vsel %vm3569, %v3561, %v3577
    %v3586 = vsel %vm3570, %v3562, %v3578
    %v3587 = vsel %vm3571, %v3563, %v3579
    %v3588 = vsel %vm3572, %v3564, %v3580
    %v3589 = vsel %vm3573, %v3565, %v3581
    %v3590 = vsel %vm3574, %v3566, %v3582
    %v3591 = vsel %vm3575, %v3567, %v3583
    %v3592 = vpack.c.bf16 %v3586, %v3584
    %v3593 = vpack.c.bf16 %v3587, %v3585
    %v3594 = vpack.c.bf16 %v3590, %v3588
    %v3595 = vpack.c.bf16 %v3591, %v3589
    %v3596 = vld [vmem:[#allocation10] sm:$0xf]
    %v3597 = vld [vmem:[#allocation10 + $0x4] sm:$0xf]
    %v3600 = vunpack.c.l.b16 %v3596
    %v3601 = vunpack.c.l.b16 %v3597
    %v3602 = vpack.c.b16 %v3601, %v3600
    %vm3603 = vcmask 261120
    %v3605 = vsel %vm3603, %v3602, 0
    %3607 = vmatprep.subr.bf16.mxu0 %v3593
    %3608 = vmatpush1.bf16.msra.mxu0 %v3592
    %3609 = vmatprep.subr.bf16.mxu0 %v3595
    %3610 = vmatpush1.bf16.msra.mxu0 %v3594
    %3611 = vmatprep.subr.bf16.mxu0 0
    %3612 = vmatpush1.bf16.msra.mxu0 0
    %3613 = vmatprep.subr.bf16.mxu0 0
    %3614 = vmatpush1.bf16.msra.mxu0 0
    %3615 = vmatprep.subr.bf16.mxu0 0
    %3616 = vmatpush1.bf16.msra.mxu0 0
    %3617 = vmatprep.subr.bf16.mxu0 0
    %3618 = vmatpush1.bf16.msra.mxu0 0
    %3619 = vmatprep.subr.bf16.mxu0 0
    %3620 = vmatpush1.bf16.msra.mxu0 0
    %3621 = vmatprep.subr.bf16.mxu0 0
    %3622 = vmatpush1.bf16.msra.mxu0 0
    %3623 = vmatprep.subr.bf16.mxu0 0
    %3624 = vmatpush1.bf16.msra.mxu0 0
    %3625 = vmatprep.subr.bf16.mxu0 0
    %3626 = vmatpush1.bf16.msra.mxu0 0
    %3627 = vmatprep.subr.bf16.mxu0 0
    %3628 = vmatpush1.bf16.msra.mxu0 0
    %3629 = vmatprep.subr.bf16.mxu0 0
    %3630 = vmatpush1.bf16.msra.mxu0 0
    %3631 = vmatprep.subr.bf16.mxu0 0
    %3632 = vmatpush1.bf16.msra.mxu0 0
    %3633 = vmatprep.subr.bf16.mxu0 0
    %3634 = vmatpush1.bf16.msra.mxu0 0
    %3635 = vmatprep.subr.bf16.mxu0 0
    %3636 = vmatpush1.bf16.msra.mxu0 0
    %3637 = vmatprep.subr.bf16.mxu0 0
    %3638 = vmatpush1.bf16.msra.mxu0 0
    %3639 = vmatprep.mubr.bf16.mxu0 0
    %3640 = vmatmul.mubr.bf16.gmra.mrb[0].mxu0 %v3605
    %v3641 = vpop.f32.mrb[0].mxu0
    %v3642 = vadd.f32 0.0, %v3641
    %v3643 = vpop.f32.mrb[0].mxu0
    %v3644 = vadd.f32 0.0, %v3643
    %v3645 = vpop.f32.mrb[0].mxu0
    %v3646 = vadd.f32 0.0, %v3645
    %v3647 = vpop.f32.mrb[0].mxu0
    %v3648 = vadd.f32 0.0, %v3647
    %3649 = vdwg.mxu0
    %v3650 = vpack.c.bf16 %v3646, %v3642
    %v3651 = vpack.c.bf16 %v3648, %v3644
    %v3652 = vld [vmem:[%s11] sm:$0xff]
    %v3653 = vld [vmem:[%s11 + $0x8] sm:$0xff]
    %v3654 = vld [vmem:[%s11 + $0x10] sm:$0xff]
    %v3655 = vld [vmem:[%s11 + $0x18] sm:$0xff]
    %v3656 = vld [vmem:[%s11 + $0x20] sm:$0xff]
    %v3657 = vld [vmem:[%s11 + $0x28] sm:$0xff]
    %v3658 = vld [vmem:[%s11 + $0x30] sm:$0xff]
    %v3659 = vld [vmem:[%s11 + $0x38] sm:$0xff]
    %v3660 = vld [vmem:[%s11 + $0x40] sm:$0xff]
    %v3661 = vld [vmem:[%s11 + $0x48] sm:$0xff]
    %v3662 = vld [vmem:[%s11 + $0x50] sm:$0xff]
    %v3663 = vld [vmem:[%s11 + $0x58] sm:$0xff]
    %v3664 = vld [vmem:[%s11 + $0x60] sm:$0xff]
    %v3665 = vld [vmem:[%s11 + $0x68] sm:$0xff]
    %v3666 = vld [vmem:[%s11 + $0x70] sm:$0xff]
    %v3667 = vld [vmem:[%s11 + $0x78] sm:$0xff]
    %v3668 = vld [vmem:[%s11 + $0x80] sm:$0xff]
    %v3669 = vld [vmem:[%s11 + $0x88] sm:$0xff]
    %v3670 = vld [vmem:[%s11 + $0x90] sm:$0xff]
    %v3671 = vld [vmem:[%s11 + $0x98] sm:$0xff]
    %v3672 = vld [vmem:[%s11 + $0xa0] sm:$0xff]
    %v3673 = vld [vmem:[%s11 + $0xa8] sm:$0xff]
    %v3674 = vld [vmem:[%s11 + $0xb0] sm:$0xff]
    %v3675 = vld [vmem:[%s11 + $0xb8] sm:$0xff]
    %v3676 = vld [vmem:[%s11 + $0xc0] sm:$0xff]
    %v3677 = vld [vmem:[%s11 + $0xc8] sm:$0xff]
    %v3678 = vld [vmem:[%s11 + $0xd0] sm:$0xff]
    %v3679 = vld [vmem:[%s11 + $0xd8] sm:$0xff]
    %v3680 = vld [vmem:[%s11 + $0xe0] sm:$0xff]
    %v3681 = vld [vmem:[%s11 + $0xe8] sm:$0xff]
    %v3682 = vld [vmem:[%s11 + $0xf0] sm:$0xff]
    %v3683 = vld [vmem:[%s11 + $0xf8] sm:$0xff]
    %s3684 = scalar_lea.vmem [#allocation10], 8
    %v3685 = vld [vmem:[%s3684] sm:$0xf]
    %v3686 = vld [vmem:[%s3684 + $0x4] sm:$0xf]
    %v3689 = vunpack.c.l.b16 %v3685
    %v3690 = vunpack.c.l.b16 %v3686
    %v3691 = vpack.c.b16 %v3690, %v3689
    %v3693 = vsel %vm3603, %v3691, 0
    %3695 = vmatprep.subr.bf16.mxu0 %v3593
    %3696 = vmatpush1.bf16.msra.mxu0 %v3592
    %3697 = vmatprep.subr.bf16.mxu0 %v3595
    %3698 = vmatpush1.bf16.msra.mxu0 %v3594
    %3699 = vmatprep.subr.bf16.mxu0 0
    %3700 = vmatpush1.bf16.msra.mxu0 0
    %3701 = vmatprep.subr.bf16.mxu0 0
    %3702 = vmatpush1.bf16.msra.mxu0 0
    %3703 = vmatprep.subr.bf16.mxu0 0
    %3704 = vmatpush1.bf16.msra.mxu0 0
    %3705 = vmatprep.subr.bf16.mxu0 0
    %3706 = vmatpush1.bf16.msra.mxu0 0
    %3707 = vmatprep.subr.bf16.mxu0 0
    %3708 = vmatpush1.bf16.msra.mxu0 0
    %3709 = vmatprep.subr.bf16.mxu0 0
    %3710 = vmatpush1.bf16.msra.mxu0 0
    %3711 = vmatprep.subr.bf16.mxu0 0
    %3712 = vmatpush1.bf16.msra.mxu0 0
    %3713 = vmatprep.subr.bf16.mxu0 0
    %3714 = vmatpush1.bf16.msra.mxu0 0
    %3715 = vmatprep.subr.bf16.mxu0 0
    %3716 = vmatpush1.bf16.msra.mxu0 0
    %3717 = vmatprep.subr.bf16.mxu0 0
    %3718 = vmatpush1.bf16.msra.mxu0 0
    %3719 = vmatprep.subr.bf16.mxu0 0
    %3720 = vmatpush1.bf16.msra.mxu0 0
    %3721 = vmatprep.subr.bf16.mxu0 0
    %3722 = vmatpush1.bf16.msra.mxu0 0
    %3723 = vmatprep.subr.bf16.mxu0 0
    %3724 = vmatpush1.bf16.msra.mxu0 0
    %3725 = vmatprep.subr.bf16.mxu0 0
    %3726 = vmatpush1.bf16.msra.mxu0 0
    %3727 = vmatprep.mubr.bf16.mxu0 0
    %3728 = vmatmul.mubr.bf16.gmra.mrb[0].mxu0 %v3693
    %v3729 = vpop.f32.mrb[0].mxu0
    %v3730 = vadd.f32 0.0, %v3729
    %v3731 = vpop.f32.mrb[0].mxu0
    %v3732 = vadd.f32 0.0, %v3731
    %v3733 = vpop.f32.mrb[0].mxu0
    %v3734 = vadd.f32 0.0, %v3733
    %v3735 = vpop.f32.mrb[0].mxu0
    %v3736 = vadd.f32 0.0, %v3735
    %3737 = vdwg.mxu0
    %v3738 = vpack.c.bf16 %v3734, %v3730
    %v3739 = vpack.c.bf16 %v3736, %v3732
    %s3740 = scalar_lea.vmem %s11, 256
    %v3741 = vld [vmem:[%s3740] sm:$0xff]
    %v3742 = vld [vmem:[%s3740 + $0x8] sm:$0xff]
    %v3743 = vld [vmem:[%s3740 + $0x10] sm:$0xff]
    %v3744 = vld [vmem:[%s3740 + $0x18] sm:$0xff]
    %v3745 = vld [vmem:[%s3740 + $0x20] sm:$0xff]
    %v3746 = vld [vmem:[%s3740 + $0x28] sm:$0xff]
    %v3747 = vld [vmem:[%s3740 + $0x30] sm:$0xff]
    %v3748 = vld [vmem:[%s3740 + $0x38] sm:$0xff]
    %v3749 = vld [vmem:[%s3740 + $0x40] sm:$0xff]
    %v3750 = vld [vmem:[%s3740 + $0x48] sm:$0xff]
    %v3751 = vld [vmem:[%s3740 + $0x50] sm:$0xff]
    %v3752 = vld [vmem:[%s3740 + $0x58] sm:$0xff]
    %v3753 = vld [vmem:[%s3740 + $0x60] sm:$0xff]
    %v3754 = vld [vmem:[%s3740 + $0x68] sm:$0xff]
    %v3755 = vld [vmem:[%s3740 + $0x70] sm:$0xff]
    %v3756 = vld [vmem:[%s3740 + $0x78] sm:$0xff]
    %v3757 = vld [vmem:[%s3740 + $0x80] sm:$0xff]
    %v3758 = vld [vmem:[%s3740 + $0x88] sm:$0xff]
    %v3759 = vld [vmem:[%s3740 + $0x90] sm:$0xff]
    %v3760 = vld [vmem:[%s3740 + $0x98] sm:$0xff]
    %v3761 = vld [vmem:[%s3740 + $0xa0] sm:$0xff]
    %v3762 = vld [vmem:[%s3740 + $0xa8] sm:$0xff]
    %v3763 = vld [vmem:[%s3740 + $0xb0] sm:$0xff]
    %v3764 = vld [vmem:[%s3740 + $0xb8] sm:$0xff]
    %v3765 = vld [vmem:[%s3740 + $0xc0] sm:$0xff]
    %v3766 = vld [vmem:[%s3740 + $0xc8] sm:$0xff]
    %v3767 = vld [vmem:[%s3740 + $0xd0] sm:$0xff]
    %v3768 = vld [vmem:[%s3740 + $0xd8] sm:$0xff]
    %v3769 = vld [vmem:[%s3740 + $0xe0] sm:$0xff]
    %v3770 = vld [vmem:[%s3740 + $0xe8] sm:$0xff]
    %v3771 = vld [vmem:[%s3740 + $0xf0] sm:$0xff]
    %v3772 = vld [vmem:[%s3740 + $0xf8] sm:$0xff]
    %v3805 = vunpack.c.l.b16 %v3741
    %v3806 = vunpack.c.h.b16 %v3741
    %v3807 = vunpack.c.l.b16 %v3742
    %v3808 = vunpack.c.h.b16 %v3742
    %v3809 = vunpack.c.l.b16 %v3743
    %v3810 = vunpack.c.h.b16 %v3743
    %v3811 = vunpack.c.l.b16 %v3744
    %v3812 = vunpack.c.h.b16 %v3744
    %v3813 = vunpack.c.l.b16 %v3745
    %v3814 = vunpack.c.h.b16 %v3745
    %v3815 = vunpack.c.l.b16 %v3746
    %v3816 = vunpack.c.h.b16 %v3746
    %v3817 = vunpack.c.l.b16 %v3747
    %v3818 = vunpack.c.h.b16 %v3747
    %v3819 = vunpack.c.l.b16 %v3748
    %v3820 = vunpack.c.h.b16 %v3748
    %v3821 = vunpack.c.l.b16 %v3749
    %v3822 = vunpack.c.h.b16 %v3749
    %v3823 = vunpack.c.l.b16 %v3750
    %v3824 = vunpack.c.h.b16 %v3750
    %v3825 = vunpack.c.l.b16 %v3751
    %v3826 = vunpack.c.h.b16 %v3751
    %v3827 = vunpack.c.l.b16 %v3752
    %v3828 = vunpack.c.h.b16 %v3752
    %v3829 = vunpack.c.l.b16 %v3753
    %v3830 = vunpack.c.h.b16 %v3753
    %v3831 = vunpack.c.l.b16 %v3754
    %v3832 = vunpack.c.h.b16 %v3754
    %v3833 = vunpack.c.l.b16 %v3755
    %v3834 = vunpack.c.h.b16 %v3755
    %v3835 = vunpack.c.l.b16 %v3756
    %v3836 = vunpack.c.h.b16 %v3756
    %v3837 = vunpack.c.l.b16 %v3757
    %v3838 = vunpack.c.h.b16 %v3757
    %v3839 = vunpack.c.l.b16 %v3758
    %v3840 = vunpack.c.h.b16 %v3758
    %v3841 = vunpack.c.l.b16 %v3759
    %v3842 = vunpack.c.h.b16 %v3759
    %v3843 = vunpack.c.l.b16 %v3760
    %v3844 = vunpack.c.h.b16 %v3760
    %v3845 = vunpack.c.l.b16 %v3761
    %v3846 = vunpack.c.h.b16 %v3761
    %v3847 = vunpack.c.l.b16 %v3762
    %v3848 = vunpack.c.h.b16 %v3762
    %v3849 = vunpack.c.l.b16 %v3763
    %v3850 = vunpack.c.h.b16 %v3763
    %v3851 = vunpack.c.l.b16 %v3764
    %v3852 = vunpack.c.h.b16 %v3764
    %v3853 = vunpack.c.l.b16 %v3765
    %v3854 = vunpack.c.h.b16 %v3765
    %v3855 = vunpack.c.l.b16 %v3766
    %v3856 = vunpack.c.h.b16 %v3766
    %v3857 = vunpack.c.l.b16 %v3767
    %v3858 = vunpack.c.h.b16 %v3767
    %v3859 = vunpack.c.l.b16 %v3768
    %v3860 = vunpack.c.h.b16 %v3768
    %v3861 = vunpack.c.l.b16 %v3769
    %v3862 = vunpack.c.h.b16 %v3769
    %v3863 = vunpack.c.l.b16 %v3770
    %v3864 = vunpack.c.h.b16 %v3770
    %v3865 = vunpack.c.l.b16 %v3771
    %v3866 = vunpack.c.h.b16 %v3771
    %v3867 = vunpack.c.l.b16 %v3772
    %v3868 = vunpack.c.h.b16 %v3772
    %v3869 = vpack.c.b16 %v3807, %v3805
    %v3870 = vpack.c.b16 %v3808, %v3806
    %v3871 = vpack.c.b16 %v3811, %v3809
    %v3872 = vpack.c.b16 %v3812, %v3810
    %v3873 = vpack.c.b16 %v3815, %v3813
    %v3874 = vpack.c.b16 %v3816, %v3814
    %v3875 = vpack.c.b16 %v3819, %v3817
    %v3876 = vpack.c.b16 %v3820, %v3818
    %v3877 = vpack.c.b16 %v3823, %v3821
    %v3878 = vpack.c.b16 %v3824, %v3822
    %v3879 = vpack.c.b16 %v3827, %v3825
    %v3880 = vpack.c.b16 %v3828, %v3826
    %v3881 = vpack.c.b16 %v3831, %v3829
    %v3882 = vpack.c.b16 %v3832, %v3830
    %v3883 = vpack.c.b16 %v3835, %v3833
    %v3884 = vpack.c.b16 %v3836, %v3834
    %v3885 = vpack.c.b16 %v3839, %v3837
    %v3886 = vpack.c.b16 %v3840, %v3838
    %v3887 = vpack.c.b16 %v3843, %v3841
    %v3888 = vpack.c.b16 %v3844, %v3842
    %v3889 = vpack.c.b16 %v3847, %v3845
    %v3890 = vpack.c.b16 %v3848, %v3846
    %v3891 = vpack.c.b16 %v3851, %v3849
    %v3892 = vpack.c.b16 %v3852, %v3850
    %v3893 = vpack.c.b16 %v3855, %v3853
    %v3894 = vpack.c.b16 %v3856, %v3854
    %v3895 = vpack.c.b16 %v3859, %v3857
    %v3896 = vpack.c.b16 %v3860, %v3858
    %v3897 = vpack.c.b16 %v3863, %v3861
    %v3898 = vpack.c.b16 %v3864, %v3862
    %v3899 = vpack.c.b16 %v3867, %v3865
    %v3900 = vpack.c.b16 %v3868, %v3866
    %3933 = vmatprep.subr.bf16.mxu0 %v3870
    %3934 = vmatpush1.bf16.msra.mxu0 %v3869
    %3935 = vmatprep.subr.bf16.mxu0 %v3872
    %3936 = vmatpush1.bf16.msra.mxu0 %v3871
    %3937 = vmatprep.subr.bf16.mxu0 %v3874
    %3938 = vmatpush1.bf16.msra.mxu0 %v3873
    %3939 = vmatprep.subr.bf16.mxu0 %v3876
    %3940 = vmatpush1.bf16.msra.mxu0 %v3875
    %3941 = vmatprep.subr.bf16.mxu0 %v3878
    %3942 = vmatpush1.bf16.msra.mxu0 %v3877
    %3943 = vmatprep.subr.bf16.mxu0 %v3880
    %3944 = vmatpush1.bf16.msra.mxu0 %v3879
    %3945 = vmatprep.subr.bf16.mxu0 %v3882
    %3946 = vmatpush1.bf16.msra.mxu0 %v3881
    %3947 = vmatprep.subr.bf16.mxu0 %v3884
    %3948 = vmatpush1.bf16.msra.mxu0 %v3883
    %3949 = vmatprep.subr.bf16.mxu0 %v3886
    %3950 = vmatpush1.bf16.msra.mxu0 %v3885
    %3951 = vmatprep.subr.bf16.mxu0 %v3888
    %3952 = vmatpush1.bf16.msra.mxu0 %v3887
    %3953 = vmatprep.subr.bf16.mxu0 %v3890
    %3954 = vmatpush1.bf16.msra.mxu0 %v3889
    %3955 = vmatprep.subr.bf16.mxu0 %v3892
    %3956 = vmatpush1.bf16.msra.mxu0 %v3891
    %3957 = vmatprep.subr.bf16.mxu0 %v3894
    %3958 = vmatpush1.bf16.msra.mxu0 %v3893
    %3959 = vmatprep.subr.bf16.mxu0 %v3896
    %3960 = vmatpush1.bf16.msra.mxu0 %v3895
    %3961 = vmatprep.subr.bf16.mxu0 %v3898
    %3962 = vmatpush1.bf16.msra.mxu0 %v3897
    %3963 = vmatprep.subr.bf16.mxu0 %v3900
    %3964 = vmatpush1.bf16.msra.mxu0 %v3899
    %3965 = vmatprep.mubr.bf16.mxu0 %v3739
    %3966 = vmatmul.mubr.bf16.gmra.mrb[0].mxu0 %v3738
    %v3967 = vpop.f32.mrb[0].mxu0
    %v3968 = vadd.f32 0.0, %v3967
    %v3969 = vpop.f32.mrb[0].mxu0
    %v3970 = vadd.f32 0.0, %v3969
    %v3971 = vpop.f32.mrb[0].mxu0
    %v3972 = vadd.f32 0.0, %v3971
    %v3973 = vpop.f32.mrb[0].mxu0
    %v3974 = vadd.f32 0.0, %v3973
    %3975 = vdwg.mxu0
    %v4008 = vunpack.c.l.b16 %v3652
    %v4009 = vunpack.c.h.b16 %v3652
    %v4010 = vunpack.c.l.b16 %v3653
    %v4011 = vunpack.c.h.b16 %v3653
    %v4012 = vunpack.c.l.b16 %v3654
    %v4013 = vunpack.c.h.b16 %v3654
    %v4014 = vunpack.c.l.b16 %v3655
    %v4015 = vunpack.c.h.b16 %v3655
    %v4016 = vunpack.c.l.b16 %v3656
    %v4017 = vunpack.c.h.b16 %v3656
    %v4018 = vunpack.c.l.b16 %v3657
    %v4019 = vunpack.c.h.b16 %v3657
    %v4020 = vunpack.c.l.b16 %v3658
    %v4021 = vunpack.c.h.b16 %v3658
    %v4022 = vunpack.c.l.b16 %v3659
    %v4023 = vunpack.c.h.b16 %v3659
    %v4024 = vunpack.c.l.b16 %v3660
    %v4025 = vunpack.c.h.b16 %v3660
    %v4026 = vunpack.c.l.b16 %v3661
    %v4027 = vunpack.c.h.b16 %v3661
    %v4028 = vunpack.c.l.b16 %v3662
    %v4029 = vunpack.c.h.b16 %v3662
    %v4030 = vunpack.c.l.b16 %v3663
    %v4031 = vunpack.c.h.b16 %v3663
    %v4032 = vunpack.c.l.b16 %v3664
    %v4033 = vunpack.c.h.b16 %v3664
    %v4034 = vunpack.c.l.b16 %v3665
    %v4035 = vunpack.c.h.b16 %v3665
    %v4036 = vunpack.c.l.b16 %v3666
    %v4037 = vunpack.c.h.b16 %v3666
    %v4038 = vunpack.c.l.b16 %v3667
    %v4039 = vunpack.c.h.b16 %v3667
    %v4040 = vunpack.c.l.b16 %v3668
    %v4041 = vunpack.c.h.b16 %v3668
    %v4042 = vunpack.c.l.b16 %v3669
    %v4043 = vunpack.c.h.b16 %v3669
    %v4044 = vunpack.c.l.b16 %v3670
    %v4045 = vunpack.c.h.b16 %v3670
    %v4046 = vunpack.c.l.b16 %v3671
    %v4047 = vunpack.c.h.b16 %v3671
    %v4048 = vunpack.c.l.b16 %v3672
    %v4049 = vunpack.c.h.b16 %v3672
    %v4050 = vunpack.c.l.b16 %v3673
    %v4051 = vunpack.c.h.b16 %v3673
    %v4052 = vunpack.c.l.b16 %v3674
    %v4053 = vunpack.c.h.b16 %v3674
    %v4054 = vunpack.c.l.b16 %v3675
    %v4055 = vunpack.c.h.b16 %v3675
    %v4056 = vunpack.c.l.b16 %v3676
    %v4057 = vunpack.c.h.b16 %v3676
    %v4058 = vunpack.c.l.b16 %v3677
    %v4059 = vunpack.c.h.b16 %v3677
    %v4060 = vunpack.c.l.b16 %v3678
    %v4061 = vunpack.c.h.b16 %v3678
    %v4062 = vunpack.c.l.b16 %v3679
    %v4063 = vunpack.c.h.b16 %v3679
    %v4064 = vunpack.c.l.b16 %v3680
    %v4065 = vunpack.c.h.b16 %v3680
    %v4066 = vunpack.c.l.b16 %v3681
    %v4067 = vunpack.c.h.b16 %v3681
    %v4068 = vunpack.c.l.b16 %v3682
    %v4069 = vunpack.c.h.b16 %v3682
    %v4070 = vunpack.c.l.b16 %v3683
    %v4071 = vunpack.c.h.b16 %v3683
    %v4072 = vpack.c.b16 %v4010, %v4008
    %v4073 = vpack.c.b16 %v4011, %v4009
    %v4074 = vpack.c.b16 %v4014, %v4012
    %v4075 = vpack.c.b16 %v4015, %v4013
    %v4076 = vpack.c.b16 %v4018, %v4016
    %v4077 = vpack.c.b16 %v4019, %v4017
    %v4078 = vpack.c.b16 %v4022, %v4020
    %v4079 = vpack.c.b16 %v4023, %v4021
    %v4080 = vpack.c.b16 %v4026, %v4024
    %v4081 = vpack.c.b16 %v4027, %v4025
    %v4082 = vpack.c.b16 %v4030, %v4028
    %v4083 = vpack.c.b16 %v4031, %v4029
    %v4084 = vpack.c.b16 %v4034, %v4032
    %v4085 = vpack.c.b16 %v4035, %v4033
    %v4086 = vpack.c.b16 %v4038, %v4036
    %v4087 = vpack.c.b16 %v4039, %v4037
    %v4088 = vpack.c.b16 %v4042, %v4040
    %v4089 = vpack.c.b16 %v4043, %v4041
    %v4090 = vpack.c.b16 %v4046, %v4044
    %v4091 = vpack.c.b16 %v4047, %v4045
    %v4092 = vpack.c.b16 %v4050, %v4048
    %v4093 = vpack.c.b16 %v4051, %v4049
    %v4094 = vpack.c.b16 %v4054, %v4052
    %v4095 = vpack.c.b16 %v4055, %v4053
    %v4096 = vpack.c.b16 %v4058, %v4056
    %v4097 = vpack.c.b16 %v4059, %v4057
    %v4098 = vpack.c.b16 %v4062, %v4060
    %v4099 = vpack.c.b16 %v4063, %v4061
    %v4100 = vpack.c.b16 %v4066, %v4064
    %v4101 = vpack.c.b16 %v4067, %v4065
    %v4102 = vpack.c.b16 %v4070, %v4068
    %v4103 = vpack.c.b16 %v4071, %v4069
    %4136 = vmatprep.subr.bf16.mxu0 %v4073
    %4137 = vmatpush1.bf16.msra.mxu0 %v4072
    %4138 = vmatprep.subr.bf16.mxu0 %v4075
    %4139 = vmatpush1.bf16.msra.mxu0 %v4074
    %4140 = vmatprep.subr.bf16.mxu0 %v4077
    %4141 = vmatpush1.bf16.msra.mxu0 %v4076
    %4142 = vmatprep.subr.bf16.mxu0 %v4079
    %4143 = vmatpush1.bf16.msra.mxu0 %v4078
    %4144 = vmatprep.subr.bf16.mxu0 %v4081
    %4145 = vmatpush1.bf16.msra.mxu0 %v4080
    %4146 = vmatprep.subr.bf16.mxu0 %v4083
    %4147 = vmatpush1.bf16.msra.mxu0 %v4082
    %4148 = vmatprep.subr.bf16.mxu0 %v4085
    %4149 = vmatpush1.bf16.msra.mxu0 %v4084
    %4150 = vmatprep.subr.bf16.mxu0 %v4087
    %4151 = vmatpush1.bf16.msra.mxu0 %v4086
    %4152 = vmatprep.subr.bf16.mxu0 %v4089
    %4153 = vmatpush1.bf16.msra.mxu0 %v4088
    %4154 = vmatprep.subr.bf16.mxu0 %v4091
    %4155 = vmatpush1.bf16.msra.mxu0 %v4090
    %4156 = vmatprep.subr.bf16.mxu0 %v4093
    %4157 = vmatpush1.bf16.msra.mxu0 %v4092
    %4158 = vmatprep.subr.bf16.mxu0 %v4095
    %4159 = vmatpush1.bf16.msra.mxu0 %v4094
    %4160 = vmatprep.subr.bf16.mxu0 %v4097
    %4161 = vmatpush1.bf16.msra.mxu0 %v4096
    %4162 = vmatprep.subr.bf16.mxu0 %v4099
    %4163 = vmatpush1.bf16.msra.mxu0 %v4098
    %4164 = vmatprep.subr.bf16.mxu0 %v4101
    %4165 = vmatpush1.bf16.msra.mxu0 %v4100
    %4166 = vmatprep.subr.bf16.mxu0 %v4103
    %4167 = vmatpush1.bf16.msra.mxu0 %v4102
    %4168 = vmatprep.mubr.bf16.mxu0 %v3651
    %4169 = vmatmul.mubr.bf16.gmra.mrb[0].mxu0 %v3650
    %v4170 = vpop.f32.mrb[0].mxu0
    %v4171 = vadd.f32 %v3968, %v4170
    %v4172 = vpop.f32.mrb[0].mxu0
    %v4173 = vadd.f32 %v3970, %v4172
    %v4174 = vpop.f32.mrb[0].mxu0
    %v4175 = vadd.f32 %v3972, %v4174
    %v4176 = vpop.f32.mrb[0].mxu0
    %v4177 = vadd.f32 %v3974, %v4176
    %4178 = vdwg.mxu0
    %s4179 = scalar_lea.vmem [#allocation10], 16
    %v4180 = vld [vmem:[%s4179] sm:$0xf]
    %v4181 = vld [vmem:[%s4179 + $0x4] sm:$0xf]
    %v4184 = vunpack.c.l.b16 %v4180
    %v4185 = vunpack.c.l.b16 %v4181
    %v4186 = vpack.c.b16 %v4185, %v4184
    %v4188 = vsel %vm3603, %v4186, 0
    %4190 = vmatprep.subr.bf16.mxu0 %v3593
    %4191 = vmatpush1.bf16.msra.mxu0 %v3592
    %4192 = vmatprep.subr.bf16.mxu0 %v3595
    %4193 = vmatpush1.bf16.msra.mxu0 %v3594
    %4194 = vmatprep.subr.bf16.mxu0 0
    %4195 = vmatpush1.bf16.msra.mxu0 0
    %4196 = vmatprep.subr.bf16.mxu0 0
    %4197 = vmatpush1.bf16.msra.mxu0 0
    %4198 = vmatprep.subr.bf16.mxu0 0
    %4199 = vmatpush1.bf16.msra.mxu0 0
    %4200 = vmatprep.subr.bf16.mxu0 0
    %4201 = vmatpush1.bf16.msra.mxu0 0
    %4202 = vmatprep.subr.bf16.mxu0 0
    %4203 = vmatpush1.bf16.msra.mxu0 0
    %4204 = vmatprep.subr.bf16.mxu0 0
    %4205 = vmatpush1.bf16.msra.mxu0 0
    %4206 = vmatprep.subr.bf16.mxu0 0
    %4207 = vmatpush1.bf16.msra.mxu0 0
    %4208 = vmatprep.subr.bf16.mxu0 0
    %4209 = vmatpush1.bf16.msra.mxu0 0
    %4210 = vmatprep.subr.bf16.mxu0 0
    %4211 = vmatpush1.bf16.msra.mxu0 0
    %4212 = vmatprep.subr.bf16.mxu0 0
    %4213 = vmatpush1.bf16.msra.mxu0 0
    %4214 = vmatprep.subr.bf16.mxu0 0
    %4215 = vmatpush1.bf16.msra.mxu0 0
    %4216 = vmatprep.subr.bf16.mxu0 0
    %4217 = vmatpush1.bf16.msra.mxu0 0
    %4218 = vmatprep.subr.bf16.mxu0 0
    %4219 = vmatpush1.bf16.msra.mxu0 0
    %4220 = vmatprep.subr.bf16.mxu0 0
    %4221 = vmatpush1.bf16.msra.mxu0 0
    %4222 = vmatprep.mubr.bf16.mxu0 0
    %4223 = vmatmul.mubr.bf16.gmra.mrb[0].mxu0 %v4188
    %v4224 = vpop.f32.mrb[0].mxu0
    %v4225 = vadd.f32 0.0, %v4224
    %v4226 = vpop.f32.mrb[0].mxu0
    %v4227 = vadd.f32 0.0, %v4226
    %v4228 = vpop.f32.mrb[0].mxu0
    %v4229 = vadd.f32 0.0, %v4228
    %v4230 = vpop.f32.mrb[0].mxu0
    %v4231 = vadd.f32 0.0, %v4230
    %4232 = vdwg.mxu0
    %v4233 = vpack.c.bf16 %v4229, %v4225
    %v4234 = vpack.c.bf16 %v4231, %v4227
    %s4235 = scalar_lea.vmem %s11, 512
    %v4236 = vld [vmem:[%s4235] sm:$0xff]
    %v4237 = vld [vmem:[%s4235 + $0x8] sm:$0xff]
    %v4238 = vld [vmem:[%s4235 + $0x10] sm:$0xff]
    %v4239 = vld [vmem:[%s4235 + $0x18] sm:$0xff]
    %v4240 = vld [vmem:[%s4235 + $0x20] sm:$0xff]
    %v4241 = vld [vmem:[%s4235 + $0x28] sm:$0xff]
    %v4242 = vld [vmem:[%s4235 + $0x30] sm:$0xff]
    %v4243 = vld [vmem:[%s4235 + $0x38] sm:$0xff]
    %v4244 = vld [vmem:[%s4235 + $0x40] sm:$0xff]
    %v4245 = vld [vmem:[%s4235 + $0x48] sm:$0xff]
    %v4246 = vld [vmem:[%s4235 + $0x50] sm:$0xff]
    %v4247 = vld [vmem:[%s4235 + $0x58] sm:$0xff]
    %v4248 = vld [vmem:[%s4235 + $0x60] sm:$0xff]
    %v4249 = vld [vmem:[%s4235 + $0x68] sm:$0xff]
    %v4250 = vld [vmem:[%s4235 + $0x70] sm:$0xff]
    %v4251 = vld [vmem:[%s4235 + $0x78] sm:$0xff]
    %v4252 = vld [vmem:[%s4235 + $0x80] sm:$0xff]
    %v4253 = vld [vmem:[%s4235 + $0x88] sm:$0xff]
    %v4254 = vld [vmem:[%s4235 + $0x90] sm:$0xff]
    %v4255 = vld [vmem:[%s4235 + $0x98] sm:$0xff]
    %v4256 = vld [vmem:[%s4235 + $0xa0] sm:$0xff]
    %v4257 = vld [vmem:[%s4235 + $0xa8] sm:$0xff]
    %v4258 = vld [vmem:[%s4235 + $0xb0] sm:$0xff]
    %v4259 = vld [vmem:[%s4235 + $0xb8] sm:$0xff]
    %v4260 = vld [vmem:[%s4235 + $0xc0] sm:$0xff]
    %v4261 = vld [vmem:[%s4235 + $0xc8] sm:$0xff]
    %v4262 = vld [vmem:[%s4235 + $0xd0] sm:$0xff]
    %v4263 = vld [vmem:[%s4235 + $0xd8] sm:$0xff]
    %v4264 = vld [vmem:[%s4235 + $0xe0] sm:$0xff]
    %v4265 = vld [vmem:[%s4235 + $0xe8] sm:$0xff]
    %v4266 = vld [vmem:[%s4235 + $0xf0] sm:$0xff]
    %v4267 = vld [vmem:[%s4235 + $0xf8] sm:$0xff]
    %v4300 = vunpack.c.l.b16 %v4236
    %v4301 = vunpack.c.h.b16 %v4236
    %v4302 = vunpack.c.l.b16 %v4237
    %v4303 = vunpack.c.h.b16 %v4237
    %v4304 = vunpack.c.l.b16 %v4238
    %v4305 = vunpack.c.h.b16 %v4238
    %v4306 = vunpack.c.l.b16 %v4239
    %v4307 = vunpack.c.h.b16 %v4239
    %v4308 = vunpack.c.l.b16 %v4240
    %v4309 = vunpack.c.h.b16 %v4240
    %v4310 = vunpack.c.l.b16 %v4241
    %v4311 = vunpack.c.h.b16 %v4241
    %v4312 = vunpack.c.l.b16 %v4242
    %v4313 = vunpack.c.h.b16 %v4242
    %v4314 = vunpack.c.l.b16 %v4243
    %v4315 = vunpack.c.h.b16 %v4243
    %v4316 = vunpack.c.l.b16 %v4244
    %v4317 = vunpack.c.h.b16 %v4244
    %v4318 = vunpack.c.l.b16 %v4245
    %v4319 = vunpack.c.h.b16 %v4245
    %v4320 = vunpack.c.l.b16 %v4246
    %v4321 = vunpack.c.h.b16 %v4246
    %v4322 = vunpack.c.l.b16 %v4247
    %v4323 = vunpack.c.h.b16 %v4247
    %v4324 = vunpack.c.l.b16 %v4248
    %v4325 = vunpack.c.h.b16 %v4248
    %v4326 = vunpack.c.l.b16 %v4249
    %v4327 = vunpack.c.h.b16 %v4249
    %v4328 = vunpack.c.l.b16 %v4250
    %v4329 = vunpack.c.h.b16 %v4250
    %v4330 = vunpack.c.l.b16 %v4251
    %v4331 = vunpack.c.h.b16 %v4251
    %v4332 = vunpack.c.l.b16 %v4252
    %v4333 = vunpack.c.h.b16 %v4252
    %v4334 = vunpack.c.l.b16 %v4253
    %v4335 = vunpack.c.h.b16 %v4253
    %v4336 = vunpack.c.l.b16 %v4254
    %v4337 = vunpack.c.h.b16 %v4254
    %v4338 = vunpack.c.l.b16 %v4255
    %v4339 = vunpack.c.h.b16 %v4255
    %v4340 = vunpack.c.l.b16 %v4256
    %v4341 = vunpack.c.h.b16 %v4256
    %v4342 = vunpack.c.l.b16 %v4257
    %v4343 = vunpack.c.h.b16 %v4257
    %v4344 = vunpack.c.l.b16 %v4258
    %v4345 = vunpack.c.h.b16 %v4258
    %v4346 = vunpack.c.l.b16 %v4259
    %v4347 = vunpack.c.h.b16 %v4259
    %v4348 = vunpack.c.l.b16 %v4260
    %v4349 = vunpack.c.h.b16 %v4260
    %v4350 = vunpack.c.l.b16 %v4261
    %v4351 = vunpack.c.h.b16 %v4261
    %v4352 = vunpack.c.l.b16 %v4262
    %v4353 = vunpack.c.h.b16 %v4262
    %v4354 = vunpack.c.l.b16 %v4263
    %v4355 = vunpack.c.h.b16 %v4263
    %v4356 = vunpack.c.l.b16 %v4264
    %v4357 = vunpack.c.h.b16 %v4264
    %v4358 = vunpack.c.l.b16 %v4265
    %v4359 = vunpack.c.h.b16 %v4265
    %v4360 = vunpack.c.l.b16 %v4266
    %v4361 = vunpack.c.h.b16 %v4266
    %v4362 = vunpack.c.l.b16 %v4267
    %v4363 = vunpack.c.h.b16 %v4267
    %v4364 = vpack.c.b16 %v4302, %v4300
    %v4365 = vpack.c.b16 %v4303, %v4301
    %v4366 = vpack.c.b16 %v4306, %v4304
    %v4367 = vpack.c.b16 %v4307, %v4305
    %v4368 = vpack.c.b16 %v4310, %v4308
    %v4369 = vpack.c.b16 %v4311, %v4309
    %v4370 = vpack.c.b16 %v4314, %v4312
    %v4371 = vpack.c.b16 %v4315, %v4313
    %v4372 = vpack.c.b16 %v4318, %v4316
    %v4373 = vpack.c.b16 %v4319, %v4317
    %v4374 = vpack.c.b16 %v4322, %v4320
    %v4375 = vpack.c.b16 %v4323, %v4321
    %v4376 = vpack.c.b16 %v4326, %v4324
    %v4377 = vpack.c.b16 %v4327, %v4325
    %v4378 = vpack.c.b16 %v4330, %v4328
    %v4379 = vpack.c.b16 %v4331, %v4329
    %v4380 = vpack.c.b16 %v4334, %v4332
    %v4381 = vpack.c.b16 %v4335, %v4333
    %v4382 = vpack.c.b16 %v4338, %v4336
    %v4383 = vpack.c.b16 %v4339, %v4337
    %v4384 = vpack.c.b16 %v4342, %v4340
    %v4385 = vpack.c.b16 %v4343, %v4341
    %v4386 = vpack.c.b16 %v4346, %v4344
    %v4387 = vpack.c.b16 %v4347, %v4345
    %v4388 = vpack.c.b16 %v4350, %v4348
    %v4389 = vpack.c.b16 %v4351, %v4349
    %v4390 = vpack.c.b16 %v4354, %v4352
    %v4391 = vpack.c.b16 %v4355, %v4353
    %v4392 = vpack.c.b16 %v4358, %v4356
    %v4393 = vpack.c.b16 %v4359, %v4357
    %v4394 = vpack.c.b16 %v4362, %v4360
    %v4395 = vpack.c.b16 %v4363, %v4361
    %4428 = vmatprep.subr.bf16.mxu0 %v4365
    %4429 = vmatpush1.bf16.msra.mxu0 %v4364
    %4430 = vmatprep.subr.bf16.mxu0 %v4367
    %4431 = vmatpush1.bf16.msra.mxu0 %v4366
    %4432 = vmatprep.subr.bf16.mxu0 %v4369
    %4433 = vmatpush1.bf16.msra.mxu0 %v4368
    %4434 = vmatprep.subr.bf16.mxu0 %v4371
    %4435 = vmatpush1.bf16.msra.mxu0 %v4370
    %4436 = vmatprep.subr.bf16.mxu0 %v4373
    %4437 = vmatpush1.bf16.msra.mxu0 %v4372
    %4438 = vmatprep.subr.bf16.mxu0 %v4375
    %4439 = vmatpush1.bf16.msra.mxu0 %v4374
    %4440 = vmatprep.subr.bf16.mxu0 %v4377
    %4441 = vmatpush1.bf16.msra.mxu0 %v4376
    %4442 = vmatprep.subr.bf16.mxu0 %v4379
    %4443 = vmatpush1.bf16.msra.mxu0 %v4378
    %4444 = vmatprep.subr.bf16.mxu0 %v4381
    %4445 = vmatpush1.bf16.msra.mxu0 %v4380
    %4446 = vmatprep.subr.bf16.mxu0 %v4383
    %4447 = vmatpush1.bf16.msra.mxu0 %v4382
    %4448 = vmatprep.subr.bf16.mxu0 %v4385
    %4449 = vmatpush1.bf16.msra.mxu0 %v4384
    %4450 = vmatprep.subr.bf16.mxu0 %v4387
    %4451 = vmatpush1.bf16.msra.mxu0 %v4386
    %4452 = vmatprep.subr.bf16.mxu0 %v4389
    %4453 = vmatpush1.bf16.msra.mxu0 %v4388
    %4454 = vmatprep.subr.bf16.mxu0 %v4391
    %4455 = vmatpush1.bf16.msra.mxu0 %v4390
    %4456 = vmatprep.subr.bf16.mxu0 %v4393
    %4457 = vmatpush1.bf16.msra.mxu0 %v4392
    %4458 = vmatprep.subr.bf16.mxu0 %v4395
    %4459 = vmatpush1.bf16.msra.mxu0 %v4394
    %4460 = vmatprep.mubr.bf16.mxu0 %v4234
    %4461 = vmatmul.mubr.bf16.gmra.mrb[0].mxu0 %v4233
    %v4462 = vpop.f32.mrb[0].mxu0
    %v4463 = vadd.f32 0.0, %v4462
    %v4464 = vpop.f32.mrb[0].mxu0
    %v4465 = vadd.f32 0.0, %v4464
    %v4466 = vpop.f32.mrb[0].mxu0
    %v4467 = vadd.f32 0.0, %v4466
    %v4468 = vpop.f32.mrb[0].mxu0
    %v4469 = vadd.f32 0.0, %v4468
    %4470 = vdwg.mxu0
    %v4471 = vadd.f32 %v4171, %v4463
    %v4472 = vadd.f32 %v4173, %v4465
    %v4473 = vadd.f32 %v4175, %v4467
    %v4474 = vadd.f32 %v4177, %v4469
    %s4475 = scalar_lea.vmem [#allocation10], 24
    %v4476 = vld [vmem:[%s4475] sm:$0xf]
    %v4477 = vld [vmem:[%s4475 + $0x4] sm:$0xf]
    %v4480 = vunpack.c.l.b16 %v4476
    %v4481 = vunpack.c.l.b16 %v4477
    %v4482 = vpack.c.b16 %v4481, %v4480
    %v4484 = vsel %vm3603, %v4482, 0
    %4486 = vmatprep.subr.bf16.mxu0 %v3593
    %4487 = vmatpush1.bf16.msra.mxu0 %v3592
    %4488 = vmatprep.subr.bf16.mxu0 %v3595
    %4489 = vmatpush1.bf16.msra.mxu0 %v3594
    %4490 = vmatprep.subr.bf16.mxu0 0
    %4491 = vmatpush1.bf16.msra.mxu0 0
    %4492 = vmatprep.subr.bf16.mxu0 0
    %4493 = vmatpush1.bf16.msra.mxu0 0
    %4494 = vmatprep.subr.bf16.mxu0 0
    %4495 = vmatpush1.bf16.msra.mxu0 0
    %4496 = vmatprep.subr.bf16.mxu0 0
    %4497 = vmatpush1.bf16.msra.mxu0 0
    %4498 = vmatprep.subr.bf16.mxu0 0
    %4499 = vmatpush1.bf16.msra.mxu0 0
    %4500 = vmatprep.subr.bf16.mxu0 0
    %4501 = vmatpush1.bf16.msra.mxu0 0
    %4502 = vmatprep.subr.bf16.mxu0 0
    %4503 = vmatpush1.bf16.msra.mxu0 0
    %4504 = vmatprep.subr.bf16.mxu0 0
    %4505 = vmatpush1.bf16.msra.mxu0 0
    %4506 = vmatprep.subr.bf16.mxu0 0
    %4507 = vmatpush1.bf16.msra.mxu0 0
    %4508 = vmatprep.subr.bf16.mxu0 0
    %4509 = vmatpush1.bf16.msra.mxu0 0
    %4510 = vmatprep.subr.bf16.mxu0 0
    %4511 = vmatpush1.bf16.msra.mxu0 0
    %4512 = vmatprep.subr.bf16.mxu0 0
    %4513 = vmatpush1.bf16.msra.mxu0 0
    %4514 = vmatprep.subr.bf16.mxu0 0
    %4515 = vmatpush1.bf16.msra.mxu0 0
    %4516 = vmatprep.subr.bf16.mxu0 0
    %4517 = vmatpush1.bf16.msra.mxu0 0
    %4518 = vmatprep.mubr.bf16.mxu0 0
    %4519 = vmatmul.mubr.bf16.gmra.mrb[0].mxu0 %v4484
    %v4520 = vpop.f32.mrb[0].mxu0
    %v4521 = vadd.f32 0.0, %v4520
    %v4522 = vpop.f32.mrb[0].mxu0
    %v4523 = vadd.f32 0.0, %v4522
    %v4524 = vpop.f32.mrb[0].mxu0
    %v4525 = vadd.f32 0.0, %v4524
    %v4526 = vpop.f32.mrb[0].mxu0
    %v4527 = vadd.f32 0.0, %v4526
    %4528 = vdwg.mxu0
    %v4529 = vpack.c.bf16 %v4525, %v4521
    %v4530 = vpack.c.bf16 %v4527, %v4523
    %s4531 = scalar_lea.vmem %s11, 768
    %v4532 = vld [vmem:[%s4531] sm:$0xff]
    %v4533 = vld [vmem:[%s4531 + $0x8] sm:$0xff]
    %v4534 = vld [vmem:[%s4531 + $0x10] sm:$0xff]
    %v4535 = vld [vmem:[%s4531 + $0x18] sm:$0xff]
    %v4536 = vld [vmem:[%s4531 + $0x20] sm:$0xff]
    %v4537 = vld [vmem:[%s4531 + $0x28] sm:$0xff]
    %v4538 = vld [vmem:[%s4531 + $0x30] sm:$0xff]
    %v4539 = vld [vmem:[%s4531 + $0x38] sm:$0xff]
    %v4540 = vld [vmem:[%s4531 + $0x40] sm:$0xff]
    %v4541 = vld [vmem:[%s4531 + $0x48] sm:$0xff]
    %v4542 = vld [vmem:[%s4531 + $0x50] sm:$0xff]
    %v4543 = vld [vmem:[%s4531 + $0x58] sm:$0xff]
    %v4544 = vld [vmem:[%s4531 + $0x60] sm:$0xff]
    %v4545 = vld [vmem:[%s4531 + $0x68] sm:$0xff]
    %v4546 = vld [vmem:[%s4531 + $0x70] sm:$0xff]
    %v4547 = vld [vmem:[%s4531 + $0x78] sm:$0xff]
    %v4548 = vld [vmem:[%s4531 + $0x80] sm:$0xff]
    %v4549 = vld [vmem:[%s4531 + $0x88] sm:$0xff]
    %v4550 = vld [vmem:[%s4531 + $0x90] sm:$0xff]
    %v4551 = vld [vmem:[%s4531 + $0x98] sm:$0xff]
    %v4552 = vld [vmem:[%s4531 + $0xa0] sm:$0xff]
    %v4553 = vld [vmem:[%s4531 + $0xa8] sm:$0xff]
    %v4554 = vld [vmem:[%s4531 + $0xb0] sm:$0xff]
    %v4555 = vld [vmem:[%s4531 + $0xb8] sm:$0xff]
    %v4556 = vld [vmem:[%s4531 + $0xc0] sm:$0xff]
    %v4557 = vld [vmem:[%s4531 + $0xc8] sm:$0xff]
    %v4558 = vld [vmem:[%s4531 + $0xd0] sm:$0xff]
    %v4559 = vld [vmem:[%s4531 + $0xd8] sm:$0xff]
    %v4560 = vld [vmem:[%s4531 + $0xe0] sm:$0xff]
    %v4561 = vld [vmem:[%s4531 + $0xe8] sm:$0xff]
    %v4562 = vld [vmem:[%s4531 + $0xf0] sm:$0xff]
    %v4563 = vld [vmem:[%s4531 + $0xf8] sm:$0xff]
    %v4596 = vunpack.c.l.b16 %v4532
    %v4597 = vunpack.c.h.b16 %v4532
    %v4598 = vunpack.c.l.b16 %v4533
    %v4599 = vunpack.c.h.b16 %v4533
    %v4600 = vunpack.c.l.b16 %v4534
    %v4601 = vunpack.c.h.b16 %v4534
    %v4602 = vunpack.c.l.b16 %v4535
    %v4603 = vunpack.c.h.b16 %v4535
    %v4604 = vunpack.c.l.b16 %v4536
    %v4605 = vunpack.c.h.b16 %v4536
    %v4606 = vunpack.c.l.b16 %v4537
    %v4607 = vunpack.c.h.b16 %v4537
    %v4608 = vunpack.c.l.b16 %v4538
    %v4609 = vunpack.c.h.b16 %v4538
    %v4610 = vunpack.c.l.b16 %v4539
    %v4611 = vunpack.c.h.b16 %v4539
    %v4612 = vunpack.c.l.b16 %v4540
    %v4613 = vunpack.c.h.b16 %v4540
    %v4614 = vunpack.c.l.b16 %v4541
    %v4615 = vunpack.c.h.b16 %v4541
    %v4616 = vunpack.c.l.b16 %v4542
    %v4617 = vunpack.c.h.b16 %v4542
    %v4618 = vunpack.c.l.b16 %v4543
    %v4619 = vunpack.c.h.b16 %v4543
    %v4620 = vunpack.c.l.b16 %v4544
    %v4621 = vunpack.c.h.b16 %v4544
    %v4622 = vunpack.c.l.b16 %v4545
    %v4623 = vunpack.c.h.b16 %v4545
    %v4624 = vunpack.c.l.b16 %v4546
    %v4625 = vunpack.c.h.b16 %v4546
    %v4626 = vunpack.c.l.b16 %v4547
    %v4627 = vunpack.c.h.b16 %v4547
    %v4628 = vunpack.c.l.b16 %v4548
    %v4629 = vunpack.c.h.b16 %v4548
    %v4630 = vunpack.c.l.b16 %v4549
    %v4631 = vunpack.c.h.b16 %v4549
    %v4632 = vunpack.c.l.b16 %v4550
    %v4633 = vunpack.c.h.b16 %v4550
    %v4634 = vunpack.c.l.b16 %v4551
    %v4635 = vunpack.c.h.b16 %v4551
    %v4636 = vunpack.c.l.b16 %v4552
    %v4637 = vunpack.c.h.b16 %v4552
    %v4638 = vunpack.c.l.b16 %v4553
    %v4639 = vunpack.c.h.b16 %v4553
    %v4640 = vunpack.c.l.b16 %v4554
    %v4641 = vunpack.c.h.b16 %v4554
    %v4642 = vunpack.c.l.b16 %v4555
    %v4643 = vunpack.c.h.b16 %v4555
    %v4644 = vunpack.c.l.b16 %v4556
    %v4645 = vunpack.c.h.b16 %v4556
    %v4646 = vunpack.c.l.b16 %v4557
    %v4647 = vunpack.c.h.b16 %v4557
    %v4648 = vunpack.c.l.b16 %v4558
    %v4649 = vunpack.c.h.b16 %v4558
    %v4650 = vunpack.c.l.b16 %v4559
    %v4651 = vunpack.c.h.b16 %v4559
    %v4652 = vunpack.c.l.b16 %v4560
    %v4653 = vunpack.c.h.b16 %v4560
    %v4654 = vunpack.c.l.b16 %v4561
    %v4655 = vunpack.c.h.b16 %v4561
    %v4656 = vunpack.c.l.b16 %v4562
    %v4657 = vunpack.c.h.b16 %v4562
    %v4658 = vunpack.c.l.b16 %v4563
    %v4659 = vunpack.c.h.b16 %v4563
    %v4660 = vpack.c.b16 %v4598, %v4596
    %v4661 = vpack.c.b16 %v4599, %v4597
    %v4662 = vpack.c.b16 %v4602, %v4600
    %v4663 = vpack.c.b16 %v4603, %v4601
    %v4664 = vpack.c.b16 %v4606, %v4604
    %v4665 = vpack.c.b16 %v4607, %v4605
    %v4666 = vpack.c.b16 %v4610, %v4608
    %v4667 = vpack.c.b16 %v4611, %v4609
    %v4668 = vpack.c.b16 %v4614, %v4612
    %v4669 = vpack.c.b16 %v4615, %v4613
    %v4670 = vpack.c.b16 %v4618, %v4616
    %v4671 = vpack.c.b16 %v4619, %v4617
    %v4672 = vpack.c.b16 %v4622, %v4620
    %v4673 = vpack.c.b16 %v4623, %v4621
    %v4674 = vpack.c.b16 %v4626, %v4624
    %v4675 = vpack.c.b16 %v4627, %v4625
    %v4676 = vpack.c.b16 %v4630, %v4628
    %v4677 = vpack.c.b16 %v4631, %v4629
    %v4678 = vpack.c.b16 %v4634, %v4632
    %v4679 = vpack.c.b16 %v4635, %v4633
    %v4680 = vpack.c.b16 %v4638, %v4636
    %v4681 = vpack.c.b16 %v4639, %v4637
    %v4682 = vpack.c.b16 %v4642, %v4640
    %v4683 = vpack.c.b16 %v4643, %v4641
    %v4684 = vpack.c.b16 %v4646, %v4644
    %v4685 = vpack.c.b16 %v4647, %v4645
    %v4686 = vpack.c.b16 %v4650, %v4648
    %v4687 = vpack.c.b16 %v4651, %v4649
    %v4688 = vpack.c.b16 %v4654, %v4652
    %v4689 = vpack.c.b16 %v4655, %v4653
    %v4690 = vpack.c.b16 %v4658, %v4656
    %v4691 = vpack.c.b16 %v4659, %v4657
    %4724 = vmatprep.subr.bf16.mxu0 %v4661
    %4725 = vmatpush1.bf16.msra.mxu0 %v4660
    %4726 = vmatprep.subr.bf16.mxu0 %v4663
    %4727 = vmatpush1.bf16.msra.mxu0 %v4662
    %4728 = vmatprep.subr.bf16.mxu0 %v4665
    %4729 = vmatpush1.bf16.msra.mxu0 %v4664
    %4730 = vmatprep.subr.bf16.mxu0 %v4667
    %4731 = vmatpush1.bf16.msra.mxu0 %v4666
    %4732 = vmatprep.subr.bf16.mxu0 %v4669
    %4733 = vmatpush1.bf16.msra.mxu0 %v4668
    %4734 = vmatprep.subr.bf16.mxu0 %v4671
    %4735 = vmatpush1.bf16.msra.mxu0 %v4670
    %4736 = vmatprep.subr.bf16.mxu0 %v4673
    %4737 = vmatpush1.bf16.msra.mxu0 %v4672
    %4738 = vmatprep.subr.bf16.mxu0 %v4675
    %4739 = vmatpush1.bf16.msra.mxu0 %v4674
    %4740 = vmatprep.subr.bf16.mxu0 %v4677
    %4741 = vmatpush1.bf16.msra.mxu0 %v4676
    %4742 = vmatprep.subr.bf16.mxu0 %v4679
    %4743 = vmatpush1.bf16.msra.mxu0 %v4678
    %4744 = vmatprep.subr.bf16.mxu0 %v4681
    %4745 = vmatpush1.bf16.msra.mxu0 %v4680
    %4746 = vmatprep.subr.bf16.mxu0 %v4683
    %4747 = vmatpush1.bf16.msra.mxu0 %v4682
    %4748 = vmatprep.subr.bf16.mxu0 %v4685
    %4749 = vmatpush1.bf16.msra.mxu0 %v4684
    %4750 = vmatprep.subr.bf16.mxu0 %v4687
    %4751 = vmatpush1.bf16.msra.mxu0 %v4686
    %4752 = vmatprep.subr.bf16.mxu0 %v4689
    %4753 = vmatpush1.bf16.msra.mxu0 %v4688
    %4754 = vmatprep.subr.bf16.mxu0 %v4691
    %4755 = vmatpush1.bf16.msra.mxu0 %v4690
    %4756 = vmatprep.mubr.bf16.mxu0 %v4530
    %4757 = vmatmul.mubr.bf16.gmra.mrb[0].mxu0 %v4529
    %v4758 = vpop.f32.mrb[0].mxu0
    %v4759 = vadd.f32 0.0, %v4758
    %v4760 = vpop.f32.mrb[0].mxu0
    %v4761 = vadd.f32 0.0, %v4760
    %v4762 = vpop.f32.mrb[0].mxu0
    %v4763 = vadd.f32 0.0, %v4762
    %v4764 = vpop.f32.mrb[0].mxu0
    %v4765 = vadd.f32 0.0, %v4764
    %4766 = vdwg.mxu0
    %v4767 = vadd.f32 %v4471, %v4759
    %v4768 = vadd.f32 %v4472, %v4761
    %v4769 = vadd.f32 %v4473, %v4763
    %v4770 = vadd.f32 %v4474, %v4765
    %v4771 = vld [vmem:[%s12] sm:$0xff]
    %v4772 = vld [vmem:[%s12 + $0x8] sm:$0xff]
    %v4773 = vld [vmem:[%s12 + $0x10] sm:$0xff]
    %v4774 = vld [vmem:[%s12 + $0x18] sm:$0xff]
    %v4775 = vld [vmem:[%s12 + $0x20] sm:$0xff]
    %v4776 = vld [vmem:[%s12 + $0x28] sm:$0xff]
    %v4777 = vld [vmem:[%s12 + $0x30] sm:$0xff]
    %v4778 = vld [vmem:[%s12 + $0x38] sm:$0xff]
    %v4779 = vld [vmem:[%s12 + $0x40] sm:$0xff]
    %v4780 = vld [vmem:[%s12 + $0x48] sm:$0xff]
    %v4781 = vld [vmem:[%s12 + $0x50] sm:$0xff]
    %v4782 = vld [vmem:[%s12 + $0x58] sm:$0xff]
    %v4783 = vld [vmem:[%s12 + $0x60] sm:$0xff]
    %v4784 = vld [vmem:[%s12 + $0x68] sm:$0xff]
    %v4785 = vld [vmem:[%s12 + $0x70] sm:$0xff]
    %v4786 = vld [vmem:[%s12 + $0x78] sm:$0xff]
    %v4787 = vld [vmem:[%s12 + $0x80] sm:$0xff]
    %v4788 = vld [vmem:[%s12 + $0x88] sm:$0xff]
    %v4789 = vld [vmem:[%s12 + $0x90] sm:$0xff]
    %v4790 = vld [vmem:[%s12 + $0x98] sm:$0xff]
    %v4791 = vld [vmem:[%s12 + $0xa0] sm:$0xff]
    %v4792 = vld [vmem:[%s12 + $0xa8] sm:$0xff]
    %v4793 = vld [vmem:[%s12 + $0xb0] sm:$0xff]
    %v4794 = vld [vmem:[%s12 + $0xb8] sm:$0xff]
    %v4795 = vld [vmem:[%s12 + $0xc0] sm:$0xff]
    %v4796 = vld [vmem:[%s12 + $0xc8] sm:$0xff]
    %v4797 = vld [vmem:[%s12 + $0xd0] sm:$0xff]
    %v4798 = vld [vmem:[%s12 + $0xd8] sm:$0xff]
    %v4799 = vld [vmem:[%s12 + $0xe0] sm:$0xff]
    %v4800 = vld [vmem:[%s12 + $0xe8] sm:$0xff]
    %v4801 = vld [vmem:[%s12 + $0xf0] sm:$0xff]
    %v4802 = vld [vmem:[%s12 + $0xf8] sm:$0xff]
    %v4803 = vld [vmem:[#allocation12] sm:$0xff]
    %v4804 = vld [vmem:[#allocation12 + $0x8] sm:$0xff]
    %v4805 = vld [vmem:[#allocation12 + $0x10] sm:$0xff]
    %v4806 = vld [vmem:[#allocation12 + $0x18] sm:$0xff]
    %v4807 = vld [vmem:[#allocation12 + $0x20] sm:$0xff]
    %v4808 = vld [vmem:[#allocation12 + $0x28] sm:$0xff]
    %v4809 = vld [vmem:[#allocation12 + $0x30] sm:$0xff]
    %v4810 = vld [vmem:[#allocation12 + $0x38] sm:$0xff]
    %v4811 = vadd.f32 %v4767, %v4769
    %v4812 = vrot.slane %v4811, 4
    %v4813 = vadd.f32 %v4811, %v4812
    %v4814 = vrot.slane %v4813, 2
    %v4815 = vadd.f32 %v4813, %v4814
    %v4816 = vrot.slane %v4815, 1
    %v4817 = vadd.f32 %v4815, %v4816
    %v4818 = vadd.f32 %v4768, %v4770
    %v4819 = vrot.slane %v4818, 4
    %v4820 = vadd.f32 %v4818, %v4819
    %v4821 = vrot.slane %v4820, 2
    %v4822 = vadd.f32 %v4820, %v4821
    %v4823 = vrot.slane %v4822, 1
    %v4824 = vadd.f32 %v4822, %v4823
    %4825 = vmatprep.subr.mxu0 0.0
    %4826 = vmatpush1.msra.mxu0 %v4771
    %4827 = vmatprep.subr.mxu0 0.0
    %4828 = vmatpush1.msra.mxu0 %v4772
    %4829 = vmatprep.subr.mxu0 0.0
    %4830 = vmatpush1.msra.mxu0 %v4773
    %4831 = vmatprep.subr.mxu0 0.0
    %4832 = vmatpush1.msra.mxu0 %v4774
    %4833 = vmatprep.subr.mxu0 0.0
    %4834 = vmatpush1.msra.mxu0 %v4775
    %4835 = vmatprep.subr.mxu0 0.0
    %4836 = vmatpush1.msra.mxu0 %v4776
    %4837 = vmatprep.subr.mxu0 0.0
    %4838 = vmatpush1.msra.mxu0 %v4777
    %4839 = vmatprep.subr.mxu0 0.0
    %4840 = vmatpush1.msra.mxu0 %v4778
    %4841 = vmatprep.subr.mxu0 0.0
    %4842 = vmatpush1.msra.mxu0 %v4779
    %4843 = vmatprep.subr.mxu0 0.0
    %4844 = vmatpush1.msra.mxu0 %v4780
    %4845 = vmatprep.subr.mxu0 0.0
    %4846 = vmatpush1.msra.mxu0 %v4781
    %4847 = vmatprep.subr.mxu0 0.0
    %4848 = vmatpush1.msra.mxu0 %v4782
    %4849 = vmatprep.subr.mxu0 0.0
    %4850 = vmatpush1.msra.mxu0 %v4783
    %4851 = vmatprep.subr.mxu0 0.0
    %4852 = vmatpush1.msra.mxu0 %v4784
    %4853 = vmatprep.subr.mxu0 0.0
    %4854 = vmatpush1.msra.mxu0 %v4785
    %4855 = vmatprep.subr.mxu0 0.0
    %4856 = vmatpush1.msra.mxu0 %v4786
    %4857 = vmatprep.subr.mxu0 0.0
    %4858 = vmatpush1.msra.mxu0 %v4787
    %4859 = vmatprep.subr.mxu0 0.0
    %4860 = vmatpush1.msra.mxu0 %v4788
    %4861 = vmatprep.subr.mxu0 0.0
    %4862 = vmatpush1.msra.mxu0 %v4789
    %4863 = vmatprep.subr.mxu0 0.0
    %4864 = vmatpush1.msra.mxu0 %v4790
    %4865 = vmatprep.subr.mxu0 0.0
    %4866 = vmatpush1.msra.mxu0 %v4791
    %4867 = vmatprep.subr.mxu0 0.0
    %4868 = vmatpush1.msra.mxu0 %v4792
    %4869 = vmatprep.subr.mxu0 0.0
    %4870 = vmatpush1.msra.mxu0 %v4793
    %4871 = vmatprep.subr.mxu0 0.0
    %4872 = vmatpush1.msra.mxu0 %v4794
    %4873 = vmatprep.subr.mxu0 0.0
    %4874 = vmatpush1.msra.mxu0 %v4795
    %4875 = vmatprep.subr.mxu0 0.0
    %4876 = vmatpush1.msra.mxu0 %v4796
    %4877 = vmatprep.subr.mxu0 0.0
    %4878 = vmatpush1.msra.mxu0 %v4797
    %4879 = vmatprep.subr.mxu0 0.0
    %4880 = vmatpush1.msra.mxu0 %v4798
    %4881 = vmatprep.subr.mxu0 0.0
    %4882 = vmatpush1.msra.mxu0 %v4799
    %4883 = vmatprep.subr.mxu0 0.0
    %4884 = vmatpush1.msra.mxu0 %v4800
    %4885 = vmatprep.subr.mxu0 0.0
    %4886 = vmatpush1.msra.mxu0 %v4801
    %4887 = vmatprep.subr.mxu0 0.0
    %4888 = vmatpush1.msra.mxu0 %v4802
    %4889 = vmatprep.mubr.f32.mxu0 %v4824
    %4890 = vmatmul.mubr.f32.gmra.mrb[0].mxu0 %v4817
    %v4891 = vpop.f32.mrb[0].mxu0
    %v4892 = vadd.f32 0.0, %v4891
    %v4893 = vpop.f32.mrb[0].mxu0
    %4894 = vdwg.mxu0
    %v4895 = vmul.f32 %v4892, 0.0078125
    %v4897 = vsel %vm3603, %v4895, 0
    %4899 = vmatprep.subr.mxu0 %v4804
    %4900 = vmatpush1.msra.mxu0 %v4803
    %4901 = vmatprep.subr.mxu0 %v4806
    %4902 = vmatpush1.msra.mxu0 %v4805
    %4903 = vmatprep.subr.mxu0 %v4808
    %4904 = vmatpush1.msra.mxu0 %v4807
    %4905 = vmatprep.subr.mxu0 %v4810
    %4906 = vmatpush1.msra.mxu0 %v4809
    %4907 = vmatprep.subr.mxu0 0.0
    %4908 = vmatpush1.msra.mxu0 0.0
    %4909 = vmatprep.subr.mxu0 0.0
    %4910 = vmatpush1.msra.mxu0 0.0
    %4911 = vmatprep.subr.mxu0 0.0
    %4912 = vmatpush1.msra.mxu0 0.0
    %4913 = vmatprep.subr.mxu0 0.0
    %4914 = vmatpush1.msra.mxu0 0.0
    %4915 = vmatprep.subr.mxu0 0.0
    %4916 = vmatpush1.msra.mxu0 0.0
    %4917 = vmatprep.subr.mxu0 0.0
    %4918 = vmatpush1.msra.mxu0 0.0
    %4919 = vmatprep.subr.mxu0 0.0
    %4920 = vmatpush1.msra.mxu0 0.0
    %4921 = vmatprep.subr.mxu0 0.0
    %4922 = vmatpush1.msra.mxu0 0.0
    %4923 = vmatprep.subr.mxu0 0.0
    %4924 = vmatpush1.msra.mxu0 0.0
    %4925 = vmatprep.subr.mxu0 0.0
    %4926 = vmatpush1.msra.mxu0 0.0
    %4927 = vmatprep.subr.mxu0 0.0
    %4928 = vmatpush1.msra.mxu0 0.0
    %4929 = vmatprep.subr.mxu0 0.0
    %4930 = vmatpush1.msra.mxu0 0.0
    %4931 = vmatprep.subr.mxu0 0.0
    %4932 = vmatpush1.msra.mxu0 0.0
    %4933 = vmatprep.subr.mxu0 0.0
    %4934 = vmatpush1.msra.mxu0 0.0
    %4935 = vmatprep.subr.mxu0 0.0
    %4936 = vmatpush1.msra.mxu0 0.0
    %4937 = vmatprep.subr.mxu0 0.0
    %4938 = vmatpush1.msra.mxu0 0.0
    %4939 = vmatprep.subr.mxu0 0.0
    %4940 = vmatpush1.msra.mxu0 0.0
    %4941 = vmatprep.subr.mxu0 0.0
    %4942 = vmatpush1.msra.mxu0 0.0
    %4943 = vmatprep.subr.mxu0 0.0
    %4944 = vmatpush1.msra.mxu0 0.0
    %4945 = vmatprep.subr.mxu0 0.0
    %4946 = vmatpush1.msra.mxu0 0.0
    %4947 = vmatprep.subr.mxu0 0.0
    %4948 = vmatpush1.msra.mxu0 0.0
    %4949 = vmatprep.subr.mxu0 0.0
    %4950 = vmatpush1.msra.mxu0 0.0
    %4951 = vmatprep.subr.mxu0 0.0
    %4952 = vmatpush1.msra.mxu0 0.0
    %4953 = vmatprep.subr.mxu0 0.0
    %4954 = vmatpush1.msra.mxu0 0.0
    %4955 = vmatprep.subr.mxu0 0.0
    %4956 = vmatpush1.msra.mxu0 0.0
    %4957 = vmatprep.subr.mxu0 0.0
    %4958 = vmatpush1.msra.mxu0 0.0
    %4959 = vmatprep.subr.mxu0 0.0
    %4960 = vmatpush1.msra.mxu0 0.0
    %4961 = vmatprep.subr.mxu0 0.0
    %4962 = vmatpush1.msra.mxu0 0.0
    %4963 = vmatprep.mubr.f32.mxu0 0.0
    %4964 = vmatmul.mubr.f32.gmra.mrb[0].mxu0 %v4897
    %v4965 = vpop.f32.mrb[0].mxu0
    %v4966 = vadd.f32 0.0, %v4965
    %v4967 = vpop.f32.mrb[0].mxu0
    %v4968 = vadd.f32 0.0, %v4967
    %4969 = vdwg.mxu0
    %v4970 = vlaneseq
    %v4971 = vshrl.u32 %v4970, 7
    %v4972 = vsub.s32 0, %v4971
    %v4973 = vrot.slane %v4966, %v4972
    %v4974 = vlaneseq
    %v4975 = vshrl.u32 %v4974, 7
    %v4976 = vsub.s32 0, %v4975
    %v4977 = vrot.slane %v4968, %v4976
    %v4978 = vsub.f32 %v4767, %v4973
    %v4979 = vsub.f32 %v4768, %v4977
    %v4980 = vsub.f32 %v4769, %v4973
    %v4981 = vsub.f32 %v4770, %v4977
    %v4982 = vmul.f32 %v4978, %v4978
    %v4983 = vmul.f32 %v4979, %v4979
    %v4984 = vmul.f32 %v4980, %v4980
    %v4985 = vmul.f32 %v4981, %v4981
    %v4986 = vadd.f32 %v4982, %v4984
    %v4987 = vrot.slane %v4986, 4
    %v4988 = vadd.f32 %v4986, %v4987
    %v4989 = vrot.slane %v4988, 2
    %v4990 = vadd.f32 %v4988, %v4989
    %v4991 = vrot.slane %v4990, 1
    %v4992 = vadd.f32 %v4990, %v4991
    %v4993 = vadd.f32 %v4983, %v4985
    %v4994 = vrot.slane %v4993, 4
    %v4995 = vadd.f32 %v4993, %v4994
    %v4996 = vrot.slane %v4995, 2
    %v4997 = vadd.f32 %v4995, %v4996
    %v4998 = vrot.slane %v4997, 1
    %v4999 = vadd.f32 %v4997, %v4998
    %5000 = vmatprep.subr.mxu0 0.0
    %5001 = vmatpush1.msra.mxu0 %v4771
    %5002 = vmatprep.subr.mxu0 0.0
    %5003 = vmatpush1.msra.mxu0 %v4772
    %5004 = vmatprep.subr.mxu0 0.0
    %5005 = vmatpush1.msra.mxu0 %v4773
    %5006 = vmatprep.subr.mxu0 0.0
    %5007 = vmatpush1.msra.mxu0 %v4774
    %5008 = vmatprep.subr.mxu0 0.0
    %5009 = vmatpush1.msra.mxu0 %v4775
    %5010 = vmatprep.subr.mxu0 0.0
    %5011 = vmatpush1.msra.mxu0 %v4776
    %5012 = vmatprep.subr.mxu0 0.0
    %5013 = vmatpush1.msra.mxu0 %v4777
    %5014 = vmatprep.subr.mxu0 0.0
    %5015 = vmatpush1.msra.mxu0 %v4778
    %5016 = vmatprep.subr.mxu0 0.0
    %5017 = vmatpush1.msra.mxu0 %v4779
    %5018 = vmatprep.subr.mxu0 0.0
    %5019 = vmatpush1.msra.mxu0 %v4780
    %5020 = vmatprep.subr.mxu0 0.0
    %5021 = vmatpush1.msra.mxu0 %v4781
    %5022 = vmatprep.subr.mxu0 0.0
    %5023 = vmatpush1.msra.mxu0 %v4782
    %5024 = vmatprep.subr.mxu0 0.0
    %5025 = vmatpush1.msra.mxu0 %v4783
    %5026 = vmatprep.subr.mxu0 0.0
    %5027 = vmatpush1.msra.mxu0 %v4784
    %5028 = vmatprep.subr.mxu0 0.0
    %5029 = vmatpush1.msra.mxu0 %v4785
    %5030 = vmatprep.subr.mxu0 0.0
    %5031 = vmatpush1.msra.mxu0 %v4786
    %5032 = vmatprep.subr.mxu0 0.0
    %5033 = vmatpush1.msra.mxu0 %v4787
    %5034 = vmatprep.subr.mxu0 0.0
    %5035 = vmatpush1.msra.mxu0 %v4788
    %5036 = vmatprep.subr.mxu0 0.0
    %5037 = vmatpush1.msra.mxu0 %v4789
    %5038 = vmatprep.subr.mxu0 0.0
    %5039 = vmatpush1.msra.mxu0 %v4790
    %5040 = vmatprep.subr.mxu0 0.0
    %5041 = vmatpush1.msra.mxu0 %v4791
    %5042 = vmatprep.subr.mxu0 0.0
    %5043 = vmatpush1.msra.mxu0 %v4792
    %5044 = vmatprep.subr.mxu0 0.0
    %5045 = vmatpush1.msra.mxu0 %v4793
    %5046 = vmatprep.subr.mxu0 0.0
    %5047 = vmatpush1.msra.mxu0 %v4794
    %5048 = vmatprep.subr.mxu0 0.0
    %5049 = vmatpush1.msra.mxu0 %v4795
    %5050 = vmatprep.subr.mxu0 0.0
    %5051 = vmatpush1.msra.mxu0 %v4796
    %5052 = vmatprep.subr.mxu0 0.0
    %5053 = vmatpush1.msra.mxu0 %v4797
    %5054 = vmatprep.subr.mxu0 0.0
    %5055 = vmatpush1.msra.mxu0 %v4798
    %5056 = vmatprep.subr.mxu0 0.0
    %5057 = vmatpush1.msra.mxu0 %v4799
    %5058 = vmatprep.subr.mxu0 0.0
    %5059 = vmatpush1.msra.mxu0 %v4800
    %5060 = vmatprep.subr.mxu0 0.0
    %5061 = vmatpush1.msra.mxu0 %v4801
    %5062 = vmatprep.subr.mxu0 0.0
    %5063 = vmatpush1.msra.mxu0 %v4802
    %5064 = vmatprep.mubr.f32.mxu0 %v4999
    %5065 = vmatmul.mubr.f32.gmra.mrb[0].mxu0 %v4992
    %v5066 = vpop.f32.mrb[0].mxu0
    %v5067 = vadd.f32 0.0, %v5066
    %v5068 = vpop.f32.mrb[0].mxu0
    %5069 = vdwg.mxu0
    %v5070 = vmul.f32 %v5067, 0.0078125
    %v5072 = vsel %vm3603, %v5070, 0
    %5074 = vmatprep.subr.mxu0 %v4804
    %5075 = vmatpush1.msra.mxu0 %v4803
    %5076 = vmatprep.subr.mxu0 %v4806
    %5077 = vmatpush1.msra.mxu0 %v4805
    %5078 = vmatprep.subr.mxu0 %v4808
    %5079 = vmatpush1.msra.mxu0 %v4807
    %5080 = vmatprep.subr.mxu0 %v4810
    %5081 = vmatpush1.msra.mxu0 %v4809
    %5082 = vmatprep.subr.mxu0 0.0
    %5083 = vmatpush1.msra.mxu0 0.0
    %5084 = vmatprep.subr.mxu0 0.0
    %5085 = vmatpush1.msra.mxu0 0.0
    %5086 = vmatprep.subr.mxu0 0.0
    %5087 = vmatpush1.msra.mxu0 0.0
    %5088 = vmatprep.subr.mxu0 0.0
    %5089 = vmatpush1.msra.mxu0 0.0
    %5090 = vmatprep.subr.mxu0 0.0
    %5091 = vmatpush1.msra.mxu0 0.0
    %5092 = vmatprep.subr.mxu0 0.0
    %5093 = vmatpush1.msra.mxu0 0.0
    %5094 = vmatprep.subr.mxu0 0.0
    %5095 = vmatpush1.msra.mxu0 0.0
    %5096 = vmatprep.subr.mxu0 0.0
    %5097 = vmatpush1.msra.mxu0 0.0
    %5098 = vmatprep.subr.mxu0 0.0
    %5099 = vmatpush1.msra.mxu0 0.0
    %5100 = vmatprep.subr.mxu0 0.0
    %5101 = vmatpush1.msra.mxu0 0.0
    %5102 = vmatprep.subr.mxu0 0.0
    %5103 = vmatpush1.msra.mxu0 0.0
    %5104 = vmatprep.subr.mxu0 0.0
    %5105 = vmatpush1.msra.mxu0 0.0
    %5106 = vmatprep.subr.mxu0 0.0
    %5107 = vmatpush1.msra.mxu0 0.0
    %5108 = vmatprep.subr.mxu0 0.0
    %5109 = vmatpush1.msra.mxu0 0.0
    %5110 = vmatprep.subr.mxu0 0.0
    %5111 = vmatpush1.msra.mxu0 0.0
    %5112 = vmatprep.subr.mxu0 0.0
    %5113 = vmatpush1.msra.mxu0 0.0
    %5114 = vmatprep.subr.mxu0 0.0
    %5115 = vmatpush1.msra.mxu0 0.0
    %5116 = vmatprep.subr.mxu0 0.0
    %5117 = vmatpush1.msra.mxu0 0.0
    %5118 = vmatprep.subr.mxu0 0.0
    %5119 = vmatpush1.msra.mxu0 0.0
    %5120 = vmatprep.subr.mxu0 0.0
    %5121 = vmatpush1.msra.mxu0 0.0
    %5122 = vmatprep.subr.mxu0 0.0
    %5123 = vmatpush1.msra.mxu0 0.0
    %5124 = vmatprep.subr.mxu0 0.0
    %5125 = vmatpush1.msra.mxu0 0.0
    %5126 = vmatprep.subr.mxu0 0.0
    %5127 = vmatpush1.msra.mxu0 0.0
    %5128 = vmatprep.subr.mxu0 0.0
    %5129 = vmatpush1.msra.mxu0 0.0
    %5130 = vmatprep.subr.mxu0 0.0
    %5131 = vmatpush1.msra.mxu0 0.0
    %5132 = vmatprep.subr.mxu0 0.0
    %5133 = vmatpush1.msra.mxu0 0.0
    %5134 = vmatprep.subr.mxu0 0.0
    %5135 = vmatpush1.msra.mxu0 0.0
    %5136 = vmatprep.subr.mxu0 0.0
    %5137 = vmatpush1.msra.mxu0 0.0
    %5138 = vmatprep.mubr.f32.mxu0 0.0
    %5139 = vmatmul.mubr.f32.gmra.mrb[0].mxu0 %v5072
    %v5140 = vpop.f32.mrb[0].mxu0
    %v5141 = vadd.f32 1e-05, %v5140
    %v5142 = vpop.f32.mrb[0].mxu0
    %v5143 = vadd.f32 1e-05, %v5142
    %5144 = vdwg.mxu0
    %v5145 = vrsqrt.pop %v5141
    %v5146 = vrsqrt.pop %v5143
    %v5147 = vlaneseq
    %v5148 = vshrl.u32 %v5147, 7
    %v5149 = vsub.s32 0, %v5148
    %v5150 = vrot.slane %v5145, %v5149
    %v5151 = vlaneseq
    %v5152 = vshrl.u32 %v5151, 7
    %v5153 = vsub.s32 0, %v5152
    %v5154 = vrot.slane %v5146, %v5153
    %v5155 = vmul.f32 %v4978, %v5150
    %v5156 = vmul.f32 %v4979, %v5154
    %v5157 = vmul.f32 %v4980, %v5150
    %v5158 = vmul.f32 %v4981, %v5154
    %v5159 = vld [vmem:[%s14] sm:$0x3]
    %v5161 = vlaneseq
    %v5162 = vshrl.u32 %v5161, 7
    %v5163 = vsub.s32 0, %v5162
    %v5164 = vrot.slane %v5159, %v5163
    %v5165 = vlaneseq
    %v5166 = vshrl.u32 %v5165, 7
    %v5167 = vsub.s32 1, %v5166
    %v5168 = vrot.slane %v5159, %v5167
    %v5171 = vmul.f32 %v5155, %v5164
    %v5172 = vmul.f32 %v5156, %v5168
    %v5173 = vmul.f32 %v5157, %v5164
    %v5174 = vmul.f32 %v5158, %v5168
    %v5175 = vld [vmem:[%s15] sm:$0x3]
    %v5177 = vlaneseq
    %v5178 = vshrl.u32 %v5177, 7
    %v5179 = vsub.s32 0, %v5178
    %v5180 = vrot.slane %v5175, %v5179
    %v5181 = vlaneseq
    %v5182 = vshrl.u32 %v5181, 7
    %v5183 = vsub.s32 1, %v5182
    %v5184 = vrot.slane %v5175, %v5183
    %v5187 = vadd.f32 %v5171, %v5180
    %v5188 = vadd.f32 %v5172, %v5184
    %v5189 = vadd.f32 %v5173, %v5180
    %v5190 = vadd.f32 %v5174, %v5184
    %vm5191 = vcmp.ge.f32.partialorder %v5187, 0.0
    %vm5192 = vcmp.ge.f32.partialorder %v5188, 0.0
    %vm5193 = vcmp.ge.f32.partialorder %v5189, 0.0
    %vm5194 = vcmp.ge.f32.partialorder %v5190, 0.0
    %v5195 = vmul.f32 %v5187, 0.2
    %v5196 = vmul.f32 %v5188, 0.2
    %v5197 = vmul.f32 %v5189, 0.2
    %v5198 = vmul.f32 %v5190, 0.2
    %v5199 = vsel %vm5191, %v5187, %v5195
    %v5200 = vsel %vm5192, %v5188, %v5196
    %v5201 = vsel %vm5193, %v5189, %v5197
    %v5202 = vsel %vm5194, %v5190, %v5198
    %v5203 = vpack.c.bf16 %v5201, %v5199
    %v5204 = vpack.c.bf16 %v5202, %v5200
    %v5205 = vld [vmem:[#allocation13] sm:$0xf]
    %v5207 = vsel %vm3248, %v5205, 0
    %5209 = vmatprep.subr.bf16.mxu0 %v5204
    %5210 = vmatpush1.bf16.msra.mxu0 %v5203
    %5211 = vmatprep.subr.bf16.mxu0 0
    %5212 = vmatpush1.bf16.msra.mxu0 0
    %5213 = vmatprep.subr.bf16.mxu0 0
    %5214 = vmatpush1.bf16.msra.mxu0 0
    %5215 = vmatprep.subr.bf16.mxu0 0
    %5216 = vmatpush1.bf16.msra.mxu0 0
    %5217 = vmatprep.subr.bf16.mxu0 0
    %5218 = vmatpush1.bf16.msra.mxu0 0
    %5219 = vmatprep.subr.bf16.mxu0 0
    %5220 = vmatpush1.bf16.msra.mxu0 0
    %5221 = vmatprep.subr.bf16.mxu0 0
    %5222 = vmatpush1.bf16.msra.mxu0 0
    %5223 = vmatprep.subr.bf16.mxu0 0
    %5224 = vmatpush1.bf16.msra.mxu0 0
    %5225 = vmatprep.subr.bf16.mxu0 0
    %5226 = vmatpush1.bf16.msra.mxu0 0
    %5227 = vmatprep.subr.bf16.mxu0 0
    %5228 = vmatpush1.bf16.msra.mxu0 0
    %5229 = vmatprep.subr.bf16.mxu0 0
    %5230 = vmatpush1.bf16.msra.mxu0 0
    %5231 = vmatprep.subr.bf16.mxu0 0
    %5232 = vmatpush1.bf16.msra.mxu0 0
    %5233 = vmatprep.subr.bf16.mxu0 0
    %5234 = vmatpush1.bf16.msra.mxu0 0
    %5235 = vmatprep.subr.bf16.mxu0 0
    %5236 = vmatpush1.bf16.msra.mxu0 0
    %5237 = vmatprep.subr.bf16.mxu0 0
    %5238 = vmatpush1.bf16.msra.mxu0 0
    %5239 = vmatprep.subr.bf16.mxu0 0
    %5240 = vmatpush1.bf16.msra.mxu0 0
    %5241 = vmatprep.mubr.bf16.mxu0 0
    %5242 = vmatmul.mubr.bf16.gmra.mrb[0].mxu0 %v5207
    %v5243 = vpop.f32.mrb[0].mxu0
    %v5244 = vadd.f32 0.0, %v5243
    %v5245 = vpop.f32.mrb[0].mxu0
    %v5246 = vadd.f32 0.0, %v5245
    %v5247 = vpop.f32.mrb[0].mxu0
    %v5248 = vpop.f32.mrb[0].mxu0
    %5249 = vdwg.mxu0
    %v5250 = vpack.c.bf16 %v5244, %v5244
    %v5251 = vpack.c.bf16 %v5246, %v5246
    %v5252 = vld [vmem:[#allocation15] sm:$0xff]
    %v5253 = vld [vmem:[#allocation15 + $0x8] sm:$0xff]
    %v5254 = vld [vmem:[#allocation15 + $0x10] sm:$0xff]
    %v5255 = vld [vmem:[#allocation15 + $0x18] sm:$0xff]
    %v5256 = vld [vmem:[#allocation15 + $0x20] sm:$0xff]
    %v5257 = vld [vmem:[#allocation15 + $0x28] sm:$0xff]
    %v5258 = vld [vmem:[#allocation15 + $0x30] sm:$0xff]
    %v5259 = vld [vmem:[#allocation15 + $0x38] sm:$0xff]
    %v5260 = vld [vmem:[#allocation15 + $0x40] sm:$0xff]
    %v5261 = vld [vmem:[#allocation15 + $0x48] sm:$0xff]
    %v5262 = vld [vmem:[#allocation15 + $0x50] sm:$0xff]
    %v5263 = vld [vmem:[#allocation15 + $0x58] sm:$0xff]
    %v5264 = vld [vmem:[#allocation15 + $0x60] sm:$0xff]
    %v5265 = vld [vmem:[#allocation15 + $0x68] sm:$0xff]
    %v5266 = vld [vmem:[#allocation15 + $0x70] sm:$0xff]
    %v5267 = vld [vmem:[#allocation15 + $0x78] sm:$0xff]
    %v5268 = vld [vmem:[#allocation15 + $0x80] sm:$0xff]
    %v5269 = vld [vmem:[#allocation15 + $0x88] sm:$0xff]
    %v5270 = vld [vmem:[#allocation15 + $0x90] sm:$0xff]
    %v5271 = vld [vmem:[#allocation15 + $0x98] sm:$0xff]
    %v5272 = vld [vmem:[#allocation15 + $0xa0] sm:$0xff]
    %v5273 = vld [vmem:[#allocation15 + $0xa8] sm:$0xff]
    %v5274 = vld [vmem:[#allocation15 + $0xb0] sm:$0xff]
    %v5275 = vld [vmem:[#allocation15 + $0xb8] sm:$0xff]
    %v5276 = vld [vmem:[#allocation15 + $0xc0] sm:$0xff]
    %v5277 = vld [vmem:[#allocation15 + $0xc8] sm:$0xff]
    %v5278 = vld [vmem:[#allocation15 + $0xd0] sm:$0xff]
    %v5279 = vld [vmem:[#allocation15 + $0xd8] sm:$0xff]
    %v5280 = vld [vmem:[#allocation15 + $0xe0] sm:$0xff]
    %v5281 = vld [vmem:[#allocation15 + $0xe8] sm:$0xff]
    %v5282 = vld [vmem:[#allocation15 + $0xf0] sm:$0xff]
    %v5283 = vld [vmem:[#allocation15 + $0xf8] sm:$0xff]
    %s5284 = scalar_lea.vmem [#allocation13], 4
    %v5285 = vld [vmem:[%s5284] sm:$0xf]
    %v5287 = vsel %vm3248, %v5285, 0
    %5289 = vmatprep.subr.bf16.mxu0 %v5204
    %5290 = vmatpush1.bf16.msra.mxu0 %v5203
    %5291 = vmatprep.subr.bf16.mxu0 0
    %5292 = vmatpush1.bf16.msra.mxu0 0
    %5293 = vmatprep.subr.bf16.mxu0 0
    %5294 = vmatpush1.bf16.msra.mxu0 0
    %5295 = vmatprep.subr.bf16.mxu0 0
    %5296 = vmatpush1.bf16.msra.mxu0 0
    %5297 = vmatprep.subr.bf16.mxu0 0
    %5298 = vmatpush1.bf16.msra.mxu0 0
    %5299 = vmatprep.subr.bf16.mxu0 0
    %5300 = vmatpush1.bf16.msra.mxu0 0
    %5301 = vmatprep.subr.bf16.mxu0 0
    %5302 = vmatpush1.bf16.msra.mxu0 0
    %5303 = vmatprep.subr.bf16.mxu0 0
    %5304 = vmatpush1.bf16.msra.mxu0 0
    %5305 = vmatprep.subr.bf16.mxu0 0
    %5306 = vmatpush1.bf16.msra.mxu0 0
    %5307 = vmatprep.subr.bf16.mxu0 0
    %5308 = vmatpush1.bf16.msra.mxu0 0
    %5309 = vmatprep.subr.bf16.mxu0 0
    %5310 = vmatpush1.bf16.msra.mxu0 0
    %5311 = vmatprep.subr.bf16.mxu0 0
    %5312 = vmatpush1.bf16.msra.mxu0 0
    %5313 = vmatprep.subr.bf16.mxu0 0
    %5314 = vmatpush1.bf16.msra.mxu0 0
    %5315 = vmatprep.subr.bf16.mxu0 0
    %5316 = vmatpush1.bf16.msra.mxu0 0
    %5317 = vmatprep.subr.bf16.mxu0 0
    %5318 = vmatpush1.bf16.msra.mxu0 0
    %5319 = vmatprep.subr.bf16.mxu0 0
    %5320 = vmatpush1.bf16.msra.mxu0 0
    %5321 = vmatprep.mubr.bf16.mxu0 0
    %5322 = vmatmul.mubr.bf16.gmra.mrb[0].mxu0 %v5287
    %v5323 = vpop.f32.mrb[0].mxu0
    %v5324 = vadd.f32 0.0, %v5323
    %v5325 = vpop.f32.mrb[0].mxu0
    %v5326 = vadd.f32 0.0, %v5325
    %v5327 = vpop.f32.mrb[0].mxu0
    %v5328 = vpop.f32.mrb[0].mxu0
    %5329 = vdwg.mxu0
    %v5330 = vpack.c.bf16 %v5324, %v5324
    %v5331 = vpack.c.bf16 %v5326, %v5326
    %s5332 = scalar_lea.vmem [#allocation15], 256
    %v5333 = vld [vmem:[%s5332] sm:$0xff]
    %v5334 = vld [vmem:[%s5332 + $0x8] sm:$0xff]
    %v5335 = vld [vmem:[%s5332 + $0x10] sm:$0xff]
    %v5336 = vld [vmem:[%s5332 + $0x18] sm:$0xff]
    %v5337 = vld [vmem:[%s5332 + $0x20] sm:$0xff]
    %v5338 = vld [vmem:[%s5332 + $0x28] sm:$0xff]
    %v5339 = vld [vmem:[%s5332 + $0x30] sm:$0xff]
    %v5340 = vld [vmem:[%s5332 + $0x38] sm:$0xff]
    %v5341 = vld [vmem:[%s5332 + $0x40] sm:$0xff]
    %v5342 = vld [vmem:[%s5332 + $0x48] sm:$0xff]
    %v5343 = vld [vmem:[%s5332 + $0x50] sm:$0xff]
    %v5344 = vld [vmem:[%s5332 + $0x58] sm:$0xff]
    %v5345 = vld [vmem:[%s5332 + $0x60] sm:$0xff]
    %v5346 = vld [vmem:[%s5332 + $0x68] sm:$0xff]
    %v5347 = vld [vmem:[%s5332 + $0x70] sm:$0xff]
    %v5348 = vld [vmem:[%s5332 + $0x78] sm:$0xff]
    %v5349 = vld [vmem:[%s5332 + $0x80] sm:$0xff]
    %v5350 = vld [vmem:[%s5332 + $0x88] sm:$0xff]
    %v5351 = vld [vmem:[%s5332 + $0x90] sm:$0xff]
    %v5352 = vld [vmem:[%s5332 + $0x98] sm:$0xff]
    %v5353 = vld [vmem:[%s5332 + $0xa0] sm:$0xff]
    %v5354 = vld [vmem:[%s5332 + $0xa8] sm:$0xff]
    %v5355 = vld [vmem:[%s5332 + $0xb0] sm:$0xff]
    %v5356 = vld [vmem:[%s5332 + $0xb8] sm:$0xff]
    %v5357 = vld [vmem:[%s5332 + $0xc0] sm:$0xff]
    %v5358 = vld [vmem:[%s5332 + $0xc8] sm:$0xff]
    %v5359 = vld [vmem:[%s5332 + $0xd0] sm:$0xff]
    %v5360 = vld [vmem:[%s5332 + $0xd8] sm:$0xff]
    %v5361 = vld [vmem:[%s5332 + $0xe0] sm:$0xff]
    %v5362 = vld [vmem:[%s5332 + $0xe8] sm:$0xff]
    %v5363 = vld [vmem:[%s5332 + $0xf0] sm:$0xff]
    %v5364 = vld [vmem:[%s5332 + $0xf8] sm:$0xff]
    %v5397 = vunpack.c.l.b16 %v5333
    %v5398 = vunpack.c.h.b16 %v5333
    %v5399 = vunpack.c.l.b16 %v5334
    %v5400 = vunpack.c.h.b16 %v5334
    %v5401 = vunpack.c.l.b16 %v5335
    %v5402 = vunpack.c.h.b16 %v5335
    %v5403 = vunpack.c.l.b16 %v5336
    %v5404 = vunpack.c.h.b16 %v5336
    %v5405 = vunpack.c.l.b16 %v5337
    %v5406 = vunpack.c.h.b16 %v5337
    %v5407 = vunpack.c.l.b16 %v5338
    %v5408 = vunpack.c.h.b16 %v5338
    %v5409 = vunpack.c.l.b16 %v5339
    %v5410 = vunpack.c.h.b16 %v5339
    %v5411 = vunpack.c.l.b16 %v5340
    %v5412 = vunpack.c.h.b16 %v5340
    %v5413 = vunpack.c.l.b16 %v5341
    %v5414 = vunpack.c.h.b16 %v5341
    %v5415 = vunpack.c.l.b16 %v5342
    %v5416 = vunpack.c.h.b16 %v5342
    %v5417 = vunpack.c.l.b16 %v5343
    %v5418 = vunpack.c.h.b16 %v5343
    %v5419 = vunpack.c.l.b16 %v5344
    %v5420 = vunpack.c.h.b16 %v5344
    %v5421 = vunpack.c.l.b16 %v5345
    %v5422 = vunpack.c.h.b16 %v5345
    %v5423 = vunpack.c.l.b16 %v5346
    %v5424 = vunpack.c.h.b16 %v5346
    %v5425 = vunpack.c.l.b16 %v5347
    %v5426 = vunpack.c.h.b16 %v5347
    %v5427 = vunpack.c.l.b16 %v5348
    %v5428 = vunpack.c.h.b16 %v5348
    %v5429 = vunpack.c.l.b16 %v5349
    %v5430 = vunpack.c.h.b16 %v5349
    %v5431 = vunpack.c.l.b16 %v5350
    %v5432 = vunpack.c.h.b16 %v5350
    %v5433 = vunpack.c.l.b16 %v5351
    %v5434 = vunpack.c.h.b16 %v5351
    %v5435 = vunpack.c.l.b16 %v5352
    %v5436 = vunpack.c.h.b16 %v5352
    %v5437 = vunpack.c.l.b16 %v5353
    %v5438 = vunpack.c.h.b16 %v5353
    %v5439 = vunpack.c.l.b16 %v5354
    %v5440 = vunpack.c.h.b16 %v5354
    %v5441 = vunpack.c.l.b16 %v5355
    %v5442 = vunpack.c.h.b16 %v5355
    %v5443 = vunpack.c.l.b16 %v5356
    %v5444 = vunpack.c.h.b16 %v5356
    %v5445 = vunpack.c.l.b16 %v5357
    %v5446 = vunpack.c.h.b16 %v5357
    %v5447 = vunpack.c.l.b16 %v5358
    %v5448 = vunpack.c.h.b16 %v5358
    %v5449 = vunpack.c.l.b16 %v5359
    %v5450 = vunpack.c.h.b16 %v5359
    %v5451 = vunpack.c.l.b16 %v5360
    %v5452 = vunpack.c.h.b16 %v5360
    %v5453 = vunpack.c.l.b16 %v5361
    %v5454 = vunpack.c.h.b16 %v5361
    %v5455 = vunpack.c.l.b16 %v5362
    %v5456 = vunpack.c.h.b16 %v5362
    %v5457 = vunpack.c.l.b16 %v5363
    %v5458 = vunpack.c.h.b16 %v5363
    %v5459 = vunpack.c.l.b16 %v5364
    %v5460 = vunpack.c.h.b16 %v5364
    %v5461 = vpack.c.b16 %v5399, %v5397
    %v5462 = vpack.c.b16 %v5400, %v5398
    %v5463 = vpack.c.b16 %v5403, %v5401
    %v5464 = vpack.c.b16 %v5404, %v5402
    %v5465 = vpack.c.b16 %v5407, %v5405
    %v5466 = vpack.c.b16 %v5408, %v5406
    %v5467 = vpack.c.b16 %v5411, %v5409
    %v5468 = vpack.c.b16 %v5412, %v5410
    %v5469 = vpack.c.b16 %v5415, %v5413
    %v5470 = vpack.c.b16 %v5416, %v5414
    %v5471 = vpack.c.b16 %v5419, %v5417
    %v5472 = vpack.c.b16 %v5420, %v5418
    %v5473 = vpack.c.b16 %v5423, %v5421
    %v5474 = vpack.c.b16 %v5424, %v5422
    %v5475 = vpack.c.b16 %v5427, %v5425
    %v5476 = vpack.c.b16 %v5428, %v5426
    %v5477 = vpack.c.b16 %v5431, %v5429
    %v5478 = vpack.c.b16 %v5432, %v5430
    %v5479 = vpack.c.b16 %v5435, %v5433
    %v5480 = vpack.c.b16 %v5436, %v5434
    %v5481 = vpack.c.b16 %v5439, %v5437
    %v5482 = vpack.c.b16 %v5440, %v5438
    %v5483 = vpack.c.b16 %v5443, %v5441
    %v5484 = vpack.c.b16 %v5444, %v5442
    %v5485 = vpack.c.b16 %v5447, %v5445
    %v5486 = vpack.c.b16 %v5448, %v5446
    %v5487 = vpack.c.b16 %v5451, %v5449
    %v5488 = vpack.c.b16 %v5452, %v5450
    %v5489 = vpack.c.b16 %v5455, %v5453
    %v5490 = vpack.c.b16 %v5456, %v5454
    %v5491 = vpack.c.b16 %v5459, %v5457
    %v5492 = vpack.c.b16 %v5460, %v5458
    %5525 = vmatprep.subr.bf16.mxu0 %v5462
    %5526 = vmatpush1.bf16.msra.mxu0 %v5461
    %5527 = vmatprep.subr.bf16.mxu0 %v5464
    %5528 = vmatpush1.bf16.msra.mxu0 %v5463
    %5529 = vmatprep.subr.bf16.mxu0 %v5466
    %5530 = vmatpush1.bf16.msra.mxu0 %v5465
    %5531 = vmatprep.subr.bf16.mxu0 %v5468
    %5532 = vmatpush1.bf16.msra.mxu0 %v5467
    %5533 = vmatprep.subr.bf16.mxu0 %v5470
    %5534 = vmatpush1.bf16.msra.mxu0 %v5469
    %5535 = vmatprep.subr.bf16.mxu0 %v5472
    %5536 = vmatpush1.bf16.msra.mxu0 %v5471
    %5537 = vmatprep.subr.bf16.mxu0 %v5474
    %5538 = vmatpush1.bf16.msra.mxu0 %v5473
    %5539 = vmatprep.subr.bf16.mxu0 %v5476
    %5540 = vmatpush1.bf16.msra.mxu0 %v5475
    %5541 = vmatprep.subr.bf16.mxu0 %v5478
    %5542 = vmatpush1.bf16.msra.mxu0 %v5477
    %5543 = vmatprep.subr.bf16.mxu0 %v5480
    %5544 = vmatpush1.bf16.msra.mxu0 %v5479
    %5545 = vmatprep.subr.bf16.mxu0 %v5482
    %5546 = vmatpush1.bf16.msra.mxu0 %v5481
    %5547 = vmatprep.subr.bf16.mxu0 %v5484
    %5548 = vmatpush1.bf16.msra.mxu0 %v5483
    %5549 = vmatprep.subr.bf16.mxu0 %v5486
    %5550 = vmatpush1.bf16.msra.mxu0 %v5485
    %5551 = vmatprep.subr.bf16.mxu0 %v5488
    %5552 = vmatpush1.bf16.msra.mxu0 %v5487
    %5553 = vmatprep.subr.bf16.mxu0 %v5490
    %5554 = vmatpush1.bf16.msra.mxu0 %v5489
    %5555 = vmatprep.subr.bf16.mxu0 %v5492
    %5556 = vmatpush1.bf16.msra.mxu0 %v5491
    %5557 = vmatprep.mubr.bf16.mxu0 %v5331
    %5558 = vmatmul.mubr.bf16.gmra.mrb[0].mxu0 %v5330
    %v5559 = vpop.f32.mrb[0].mxu0
    %v5560 = vadd.f32 0.0, %v5559
    %v5561 = vpop.f32.mrb[0].mxu0
    %v5562 = vadd.f32 0.0, %v5561
    %v5563 = vpop.f32.mrb[0].mxu0
    %v5564 = vpop.f32.mrb[0].mxu0
    %5565 = vdwg.mxu0
    %v5598 = vunpack.c.l.b16 %v5252
    %v5599 = vunpack.c.h.b16 %v5252
    %v5600 = vunpack.c.l.b16 %v5253
    %v5601 = vunpack.c.h.b16 %v5253
    %v5602 = vunpack.c.l.b16 %v5254
    %v5603 = vunpack.c.h.b16 %v5254
    %v5604 = vunpack.c.l.b16 %v5255
    %v5605 = vunpack.c.h.b16 %v5255
    %v5606 = vunpack.c.l.b16 %v5256
    %v5607 = vunpack.c.h.b16 %v5256
    %v5608 = vunpack.c.l.b16 %v5257
    %v5609 = vunpack.c.h.b16 %v5257
    %v5610 = vunpack.c.l.b16 %v5258
    %v5611 = vunpack.c.h.b16 %v5258
    %v5612 = vunpack.c.l.b16 %v5259
    %v5613 = vunpack.c.h.b16 %v5259
    %v5614 = vunpack.c.l.b16 %v5260
    %v5615 = vunpack.c.h.b16 %v5260
    %v5616 = vunpack.c.l.b16 %v5261
    %v5617 = vunpack.c.h.b16 %v5261
    %v5618 = vunpack.c.l.b16 %v5262
    %v5619 = vunpack.c.h.b16 %v5262
    %v5620 = vunpack.c.l.b16 %v5263
    %v5621 = vunpack.c.h.b16 %v5263
    %v5622 = vunpack.c.l.b16 %v5264
    %v5623 = vunpack.c.h.b16 %v5264
    %v5624 = vunpack.c.l.b16 %v5265
    %v5625 = vunpack.c.h.b16 %v5265
    %v5626 = vunpack.c.l.b16 %v5266
    %v5627 = vunpack.c.h.b16 %v5266
    %v5628 = vunpack.c.l.b16 %v5267
    %v5629 = vunpack.c.h.b16 %v5267
    %v5630 = vunpack.c.l.b16 %v5268
    %v5631 = vunpack.c.h.b16 %v5268
    %v5632 = vunpack.c.l.b16 %v5269
    %v5633 = vunpack.c.h.b16 %v5269
    %v5634 = vunpack.c.l.b16 %v5270
    %v5635 = vunpack.c.h.b16 %v5270
    %v5636 = vunpack.c.l.b16 %v5271
    %v5637 = vunpack.c.h.b16 %v5271
    %v5638 = vunpack.c.l.b16 %v5272
    %v5639 = vunpack.c.h.b16 %v5272
    %v5640 = vunpack.c.l.b16 %v5273
    %v5641 = vunpack.c.h.b16 %v5273
    %v5642 = vunpack.c.l.b16 %v5274
    %v5643 = vunpack.c.h.b16 %v5274
    %v5644 = vunpack.c.l.b16 %v5275
    %v5645 = vunpack.c.h.b16 %v5275
    %v5646 = vunpack.c.l.b16 %v5276
    %v5647 = vunpack.c.h.b16 %v5276
    %v5648 = vunpack.c.l.b16 %v5277
    %v5649 = vunpack.c.h.b16 %v5277
    %v5650 = vunpack.c.l.b16 %v5278
    %v5651 = vunpack.c.h.b16 %v5278
    %v5652 = vunpack.c.l.b16 %v5279
    %v5653 = vunpack.c.h.b16 %v5279
    %v5654 = vunpack.c.l.b16 %v5280
    %v5655 = vunpack.c.h.b16 %v5280
    %v5656 = vunpack.c.l.b16 %v5281
    %v5657 = vunpack.c.h.b16 %v5281
    %v5658 = vunpack.c.l.b16 %v5282
    %v5659 = vunpack.c.h.b16 %v5282
    %v5660 = vunpack.c.l.b16 %v5283
    %v5661 = vunpack.c.h.b16 %v5283
    %v5662 = vpack.c.b16 %v5600, %v5598
    %v5663 = vpack.c.b16 %v5601, %v5599
    %v5664 = vpack.c.b16 %v5604, %v5602
    %v5665 = vpack.c.b16 %v5605, %v5603
    %v5666 = vpack.c.b16 %v5608, %v5606
    %v5667 = vpack.c.b16 %v5609, %v5607
    %v5668 = vpack.c.b16 %v5612, %v5610
    %v5669 = vpack.c.b16 %v5613, %v5611
    %v5670 = vpack.c.b16 %v5616, %v5614
    %v5671 = vpack.c.b16 %v5617, %v5615
    %v5672 = vpack.c.b16 %v5620, %v5618
    %v5673 = vpack.c.b16 %v5621, %v5619
    %v5674 = vpack.c.b16 %v5624, %v5622
    %v5675 = vpack.c.b16 %v5625, %v5623
    %v5676 = vpack.c.b16 %v5628, %v5626
    %v5677 = vpack.c.b16 %v5629, %v5627
    %v5678 = vpack.c.b16 %v5632, %v5630
    %v5679 = vpack.c.b16 %v5633, %v5631
    %v5680 = vpack.c.b16 %v5636, %v5634
    %v5681 = vpack.c.b16 %v5637, %v5635
    %v5682 = vpack.c.b16 %v5640, %v5638
    %v5683 = vpack.c.b16 %v5641, %v5639
    %v5684 = vpack.c.b16 %v5644, %v5642
    %v5685 = vpack.c.b16 %v5645, %v5643
    %v5686 = vpack.c.b16 %v5648, %v5646
    %v5687 = vpack.c.b16 %v5649, %v5647
    %v5688 = vpack.c.b16 %v5652, %v5650
    %v5689 = vpack.c.b16 %v5653, %v5651
    %v5690 = vpack.c.b16 %v5656, %v5654
    %v5691 = vpack.c.b16 %v5657, %v5655
    %v5692 = vpack.c.b16 %v5660, %v5658
    %v5693 = vpack.c.b16 %v5661, %v5659
    %5726 = vmatprep.subr.bf16.mxu0 %v5663
    %5727 = vmatpush1.bf16.msra.mxu0 %v5662
    %5728 = vmatprep.subr.bf16.mxu0 %v5665
    %5729 = vmatpush1.bf16.msra.mxu0 %v5664
    %5730 = vmatprep.subr.bf16.mxu0 %v5667
    %5731 = vmatpush1.bf16.msra.mxu0 %v5666
    %5732 = vmatprep.subr.bf16.mxu0 %v5669
    %5733 = vmatpush1.bf16.msra.mxu0 %v5668
    %5734 = vmatprep.subr.bf16.mxu0 %v5671
    %5735 = vmatpush1.bf16.msra.mxu0 %v5670
    %5736 = vmatprep.subr.bf16.mxu0 %v5673
    %5737 = vmatpush1.bf16.msra.mxu0 %v5672
    %5738 = vmatprep.subr.bf16.mxu0 %v5675
    %5739 = vmatpush1.bf16.msra.mxu0 %v5674
    %5740 = vmatprep.subr.bf16.mxu0 %v5677
    %5741 = vmatpush1.bf16.msra.mxu0 %v5676
    %5742 = vmatprep.subr.bf16.mxu0 %v5679
    %5743 = vmatpush1.bf16.msra.mxu0 %v5678
    %5744 = vmatprep.subr.bf16.mxu0 %v5681
    %5745 = vmatpush1.bf16.msra.mxu0 %v5680
    %5746 = vmatprep.subr.bf16.mxu0 %v5683
    %5747 = vmatpush1.bf16.msra.mxu0 %v5682
    %5748 = vmatprep.subr.bf16.mxu0 %v5685
    %5749 = vmatpush1.bf16.msra.mxu0 %v5684
    %5750 = vmatprep.subr.bf16.mxu0 %v5687
    %5751 = vmatpush1.bf16.msra.mxu0 %v5686
    %5752 = vmatprep.subr.bf16.mxu0 %v5689
    %5753 = vmatpush1.bf16.msra.mxu0 %v5688
    %5754 = vmatprep.subr.bf16.mxu0 %v5691
    %5755 = vmatpush1.bf16.msra.mxu0 %v5690
    %5756 = vmatprep.subr.bf16.mxu0 %v5693
    %5757 = vmatpush1.bf16.msra.mxu0 %v5692
    %5758 = vmatprep.mubr.bf16.mxu0 %v5251
    %5759 = vmatmul.mubr.bf16.gmra.mrb[0].mxu0 %v5250
    %v5760 = vpop.f32.mrb[0].mxu0
    %v5761 = vadd.f32 %v5560, %v5760
    %v5762 = vpop.f32.mrb[0].mxu0
    %v5763 = vadd.f32 %v5562, %v5762
    %v5764 = vpop.f32.mrb[0].mxu0
    %v5765 = vpop.f32.mrb[0].mxu0
    %5766 = vdwg.mxu0
    %s5767 = scalar_lea.vmem [#allocation13], 8
    %v5768 = vld [vmem:[%s5767] sm:$0xf]
    %v5770 = vsel %vm3248, %v5768, 0
    %5772 = vmatprep.subr.bf16.mxu0 %v5204
    %5773 = vmatpush1.bf16.msra.mxu0 %v5203
    %5774 = vmatprep.subr.bf16.mxu0 0
    %5775 = vmatpush1.bf16.msra.mxu0 0
    %5776 = vmatprep.subr.bf16.mxu0 0
    %5777 = vmatpush1.bf16.msra.mxu0 0
    %5778 = vmatprep.subr.bf16.mxu0 0
    %5779 = vmatpush1.bf16.msra.mxu0 0
    %5780 = vmatprep.subr.bf16.mxu0 0
    %5781 = vmatpush1.bf16.msra.mxu0 0
    %5782 = vmatprep.subr.bf16.mxu0 0
    %5783 = vmatpush1.bf16.msra.mxu0 0
    %5784 = vmatprep.subr.bf16.mxu0 0
    %5785 = vmatpush1.bf16.msra.mxu0 0
    %5786 = vmatprep.subr.bf16.mxu0 0
    %5787 = vmatpush1.bf16.msra.mxu0 0
    %5788 = vmatprep.subr.bf16.mxu0 0
    %5789 = vmatpush1.bf16.msra.mxu0 0
    %5790 = vmatprep.subr.bf16.mxu0 0
    %5791 = vmatpush1.bf16.msra.mxu0 0
    %5792 = vmatprep.subr.bf16.mxu0 0
    %5793 = vmatpush1.bf16.msra.mxu0 0
    %5794 = vmatprep.subr.bf16.mxu0 0
    %5795 = vmatpush1.bf16.msra.mxu0 0
    %5796 = vmatprep.subr.bf16.mxu0 0
    %5797 = vmatpush1.bf16.msra.mxu0 0
    %5798 = vmatprep.subr.bf16.mxu0 0
    %5799 = vmatpush1.bf16.msra.mxu0 0
    %5800 = vmatprep.subr.bf16.mxu0 0
    %5801 = vmatpush1.bf16.msra.mxu0 0
    %5802 = vmatprep.subr.bf16.mxu0 0
    %5803 = vmatpush1.bf16.msra.mxu0 0
    %5804 = vmatprep.mubr.bf16.mxu0 0
    %5805 = vmatmul.mubr.bf16.gmra.mrb[0].mxu0 %v5770
    %v5806 = vpop.f32.mrb[0].mxu0
    %v5807 = vadd.f32 0.0, %v5806
    %v5808 = vpop.f32.mrb[0].mxu0
    %v5809 = vadd.f32 0.0, %v5808
    %v5810 = vpop.f32.mrb[0].mxu0
    %v5811 = vpop.f32.mrb[0].mxu0
    %5812 = vdwg.mxu0
    %v5813 = vpack.c.bf16 %v5807, %v5807
    %v5814 = vpack.c.bf16 %v5809, %v5809
    %s5815 = scalar_lea.vmem [#allocation15], 512
    %v5816 = vld [vmem:[%s5815] sm:$0xff]
    %v5817 = vld [vmem:[%s5815 + $0x8] sm:$0xff]
    %v5818 = vld [vmem:[%s5815 + $0x10] sm:$0xff]
    %v5819 = vld [vmem:[%s5815 + $0x18] sm:$0xff]
    %v5820 = vld [vmem:[%s5815 + $0x20] sm:$0xff]
    %v5821 = vld [vmem:[%s5815 + $0x28] sm:$0xff]
    %v5822 = vld [vmem:[%s5815 + $0x30] sm:$0xff]
    %v5823 = vld [vmem:[%s5815 + $0x38] sm:$0xff]
    %v5824 = vld [vmem:[%s5815 + $0x40] sm:$0xff]
    %v5825 = vld [vmem:[%s5815 + $0x48] sm:$0xff]
    %v5826 = vld [vmem:[%s5815 + $0x50] sm:$0xff]
    %v5827 = vld [vmem:[%s5815 + $0x58] sm:$0xff]
    %v5828 = vld [vmem:[%s5815 + $0x60] sm:$0xff]
    %v5829 = vld [vmem:[%s5815 + $0x68] sm:$0xff]
    %v5830 = vld [vmem:[%s5815 + $0x70] sm:$0xff]
    %v5831 = vld [vmem:[%s5815 + $0x78] sm:$0xff]
    %v5832 = vld [vmem:[%s5815 + $0x80] sm:$0xff]
    %v5833 = vld [vmem:[%s5815 + $0x88] sm:$0xff]
    %v5834 = vld [vmem:[%s5815 + $0x90] sm:$0xff]
    %v5835 = vld [vmem:[%s5815 + $0x98] sm:$0xff]
    %v5836 = vld [vmem:[%s5815 + $0xa0] sm:$0xff]
    %v5837 = vld [vmem:[%s5815 + $0xa8] sm:$0xff]
    %v5838 = vld [vmem:[%s5815 + $0xb0] sm:$0xff]
    %v5839 = vld [vmem:[%s5815 + $0xb8] sm:$0xff]
    %v5840 = vld [vmem:[%s5815 + $0xc0] sm:$0xff]
    %v5841 = vld [vmem:[%s5815 + $0xc8] sm:$0xff]
    %v5842 = vld [vmem:[%s5815 + $0xd0] sm:$0xff]
    %v5843 = vld [vmem:[%s5815 + $0xd8] sm:$0xff]
    %v5844 = vld [vmem:[%s5815 + $0xe0] sm:$0xff]
    %v5845 = vld [vmem:[%s5815 + $0xe8] sm:$0xff]
    %v5846 = vld [vmem:[%s5815 + $0xf0] sm:$0xff]
    %v5847 = vld [vmem:[%s5815 + $0xf8] sm:$0xff]
    %v5880 = vunpack.c.l.b16 %v5816
    %v5881 = vunpack.c.h.b16 %v5816
    %v5882 = vunpack.c.l.b16 %v5817
    %v5883 = vunpack.c.h.b16 %v5817
    %v5884 = vunpack.c.l.b16 %v5818
    %v5885 = vunpack.c.h.b16 %v5818
    %v5886 = vunpack.c.l.b16 %v5819
    %v5887 = vunpack.c.h.b16 %v5819
    %v5888 = vunpack.c.l.b16 %v5820
    %v5889 = vunpack.c.h.b16 %v5820
    %v5890 = vunpack.c.l.b16 %v5821
    %v5891 = vunpack.c.h.b16 %v5821
    %v5892 = vunpack.c.l.b16 %v5822
    %v5893 = vunpack.c.h.b16 %v5822
    %v5894 = vunpack.c.l.b16 %v5823
    %v5895 = vunpack.c.h.b16 %v5823
    %v5896 = vunpack.c.l.b16 %v5824
    %v5897 = vunpack.c.h.b16 %v5824
    %v5898 = vunpack.c.l.b16 %v5825
    %v5899 = vunpack.c.h.b16 %v5825
    %v5900 = vunpack.c.l.b16 %v5826
    %v5901 = vunpack.c.h.b16 %v5826
    %v5902 = vunpack.c.l.b16 %v5827
    %v5903 = vunpack.c.h.b16 %v5827
    %v5904 = vunpack.c.l.b16 %v5828
    %v5905 = vunpack.c.h.b16 %v5828
    %v5906 = vunpack.c.l.b16 %v5829
    %v5907 = vunpack.c.h.b16 %v5829
    %v5908 = vunpack.c.l.b16 %v5830
    %v5909 = vunpack.c.h.b16 %v5830
    %v5910 = vunpack.c.l.b16 %v5831
    %v5911 = vunpack.c.h.b16 %v5831
    %v5912 = vunpack.c.l.b16 %v5832
    %v5913 = vunpack.c.h.b16 %v5832
    %v5914 = vunpack.c.l.b16 %v5833
    %v5915 = vunpack.c.h.b16 %v5833
    %v5916 = vunpack.c.l.b16 %v5834
    %v5917 = vunpack.c.h.b16 %v5834
    %v5918 = vunpack.c.l.b16 %v5835
    %v5919 = vunpack.c.h.b16 %v5835
    %v5920 = vunpack.c.l.b16 %v5836
    %v5921 = vunpack.c.h.b16 %v5836
    %v5922 = vunpack.c.l.b16 %v5837
    %v5923 = vunpack.c.h.b16 %v5837
    %v5924 = vunpack.c.l.b16 %v5838
    %v5925 = vunpack.c.h.b16 %v5838
    %v5926 = vunpack.c.l.b16 %v5839
    %v5927 = vunpack.c.h.b16 %v5839
    %v5928 = vunpack.c.l.b16 %v5840
    %v5929 = vunpack.c.h.b16 %v5840
    %v5930 = vunpack.c.l.b16 %v5841
    %v5931 = vunpack.c.h.b16 %v5841
    %v5932 = vunpack.c.l.b16 %v5842
    %v5933 = vunpack.c.h.b16 %v5842
    %v5934 = vunpack.c.l.b16 %v5843
    %v5935 = vunpack.c.h.b16 %v5843
    %v5936 = vunpack.c.l.b16 %v5844
    %v5937 = vunpack.c.h.b16 %v5844
    %v5938 = vunpack.c.l.b16 %v5845
    %v5939 = vunpack.c.h.b16 %v5845
    %v5940 = vunpack.c.l.b16 %v5846
    %v5941 = vunpack.c.h.b16 %v5846
    %v5942 = vunpack.c.l.b16 %v5847
    %v5943 = vunpack.c.h.b16 %v5847
    %v5944 = vpack.c.b16 %v5882, %v5880
    %v5945 = vpack.c.b16 %v5883, %v5881
    %v5946 = vpack.c.b16 %v5886, %v5884
    %v5947 = vpack.c.b16 %v5887, %v5885
    %v5948 = vpack.c.b16 %v5890, %v5888
    %v5949 = vpack.c.b16 %v5891, %v5889
    %v5950 = vpack.c.b16 %v5894, %v5892
    %v5951 = vpack.c.b16 %v5895, %v5893
    %v5952 = vpack.c.b16 %v5898, %v5896
    %v5953 = vpack.c.b16 %v5899, %v5897
    %v5954 = vpack.c.b16 %v5902, %v5900
    %v5955 = vpack.c.b16 %v5903, %v5901
    %v5956 = vpack.c.b16 %v5906, %v5904
    %v5957 = vpack.c.b16 %v5907, %v5905
    %v5958 = vpack.c.b16 %v5910, %v5908
    %v5959 = vpack.c.b16 %v5911, %v5909
    %v5960 = vpack.c.b16 %v5914, %v5912
    %v5961 = vpack.c.b16 %v5915, %v5913
    %v5962 = vpack.c.b16 %v5918, %v5916
    %v5963 = vpack.c.b16 %v5919, %v5917
    %v5964 = vpack.c.b16 %v5922, %v5920
    %v5965 = vpack.c.b16 %v5923, %v5921
    %v5966 = vpack.c.b16 %v5926, %v5924
    %v5967 = vpack.c.b16 %v5927, %v5925
    %v5968 = vpack.c.b16 %v5930, %v5928
    %v5969 = vpack.c.b16 %v5931, %v5929
    %v5970 = vpack.c.b16 %v5934, %v5932
    %v5971 = vpack.c.b16 %v5935, %v5933
    %v5972 = vpack.c.b16 %v5938, %v5936
    %v5973 = vpack.c.b16 %v5939, %v5937
    %v5974 = vpack.c.b16 %v5942, %v5940
    %v5975 = vpack.c.b16 %v5943, %v5941
    %6008 = vmatprep.subr.bf16.mxu0 %v5945
    %6009 = vmatpush1.bf16.msra.mxu0 %v5944
    %6010 = vmatprep.subr.bf16.mxu0 %v5947
    %6011 = vmatpush1.bf16.msra.mxu0 %v5946
    %6012 = vmatprep.subr.bf16.mxu0 %v5949
    %6013 = vmatpush1.bf16.msra.mxu0 %v5948
    %6014 = vmatprep.subr.bf16.mxu0 %v5951
    %6015 = vmatpush1.bf16.msra.mxu0 %v5950
    %6016 = vmatprep.subr.bf16.mxu0 %v5953
    %6017 = vmatpush1.bf16.msra.mxu0 %v5952
    %6018 = vmatprep.subr.bf16.mxu0 %v5955
    %6019 = vmatpush1.bf16.msra.mxu0 %v5954
    %6020 = vmatprep.subr.bf16.mxu0 %v5957
    %6021 = vmatpush1.bf16.msra.mxu0 %v5956
    %6022 = vmatprep.subr.bf16.mxu0 %v5959
    %6023 = vmatpush1.bf16.msra.mxu0 %v5958
    %6024 = vmatprep.subr.bf16.mxu0 %v5961
    %6025 = vmatpush1.bf16.msra.mxu0 %v5960
    %6026 = vmatprep.subr.bf16.mxu0 %v5963
    %6027 = vmatpush1.bf16.msra.mxu0 %v5962
    %6028 = vmatprep.subr.bf16.mxu0 %v5965
    %6029 = vmatpush1.bf16.msra.mxu0 %v5964
    %6030 = vmatprep.subr.bf16.mxu0 %v5967
    %6031 = vmatpush1.bf16.msra.mxu0 %v5966
    %6032 = vmatprep.subr.bf16.mxu0 %v5969
    %6033 = vmatpush1.bf16.msra.mxu0 %v5968
    %6034 = vmatprep.subr.bf16.mxu0 %v5971
    %6035 = vmatpush1.bf16.msra.mxu0 %v5970
    %6036 = vmatprep.subr.bf16.mxu0 %v5973
    %6037 = vmatpush1.bf16.msra.mxu0 %v5972
    %6038 = vmatprep.subr.bf16.mxu0 %v5975
    %6039 = vmatpush1.bf16.msra.mxu0 %v5974
    %6040 = vmatprep.mubr.bf16.mxu0 %v5814
    %6041 = vmatmul.mubr.bf16.gmra.mrb[0].mxu0 %v5813
    %v6042 = vpop.f32.mrb[0].mxu0
    %v6043 = vadd.f32 0.0, %v6042
    %v6044 = vpop.f32.mrb[0].mxu0
    %v6045 = vadd.f32 0.0, %v6044
    %v6046 = vpop.f32.mrb[0].mxu0
    %v6047 = vpop.f32.mrb[0].mxu0
    %6048 = vdwg.mxu0
    %v6049 = vadd.f32 %v5761, %v6043
    %v6050 = vadd.f32 %v5763, %v6045
    %s6051 = scalar_lea.vmem [#allocation13], 12
    %v6052 = vld [vmem:[%s6051] sm:$0xf]
    %v6054 = vsel %vm3248, %v6052, 0
    %6056 = vmatprep.subr.bf16.mxu0 %v5204
    %6057 = vmatpush1.bf16.msra.mxu0 %v5203
    %6058 = vmatprep.subr.bf16.mxu0 0
    %6059 = vmatpush1.bf16.msra.mxu0 0
    %6060 = vmatprep.subr.bf16.mxu0 0
    %6061 = vmatpush1.bf16.msra.mxu0 0
    %6062 = vmatprep.subr.bf16.mxu0 0
    %6063 = vmatpush1.bf16.msra.mxu0 0
    %6064 = vmatprep.subr.bf16.mxu0 0
    %6065 = vmatpush1.bf16.msra.mxu0 0
    %6066 = vmatprep.subr.bf16.mxu0 0
    %6067 = vmatpush1.bf16.msra.mxu0 0
    %6068 = vmatprep.subr.bf16.mxu0 0
    %6069 = vmatpush1.bf16.msra.mxu0 0
    %6070 = vmatprep.subr.bf16.mxu0 0
    %6071 = vmatpush1.bf16.msra.mxu0 0
    %6072 = vmatprep.subr.bf16.mxu0 0
    %6073 = vmatpush1.bf16.msra.mxu0 0
    %6074 = vmatprep.subr.bf16.mxu0 0
    %6075 = vmatpush1.bf16.msra.mxu0 0
    %6076 = vmatprep.subr.bf16.mxu0 0
    %6077 = vmatpush1.bf16.msra.mxu0 0
    %6078 = vmatprep.subr.bf16.mxu0 0
    %6079 = vmatpush1.bf16.msra.mxu0 0
    %6080 = vmatprep.subr.bf16.mxu0 0
    %6081 = vmatpush1.bf16.msra.mxu0 0
    %6082 = vmatprep.subr.bf16.mxu0 0
    %6083 = vmatpush1.bf16.msra.mxu0 0
    %6084 = vmatprep.subr.bf16.mxu0 0
    %6085 = vmatpush1.bf16.msra.mxu0 0
    %6086 = vmatprep.subr.bf16.mxu0 0
    %6087 = vmatpush1.bf16.msra.mxu0 0
    %6088 = vmatprep.mubr.bf16.mxu0 0
    %6089 = vmatmul.mubr.bf16.gmra.mrb[0].mxu0 %v6054
    %v6090 = vpop.f32.mrb[0].mxu0
    %v6091 = vadd.f32 0.0, %v6090
    %v6092 = vpop.f32.mrb[0].mxu0
    %v6093 = vadd.f32 0.0, %v6092
    %v6094 = vpop.f32.mrb[0].mxu0
    %v6095 = vpop.f32.mrb[0].mxu0
    %6096 = vdwg.mxu0
    %v6097 = vpack.c.bf16 %v6091, %v6091
    %v6098 = vpack.c.bf16 %v6093, %v6093
    %s6099 = scalar_lea.vmem [#allocation15], 768
    %v6100 = vld [vmem:[%s6099] sm:$0xff]
    %v6101 = vld [vmem:[%s6099 + $0x8] sm:$0xff]
    %v6102 = vld [vmem:[%s6099 + $0x10] sm:$0xff]
    %v6103 = vld [vmem:[%s6099 + $0x18] sm:$0xff]
    %v6104 = vld [vmem:[%s6099 + $0x20] sm:$0xff]
    %v6105 = vld [vmem:[%s6099 + $0x28] sm:$0xff]
    %v6106 = vld [vmem:[%s6099 + $0x30] sm:$0xff]
    %v6107 = vld [vmem:[%s6099 + $0x38] sm:$0xff]
    %v6108 = vld [vmem:[%s6099 + $0x40] sm:$0xff]
    %v6109 = vld [vmem:[%s6099 + $0x48] sm:$0xff]
    %v6110 = vld [vmem:[%s6099 + $0x50] sm:$0xff]
    %v6111 = vld [vmem:[%s6099 + $0x58] sm:$0xff]
    %v6112 = vld [vmem:[%s6099 + $0x60] sm:$0xff]
    %v6113 = vld [vmem:[%s6099 + $0x68] sm:$0xff]
    %v6114 = vld [vmem:[%s6099 + $0x70] sm:$0xff]
    %v6115 = vld [vmem:[%s6099 + $0x78] sm:$0xff]
    %v6116 = vld [vmem:[%s6099 + $0x80] sm:$0xff]
    %v6117 = vld [vmem:[%s6099 + $0x88] sm:$0xff]
    %v6118 = vld [vmem:[%s6099 + $0x90] sm:$0xff]
    %v6119 = vld [vmem:[%s6099 + $0x98] sm:$0xff]
    %v6120 = vld [vmem:[%s6099 + $0xa0] sm:$0xff]
    %v6121 = vld [vmem:[%s6099 + $0xa8] sm:$0xff]
    %v6122 = vld [vmem:[%s6099 + $0xb0] sm:$0xff]
    %v6123 = vld [vmem:[%s6099 + $0xb8] sm:$0xff]
    %v6124 = vld [vmem:[%s6099 + $0xc0] sm:$0xff]
    %v6125 = vld [vmem:[%s6099 + $0xc8] sm:$0xff]
    %v6126 = vld [vmem:[%s6099 + $0xd0] sm:$0xff]
    %v6127 = vld [vmem:[%s6099 + $0xd8] sm:$0xff]
    %v6128 = vld [vmem:[%s6099 + $0xe0] sm:$0xff]
    %v6129 = vld [vmem:[%s6099 + $0xe8] sm:$0xff]
    %v6130 = vld [vmem:[%s6099 + $0xf0] sm:$0xff]
    %v6131 = vld [vmem:[%s6099 + $0xf8] sm:$0xff]
    %v6164 = vunpack.c.l.b16 %v6100
    %v6165 = vunpack.c.h.b16 %v6100
    %v6166 = vunpack.c.l.b16 %v6101
    %v6167 = vunpack.c.h.b16 %v6101
    %v6168 = vunpack.c.l.b16 %v6102
    %v6169 = vunpack.c.h.b16 %v6102
    %v6170 = vunpack.c.l.b16 %v6103
    %v6171 = vunpack.c.h.b16 %v6103
    %v6172 = vunpack.c.l.b16 %v6104
    %v6173 = vunpack.c.h.b16 %v6104
    %v6174 = vunpack.c.l.b16 %v6105
    %v6175 = vunpack.c.h.b16 %v6105
    %v6176 = vunpack.c.l.b16 %v6106
    %v6177 = vunpack.c.h.b16 %v6106
    %v6178 = vunpack.c.l.b16 %v6107
    %v6179 = vunpack.c.h.b16 %v6107
    %v6180 = vunpack.c.l.b16 %v6108
    %v6181 = vunpack.c.h.b16 %v6108
    %v6182 = vunpack.c.l.b16 %v6109
    %v6183 = vunpack.c.h.b16 %v6109
    %v6184 = vunpack.c.l.b16 %v6110
    %v6185 = vunpack.c.h.b16 %v6110
    %v6186 = vunpack.c.l.b16 %v6111
    %v6187 = vunpack.c.h.b16 %v6111
    %v6188 = vunpack.c.l.b16 %v6112
    %v6189 = vunpack.c.h.b16 %v6112
    %v6190 = vunpack.c.l.b16 %v6113
    %v6191 = vunpack.c.h.b16 %v6113
    %v6192 = vunpack.c.l.b16 %v6114
    %v6193 = vunpack.c.h.b16 %v6114
    %v6194 = vunpack.c.l.b16 %v6115
    %v6195 = vunpack.c.h.b16 %v6115
    %v6196 = vunpack.c.l.b16 %v6116
    %v6197 = vunpack.c.h.b16 %v6116
    %v6198 = vunpack.c.l.b16 %v6117
    %v6199 = vunpack.c.h.b16 %v6117
    %v6200 = vunpack.c.l.b16 %v6118
    %v6201 = vunpack.c.h.b16 %v6118
    %v6202 = vunpack.c.l.b16 %v6119
    %v6203 = vunpack.c.h.b16 %v6119
    %v6204 = vunpack.c.l.b16 %v6120
    %v6205 = vunpack.c.h.b16 %v6120
    %v6206 = vunpack.c.l.b16 %v6121
    %v6207 = vunpack.c.h.b16 %v6121
    %v6208 = vunpack.c.l.b16 %v6122
    %v6209 = vunpack.c.h.b16 %v6122
    %v6210 = vunpack.c.l.b16 %v6123
    %v6211 = vunpack.c.h.b16 %v6123
    %v6212 = vunpack.c.l.b16 %v6124
    %v6213 = vunpack.c.h.b16 %v6124
    %v6214 = vunpack.c.l.b16 %v6125
    %v6215 = vunpack.c.h.b16 %v6125
    %v6216 = vunpack.c.l.b16 %v6126
    %v6217 = vunpack.c.h.b16 %v6126
    %v6218 = vunpack.c.l.b16 %v6127
    %v6219 = vunpack.c.h.b16 %v6127
    %v6220 = vunpack.c.l.b16 %v6128
    %v6221 = vunpack.c.h.b16 %v6128
    %v6222 = vunpack.c.l.b16 %v6129
    %v6223 = vunpack.c.h.b16 %v6129
    %v6224 = vunpack.c.l.b16 %v6130
    %v6225 = vunpack.c.h.b16 %v6130
    %v6226 = vunpack.c.l.b16 %v6131
    %v6227 = vunpack.c.h.b16 %v6131
    %v6228 = vpack.c.b16 %v6166, %v6164
    %v6229 = vpack.c.b16 %v6167, %v6165
    %v6230 = vpack.c.b16 %v6170, %v6168
    %v6231 = vpack.c.b16 %v6171, %v6169
    %v6232 = vpack.c.b16 %v6174, %v6172
    %v6233 = vpack.c.b16 %v6175, %v6173
    %v6234 = vpack.c.b16 %v6178, %v6176
    %v6235 = vpack.c.b16 %v6179, %v6177
    %v6236 = vpack.c.b16 %v6182, %v6180
    %v6237 = vpack.c.b16 %v6183, %v6181
    %v6238 = vpack.c.b16 %v6186, %v6184
    %v6239 = vpack.c.b16 %v6187, %v6185
    %v6240 = vpack.c.b16 %v6190, %v6188
    %v6241 = vpack.c.b16 %v6191, %v6189
    %v6242 = vpack.c.b16 %v6194, %v6192
    %v6243 = vpack.c.b16 %v6195, %v6193
    %v6244 = vpack.c.b16 %v6198, %v6196
    %v6245 = vpack.c.b16 %v6199, %v6197
    %v6246 = vpack.c.b16 %v6202, %v6200
    %v6247 = vpack.c.b16 %v6203, %v6201
    %v6248 = vpack.c.b16 %v6206, %v6204
    %v6249 = vpack.c.b16 %v6207, %v6205
    %v6250 = vpack.c.b16 %v6210, %v6208
    %v6251 = vpack.c.b16 %v6211, %v6209
    %v6252 = vpack.c.b16 %v6214, %v6212
    %v6253 = vpack.c.b16 %v6215, %v6213
    %v6254 = vpack.c.b16 %v6218, %v6216
    %v6255 = vpack.c.b16 %v6219, %v6217
    %v6256 = vpack.c.b16 %v6222, %v6220
    %v6257 = vpack.c.b16 %v6223, %v6221
    %v6258 = vpack.c.b16 %v6226, %v6224
    %v6259 = vpack.c.b16 %v6227, %v6225
    %6292 = vmatprep.subr.bf16.mxu0 %v6229
    %6293 = vmatpush1.bf16.msra.mxu0 %v6228
    %6294 = vmatprep.subr.bf16.mxu0 %v6231
    %6295 = vmatpush1.bf16.msra.mxu0 %v6230
    %6296 = vmatprep.subr.bf16.mxu0 %v6233
    %6297 = vmatpush1.bf16.msra.mxu0 %v6232
    %6298 = vmatprep.subr.bf16.mxu0 %v6235
    %6299 = vmatpush1.bf16.msra.mxu0 %v6234
    %6300 = vmatprep.subr.bf16.mxu0 %v6237
    %6301 = vmatpush1.bf16.msra.mxu0 %v6236
    %6302 = vmatprep.subr.bf16.mxu0 %v6239
    %6303 = vmatpush1.bf16.msra.mxu0 %v6238
    %6304 = vmatprep.subr.bf16.mxu0 %v6241
    %6305 = vmatpush1.bf16.msra.mxu0 %v6240
    %6306 = vmatprep.subr.bf16.mxu0 %v6243
    %6307 = vmatpush1.bf16.msra.mxu0 %v6242
    %6308 = vmatprep.subr.bf16.mxu0 %v6245
    %6309 = vmatpush1.bf16.msra.mxu0 %v6244
    %6310 = vmatprep.subr.bf16.mxu0 %v6247
    %6311 = vmatpush1.bf16.msra.mxu0 %v6246
    %6312 = vmatprep.subr.bf16.mxu0 %v6249
    %6313 = vmatpush1.bf16.msra.mxu0 %v6248
    %6314 = vmatprep.subr.bf16.mxu0 %v6251
    %6315 = vmatpush1.bf16.msra.mxu0 %v6250
    %6316 = vmatprep.subr.bf16.mxu0 %v6253
    %6317 = vmatpush1.bf16.msra.mxu0 %v6252
    %6318 = vmatprep.subr.bf16.mxu0 %v6255
    %6319 = vmatpush1.bf16.msra.mxu0 %v6254
    %6320 = vmatprep.subr.bf16.mxu0 %v6257
    %6321 = vmatpush1.bf16.msra.mxu0 %v6256
    %6322 = vmatprep.subr.bf16.mxu0 %v6259
    %6323 = vmatpush1.bf16.msra.mxu0 %v6258
    %6324 = vmatprep.mubr.bf16.mxu0 %v6098
    %6325 = vmatmul.mubr.bf16.gmra.mrb[0].mxu0 %v6097
    %v6326 = vpop.f32.mrb[0].mxu0
    %v6327 = vadd.f32 0.0, %v6326
    %v6328 = vpop.f32.mrb[0].mxu0
    %v6329 = vadd.f32 0.0, %v6328
    %v6330 = vpop.f32.mrb[0].mxu0
    %v6331 = vpop.f32.mrb[0].mxu0
    %6332 = vdwg.mxu0
    %v6333 = vadd.f32 %v6049, %v6327
    %v6334 = vadd.f32 %v6050, %v6329
    %v6335 = vld [vmem:[%s18] sm:$0xff]
    %v6336 = vld [vmem:[%s18 + $0x8] sm:$0xff]
    %v6337 = vld [vmem:[%s18 + $0x10] sm:$0xff]
    %v6338 = vld [vmem:[%s18 + $0x18] sm:$0xff]
    %v6339 = vld [vmem:[%s18 + $0x20] sm:$0xff]
    %v6340 = vld [vmem:[%s18 + $0x28] sm:$0xff]
    %v6341 = vld [vmem:[%s18 + $0x30] sm:$0xff]
    %v6342 = vld [vmem:[%s18 + $0x38] sm:$0xff]
    %v6343 = vld [vmem:[%s18 + $0x40] sm:$0xff]
    %v6344 = vld [vmem:[%s18 + $0x48] sm:$0xff]
    %v6345 = vld [vmem:[%s18 + $0x50] sm:$0xff]
    %v6346 = vld [vmem:[%s18 + $0x58] sm:$0xff]
    %v6347 = vld [vmem:[%s18 + $0x60] sm:$0xff]
    %v6348 = vld [vmem:[%s18 + $0x68] sm:$0xff]
    %v6349 = vld [vmem:[%s18 + $0x70] sm:$0xff]
    %v6350 = vld [vmem:[%s18 + $0x78] sm:$0xff]
    %v6351 = vld [vmem:[%s18 + $0x80] sm:$0xff]
    %v6352 = vld [vmem:[%s18 + $0x88] sm:$0xff]
    %v6353 = vld [vmem:[%s18 + $0x90] sm:$0xff]
    %v6354 = vld [vmem:[%s18 + $0x98] sm:$0xff]
    %v6355 = vld [vmem:[%s18 + $0xa0] sm:$0xff]
    %v6356 = vld [vmem:[%s18 + $0xa8] sm:$0xff]
    %v6357 = vld [vmem:[%s18 + $0xb0] sm:$0xff]
    %v6358 = vld [vmem:[%s18 + $0xb8] sm:$0xff]
    %v6359 = vld [vmem:[%s18 + $0xc0] sm:$0xff]
    %v6360 = vld [vmem:[%s18 + $0xc8] sm:$0xff]
    %v6361 = vld [vmem:[%s18 + $0xd0] sm:$0xff]
    %v6362 = vld [vmem:[%s18 + $0xd8] sm:$0xff]
    %v6363 = vld [vmem:[%s18 + $0xe0] sm:$0xff]
    %v6364 = vld [vmem:[%s18 + $0xe8] sm:$0xff]
    %v6365 = vld [vmem:[%s18 + $0xf0] sm:$0xff]
    %v6366 = vld [vmem:[%s18 + $0xf8] sm:$0xff]
    %v6367 = vld [vmem:[#allocation16] sm:$0xff]
    %v6368 = vld [vmem:[#allocation16 + $0x8] sm:$0xff]
    %v6369 = vld [vmem:[#allocation16 + $0x10] sm:$0xff]
    %v6370 = vld [vmem:[#allocation16 + $0x18] sm:$0xff]
    %v6371 = vld [vmem:[#allocation16 + $0x20] sm:$0xff]
    %v6372 = vld [vmem:[#allocation16 + $0x28] sm:$0xff]
    %v6373 = vld [vmem:[#allocation16 + $0x30] sm:$0xff]
    %v6374 = vld [vmem:[#allocation16 + $0x38] sm:$0xff]
    %v6375 = vld [vmem:[#allocation16 + $0x40] sm:$0xff]
    %v6376 = vld [vmem:[#allocation16 + $0x48] sm:$0xff]
    %v6377 = vld [vmem:[#allocation16 + $0x50] sm:$0xff]
    %v6378 = vld [vmem:[#allocation16 + $0x58] sm:$0xff]
    %v6379 = vld [vmem:[#allocation16 + $0x60] sm:$0xff]
    %v6380 = vld [vmem:[#allocation16 + $0x68] sm:$0xff]
    %v6381 = vld [vmem:[#allocation16 + $0x70] sm:$0xff]
    %v6382 = vld [vmem:[#allocation16 + $0x78] sm:$0xff]
    %v6383 = vrot.slane %v6333, 4
    %v6384 = vadd.f32 %v6333, %v6383
    %v6385 = vrot.slane %v6384, 2
    %v6386 = vadd.f32 %v6384, %v6385
    %v6387 = vrot.slane %v6386, 1
    %v6388 = vadd.f32 %v6386, %v6387
    %v6389 = vrot.slane %v6334, 4
    %v6390 = vadd.f32 %v6334, %v6389
    %v6391 = vrot.slane %v6390, 2
    %v6392 = vadd.f32 %v6390, %v6391
    %v6393 = vrot.slane %v6392, 1
    %v6394 = vadd.f32 %v6392, %v6393
    %6395 = vmatprep.subr.mxu0 0.0
    %6396 = vmatpush1.msra.mxu0 %v6335
    %6397 = vmatprep.subr.mxu0 0.0
    %6398 = vmatpush1.msra.mxu0 %v6336
    %6399 = vmatprep.subr.mxu0 0.0
    %6400 = vmatpush1.msra.mxu0 %v6337
    %6401 = vmatprep.subr.mxu0 0.0
    %6402 = vmatpush1.msra.mxu0 %v6338
    %6403 = vmatprep.subr.mxu0 0.0
    %6404 = vmatpush1.msra.mxu0 %v6339
    %6405 = vmatprep.subr.mxu0 0.0
    %6406 = vmatpush1.msra.mxu0 %v6340
    %6407 = vmatprep.subr.mxu0 0.0
    %6408 = vmatpush1.msra.mxu0 %v6341
    %6409 = vmatprep.subr.mxu0 0.0
    %6410 = vmatpush1.msra.mxu0 %v6342
    %6411 = vmatprep.subr.mxu0 0.0
    %6412 = vmatpush1.msra.mxu0 %v6343
    %6413 = vmatprep.subr.mxu0 0.0
    %6414 = vmatpush1.msra.mxu0 %v6344
    %6415 = vmatprep.subr.mxu0 0.0
    %6416 = vmatpush1.msra.mxu0 %v6345
    %6417 = vmatprep.subr.mxu0 0.0
    %6418 = vmatpush1.msra.mxu0 %v6346
    %6419 = vmatprep.subr.mxu0 0.0
    %6420 = vmatpush1.msra.mxu0 %v6347
    %6421 = vmatprep.subr.mxu0 0.0
    %6422 = vmatpush1.msra.mxu0 %v6348
    %6423 = vmatprep.subr.mxu0 0.0
    %6424 = vmatpush1.msra.mxu0 %v6349
    %6425 = vmatprep.subr.mxu0 0.0
    %6426 = vmatpush1.msra.mxu0 %v6350
    %6427 = vmatprep.subr.mxu0 0.0
    %6428 = vmatpush1.msra.mxu0 %v6351
    %6429 = vmatprep.subr.mxu0 0.0
    %6430 = vmatpush1.msra.mxu0 %v6352
    %6431 = vmatprep.subr.mxu0 0.0
    %6432 = vmatpush1.msra.mxu0 %v6353
    %6433 = vmatprep.subr.mxu0 0.0
    %6434 = vmatpush1.msra.mxu0 %v6354
    %6435 = vmatprep.subr.mxu0 0.0
    %6436 = vmatpush1.msra.mxu0 %v6355
    %6437 = vmatprep.subr.mxu0 0.0
    %6438 = vmatpush1.msra.mxu0 %v6356
    %6439 = vmatprep.subr.mxu0 0.0
    %6440 = vmatpush1.msra.mxu0 %v6357
    %6441 = vmatprep.subr.mxu0 0.0
    %6442 = vmatpush1.msra.mxu0 %v6358
    %6443 = vmatprep.subr.mxu0 0.0
    %6444 = vmatpush1.msra.mxu0 %v6359
    %6445 = vmatprep.subr.mxu0 0.0
    %6446 = vmatpush1.msra.mxu0 %v6360
    %6447 = vmatprep.subr.mxu0 0.0
    %6448 = vmatpush1.msra.mxu0 %v6361
    %6449 = vmatprep.subr.mxu0 0.0
    %6450 = vmatpush1.msra.mxu0 %v6362
    %6451 = vmatprep.subr.mxu0 0.0
    %6452 = vmatpush1.msra.mxu0 %v6363
    %6453 = vmatprep.subr.mxu0 0.0
    %6454 = vmatpush1.msra.mxu0 %v6364
    %6455 = vmatprep.subr.mxu0 0.0
    %6456 = vmatpush1.msra.mxu0 %v6365
    %6457 = vmatprep.subr.mxu0 0.0
    %6458 = vmatpush1.msra.mxu0 %v6366
    %6459 = vmatprep.mubr.f32.mxu0 %v6394
    %6460 = vmatmul.mubr.f32.gmra.mrb[0].mxu0 %v6388
    %v6461 = vpop.f32.mrb[0].mxu0
    %v6462 = vadd.f32 0.0, %v6461
    %v6463 = vpop.f32.mrb[0].mxu0
    %6464 = vdwg.mxu0
    %v6465 = vmul.f32 %v6462, 0.03125
    %v6467 = vsel %vm718, %v6465, 0
    %6469 = vmatprep.subr.mxu0 %v6368
    %6470 = vmatpush1.msra.mxu0 %v6367
    %6471 = vmatprep.subr.mxu0 %v6370
    %6472 = vmatpush1.msra.mxu0 %v6369
    %6473 = vmatprep.subr.mxu0 %v6372
    %6474 = vmatpush1.msra.mxu0 %v6371
    %6475 = vmatprep.subr.mxu0 %v6374
    %6476 = vmatpush1.msra.mxu0 %v6373
    %6477 = vmatprep.subr.mxu0 %v6376
    %6478 = vmatpush1.msra.mxu0 %v6375
    %6479 = vmatprep.subr.mxu0 %v6378
    %6480 = vmatpush1.msra.mxu0 %v6377
    %6481 = vmatprep.subr.mxu0 %v6380
    %6482 = vmatpush1.msra.mxu0 %v6379
    %6483 = vmatprep.subr.mxu0 %v6382
    %6484 = vmatpush1.msra.mxu0 %v6381
    %6485 = vmatprep.subr.mxu0 0.0
    %6486 = vmatpush1.msra.mxu0 0.0
    %6487 = vmatprep.subr.mxu0 0.0
    %6488 = vmatpush1.msra.mxu0 0.0
    %6489 = vmatprep.subr.mxu0 0.0
    %6490 = vmatpush1.msra.mxu0 0.0
    %6491 = vmatprep.subr.mxu0 0.0
    %6492 = vmatpush1.msra.mxu0 0.0
    %6493 = vmatprep.subr.mxu0 0.0
    %6494 = vmatpush1.msra.mxu0 0.0
    %6495 = vmatprep.subr.mxu0 0.0
    %6496 = vmatpush1.msra.mxu0 0.0
    %6497 = vmatprep.subr.mxu0 0.0
    %6498 = vmatpush1.msra.mxu0 0.0
    %6499 = vmatprep.subr.mxu0 0.0
    %6500 = vmatpush1.msra.mxu0 0.0
    %6501 = vmatprep.subr.mxu0 0.0
    %6502 = vmatpush1.msra.mxu0 0.0
    %6503 = vmatprep.subr.mxu0 0.0
    %6504 = vmatpush1.msra.mxu0 0.0
    %6505 = vmatprep.subr.mxu0 0.0
    %6506 = vmatpush1.msra.mxu0 0.0
    %6507 = vmatprep.subr.mxu0 0.0
    %6508 = vmatpush1.msra.mxu0 0.0
    %6509 = vmatprep.subr.mxu0 0.0
    %6510 = vmatpush1.msra.mxu0 0.0
    %6511 = vmatprep.subr.mxu0 0.0
    %6512 = vmatpush1.msra.mxu0 0.0
    %6513 = vmatprep.subr.mxu0 0.0
    %6514 = vmatpush1.msra.mxu0 0.0
    %6515 = vmatprep.subr.mxu0 0.0
    %6516 = vmatpush1.msra.mxu0 0.0
    %6517 = vmatprep.subr.mxu0 0.0
    %6518 = vmatpush1.msra.mxu0 0.0
    %6519 = vmatprep.subr.mxu0 0.0
    %6520 = vmatpush1.msra.mxu0 0.0
    %6521 = vmatprep.subr.mxu0 0.0
    %6522 = vmatpush1.msra.mxu0 0.0
    %6523 = vmatprep.subr.mxu0 0.0
    %6524 = vmatpush1.msra.mxu0 0.0
    %6525 = vmatprep.subr.mxu0 0.0
    %6526 = vmatpush1.msra.mxu0 0.0
    %6527 = vmatprep.subr.mxu0 0.0
    %6528 = vmatpush1.msra.mxu0 0.0
    %6529 = vmatprep.subr.mxu0 0.0
    %6530 = vmatpush1.msra.mxu0 0.0
    %6531 = vmatprep.subr.mxu0 0.0
    %6532 = vmatpush1.msra.mxu0 0.0
    %6533 = vmatprep.mubr.f32.mxu0 0.0
    %6534 = vmatmul.mubr.f32.gmra.mrb[0].mxu0 %v6467
    %v6535 = vpop.f32.mrb[0].mxu0
    %v6536 = vadd.f32 0.0, %v6535
    %v6537 = vpop.f32.mrb[0].mxu0
    %v6538 = vadd.f32 0.0, %v6537
    %6539 = vdwg.mxu0
    %v6540 = vlaneseq
    %v6541 = vshrl.u32 %v6540, 7
    %v6542 = vsub.s32 0, %v6541
    %v6543 = vrot.slane %v6536, %v6542
    %v6544 = vlaneseq
    %v6545 = vshrl.u32 %v6544, 7
    %v6546 = vsub.s32 0, %v6545
    %v6547 = vrot.slane %v6538, %v6546
    %v6548 = vsub.f32 %v6333, %v6543
    %v6549 = vsub.f32 %v6334, %v6547
    %v6550 = vmul.f32 %v6548, %v6548
    %v6551 = vmul.f32 %v6549, %v6549
    %v6552 = vrot.slane %v6550, 4
    %v6553 = vadd.f32 %v6550, %v6552
    %v6554 = vrot.slane %v6553, 2
    %v6555 = vadd.f32 %v6553, %v6554
    %v6556 = vrot.slane %v6555, 1
    %v6557 = vadd.f32 %v6555, %v6556
    %v6558 = vrot.slane %v6551, 4
    %v6559 = vadd.f32 %v6551, %v6558
    %v6560 = vrot.slane %v6559, 2
    %v6561 = vadd.f32 %v6559, %v6560
    %v6562 = vrot.slane %v6561, 1
    %v6563 = vadd.f32 %v6561, %v6562
    %6564 = vmatprep.subr.mxu0 0.0
    %6565 = vmatpush1.msra.mxu0 %v6335
    %6566 = vmatprep.subr.mxu0 0.0
    %6567 = vmatpush1.msra.mxu0 %v6336
    %6568 = vmatprep.subr.mxu0 0.0
    %6569 = vmatpush1.msra.mxu0 %v6337
    %6570 = vmatprep.subr.mxu0 0.0
    %6571 = vmatpush1.msra.mxu0 %v6338
    %6572 = vmatprep.subr.mxu0 0.0
    %6573 = vmatpush1.msra.mxu0 %v6339
    %6574 = vmatprep.subr.mxu0 0.0
    %6575 = vmatpush1.msra.mxu0 %v6340
    %6576 = vmatprep.subr.mxu0 0.0
    %6577 = vmatpush1.msra.mxu0 %v6341
    %6578 = vmatprep.subr.mxu0 0.0
    %6579 = vmatpush1.msra.mxu0 %v6342
    %6580 = vmatprep.subr.mxu0 0.0
    %6581 = vmatpush1.msra.mxu0 %v6343
    %6582 = vmatprep.subr.mxu0 0.0
    %6583 = vmatpush1.msra.mxu0 %v6344
    %6584 = vmatprep.subr.mxu0 0.0
    %6585 = vmatpush1.msra.mxu0 %v6345
    %6586 = vmatprep.subr.mxu0 0.0
    %6587 = vmatpush1.msra.mxu0 %v6346
    %6588 = vmatprep.subr.mxu0 0.0
    %6589 = vmatpush1.msra.mxu0 %v6347
    %6590 = vmatprep.subr.mxu0 0.0
    %6591 = vmatpush1.msra.mxu0 %v6348
    %6592 = vmatprep.subr.mxu0 0.0
    %6593 = vmatpush1.msra.mxu0 %v6349
    %6594 = vmatprep.subr.mxu0 0.0
    %6595 = vmatpush1.msra.mxu0 %v6350
    %6596 = vmatprep.subr.mxu0 0.0
    %6597 = vmatpush1.msra.mxu0 %v6351
    %6598 = vmatprep.subr.mxu0 0.0
    %6599 = vmatpush1.msra.mxu0 %v6352
    %6600 = vmatprep.subr.mxu0 0.0
    %6601 = vmatpush1.msra.mxu0 %v6353
    %6602 = vmatprep.subr.mxu0 0.0
    %6603 = vmatpush1.msra.mxu0 %v6354
    %6604 = vmatprep.subr.mxu0 0.0
    %6605 = vmatpush1.msra.mxu0 %v6355
    %6606 = vmatprep.subr.mxu0 0.0
    %6607 = vmatpush1.msra.mxu0 %v6356
    %6608 = vmatprep.subr.mxu0 0.0
    %6609 = vmatpush1.msra.mxu0 %v6357
    %6610 = vmatprep.subr.mxu0 0.0
    %6611 = vmatpush1.msra.mxu0 %v6358
    %6612 = vmatprep.subr.mxu0 0.0
    %6613 = vmatpush1.msra.mxu0 %v6359
    %6614 = vmatprep.subr.mxu0 0.0
    %6615 = vmatpush1.msra.mxu0 %v6360
    %6616 = vmatprep.subr.mxu0 0.0
    %6617 = vmatpush1.msra.mxu0 %v6361
    %6618 = vmatprep.subr.mxu0 0.0
    %6619 = vmatpush1.msra.mxu0 %v6362
    %6620 = vmatprep.subr.mxu0 0.0
    %6621 = vmatpush1.msra.mxu0 %v6363
    %6622 = vmatprep.subr.mxu0 0.0
    %6623 = vmatpush1.msra.mxu0 %v6364
    %6624 = vmatprep.subr.mxu0 0.0
    %6625 = vmatpush1.msra.mxu0 %v6365
    %6626 = vmatprep.subr.mxu0 0.0
    %6627 = vmatpush1.msra.mxu0 %v6366
    %6628 = vmatprep.mubr.f32.mxu0 %v6563
    %6629 = vmatmul.mubr.f32.gmra.mrb[0].mxu0 %v6557
    %v6630 = vpop.f32.mrb[0].mxu0
    %v6631 = vadd.f32 0.0, %v6630
    %v6632 = vpop.f32.mrb[0].mxu0
    %6633 = vdwg.mxu0
    %v6634 = vmul.f32 %v6631, 0.03125
    %v6636 = vsel %vm718, %v6634, 0
    %6638 = vmatprep.subr.mxu0 %v6368
    %6639 = vmatpush1.msra.mxu0 %v6367
    %6640 = vmatprep.subr.mxu0 %v6370
    %6641 = vmatpush1.msra.mxu0 %v6369
    %6642 = vmatprep.subr.mxu0 %v6372
    %6643 = vmatpush1.msra.mxu0 %v6371
    %6644 = vmatprep.subr.mxu0 %v6374
    %6645 = vmatpush1.msra.mxu0 %v6373
    %6646 = vmatprep.subr.mxu0 %v6376
    %6647 = vmatpush1.msra.mxu0 %v6375
    %6648 = vmatprep.subr.mxu0 %v6378
    %6649 = vmatpush1.msra.mxu0 %v6377
    %6650 = vmatprep.subr.mxu0 %v6380
    %6651 = vmatpush1.msra.mxu0 %v6379
    %6652 = vmatprep.subr.mxu0 %v6382
    %6653 = vmatpush1.msra.mxu0 %v6381
    %6654 = vmatprep.subr.mxu0 0.0
    %6655 = vmatpush1.msra.mxu0 0.0
    %6656 = vmatprep.subr.mxu0 0.0
    %6657 = vmatpush1.msra.mxu0 0.0
    %6658 = vmatprep.subr.mxu0 0.0
    %6659 = vmatpush1.msra.mxu0 0.0
    %6660 = vmatprep.subr.mxu0 0.0
    %6661 = vmatpush1.msra.mxu0 0.0
    %6662 = vmatprep.subr.mxu0 0.0
    %6663 = vmatpush1.msra.mxu0 0.0
    %6664 = vmatprep.subr.mxu0 0.0
    %6665 = vmatpush1.msra.mxu0 0.0
    %6666 = vmatprep.subr.mxu0 0.0
    %6667 = vmatpush1.msra.mxu0 0.0
    %6668 = vmatprep.subr.mxu0 0.0
    %6669 = vmatpush1.msra.mxu0 0.0
    %6670 = vmatprep.subr.mxu0 0.0
    %6671 = vmatpush1.msra.mxu0 0.0
    %6672 = vmatprep.subr.mxu0 0.0
    %6673 = vmatpush1.msra.mxu0 0.0
    %6674 = vmatprep.subr.mxu0 0.0
    %6675 = vmatpush1.msra.mxu0 0.0
    %6676 = vmatprep.subr.mxu0 0.0
    %6677 = vmatpush1.msra.mxu0 0.0
    %6678 = vmatprep.subr.mxu0 0.0
    %6679 = vmatpush1.msra.mxu0 0.0
    %6680 = vmatprep.subr.mxu0 0.0
    %6681 = vmatpush1.msra.mxu0 0.0
    %6682 = vmatprep.subr.mxu0 0.0
    %6683 = vmatpush1.msra.mxu0 0.0
    %6684 = vmatprep.subr.mxu0 0.0
    %6685 = vmatpush1.msra.mxu0 0.0
    %6686 = vmatprep.subr.mxu0 0.0
    %6687 = vmatpush1.msra.mxu0 0.0
    %6688 = vmatprep.subr.mxu0 0.0
    %6689 = vmatpush1.msra.mxu0 0.0
    %6690 = vmatprep.subr.mxu0 0.0
    %6691 = vmatpush1.msra.mxu0 0.0
    %6692 = vmatprep.subr.mxu0 0.0
    %6693 = vmatpush1.msra.mxu0 0.0
    %6694 = vmatprep.subr.mxu0 0.0
    %6695 = vmatpush1.msra.mxu0 0.0
    %6696 = vmatprep.subr.mxu0 0.0
    %6697 = vmatpush1.msra.mxu0 0.0
    %6698 = vmatprep.subr.mxu0 0.0
    %6699 = vmatpush1.msra.mxu0 0.0
    %6700 = vmatprep.subr.mxu0 0.0
    %6701 = vmatpush1.msra.mxu0 0.0
    %6702 = vmatprep.mubr.f32.mxu0 0.0
    %6703 = vmatmul.mubr.f32.gmra.mrb[0].mxu0 %v6636
    %v6704 = vpop.f32.mrb[0].mxu0
    %v6705 = vadd.f32 1e-05, %v6704
    %v6706 = vpop.f32.mrb[0].mxu0
    %v6707 = vadd.f32 1e-05, %v6706
    %6708 = vdwg.mxu0
    %v6709 = vrsqrt.pop %v6705
    %v6710 = vrsqrt.pop %v6707
    %v6711 = vlaneseq
    %v6712 = vshrl.u32 %v6711, 7
    %v6713 = vsub.s32 0, %v6712
    %v6714 = vrot.slane %v6709, %v6713
    %v6715 = vlaneseq
    %v6716 = vshrl.u32 %v6715, 7
    %v6717 = vsub.s32 0, %v6716
    %v6718 = vrot.slane %v6710, %v6717
    %v6719 = vmul.f32 %v6548, %v6714
    %v6720 = vmul.f32 %v6549, %v6718
    %v6721 = vld [vmem:[#allocation18] sm:$0x3]
    %v6723 = vlaneseq
    %v6724 = vshrl.u32 %v6723, 7
    %v6725 = vsub.s32 0, %v6724
    %v6726 = vrot.slane %v6721, %v6725
    %v6727 = vlaneseq
    %v6728 = vshrl.u32 %v6727, 7
    %v6729 = vsub.s32 1, %v6728
    %v6730 = vrot.slane %v6721, %v6729
    %v6733 = vmul.f32 %v6719, %v6726
    %v6734 = vmul.f32 %v6720, %v6730
    %v6735 = vld [vmem:[#allocation19] sm:$0x3]
    %v6737 = vlaneseq
    %v6738 = vshrl.u32 %v6737, 7
    %v6739 = vsub.s32 0, %v6738
    %v6740 = vrot.slane %v6735, %v6739
    %v6741 = vlaneseq
    %v6742 = vshrl.u32 %v6741, 7
    %v6743 = vsub.s32 1, %v6742
    %v6744 = vrot.slane %v6735, %v6743
    %v6747 = vadd.f32 %v6733, %v6740
    %v6748 = vadd.f32 %v6734, %v6744
    %vm6749 = vcmp.ge.f32.partialorder %v6747, 0.0
    %vm6750 = vcmp.ge.f32.partialorder %v6748, 0.0
    %v6751 = vmul.f32 %v6747, 0.2
    %v6752 = vmul.f32 %v6748, 0.2
    %v6753 = vsel %vm6749, %v6747, %v6751
    %v6754 = vsel %vm6750, %v6748, %v6752
    %v6755 = vpack.c.bf16 %v6753, %v6753
    %v6756 = vpack.c.bf16 %v6754, %v6754
    %v6757 = vld [vmem:[#allocation21] sm:$0x1]
    %vm6758 = vcmask 64512
    %v6760 = vsel %vm6758, %v6757, 0
    %vm6762 = vcmask 1043456
    %v6764 = vsel %vm6762, %v6755, 0
    %v6767 = vsel %vm6762, %v6756, 0
    %6769 = vmatprep.subr.bf16.mxu0 %v6767
    %6770 = vmatpush1.bf16.msra.mxu0 %v6764
    %6771 = vmatprep.subr.bf16.mxu0 0
    %6772 = vmatpush1.bf16.msra.mxu0 0
    %6773 = vmatprep.subr.bf16.mxu0 0
    %6774 = vmatpush1.bf16.msra.mxu0 0
    %6775 = vmatprep.subr.bf16.mxu0 0
    %6776 = vmatpush1.bf16.msra.mxu0 0
    %6777 = vmatprep.subr.bf16.mxu0 0
    %6778 = vmatpush1.bf16.msra.mxu0 0
    %6779 = vmatprep.subr.bf16.mxu0 0
    %6780 = vmatpush1.bf16.msra.mxu0 0
    %6781 = vmatprep.subr.bf16.mxu0 0
    %6782 = vmatpush1.bf16.msra.mxu0 0
    %6783 = vmatprep.subr.bf16.mxu0 0
    %6784 = vmatpush1.bf16.msra.mxu0 0
    %6785 = vmatprep.subr.bf16.mxu0 0
    %6786 = vmatpush1.bf16.msra.mxu0 0
    %6787 = vmatprep.subr.bf16.mxu0 0
    %6788 = vmatpush1.bf16.msra.mxu0 0
    %6789 = vmatprep.subr.bf16.mxu0 0
    %6790 = vmatpush1.bf16.msra.mxu0 0
    %6791 = vmatprep.subr.bf16.mxu0 0
    %6792 = vmatpush1.bf16.msra.mxu0 0
    %6793 = vmatprep.subr.bf16.mxu0 0
    %6794 = vmatpush1.bf16.msra.mxu0 0
    %6795 = vmatprep.subr.bf16.mxu0 0
    %6796 = vmatpush1.bf16.msra.mxu0 0
    %6797 = vmatprep.subr.bf16.mxu0 0
    %6798 = vmatpush1.bf16.msra.mxu0 0
    %6799 = vmatprep.subr.bf16.mxu0 0
    %6800 = vmatpush1.bf16.msra.mxu0 0
    %6801 = vmatprep.mubr.bf16.mxu0 0
    %6802 = vmatmul.mubr.bf16.gmra.mrb[0].mxu0 %v6760
    %v6803 = vpop.f32.mrb[0].mxu0
    %v6804 = vadd.f32 0.0, %v6803
    %v6805 = vpop.f32.mrb[0].mxu0
    %v6806 = vadd.f32 0.0, %v6805
    %v6807 = vpop.f32.mrb[0].mxu0
    %v6808 = vpop.f32.mrb[0].mxu0
    %6809 = vdwg.mxu0
    %v6810 = vpack.c.bf16 %v6804, %v6804
    %v6811 = vpack.c.bf16 %v6806, %v6806
    %v6812 = vld [vmem:[#allocation22] sm:$0xf]
    %v6813 = vld [vmem:[#allocation22 + $0x4] sm:$0xf]
    %v6814 = vld [vmem:[#allocation22 + $0x8] sm:$0xf]
    %v6815 = vld [vmem:[#allocation22 + $0xc] sm:$0xf]
    %v6816 = vld [vmem:[#allocation22 + $0x10] sm:$0xf]
    %v6817 = vld [vmem:[#allocation22 + $0x14] sm:$0xf]
    %v6818 = vld [vmem:[#allocation22 + $0x18] sm:$0xf]
    %v6819 = vld [vmem:[#allocation22 + $0x1c] sm:$0xf]
    %v6820 = vld [vmem:[#allocation22 + $0x20] sm:$0xf]
    %v6821 = vld [vmem:[#allocation22 + $0x24] sm:$0xf]
    %v6822 = vld [vmem:[#allocation22 + $0x28] sm:$0xf]
    %v6823 = vld [vmem:[#allocation22 + $0x2c] sm:$0xf]
    %v6824 = vld [vmem:[#allocation22 + $0x30] sm:$0xf]
    %v6825 = vld [vmem:[#allocation22 + $0x34] sm:$0xf]
    %v6826 = vld [vmem:[#allocation22 + $0x38] sm:$0xf]
    %v6827 = vld [vmem:[#allocation22 + $0x3c] sm:$0xf]
    %v6828 = vld [vmem:[#allocation22 + $0x40] sm:$0xf]
    %v6829 = vld [vmem:[#allocation22 + $0x44] sm:$0xf]
    %v6830 = vld [vmem:[#allocation22 + $0x48] sm:$0xf]
    %v6831 = vld [vmem:[#allocation22 + $0x4c] sm:$0xf]
    %v6832 = vld [vmem:[#allocation22 + $0x50] sm:$0xf]
    %v6833 = vld [vmem:[#allocation22 + $0x54] sm:$0xf]
    %v6834 = vld [vmem:[#allocation22 + $0x58] sm:$0xf]
    %v6835 = vld [vmem:[#allocation22 + $0x5c] sm:$0xf]
    %v6836 = vld [vmem:[#allocation22 + $0x60] sm:$0xf]
    %v6837 = vld [vmem:[#allocation22 + $0x64] sm:$0xf]
    %v6838 = vld [vmem:[#allocation22 + $0x68] sm:$0xf]
    %v6839 = vld [vmem:[#allocation22 + $0x6c] sm:$0xf]
    %v6840 = vld [vmem:[#allocation22 + $0x70] sm:$0xf]
    %v6841 = vld [vmem:[#allocation22 + $0x74] sm:$0xf]
    %v6842 = vld [vmem:[#allocation22 + $0x78] sm:$0xf]
    %v6843 = vld [vmem:[#allocation22 + $0x7c] sm:$0xf]
    %s6844 = scalar_lea.vmem [#allocation21], 1
    %v6845 = vld [vmem:[%s6844] sm:$0x1]
    %v6847 = vsel %vm6758, %v6845, 0
    %6849 = vmatprep.subr.bf16.mxu0 %v6767
    %6850 = vmatpush1.bf16.msra.mxu0 %v6764
    %6851 = vmatprep.subr.bf16.mxu0 0
    %6852 = vmatpush1.bf16.msra.mxu0 0
    %6853 = vmatprep.subr.bf16.mxu0 0
    %6854 = vmatpush1.bf16.msra.mxu0 0
    %6855 = vmatprep.subr.bf16.mxu0 0
    %6856 = vmatpush1.bf16.msra.mxu0 0
    %6857 = vmatprep.subr.bf16.mxu0 0
    %6858 = vmatpush1.bf16.msra.mxu0 0
    %6859 = vmatprep.subr.bf16.mxu0 0
    %6860 = vmatpush1.bf16.msra.mxu0 0
    %6861 = vmatprep.subr.bf16.mxu0 0
    %6862 = vmatpush1.bf16.msra.mxu0 0
    %6863 = vmatprep.subr.bf16.mxu0 0
    %6864 = vmatpush1.bf16.msra.mxu0 0
    %6865 = vmatprep.subr.bf16.mxu0 0
    %6866 = vmatpush1.bf16.msra.mxu0 0
    %6867 = vmatprep.subr.bf16.mxu0 0
    %6868 = vmatpush1.bf16.msra.mxu0 0
    %6869 = vmatprep.subr.bf16.mxu0 0
    %6870 = vmatpush1.bf16.msra.mxu0 0
    %6871 = vmatprep.subr.bf16.mxu0 0
    %6872 = vmatpush1.bf16.msra.mxu0 0
    %6873 = vmatprep.subr.bf16.mxu0 0
    %6874 = vmatpush1.bf16.msra.mxu0 0
    %6875 = vmatprep.subr.bf16.mxu0 0
    %6876 = vmatpush1.bf16.msra.mxu0 0
    %6877 = vmatprep.subr.bf16.mxu0 0
    %6878 = vmatpush1.bf16.msra.mxu0 0
    %6879 = vmatprep.subr.bf16.mxu0 0
    %6880 = vmatpush1.bf16.msra.mxu0 0
    %6881 = vmatprep.mubr.bf16.mxu0 0
    %6882 = vmatmul.mubr.bf16.gmra.mrb[0].mxu0 %v6847
    %v6883 = vpop.f32.mrb[0].mxu0
    %v6884 = vadd.f32 0.0, %v6883
    %v6885 = vpop.f32.mrb[0].mxu0
    %v6886 = vadd.f32 0.0, %v6885
    %v6887 = vpop.f32.mrb[0].mxu0
    %v6888 = vpop.f32.mrb[0].mxu0
    %6889 = vdwg.mxu0
    %v6890 = vpack.c.bf16 %v6884, %v6884
    %v6891 = vpack.c.bf16 %v6886, %v6886
    %s6892 = scalar_lea.vmem [#allocation22], 128
    %v6893 = vld [vmem:[%s6892] sm:$0xf]
    %v6894 = vld [vmem:[%s6892 + $0x4] sm:$0xf]
    %v6895 = vld [vmem:[%s6892 + $0x8] sm:$0xf]
    %v6896 = vld [vmem:[%s6892 + $0xc] sm:$0xf]
    %v6897 = vld [vmem:[%s6892 + $0x10] sm:$0xf]
    %v6898 = vld [vmem:[%s6892 + $0x14] sm:$0xf]
    %v6899 = vld [vmem:[%s6892 + $0x18] sm:$0xf]
    %v6900 = vld [vmem:[%s6892 + $0x1c] sm:$0xf]
    %v6901 = vld [vmem:[%s6892 + $0x20] sm:$0xf]
    %v6902 = vld [vmem:[%s6892 + $0x24] sm:$0xf]
    %v6903 = vld [vmem:[%s6892 + $0x28] sm:$0xf]
    %v6904 = vld [vmem:[%s6892 + $0x2c] sm:$0xf]
    %v6905 = vld [vmem:[%s6892 + $0x30] sm:$0xf]
    %v6906 = vld [vmem:[%s6892 + $0x34] sm:$0xf]
    %v6907 = vld [vmem:[%s6892 + $0x38] sm:$0xf]
    %v6908 = vld [vmem:[%s6892 + $0x3c] sm:$0xf]
    %v6909 = vld [vmem:[%s6892 + $0x40] sm:$0xf]
    %v6910 = vld [vmem:[%s6892 + $0x44] sm:$0xf]
    %v6911 = vld [vmem:[%s6892 + $0x48] sm:$0xf]
    %v6912 = vld [vmem:[%s6892 + $0x4c] sm:$0xf]
    %v6913 = vld [vmem:[%s6892 + $0x50] sm:$0xf]
    %v6914 = vld [vmem:[%s6892 + $0x54] sm:$0xf]
    %v6915 = vld [vmem:[%s6892 + $0x58] sm:$0xf]
    %v6916 = vld [vmem:[%s6892 + $0x5c] sm:$0xf]
    %v6917 = vld [vmem:[%s6892 + $0x60] sm:$0xf]
    %v6918 = vld [vmem:[%s6892 + $0x64] sm:$0xf]
    %v6919 = vld [vmem:[%s6892 + $0x68] sm:$0xf]
    %v6920 = vld [vmem:[%s6892 + $0x6c] sm:$0xf]
    %v6921 = vld [vmem:[%s6892 + $0x70] sm:$0xf]
    %v6922 = vld [vmem:[%s6892 + $0x74] sm:$0xf]
    %v6923 = vld [vmem:[%s6892 + $0x78] sm:$0xf]
    %v6924 = vld [vmem:[%s6892 + $0x7c] sm:$0xf]
    %v6957 = vunpack.c.l.b16 %v6893
    %v6958 = vunpack.c.l.b16 %v6894
    %v6959 = vunpack.c.l.b16 %v6895
    %v6960 = vunpack.c.l.b16 %v6896
    %v6961 = vunpack.c.l.b16 %v6897
    %v6962 = vunpack.c.l.b16 %v6898
    %v6963 = vunpack.c.l.b16 %v6899
    %v6964 = vunpack.c.l.b16 %v6900
    %v6965 = vunpack.c.l.b16 %v6901
    %v6966 = vunpack.c.l.b16 %v6902
    %v6967 = vunpack.c.l.b16 %v6903
    %v6968 = vunpack.c.l.b16 %v6904
    %v6969 = vunpack.c.l.b16 %v6905
    %v6970 = vunpack.c.l.b16 %v6906
    %v6971 = vunpack.c.l.b16 %v6907
    %v6972 = vunpack.c.l.b16 %v6908
    %v6973 = vunpack.c.l.b16 %v6909
    %v6974 = vunpack.c.l.b16 %v6910
    %v6975 = vunpack.c.l.b16 %v6911
    %v6976 = vunpack.c.l.b16 %v6912
    %v6977 = vunpack.c.l.b16 %v6913
    %v6978 = vunpack.c.l.b16 %v6914
    %v6979 = vunpack.c.l.b16 %v6915
    %v6980 = vunpack.c.l.b16 %v6916
    %v6981 = vunpack.c.l.b16 %v6917
    %v6982 = vunpack.c.l.b16 %v6918
    %v6983 = vunpack.c.l.b16 %v6919
    %v6984 = vunpack.c.l.b16 %v6920
    %v6985 = vunpack.c.l.b16 %v6921
    %v6986 = vunpack.c.l.b16 %v6922
    %v6987 = vunpack.c.l.b16 %v6923
    %v6988 = vunpack.c.l.b16 %v6924
    %v6989 = vpack.c.b16 %v6958, %v6957
    %v6990 = vpack.c.b16 %v6960, %v6959
    %v6991 = vpack.c.b16 %v6962, %v6961
    %v6992 = vpack.c.b16 %v6964, %v6963
    %v6993 = vpack.c.b16 %v6966, %v6965
    %v6994 = vpack.c.b16 %v6968, %v6967
    %v6995 = vpack.c.b16 %v6970, %v6969
    %v6996 = vpack.c.b16 %v6972, %v6971
    %v6997 = vpack.c.b16 %v6974, %v6973
    %v6998 = vpack.c.b16 %v6976, %v6975
    %v6999 = vpack.c.b16 %v6978, %v6977
    %v7000 = vpack.c.b16 %v6980, %v6979
    %v7001 = vpack.c.b16 %v6982, %v6981
    %v7002 = vpack.c.b16 %v6984, %v6983
    %v7003 = vpack.c.b16 %v6986, %v6985
    %v7004 = vpack.c.b16 %v6988, %v6987
    %7021 = vmatprep.subr.bf16.mxu0 0
    %7022 = vmatpush1.bf16.msra.mxu0 %v6989
    %7023 = vmatprep.subr.bf16.mxu0 0
    %7024 = vmatpush1.bf16.msra.mxu0 %v6990
    %7025 = vmatprep.subr.bf16.mxu0 0
    %7026 = vmatpush1.bf16.msra.mxu0 %v6991
    %7027 = vmatprep.subr.bf16.mxu0 0
    %7028 = vmatpush1.bf16.msra.mxu0 %v6992
    %7029 = vmatprep.subr.bf16.mxu0 0
    %7030 = vmatpush1.bf16.msra.mxu0 %v6993
    %7031 = vmatprep.subr.bf16.mxu0 0
    %7032 = vmatpush1.bf16.msra.mxu0 %v6994
    %7033 = vmatprep.subr.bf16.mxu0 0
    %7034 = vmatpush1.bf16.msra.mxu0 %v6995
    %7035 = vmatprep.subr.bf16.mxu0 0
    %7036 = vmatpush1.bf16.msra.mxu0 %v6996
    %7037 = vmatprep.subr.bf16.mxu0 0
    %7038 = vmatpush1.bf16.msra.mxu0 %v6997
    %7039 = vmatprep.subr.bf16.mxu0 0
    %7040 = vmatpush1.bf16.msra.mxu0 %v6998
    %7041 = vmatprep.subr.bf16.mxu0 0
    %7042 = vmatpush1.bf16.msra.mxu0 %v6999
    %7043 = vmatprep.subr.bf16.mxu0 0
    %7044 = vmatpush1.bf16.msra.mxu0 %v7000
    %7045 = vmatprep.subr.bf16.mxu0 0
    %7046 = vmatpush1.bf16.msra.mxu0 %v7001
    %7047 = vmatprep.subr.bf16.mxu0 0
    %7048 = vmatpush1.bf16.msra.mxu0 %v7002
    %7049 = vmatprep.subr.bf16.mxu0 0
    %7050 = vmatpush1.bf16.msra.mxu0 %v7003
    %7051 = vmatprep.subr.bf16.mxu0 0
    %7052 = vmatpush1.bf16.msra.mxu0 %v7004
    %7053 = vmatprep.mubr.bf16.mxu0 %v6891
    %7054 = vmatmul.mubr.bf16.gmra.mrb[0].mxu0 %v6890
    %v7055 = vpop.f32.mrb[0].mxu0
    %v7056 = vadd.f32 0.0, %v7055
    %v7057 = vpop.f32.mrb[0].mxu0
    %v7058 = vpop.f32.mrb[0].mxu0
    %v7059 = vpop.f32.mrb[0].mxu0
    %7060 = vdwg.mxu0
    %v7093 = vunpack.c.l.b16 %v6812
    %v7094 = vunpack.c.l.b16 %v6813
    %v7095 = vunpack.c.l.b16 %v6814
    %v7096 = vunpack.c.l.b16 %v6815
    %v7097 = vunpack.c.l.b16 %v6816
    %v7098 = vunpack.c.l.b16 %v6817
    %v7099 = vunpack.c.l.b16 %v6818
    %v7100 = vunpack.c.l.b16 %v6819
    %v7101 = vunpack.c.l.b16 %v6820
    %v7102 = vunpack.c.l.b16 %v6821
    %v7103 = vunpack.c.l.b16 %v6822
    %v7104 = vunpack.c.l.b16 %v6823
    %v7105 = vunpack.c.l.b16 %v6824
    %v7106 = vunpack.c.l.b16 %v6825
    %v7107 = vunpack.c.l.b16 %v6826
    %v7108 = vunpack.c.l.b16 %v6827
    %v7109 = vunpack.c.l.b16 %v6828
    %v7110 = vunpack.c.l.b16 %v6829
    %v7111 = vunpack.c.l.b16 %v6830
    %v7112 = vunpack.c.l.b16 %v6831
    %v7113 = vunpack.c.l.b16 %v6832
    %v7114 = vunpack.c.l.b16 %v6833
    %v7115 = vunpack.c.l.b16 %v6834
    %v7116 = vunpack.c.l.b16 %v6835
    %v7117 = vunpack.c.l.b16 %v6836
    %v7118 = vunpack.c.l.b16 %v6837
    %v7119 = vunpack.c.l.b16 %v6838
    %v7120 = vunpack.c.l.b16 %v6839
    %v7121 = vunpack.c.l.b16 %v6840
    %v7122 = vunpack.c.l.b16 %v6841
    %v7123 = vunpack.c.l.b16 %v6842
    %v7124 = vunpack.c.l.b16 %v6843
    %v7125 = vpack.c.b16 %v7094, %v7093
    %v7126 = vpack.c.b16 %v7096, %v7095
    %v7127 = vpack.c.b16 %v7098, %v7097
    %v7128 = vpack.c.b16 %v7100, %v7099
    %v7129 = vpack.c.b16 %v7102, %v7101
    %v7130 = vpack.c.b16 %v7104, %v7103
    %v7131 = vpack.c.b16 %v7106, %v7105
    %v7132 = vpack.c.b16 %v7108, %v7107
    %v7133 = vpack.c.b16 %v7110, %v7109
    %v7134 = vpack.c.b16 %v7112, %v7111
    %v7135 = vpack.c.b16 %v7114, %v7113
    %v7136 = vpack.c.b16 %v7116, %v7115
    %v7137 = vpack.c.b16 %v7118, %v7117
    %v7138 = vpack.c.b16 %v7120, %v7119
    %v7139 = vpack.c.b16 %v7122, %v7121
    %v7140 = vpack.c.b16 %v7124, %v7123
    %7157 = vmatprep.subr.bf16.mxu0 0
    %7158 = vmatpush1.bf16.msra.mxu0 %v7125
    %7159 = vmatprep.subr.bf16.mxu0 0
    %7160 = vmatpush1.bf16.msra.mxu0 %v7126
    %7161 = vmatprep.subr.bf16.mxu0 0
    %7162 = vmatpush1.bf16.msra.mxu0 %v7127
    %7163 = vmatprep.subr.bf16.mxu0 0
    %7164 = vmatpush1.bf16.msra.mxu0 %v7128
    %7165 = vmatprep.subr.bf16.mxu0 0
    %7166 = vmatpush1.bf16.msra.mxu0 %v7129
    %7167 = vmatprep.subr.bf16.mxu0 0
    %7168 = vmatpush1.bf16.msra.mxu0 %v7130
    %7169 = vmatprep.subr.bf16.mxu0 0
    %7170 = vmatpush1.bf16.msra.mxu0 %v7131
    %7171 = vmatprep.subr.bf16.mxu0 0
    %7172 = vmatpush1.bf16.msra.mxu0 %v7132
    %7173 = vmatprep.subr.bf16.mxu0 0
    %7174 = vmatpush1.bf16.msra.mxu0 %v7133
    %7175 = vmatprep.subr.bf16.mxu0 0
    %7176 = vmatpush1.bf16.msra.mxu0 %v7134
    %7177 = vmatprep.subr.bf16.mxu0 0
    %7178 = vmatpush1.bf16.msra.mxu0 %v7135
    %7179 = vmatprep.subr.bf16.mxu0 0
    %7180 = vmatpush1.bf16.msra.mxu0 %v7136
    %7181 = vmatprep.subr.bf16.mxu0 0
    %7182 = vmatpush1.bf16.msra.mxu0 %v7137
    %7183 = vmatprep.subr.bf16.mxu0 0
    %7184 = vmatpush1.bf16.msra.mxu0 %v7138
    %7185 = vmatprep.subr.bf16.mxu0 0
    %7186 = vmatpush1.bf16.msra.mxu0 %v7139
    %7187 = vmatprep.subr.bf16.mxu0 0
    %7188 = vmatpush1.bf16.msra.mxu0 %v7140
    %7189 = vmatprep.mubr.bf16.mxu0 %v6811
    %7190 = vmatmul.mubr.bf16.gmra.mrb[0].mxu0 %v6810
    %v7191 = vpop.f32.mrb[0].mxu0
    %v7192 = vadd.f32 %v7056, %v7191
    %v7193 = vpop.f32.mrb[0].mxu0
    %v7194 = vpop.f32.mrb[0].mxu0
    %v7195 = vpop.f32.mrb[0].mxu0
    %7196 = vdwg.mxu0
    %s7197 = scalar_lea.vmem [#allocation21], 2
    %v7198 = vld [vmem:[%s7197] sm:$0x1]
    %v7200 = vsel %vm6758, %v7198, 0
    %7202 = vmatprep.subr.bf16.mxu0 %v6767
    %7203 = vmatpush1.bf16.msra.mxu0 %v6764
    %7204 = vmatprep.subr.bf16.mxu0 0
    %7205 = vmatpush1.bf16.msra.mxu0 0
    %7206 = vmatprep.subr.bf16.mxu0 0
    %7207 = vmatpush1.bf16.msra.mxu0 0
    %7208 = vmatprep.subr.bf16.mxu0 0
    %7209 = vmatpush1.bf16.msra.mxu0 0
    %7210 = vmatprep.subr.bf16.mxu0 0
    %7211 = vmatpush1.bf16.msra.mxu0 0
    %7212 = vmatprep.subr.bf16.mxu0 0
    %7213 = vmatpush1.bf16.msra.mxu0 0
    %7214 = vmatprep.subr.bf16.mxu0 0
    %7215 = vmatpush1.bf16.msra.mxu0 0
    %7216 = vmatprep.subr.bf16.mxu0 0
    %7217 = vmatpush1.bf16.msra.mxu0 0
    %7218 = vmatprep.subr.bf16.mxu0 0
    %7219 = vmatpush1.bf16.msra.mxu0 0
    %7220 = vmatprep.subr.bf16.mxu0 0
    %7221 = vmatpush1.bf16.msra.mxu0 0
    %7222 = vmatprep.subr.bf16.mxu0 0
    %7223 = vmatpush1.bf16.msra.mxu0 0
    %7224 = vmatprep.subr.bf16.mxu0 0
    %7225 = vmatpush1.bf16.msra.mxu0 0
    %7226 = vmatprep.subr.bf16.mxu0 0
    %7227 = vmatpush1.bf16.msra.mxu0 0
    %7228 = vmatprep.subr.bf16.mxu0 0
    %7229 = vmatpush1.bf16.msra.mxu0 0
    %7230 = vmatprep.subr.bf16.mxu0 0
    %7231 = vmatpush1.bf16.msra.mxu0 0
    %7232 = vmatprep.subr.bf16.mxu0 0
    %7233 = vmatpush1.bf16.msra.mxu0 0
    %7234 = vmatprep.mubr.bf16.mxu0 0
    %7235 = vmatmul.mubr.bf16.gmra.mrb[0].mxu0 %v7200
    %v7236 = vpop.f32.mrb[0].mxu0
    %v7237 = vadd.f32 0.0, %v7236
    %v7238 = vpop.f32.mrb[0].mxu0
    %v7239 = vadd.f32 0.0, %v7238
    %v7240 = vpop.f32.mrb[0].mxu0
    %v7241 = vpop.f32.mrb[0].mxu0
    %7242 = vdwg.mxu0
    %v7243 = vpack.c.bf16 %v7237, %v7237
    %v7244 = vpack.c.bf16 %v7239, %v7239
    %s7245 = scalar_lea.vmem [#allocation22], 256
    %v7246 = vld [vmem:[%s7245] sm:$0xf]
    %v7247 = vld [vmem:[%s7245 + $0x4] sm:$0xf]
    %v7248 = vld [vmem:[%s7245 + $0x8] sm:$0xf]
    %v7249 = vld [vmem:[%s7245 + $0xc] sm:$0xf]
    %v7250 = vld [vmem:[%s7245 + $0x10] sm:$0xf]
    %v7251 = vld [vmem:[%s7245 + $0x14] sm:$0xf]
    %v7252 = vld [vmem:[%s7245 + $0x18] sm:$0xf]
    %v7253 = vld [vmem:[%s7245 + $0x1c] sm:$0xf]
    %v7254 = vld [vmem:[%s7245 + $0x20] sm:$0xf]
    %v7255 = vld [vmem:[%s7245 + $0x24] sm:$0xf]
    %v7256 = vld [vmem:[%s7245 + $0x28] sm:$0xf]
    %v7257 = vld [vmem:[%s7245 + $0x2c] sm:$0xf]
    %v7258 = vld [vmem:[%s7245 + $0x30] sm:$0xf]
    %v7259 = vld [vmem:[%s7245 + $0x34] sm:$0xf]
    %v7260 = vld [vmem:[%s7245 + $0x38] sm:$0xf]
    %v7261 = vld [vmem:[%s7245 + $0x3c] sm:$0xf]
    %v7262 = vld [vmem:[%s7245 + $0x40] sm:$0xf]
    %v7263 = vld [vmem:[%s7245 + $0x44] sm:$0xf]
    %v7264 = vld [vmem:[%s7245 + $0x48] sm:$0xf]
    %v7265 = vld [vmem:[%s7245 + $0x4c] sm:$0xf]
    %v7266 = vld [vmem:[%s7245 + $0x50] sm:$0xf]
    %v7267 = vld [vmem:[%s7245 + $0x54] sm:$0xf]
    %v7268 = vld [vmem:[%s7245 + $0x58] sm:$0xf]
    %v7269 = vld [vmem:[%s7245 + $0x5c] sm:$0xf]
    %v7270 = vld [vmem:[%s7245 + $0x60] sm:$0xf]
    %v7271 = vld [vmem:[%s7245 + $0x64] sm:$0xf]
    %v7272 = vld [vmem:[%s7245 + $0x68] sm:$0xf]
    %v7273 = vld [vmem:[%s7245 + $0x6c] sm:$0xf]
    %v7274 = vld [vmem:[%s7245 + $0x70] sm:$0xf]
    %v7275 = vld [vmem:[%s7245 + $0x74] sm:$0xf]
    %v7276 = vld [vmem:[%s7245 + $0x78] sm:$0xf]
    %v7277 = vld [vmem:[%s7245 + $0x7c] sm:$0xf]
    %v7310 = vunpack.c.l.b16 %v7246
    %v7311 = vunpack.c.l.b16 %v7247
    %v7312 = vunpack.c.l.b16 %v7248
    %v7313 = vunpack.c.l.b16 %v7249
    %v7314 = vunpack.c.l.b16 %v7250
    %v7315 = vunpack.c.l.b16 %v7251
    %v7316 = vunpack.c.l.b16 %v7252
    %v7317 = vunpack.c.l.b16 %v7253
    %v7318 = vunpack.c.l.b16 %v7254
    %v7319 = vunpack.c.l.b16 %v7255
    %v7320 = vunpack.c.l.b16 %v7256
    %v7321 = vunpack.c.l.b16 %v7257
    %v7322 = vunpack.c.l.b16 %v7258
    %v7323 = vunpack.c.l.b16 %v7259
    %v7324 = vunpack.c.l.b16 %v7260
    %v7325 = vunpack.c.l.b16 %v7261
    %v7326 = vunpack.c.l.b16 %v7262
    %v7327 = vunpack.c.l.b16 %v7263
    %v7328 = vunpack.c.l.b16 %v7264
    %v7329 = vunpack.c.l.b16 %v7265
    %v7330 = vunpack.c.l.b16 %v7266
    %v7331 = vunpack.c.l.b16 %v7267
    %v7332 = vunpack.c.l.b16 %v7268
    %v7333 = vunpack.c.l.b16 %v7269
    %v7334 = vunpack.c.l.b16 %v7270
    %v7335 = vunpack.c.l.b16 %v7271
    %v7336 = vunpack.c.l.b16 %v7272
    %v7337 = vunpack.c.l.b16 %v7273
    %v7338 = vunpack.c.l.b16 %v7274
    %v7339 = vunpack.c.l.b16 %v7275
    %v7340 = vunpack.c.l.b16 %v7276
    %v7341 = vunpack.c.l.b16 %v7277
    %v7342 = vpack.c.b16 %v7311, %v7310
    %v7343 = vpack.c.b16 %v7313, %v7312
    %v7344 = vpack.c.b16 %v7315, %v7314
    %v7345 = vpack.c.b16 %v7317, %v7316
    %v7346 = vpack.c.b16 %v7319, %v7318
    %v7347 = vpack.c.b16 %v7321, %v7320
    %v7348 = vpack.c.b16 %v7323, %v7322
    %v7349 = vpack.c.b16 %v7325, %v7324
    %v7350 = vpack.c.b16 %v7327, %v7326
    %v7351 = vpack.c.b16 %v7329, %v7328
    %v7352 = vpack.c.b16 %v7331, %v7330
    %v7353 = vpack.c.b16 %v7333, %v7332
    %v7354 = vpack.c.b16 %v7335, %v7334
    %v7355 = vpack.c.b16 %v7337, %v7336
    %v7356 = vpack.c.b16 %v7339, %v7338
    %v7357 = vpack.c.b16 %v7341, %v7340
    %7374 = vmatprep.subr.bf16.mxu0 0
    %7375 = vmatpush1.bf16.msra.mxu0 %v7342
    %7376 = vmatprep.subr.bf16.mxu0 0
    %7377 = vmatpush1.bf16.msra.mxu0 %v7343
    %7378 = vmatprep.subr.bf16.mxu0 0
    %7379 = vmatpush1.bf16.msra.mxu0 %v7344
    %7380 = vmatprep.subr.bf16.mxu0 0
    %7381 = vmatpush1.bf16.msra.mxu0 %v7345
    %7382 = vmatprep.subr.bf16.mxu0 0
    %7383 = vmatpush1.bf16.msra.mxu0 %v7346
    %7384 = vmatprep.subr.bf16.mxu0 0
    %7385 = vmatpush1.bf16.msra.mxu0 %v7347
    %7386 = vmatprep.subr.bf16.mxu0 0
    %7387 = vmatpush1.bf16.msra.mxu0 %v7348
    %7388 = vmatprep.subr.bf16.mxu0 0
    %7389 = vmatpush1.bf16.msra.mxu0 %v7349
    %7390 = vmatprep.subr.bf16.mxu0 0
    %7391 = vmatpush1.bf16.msra.mxu0 %v7350
    %7392 = vmatprep.subr.bf16.mxu0 0
    %7393 = vmatpush1.bf16.msra.mxu0 %v7351
    %7394 = vmatprep.subr.bf16.mxu0 0
    %7395 = vmatpush1.bf16.msra.mxu0 %v7352
    %7396 = vmatprep.subr.bf16.mxu0 0
    %7397 = vmatpush1.bf16.msra.mxu0 %v7353
    %7398 = vmatprep.subr.bf16.mxu0 0
    %7399 = vmatpush1.bf16.msra.mxu0 %v7354
    %7400 = vmatprep.subr.bf16.mxu0 0
    %7401 = vmatpush1.bf16.msra.mxu0 %v7355
    %7402 = vmatprep.subr.bf16.mxu0 0
    %7403 = vmatpush1.bf16.msra.mxu0 %v7356
    %7404 = vmatprep.subr.bf16.mxu0 0
    %7405 = vmatpush1.bf16.msra.mxu0 %v7357
    %7406 = vmatprep.mubr.bf16.mxu0 %v7244
    %7407 = vmatmul.mubr.bf16.gmra.mrb[0].mxu0 %v7243
    %v7408 = vpop.f32.mrb[0].mxu0
    %v7409 = vadd.f32 0.0, %v7408
    %v7410 = vpop.f32.mrb[0].mxu0
    %v7411 = vpop.f32.mrb[0].mxu0
    %v7412 = vpop.f32.mrb[0].mxu0
    %7413 = vdwg.mxu0
    %v7414 = vadd.f32 %v7192, %v7409
    %s7415 = scalar_lea.vmem [#allocation21], 3
    %v7416 = vld [vmem:[%s7415] sm:$0x1]
    %v7418 = vsel %vm6758, %v7416, 0
    %7420 = vmatprep.subr.bf16.mxu0 %v6767
    %7421 = vmatpush1.bf16.msra.mxu0 %v6764
    %7422 = vmatprep.subr.bf16.mxu0 0
    %7423 = vmatpush1.bf16.msra.mxu0 0
    %7424 = vmatprep.subr.bf16.mxu0 0
    %7425 = vmatpush1.bf16.msra.mxu0 0
    %7426 = vmatprep.subr.bf16.mxu0 0
    %7427 = vmatpush1.bf16.msra.mxu0 0
    %7428 = vmatprep.subr.bf16.mxu0 0
    %7429 = vmatpush1.bf16.msra.mxu0 0
    %7430 = vmatprep.subr.bf16.mxu0 0
    %7431 = vmatpush1.bf16.msra.mxu0 0
    %7432 = vmatprep.subr.bf16.mxu0 0
    %7433 = vmatpush1.bf16.msra.mxu0 0
    %7434 = vmatprep.subr.bf16.mxu0 0
    %7435 = vmatpush1.bf16.msra.mxu0 0
    %7436 = vmatprep.subr.bf16.mxu0 0
    %7437 = vmatpush1.bf16.msra.mxu0 0
    %7438 = vmatprep.subr.bf16.mxu0 0
    %7439 = vmatpush1.bf16.msra.mxu0 0
    %7440 = vmatprep.subr.bf16.mxu0 0
    %7441 = vmatpush1.bf16.msra.mxu0 0
    %7442 = vmatprep.subr.bf16.mxu0 0
    %7443 = vmatpush1.bf16.msra.mxu0 0
    %7444 = vmatprep.subr.bf16.mxu0 0
    %7445 = vmatpush1.bf16.msra.mxu0 0
    %7446 = vmatprep.subr.bf16.mxu0 0
    %7447 = vmatpush1.bf16.msra.mxu0 0
    %7448 = vmatprep.subr.bf16.mxu0 0
    %7449 = vmatpush1.bf16.msra.mxu0 0
    %7450 = vmatprep.subr.bf16.mxu0 0
    %7451 = vmatpush1.bf16.msra.mxu0 0
    %7452 = vmatprep.mubr.bf16.mxu0 0
    %7453 = vmatmul.mubr.bf16.gmra.mrb[0].mxu0 %v7418
    %v7454 = vpop.f32.mrb[0].mxu0
    %v7455 = vadd.f32 0.0, %v7454
    %v7456 = vpop.f32.mrb[0].mxu0
    %v7457 = vadd.f32 0.0, %v7456
    %v7458 = vpop.f32.mrb[0].mxu0
    %v7459 = vpop.f32.mrb[0].mxu0
    %7460 = vdwg.mxu0
    %v7461 = vpack.c.bf16 %v7455, %v7455
    %v7462 = vpack.c.bf16 %v7457, %v7457
    %s7463 = scalar_lea.vmem [#allocation22], 384
    %v7464 = vld [vmem:[%s7463] sm:$0xf]
    %v7465 = vld [vmem:[%s7463 + $0x4] sm:$0xf]
    %v7466 = vld [vmem:[%s7463 + $0x8] sm:$0xf]
    %v7467 = vld [vmem:[%s7463 + $0xc] sm:$0xf]
    %v7468 = vld [vmem:[%s7463 + $0x10] sm:$0xf]
    %v7469 = vld [vmem:[%s7463 + $0x14] sm:$0xf]
    %v7470 = vld [vmem:[%s7463 + $0x18] sm:$0xf]
    %v7471 = vld [vmem:[%s7463 + $0x1c] sm:$0xf]
    %v7472 = vld [vmem:[%s7463 + $0x20] sm:$0xf]
    %v7473 = vld [vmem:[%s7463 + $0x24] sm:$0xf]
    %v7474 = vld [vmem:[%s7463 + $0x28] sm:$0xf]
    %v7475 = vld [vmem:[%s7463 + $0x2c] sm:$0xf]
    %v7476 = vld [vmem:[%s7463 + $0x30] sm:$0xf]
    %v7477 = vld [vmem:[%s7463 + $0x34] sm:$0xf]
    %v7478 = vld [vmem:[%s7463 + $0x38] sm:$0xf]
    %v7479 = vld [vmem:[%s7463 + $0x3c] sm:$0xf]
    %v7480 = vld [vmem:[%s7463 + $0x40] sm:$0xf]
    %v7481 = vld [vmem:[%s7463 + $0x44] sm:$0xf]
    %v7482 = vld [vmem:[%s7463 + $0x48] sm:$0xf]
    %v7483 = vld [vmem:[%s7463 + $0x4c] sm:$0xf]
    %v7484 = vld [vmem:[%s7463 + $0x50] sm:$0xf]
    %v7485 = vld [vmem:[%s7463 + $0x54] sm:$0xf]
    %v7486 = vld [vmem:[%s7463 + $0x58] sm:$0xf]
    %v7487 = vld [vmem:[%s7463 + $0x5c] sm:$0xf]
    %v7488 = vld [vmem:[%s7463 + $0x60] sm:$0xf]
    %v7489 = vld [vmem:[%s7463 + $0x64] sm:$0xf]
    %v7490 = vld [vmem:[%s7463 + $0x68] sm:$0xf]
    %v7491 = vld [vmem:[%s7463 + $0x6c] sm:$0xf]
    %v7492 = vld [vmem:[%s7463 + $0x70] sm:$0xf]
    %v7493 = vld [vmem:[%s7463 + $0x74] sm:$0xf]
    %v7494 = vld [vmem:[%s7463 + $0x78] sm:$0xf]
    %v7495 = vld [vmem:[%s7463 + $0x7c] sm:$0xf]
    %v7528 = vunpack.c.l.b16 %v7464
    %v7529 = vunpack.c.l.b16 %v7465
    %v7530 = vunpack.c.l.b16 %v7466
    %v7531 = vunpack.c.l.b16 %v7467
    %v7532 = vunpack.c.l.b16 %v7468
    %v7533 = vunpack.c.l.b16 %v7469
    %v7534 = vunpack.c.l.b16 %v7470
    %v7535 = vunpack.c.l.b16 %v7471
    %v7536 = vunpack.c.l.b16 %v7472
    %v7537 = vunpack.c.l.b16 %v7473
    %v7538 = vunpack.c.l.b16 %v7474
    %v7539 = vunpack.c.l.b16 %v7475
    %v7540 = vunpack.c.l.b16 %v7476
    %v7541 = vunpack.c.l.b16 %v7477
    %v7542 = vunpack.c.l.b16 %v7478
    %v7543 = vunpack.c.l.b16 %v7479
    %v7544 = vunpack.c.l.b16 %v7480
    %v7545 = vunpack.c.l.b16 %v7481
    %v7546 = vunpack.c.l.b16 %v7482
    %v7547 = vunpack.c.l.b16 %v7483
    %v7548 = vunpack.c.l.b16 %v7484
    %v7549 = vunpack.c.l.b16 %v7485
    %v7550 = vunpack.c.l.b16 %v7486
    %v7551 = vunpack.c.l.b16 %v7487
    %v7552 = vunpack.c.l.b16 %v7488
    %v7553 = vunpack.c.l.b16 %v7489
    %v7554 = vunpack.c.l.b16 %v7490
    %v7555 = vunpack.c.l.b16 %v7491
    %v7556 = vunpack.c.l.b16 %v7492
    %v7557 = vunpack.c.l.b16 %v7493
    %v7558 = vunpack.c.l.b16 %v7494
    %v7559 = vunpack.c.l.b16 %v7495
    %v7560 = vpack.c.b16 %v7529, %v7528
    %v7561 = vpack.c.b16 %v7531, %v7530
    %v7562 = vpack.c.b16 %v7533, %v7532
    %v7563 = vpack.c.b16 %v7535, %v7534
    %v7564 = vpack.c.b16 %v7537, %v7536
    %v7565 = vpack.c.b16 %v7539, %v7538
    %v7566 = vpack.c.b16 %v7541, %v7540
    %v7567 = vpack.c.b16 %v7543, %v7542
    %v7568 = vpack.c.b16 %v7545, %v7544
    %v7569 = vpack.c.b16 %v7547, %v7546
    %v7570 = vpack.c.b16 %v7549, %v7548
    %v7571 = vpack.c.b16 %v7551, %v7550
    %v7572 = vpack.c.b16 %v7553, %v7552
    %v7573 = vpack.c.b16 %v7555, %v7554
    %v7574 = vpack.c.b16 %v7557, %v7556
    %v7575 = vpack.c.b16 %v7559, %v7558
    %7592 = vmatprep.subr.bf16.mxu0 0
    %7593 = vmatpush1.bf16.msra.mxu0 %v7560
    %7594 = vmatprep.subr.bf16.mxu0 0
    %7595 = vmatpush1.bf16.msra.mxu0 %v7561
    %7596 = vmatprep.subr.bf16.mxu0 0
    %7597 = vmatpush1.bf16.msra.mxu0 %v7562
    %7598 = vmatprep.subr.bf16.mxu0 0
    %7599 = vmatpush1.bf16.msra.mxu0 %v7563
    %7600 = vmatprep.subr.bf16.mxu0 0
    %7601 = vmatpush1.bf16.msra.mxu0 %v7564
    %7602 = vmatprep.subr.bf16.mxu0 0
    %7603 = vmatpush1.bf16.msra.mxu0 %v7565
    %7604 = vmatprep.subr.bf16.mxu0 0
    %7605 = vmatpush1.bf16.msra.mxu0 %v7566
    %7606 = vmatprep.subr.bf16.mxu0 0
    %7607 = vmatpush1.bf16.msra.mxu0 %v7567
    %7608 = vmatprep.subr.bf16.mxu0 0
    %7609 = vmatpush1.bf16.msra.mxu0 %v7568
    %7610 = vmatprep.subr.bf16.mxu0 0
    %7611 = vmatpush1.bf16.msra.mxu0 %v7569
    %7612 = vmatprep.subr.bf16.mxu0 0
    %7613 = vmatpush1.bf16.msra.mxu0 %v7570
    %7614 = vmatprep.subr.bf16.mxu0 0
    %7615 = vmatpush1.bf16.msra.mxu0 %v7571
    %7616 = vmatprep.subr.bf16.mxu0 0
    %7617 = vmatpush1.bf16.msra.mxu0 %v7572
    %7618 = vmatprep.subr.bf16.mxu0 0
    %7619 = vmatpush1.bf16.msra.mxu0 %v7573
    %7620 = vmatprep.subr.bf16.mxu0 0
    %7621 = vmatpush1.bf16.msra.mxu0 %v7574
    %7622 = vmatprep.subr.bf16.mxu0 0
    %7623 = vmatpush1.bf16.msra.mxu0 %v7575
    %7624 = vmatprep.mubr.bf16.mxu0 %v7462
    %7625 = vmatmul.mubr.bf16.gmra.mrb[0].mxu0 %v7461
    %v7626 = vpop.f32.mrb[0].mxu0
    %v7627 = vadd.f32 0.0, %v7626
    %v7628 = vpop.f32.mrb[0].mxu0
    %v7629 = vpop.f32.mrb[0].mxu0
    %v7630 = vpop.f32.mrb[0].mxu0
    %7631 = vdwg.mxu0
    %v7632 = vadd.f32 %v7414, %v7627
    %v7633 = vld [vmem:[#allocation24] sm:$0x1]
    %v7635 = vlaneseq
    %v7636 = vshrl.u32 %v7635, 7
    %v7637 = vsub.s32 0, %v7636
    %v7638 = vrot.slane %v7633, %v7637
    %v7640 = vadd.f32 %v7632, %v7638
    %v7641 = vsub.f32 0.0, %v7640
    %v7642 = vmul.f32 %v7641, 1.442695
    %v7643 = vpow.pop %v7642
    %v7644 = vadd.f32 %v7643, 1.0
    %v7645 = vrcp.pop %v7644
    %v7646 = vmul.f32 1.0, %v7645
    %7647 = vst [vmem:[%s25] sm:$0x3] %v7646
    // Predicated region
    $region162: #{fused_forward.1} parent=1 // pred_check
      _
    $region163: #{fused_forward.1} parent=1 // pred_check_branch
      %7649 = sbr.rel (0) target = $region165
    $region164: #{fused_forward.1} parent=1 // pred_region
      _
    $region165: #{fused_forward.1} parent=1 // pred_fallthru
      _
    // Predicated region
    $region166: #{fused_forward.1} parent=1 // pred_check
      _
    $region167: #{fused_forward.1} parent=1 // pred_check_branch
      %7651 = sbr.rel (0) target = $region169
    $region168: #{fused_forward.1} parent=1 // pred_region
      _
    $region169: #{fused_forward.1} parent=1 // pred_fallthru
      _
    %7652 = vsyncpa [#allocation3], 1
    %7653 = vsyncpa [#allocation5], 1
    %7654 = vsyncpa [#allocation8], 1
    %7655 = vsyncpa [#allocation11], 1
    %7656 = vsyncpa [#allocation14], 1
    %7657 = vsyncpa [#allocation17], 1
    %7658 = vsyncpa [#allocation20], 1
    %7659 = vsyncpa [#allocation23], 1

</llo_original>
